<compile_context>
chip_gen: v7x
topology: tpu7x:2x2x1
jax: 0.10.0
libtpu: 0.0.40
codegen_flags: <defaults>
</compile_context>

<pallas_src>
import jax
import jax.numpy as jnp
from jax.experimental import pallas as pl
from jax.experimental.pallas import tpu as pltpu


# ----------------------------- model config ---------------------------------
NUM_LAYERS = 2
D_MODEL = 32
NUM_HEADS = 4
D_KV = 16                      # per-head dim
INNER = NUM_HEADS * D_KV       # 64
D_FF = 64
VOCAB = 256

BATCH = 2
DEC_SEQ = 8
ENC_SEQ = 8

_F32 = jnp.float32
_BF16 = jnp.bfloat16
_NEG_INF = -1e9


# --------------------------- in-kernel helpers -------------------------------
def _rmsnorm(x, w):
    # T5 "LayerNorm": no mean subtraction, no bias.  fp32 math.
    var = jnp.mean(x * x, axis=-1, keepdims=True)
    return x * jax.lax.rsqrt(var + 1e-6) * w


def _softmax(s):
    # s: (H, Tq, Tk) fp32.  Reciprocal goes to the EUP slot (approx, free-ish).
    # TODO(synk): use an exact divide if parity with the fp32 ONNX ref is needed.
    m = jnp.max(s, axis=-1, keepdims=True)
    p = jnp.exp(s - m)
    denom = jnp.sum(p, axis=-1, keepdims=True)
    return p * pl.reciprocal(denom, approx=True)


# ------------------------------ fused kernel ---------------------------------
def _make_decoder_kernel(T, S):
    H, DK, D = NUM_HEADS, D_KV, D_MODEL

    def kernel(ids_ref, enc_ref, embed_ref, lm_head_ref, ln_f_ref,
               ln1_ref, wkv_ref, wq_ref, wk_ref, wv_ref, wo_ref,
               ln2_ref, cwkv_ref, cwq_ref, cwk_ref, cwv_ref, cwo_ref,
               ln3_ref, wi_ref, woff_ref,
               logits_ref, kvdec_ref, kvenc_ref):
        # ---- embedding lookup as a one-hot MXU matmul (keeps it in one kernel)
        ids = ids_ref[...]                                            # (T, 1) i32
        vocab_iota = jax.lax.broadcasted_iota(jnp.int32, (T, VOCAB), 1)
        onehot = jnp.where(vocab_iota == ids, 1.0, 0.0).astype(_BF16)  # (T, V)
        x = jnp.dot(onehot, embed_ref[...], preferred_element_type=_F32)  # (T, D)

        enc_bf = enc_ref[...]                                         # (S, D) bf16
        enc_b = jnp.broadcast_to(enc_bf, (H, S, D))                   # heads-leading

        # Causal additive mask built in-kernel (no mask DMA / BlockSpec).
        qpos = jax.lax.broadcasted_iota(jnp.int32, (T, T), 0)
        kpos = jax.lax.broadcasted_iota(jnp.int32, (T, T), 1)
        causal = jnp.where(qpos >= kpos, 0.0, _NEG_INF).astype(_F32)  # (T, T)

        def attend(q_h, k_h, v_h, wo_h, bias):
            # All einsums keep the head dim leading (batch dims = (0, 0)).
            s = jnp.einsum("hqd,hkd->hqk", q_h.astype(_BF16), k_h.astype(_BF16),
                           preferred_element_type=_F32)                # (H, Tq, Tk)
            if bias is not None:
                s = s + bias
            p = _softmax(s)
            ctx = jnp.einsum("hqk,hkd->hqd", p.astype(_BF16), v_h.astype(_BF16),
                             preferred_element_type=_F32)              # (H, Tq, DK)
            y = jnp.einsum("hqd,hdm->hqm", ctx.astype(_BF16), wo_h,
                           preferred_element_type=_F32)                # (H, Tq, D)
            out = y[0]
            for h in range(1, H):
                out = out + y[h]
            return out                                                 # (Tq, D)

        for li in range(NUM_LAYERS):
            # ------------- self attention -------------
            n = _rmsnorm(x, ln1_ref[li]).astype(_BF16)                 # (T, D)
            # Lane-dense [K|V] slab (T, 128) for the cache: ONE unmasked store.
            kv = jnp.dot(n, wkv_ref[li], preferred_element_type=_F32)
            kvdec_ref[li] = kv.astype(_BF16)
            # Heads-leading batched projections (no per-head loop / lane slices).
            n_b = jnp.broadcast_to(n, (H, T, D))
            q_h = jnp.einsum("htd,hde->hte", n_b, wq_ref[li],
                             preferred_element_type=_F32)
            k_h = jnp.einsum("htd,hde->hte", n_b, wk_ref[li],
                             preferred_element_type=_F32)
            v_h = jnp.einsum("htd,hde->hte", n_b, wv_ref[li],
                             preferred_element_type=_F32)
            # NOTE: T5 attention has NO 1/sqrt(d) scaling (folded into init).
            # TODO(synk): T5 relative-position bias (layer-0 bucketed bias) omitted.
            x = x + attend(q_h, k_h, v_h, wo_ref[li], causal[None])

            # ------------- cross attention -------------
            n = _rmsnorm(x, ln2_ref[li]).astype(_BF16)
            ckv = jnp.dot(enc_bf, cwkv_ref[li], preferred_element_type=_F32)
            kvenc_ref[li] = ckv.astype(_BF16)                          # (S, 128)
            n_b = jnp.broadcast_to(n, (H, T, D))
            q_h = jnp.einsum("htd,hde->hte", n_b, cwq_ref[li],
                             preferred_element_type=_F32)
            ck_h = jnp.einsum("hsd,hde->hse", enc_b, cwk_ref[li],
                              preferred_element_type=_F32)
            cv_h = jnp.einsum("hsd,hde->hse", enc_b, cwv_ref[li],
                              preferred_element_type=_F32)
            x = x + attend(q_h, ck_h, cv_h, cwo_ref[li], None)         # no mask

            # ------------- feed-forward (ReLU), residual fused -------------
            n = _rmsnorm(x, ln3_ref[li]).astype(_BF16)
            hdn = jnp.maximum(
                jnp.dot(n, wi_ref[li], preferred_element_type=_F32), 0.0)
            x = x + jnp.dot(hdn.astype(_BF16), woff_ref[li],
                            preferred_element_type=_F32)

        # ------------- final RMSNorm + LM head (lane-dense 256-wide output) ----
        n = _rmsnorm(x, ln_f_ref[...]).astype(_BF16)
        logits_ref[...] = jnp.dot(n, lm_head_ref[...],
                                  preferred_element_type=_F32)

    return kernel


# ------------------------------ parameter init -------------------------------
def init_params(key):
    # Weights stored bf16 (MXU inputs); norm scales fp32.
    def nrm(k, shape, scale=0.05):
        return (scale * jax.random.normal(k, shape, jnp.float32)).astype(_BF16)

    keys = jax.random.split(key, 10)
    L, H, D, DK = NUM_LAYERS, NUM_HEADS, D_MODEL, D_KV

    wq = nrm(keys[2], (L, D, INNER))
    wkv = nrm(keys[3], (L, D, 2 * INNER))      # cols: [K heads | V heads]
    wo = nrm(keys[4], (L, INNER, D))
    cwq = nrm(keys[5], (L, D, INNER))
    cwkv = nrm(keys[6], (L, D, 2 * INNER))
    cwo = nrm(keys[7], (L, INNER, D))

    def per_head(w):                           # (L, D, H*DK) -> (L, H, D, DK)
        return jnp.transpose(w.reshape(L, D, H, DK), (0, 2, 1, 3))

    return {
        "embed": nrm(keys[0], (VOCAB, D)),
        "lm_head": nrm(keys[1], (D, VOCAB)),
        "ln_f": jnp.ones((1, D), jnp.float32),
        "ln1": jnp.ones((L, 1, D), jnp.float32),
        "ln2": jnp.ones((L, 1, D), jnp.float32),
        "ln3": jnp.ones((L, 1, D), jnp.float32),
        # Fused K|V projections -> lane-dense (seq, 128) cache slabs.
        "wkv": wkv,
        "cwkv": cwkv,
        # Heads-leading copies of the same weights for the batched attention.
        "wq_h": per_head(wq),
        "wk_h": per_head(wkv[:, :, :INNER]),
        "wv_h": per_head(wkv[:, :, INNER:]),
        "wo_h": wo.reshape(L, H, DK, D),
        "cwq_h": per_head(cwq),
        "cwk_h": per_head(cwkv[:, :, :INNER]),
        "cwv_h": per_head(cwkv[:, :, INNER:]),
        "cwo_h": cwo.reshape(L, H, DK, D),
        "wi": nrm(keys[8], (L, D, D_FF)),
        "wo_ff": nrm(keys[9], (L, D_FF, D)),
    }


# ------------------------------- forward pass --------------------------------
@jax.jit
def _decoder_apply(params, input_ids, encoder_hidden_states):
    B, T = input_ids.shape
    S = encoder_hidden_states.shape[1]
    L, H, DK = NUM_LAYERS, NUM_HEADS, D_KV

    ids = input_ids.astype(jnp.int32).reshape(B, T, 1)
    enc = encoder_hidden_states.astype(_BF16)            # (B, S, D) bf16 input DMA

    kernel = _make_decoder_kernel(T, S)

    def rep_spec(a):  # weight broadcast across the batch grid (fetched once)
        nd = a.ndim
        return pl.BlockSpec(a.shape, lambda b, _n=nd: (0,) * _n)

    weight_args = (params["embed"], params["lm_head"], params["ln_f"],
                   params["ln1"], params["wkv"], params["wq_h"], params["wk_h"],
                   params["wv_h"], params["wo_h"],
                   params["ln2"], params["cwkv"], params["cwq_h"],
                   params["cwk_h"], params["cwv_h"], params["cwo_h"],
                   params["ln3"], params["wi"], params["wo_ff"])

    in_specs = [pl.BlockSpec((None, T, 1), lambda b: (b, 0, 0)),
                pl.BlockSpec((None, S, D_MODEL), lambda b: (b, 0, 0))]
    in_specs += [rep_spec(w) for w in weight_args]

    out_shape = (
        jax.ShapeDtypeStruct((B, T, VOCAB), jnp.float32),
        jax.ShapeDtypeStruct((B, L, T, 2 * INNER), _BF16),   # dec [K|V] slabs
        jax.ShapeDtypeStruct((B, L, S, 2 * INNER), _BF16),   # enc [K|V] slabs
    )
    out_specs = (
        pl.BlockSpec((None, T, VOCAB), lambda b: (b, 0, 0)),
        pl.BlockSpec((None, L, T, 2 * INNER), lambda b: (b, 0, 0, 0)),
        pl.BlockSpec((None, L, S, 2 * INNER), lambda b: (b, 0, 0, 0)),
    )

    logits, kvdec, kvenc = pl.pallas_call(
        kernel,
        grid=(B,),
        out_shape=out_shape,
        in_specs=in_specs,
        out_specs=out_specs,
        compiler_params=pltpu.CompilerParams(
            dimension_semantics=("parallel",)),
    )(ids, enc, *weight_args)

    # Split the lane-dense slabs into (L, B, H, seq, d_kv) fp32 once, outside
    # the hot kernel (API dtype of the original module is fp32).
    kvdec = kvdec.astype(jnp.float32).reshape(B, L, T, 2, H, DK)
    kvenc = kvenc.astype(jnp.float32).reshape(B, L, S, 2, H, DK)
    k_dec = jnp.transpose(kvdec[:, :, :, 0], (1, 0, 3, 2, 4))
    v_dec = jnp.transpose(kvdec[:, :, :, 1], (1, 0, 3, 2, 4))
    k_enc = jnp.transpose(kvenc[:, :, :, 0], (1, 0, 3, 2, 4))
    v_enc = jnp.transpose(kvenc[:, :, :, 1], (1, 0, 3, 2, 4))
    return logits, k_dec, v_dec, k_enc, v_enc


def t5_decoder_forward(params, input_ids, encoder_hidden_states, enable_cache,
                       past_key_values=None):
    """Mirrors ExtT5Triton.forward(): returns (logits, past_key_values)."""
    # TODO(synk): cached incremental-decode path (enable_cache=1 with
    # past_key_values concatenation) is not implemented; full-sequence path only.
    del enable_cache, past_key_values
    logits, kdec, vdec, kenc, venc = _decoder_apply(
        params, input_ids, encoder_hidden_states)
    presents = [(kdec[li], vdec[li], kenc[li], venc[li])
                for li in range(NUM_LAYERS)]
    return logits, presents


class ExtT5TritonPallas:
    """JAX/Pallas stand-in for ExtT5Triton (Seq2SeqLMOutput-style dict)."""

    def __init__(self, params):
        self.params = params
        self.use_cache = True

    def forward(self, input_ids, encoder_hidden_states, enable_cache,
                past_key_values=None, **_):
        logits, presents = t5_decoder_forward(
            self.params, input_ids, encoder_hidden_states, enable_cache,
            past_key_values)
        return {"logits": logits, "past_key_values": presents}


# ----------------------------------- main ------------------------------------
if __name__ == "__main__":
    key = jax.random.PRNGKey(0)
    kp, ki, ke = jax.random.split(key, 3)

    params = init_params(kp)
    model = ExtT5TritonPallas(params)

    input_ids = jax.random.randint(ki, (BATCH, DEC_SEQ), 0, VOCAB, jnp.int32)
    encoder_hidden_states = jax.random.normal(
        ke, (BATCH, ENC_SEQ, D_MODEL), jnp.float32)
    enable_cache = jnp.array([0], jnp.int32)

    out = model.forward(input_ids=input_ids,
                        encoder_hidden_states=encoder_hidden_states,
                        enable_cache=enable_cache,
                        past_key_values=None)

    logits = jax.block_until_ready(out["logits"])
    for layer_kv in out["past_key_values"]:
        for t in layer_kv:
            jax.block_until_ready(t)

    assert logits.shape == (BATCH, DEC_SEQ, VOCAB)
    assert logits.dtype == jnp.float32
    assert len(out["past_key_values"]) == NUM_LAYERS
    k_dec, v_dec, k_enc, v_enc = out["past_key_values"][0]
    assert k_dec.shape == (BATCH, NUM_HEADS, DEC_SEQ, D_KV)
    assert v_dec.shape == (BATCH, NUM_HEADS, DEC_SEQ, D_KV)
    assert k_enc.shape == (BATCH, NUM_HEADS, ENC_SEQ, D_KV)
    assert v_enc.shape == (BATCH, NUM_HEADS, ENC_SEQ, D_KV)
    assert bool(jnp.isfinite(logits).all())

    print("KERNEL_OK")
</pallas_src>

<mosaic_0001>
module attributes {stable_mosaic.version = 11 : i64} {
  func.func @kernel(%arg0: i32, %arg1: memref<1x8x1xi32, #tpu.memory_space<vmem>>, %arg2: memref<1x8x32xbf16, #tpu.memory_space<vmem>>, %arg3: memref<256x32xbf16, #tpu.memory_space<vmem>>, %arg4: memref<32x256xbf16, #tpu.memory_space<vmem>>, %arg5: memref<1x32xf32, #tpu.memory_space<vmem>>, %arg6: memref<2x1x32xf32, #tpu.memory_space<vmem>>, %arg7: memref<2x32x128xbf16, #tpu.memory_space<vmem>>, %arg8: memref<2x4x32x16xbf16, #tpu.memory_space<vmem>>, %arg9: memref<2x4x32x16xbf16, #tpu.memory_space<vmem>>, %arg10: memref<2x4x32x16xbf16, #tpu.memory_space<vmem>>, %arg11: memref<2x4x16x32xbf16, #tpu.memory_space<vmem>>, %arg12: memref<2x1x32xf32, #tpu.memory_space<vmem>>, %arg13: memref<2x32x128xbf16, #tpu.memory_space<vmem>>, %arg14: memref<2x4x32x16xbf16, #tpu.memory_space<vmem>>, %arg15: memref<2x4x32x16xbf16, #tpu.memory_space<vmem>>, %arg16: memref<2x4x32x16xbf16, #tpu.memory_space<vmem>>, %arg17: memref<2x4x16x32xbf16, #tpu.memory_space<vmem>>, %arg18: memref<2x1x32xf32, #tpu.memory_space<vmem>>, %arg19: memref<2x32x64xbf16, #tpu.memory_space<vmem>>, %arg20: memref<2x64x32xbf16, #tpu.memory_space<vmem>>, %arg21: memref<1x8x256xf32, #tpu.memory_space<vmem>>, %arg22: memref<1x2x8x128xbf16, #tpu.memory_space<vmem>>, %arg23: memref<1x2x8x128xbf16, #tpu.memory_space<vmem>>) attributes {dimension_semantics = [#tpu.dimension_semantics<parallel>], iteration_bounds = array<i64: 2>, scalar_prefetch = 0 : i64, scratch_operands = 0 : i64, tpu.core_type = #tpu.core_type<tc>, window_params = [{transform_indices = @transform_0, window_bounds = array<i64: 1, 8, 1>}, {transform_indices = @transform_1, window_bounds = array<i64: 1, 8, 32>}, {pipeline_mode = #tpu.pipeline_mode<synchronous>, transform_indices = @transform_2, window_bounds = array<i64: 256, 32>}, {pipeline_mode = #tpu.pipeline_mode<synchronous>, transform_indices = @transform_3, window_bounds = array<i64: 32, 256>}, {pipeline_mode = #tpu.pipeline_mode<synchronous>, transform_indices = @transform_4, window_bounds = array<i64: 1, 32>}, {pipeline_mode = #tpu.pipeline_mode<synchronous>, transform_indices = @transform_5, window_bounds = array<i64: 2, 1, 32>}, {pipeline_mode = #tpu.pipeline_mode<synchronous>, transform_indices = @transform_6, window_bounds = array<i64: 2, 32, 128>}, {pipeline_mode = #tpu.pipeline_mode<synchronous>, transform_indices = @transform_7, window_bounds = array<i64: 2, 4, 32, 16>}, {pipeline_mode = #tpu.pipeline_mode<synchronous>, transform_indices = @transform_8, window_bounds = array<i64: 2, 4, 32, 16>}, {pipeline_mode = #tpu.pipeline_mode<synchronous>, transform_indices = @transform_9, window_bounds = array<i64: 2, 4, 32, 16>}, {pipeline_mode = #tpu.pipeline_mode<synchronous>, transform_indices = @transform_10, window_bounds = array<i64: 2, 4, 16, 32>}, {pipeline_mode = #tpu.pipeline_mode<synchronous>, transform_indices = @transform_11, window_bounds = array<i64: 2, 1, 32>}, {pipeline_mode = #tpu.pipeline_mode<synchronous>, transform_indices = @transform_12, window_bounds = array<i64: 2, 32, 128>}, {pipeline_mode = #tpu.pipeline_mode<synchronous>, transform_indices = @transform_13, window_bounds = array<i64: 2, 4, 32, 16>}, {pipeline_mode = #tpu.pipeline_mode<synchronous>, transform_indices = @transform_14, window_bounds = array<i64: 2, 4, 32, 16>}, {pipeline_mode = #tpu.pipeline_mode<synchronous>, transform_indices = @transform_15, window_bounds = array<i64: 2, 4, 32, 16>}, {pipeline_mode = #tpu.pipeline_mode<synchronous>, transform_indices = @transform_16, window_bounds = array<i64: 2, 4, 16, 32>}, {pipeline_mode = #tpu.pipeline_mode<synchronous>, transform_indices = @transform_17, window_bounds = array<i64: 2, 1, 32>}, {pipeline_mode = #tpu.pipeline_mode<synchronous>, transform_indices = @transform_18, window_bounds = array<i64: 2, 32, 64>}, {pipeline_mode = #tpu.pipeline_mode<synchronous>, transform_indices = @transform_19, window_bounds = array<i64: 2, 64, 32>}, {transform_indices = @transform_20, window_bounds = array<i64: 1, 8, 256>}, {transform_indices = @transform_21, window_bounds = array<i64: 1, 2, 8, 128>}, {transform_indices = @transform_22, window_bounds = array<i64: 1, 2, 8, 128>}]} {
    %c0 = arith.constant 0 : index
    %c0_0 = arith.constant 0 : index
    %c0_1 = arith.constant 0 : index
    %0 = vector.load %arg1[%c0, %c0_0, %c0_1] : memref<1x8x1xi32, #tpu.memory_space<vmem>>, vector<1x8x1xi32>
    %1 = vector.shape_cast %0 : vector<1x8x1xi32> to vector<8x1xi32>
    %2 = tpu.iota {dimensions = array<i32: 1>} : vector<8x256xi32>
    %3 = vector.broadcast %1 : vector<8x1xi32> to vector<8x256xi32>
    %4 = arith.cmpi eq, %2, %3 : vector<8x256xi32>
    %cst = arith.constant 1.000000e+00 : f32
    %cst_2 = arith.constant 0.000000e+00 : f32
    %5 = vector.broadcast %cst : f32 to vector<8x256xf32>
    %6 = vector.broadcast %cst_2 : f32 to vector<8x256xf32>
    %7 = arith.select %4, %5, %6 : vector<8x256xi1>, vector<8x256xf32>
    %8 = arith.truncf %7 : vector<8x256xf32> to vector<8x256xbf16>
    %c0_3 = arith.constant 0 : index
    %c0_4 = arith.constant 0 : index
    %9 = vector.load %arg3[%c0_3, %c0_4] : memref<256x32xbf16, #tpu.memory_space<vmem>>, vector<256x32xbf16>
    %cst_5 = arith.constant dense<0.000000e+00> : vector<8x32xf32>
    %10 = tpu.matmul %8, %9, %cst_5 {dimension_numbers = #tpu.dot_dimension_numbers<[1], [0], [0], [1], [0, 0, 1, 1], [], []>} : vector<8x256xbf16>, vector<256x32xbf16>, vector<8x32xf32> -> vector<8x32xf32>
    %c0_6 = arith.constant 0 : index
    %c0_7 = arith.constant 0 : index
    %c0_8 = arith.constant 0 : index
    %11 = vector.load %arg2[%c0_6, %c0_7, %c0_8] : memref<1x8x32xbf16, #tpu.memory_space<vmem>>, vector<1x8x32xbf16>
    %12 = vector.shape_cast %11 : vector<1x8x32xbf16> to vector<8x32xbf16>
    %13 = vector.shape_cast %12 : vector<8x32xbf16> to vector<1x8x32xbf16>
    %14 = vector.broadcast %13 : vector<1x8x32xbf16> to vector<4x8x32xbf16>
    %15 = tpu.iota {dimensions = array<i32: 0>} : vector<8x8xi32>
    %16 = tpu.iota {dimensions = array<i32: 1>} : vector<8x8xi32>
    %17 = arith.cmpi sge, %15, %16 : vector<8x8xi32>
    %cst_9 = arith.constant 0.000000e+00 : f32
    %cst_10 = arith.constant -1.000000e+09 : f32
    %18 = vector.broadcast %cst_9 : f32 to vector<8x8xf32>
    %19 = vector.broadcast %cst_10 : f32 to vector<8x8xf32>
    %20 = arith.select %17, %18, %19 : vector<8x8xi1>, vector<8x8xf32>
    %c0_11 = arith.constant 0 : index
    %c0_12 = arith.constant 0 : index
    %c0_13 = arith.constant 0 : index
    %21 = vector.load %arg6[%c0_11, %c0_12, %c0_13] : memref<2x1x32xf32, #tpu.memory_space<vmem>>, vector<1x1x32xf32>
    %22 = vector.shape_cast %21 : vector<1x1x32xf32> to vector<1x32xf32>
    %23 = arith.mulf %10, %10 : vector<8x32xf32>
    %cst_14 = arith.constant dense<0.000000e+00> : vector<8xf32>
    %24 = vector.multi_reduction <add>, %23, %cst_14 [1] : vector<8x32xf32> to vector<8xf32>
    %25 = vector.shape_cast %24 : vector<8xf32> to vector<8x1xf32>
    %cst_15 = arith.constant 3.200000e+01 : f32
    %26 = vector.broadcast %cst_15 : f32 to vector<8x1xf32>
    %27 = arith.divf %25, %26 : vector<8x1xf32>
    %cst_16 = arith.constant 9.99999997E-7 : f32
    %28 = vector.broadcast %cst_16 : f32 to vector<8x1xf32>
    %29 = arith.addf %27, %28 : vector<8x1xf32>
    %30 = math.rsqrt %29 : vector<8x1xf32>
    %31 = vector.broadcast %30 : vector<8x1xf32> to vector<8x32xf32>
    %32 = arith.mulf %10, %31 : vector<8x32xf32>
    %33 = vector.broadcast %22 : vector<1x32xf32> to vector<8x32xf32>
    %34 = arith.mulf %32, %33 : vector<8x32xf32>
    %35 = arith.truncf %34 : vector<8x32xf32> to vector<8x32xbf16>
    %c0_17 = arith.constant 0 : index
    %c0_18 = arith.constant 0 : index
    %c0_19 = arith.constant 0 : index
    %36 = vector.load %arg7[%c0_17, %c0_18, %c0_19] : memref<2x32x128xbf16, #tpu.memory_space<vmem>>, vector<1x32x128xbf16>
    %37 = vector.shape_cast %36 : vector<1x32x128xbf16> to vector<32x128xbf16>
    %cst_20 = arith.constant dense<0.000000e+00> : vector<8x128xf32>
    %38 = tpu.matmul %35, %37, %cst_20 {dimension_numbers = #tpu.dot_dimension_numbers<[1], [0], [0], [1], [0, 0, 1, 1], [], []>} : vector<8x32xbf16>, vector<32x128xbf16>, vector<8x128xf32> -> vector<8x128xf32>
    %39 = arith.truncf %38 : vector<8x128xf32> to vector<8x128xbf16>
    %c0_21 = arith.constant 0 : index
    %c0_22 = arith.constant 0 : index
    %c0_23 = arith.constant 0 : index
    %c0_24 = arith.constant 0 : index
    %40 = vector.load %arg22[%c0_21, %c0_22, %c0_23, %c0_24] : memref<1x2x8x128xbf16, #tpu.memory_space<vmem>>, vector<1x1x8x128xbf16>
    %41 = vector.shape_cast %40 : vector<1x1x8x128xbf16> to vector<8x128xbf16>
    %42 = vector.shape_cast %39 : vector<8x128xbf16> to vector<1x1x8x128xbf16>
    tpu.vector_store %arg22[%c0_21, %c0_22, %c0_23, %c0_24], %42 {strides = array<i32>} : memref<1x2x8x128xbf16, #tpu.memory_space<vmem>>, vector<1x1x8x128xbf16>,
    %43 = vector.shape_cast %35 : vector<8x32xbf16> to vector<1x8x32xbf16>
    %44 = vector.broadcast %43 : vector<1x8x32xbf16> to vector<4x8x32xbf16>
    %c0_25 = arith.constant 0 : index
    %c0_26 = arith.constant 0 : index
    %c0_27 = arith.constant 0 : index
    %c0_28 = arith.constant 0 : index
    %45 = vector.load %arg8[%c0_25, %c0_26, %c0_27, %c0_28] : memref<2x4x32x16xbf16, #tpu.memory_space<vmem>>, vector<1x4x32x16xbf16>
    %46 = vector.shape_cast %45 : vector<1x4x32x16xbf16> to vector<4x32x16xbf16>
    "tpu.trace_start"() <{level = 10 : i32, message = "htd,hde->hte"}> : () -> ()
    %cst_29 = arith.constant dense<0.000000e+00> : vector<4x8x16xf32>
    %47 = tpu.matmul %44, %46, %cst_29 {dimension_numbers = #tpu.dot_dimension_numbers<[2], [1], [1], [2], [0, 0, 0, 1, 1, 2], [0], [0]>} : vector<4x8x32xbf16>, vector<4x32x16xbf16>, vector<4x8x16xf32> -> vector<4x8x16xf32>
    "tpu.trace_stop"() : () -> ()
    %c0_30 = arith.constant 0 : index
    %c0_31 = arith.constant 0 : index
    %c0_32 = arith.constant 0 : index
    %c0_33 = arith.constant 0 : index
    %48 = vector.load %arg9[%c0_30, %c0_31, %c0_32, %c0_33] : memref<2x4x32x16xbf16, #tpu.memory_space<vmem>>, vector<1x4x32x16xbf16>
    %49 = vector.shape_cast %48 : vector<1x4x32x16xbf16> to vector<4x32x16xbf16>
    "tpu.trace_start"() <{level = 10 : i32, message = "htd,hde->hte"}> : () -> ()
    %cst_34 = arith.constant dense<0.000000e+00> : vector<4x8x16xf32>
    %50 = tpu.matmul %44, %49, %cst_34 {dimension_numbers = #tpu.dot_dimension_numbers<[2], [1], [1], [2], [0, 0, 0, 1, 1, 2], [0], [0]>} : vector<4x8x32xbf16>, vector<4x32x16xbf16>, vector<4x8x16xf32> -> vector<4x8x16xf32>
    "tpu.trace_stop"() : () -> ()
    %c0_35 = arith.constant 0 : index
    %c0_36 = arith.constant 0 : index
    %c0_37 = arith.constant 0 : index
    %c0_38 = arith.constant 0 : index
    %51 = vector.load %arg10[%c0_35, %c0_36, %c0_37, %c0_38] : memref<2x4x32x16xbf16, #tpu.memory_space<vmem>>, vector<1x4x32x16xbf16>
    %52 = vector.shape_cast %51 : vector<1x4x32x16xbf16> to vector<4x32x16xbf16>
    "tpu.trace_start"() <{level = 10 : i32, message = "htd,hde->hte"}> : () -> ()
    %cst_39 = arith.constant dense<0.000000e+00> : vector<4x8x16xf32>
    %53 = tpu.matmul %44, %52, %cst_39 {dimension_numbers = #tpu.dot_dimension_numbers<[2], [1], [1], [2], [0, 0, 0, 1, 1, 2], [0], [0]>} : vector<4x8x32xbf16>, vector<4x32x16xbf16>, vector<4x8x16xf32> -> vector<4x8x16xf32>
    "tpu.trace_stop"() : () -> ()
    %c0_40 = arith.constant 0 : index
    %c0_41 = arith.constant 0 : index
    %c0_42 = arith.constant 0 : index
    %c0_43 = arith.constant 0 : index
    %54 = vector.load %arg11[%c0_40, %c0_41, %c0_42, %c0_43] : memref<2x4x16x32xbf16, #tpu.memory_space<vmem>>, vector<1x4x16x32xbf16>
    %55 = vector.shape_cast %54 : vector<1x4x16x32xbf16> to vector<4x16x32xbf16>
    %56 = vector.shape_cast %20 : vector<8x8xf32> to vector<1x8x8xf32>
    %57 = arith.truncf %47 : vector<4x8x16xf32> to vector<4x8x16xbf16>
    %58 = arith.truncf %50 : vector<4x8x16xf32> to vector<4x8x16xbf16>
    "tpu.trace_start"() <{level = 10 : i32, message = "hqd,hkd->hqk"}> : () -> ()
    %cst_44 = arith.constant dense<0.000000e+00> : vector<4x8x8xf32>
    %59 = tpu.matmul %57, %58, %cst_44 {dimension_numbers = #tpu.dot_dimension_numbers<[2], [2], [1], [1], [0, 0, 0, 1, 1, 1], [0], [0]>} : vector<4x8x16xbf16>, vector<4x8x16xbf16>, vector<4x8x8xf32> -> vector<4x8x8xf32>
    "tpu.trace_stop"() : () -> ()
    %60 = vector.broadcast %56 : vector<1x8x8xf32> to vector<4x8x8xf32>
    %61 = arith.addf %59, %60 : vector<4x8x8xf32>
    %cst_45 = arith.constant dense<0xFF800000> : vector<4x8xf32>
    %62 = vector.multi_reduction <maximumf>, %61, %cst_45 [2] : vector<4x8x8xf32> to vector<4x8xf32>
    %63 = vector.shape_cast %62 : vector<4x8xf32> to vector<4x8x1xf32>
    %64 = vector.broadcast %63 : vector<4x8x1xf32> to vector<4x8x8xf32>
    %65 = arith.subf %61, %64 : vector<4x8x8xf32>
    %66 = math.exp %65 : vector<4x8x8xf32>
    %cst_46 = arith.constant dense<0.000000e+00> : vector<4x8xf32>
    %67 = vector.multi_reduction <add>, %66, %cst_46 [2] : vector<4x8x8xf32> to vector<4x8xf32>
    %68 = vector.shape_cast %67 : vector<4x8xf32> to vector<4x8x1xf32>
    %69 = tpu.reciprocal %68 {approx = true} : vector<4x8x1xf32> -> vector<4x8x1xf32>
    %70 = vector.broadcast %69 : vector<4x8x1xf32> to vector<4x8x8xf32>
    %71 = arith.mulf %66, %70 : vector<4x8x8xf32>
    %72 = arith.truncf %71 : vector<4x8x8xf32> to vector<4x8x8xbf16>
    %73 = arith.truncf %53 : vector<4x8x16xf32> to vector<4x8x16xbf16>
    "tpu.trace_start"() <{level = 10 : i32, message = "hqk,hkd->hqd"}> : () -> ()
    %cst_47 = arith.constant dense<0.000000e+00> : vector<4x8x16xf32>
    %74 = tpu.matmul %72, %73, %cst_47 {dimension_numbers = #tpu.dot_dimension_numbers<[2], [1], [1], [2], [0, 0, 0, 1, 1, 2], [0], [0]>} : vector<4x8x8xbf16>, vector<4x8x16xbf16>, vector<4x8x16xf32> -> vector<4x8x16xf32>
    "tpu.trace_stop"() : () -> ()
    %75 = arith.truncf %74 : vector<4x8x16xf32> to vector<4x8x16xbf16>
    "tpu.trace_start"() <{level = 10 : i32, message = "hqd,hdm->hqm"}> : () -> ()
    %cst_48 = arith.constant dense<0.000000e+00> : vector<4x8x32xf32>
    %76 = tpu.matmul %75, %55, %cst_48 {dimension_numbers = #tpu.dot_dimension_numbers<[2], [1], [1], [2], [0, 0, 0, 1, 1, 2], [0], [0]>} : vector<4x8x16xbf16>, vector<4x16x32xbf16>, vector<4x8x32xf32> -> vector<4x8x32xf32>
    "tpu.trace_stop"() : () -> ()
    %77 = vector.extract_strided_slice %76 {offsets = [0, 0, 0], sizes = [1, 8, 32], strides = [1, 1, 1]} : vector<4x8x32xf32> to vector<1x8x32xf32>
    %78 = vector.shape_cast %77 : vector<1x8x32xf32> to vector<8x32xf32>
    %79 = vector.extract_strided_slice %76 {offsets = [1, 0, 0], sizes = [1, 8, 32], strides = [1, 1, 1]} : vector<4x8x32xf32> to vector<1x8x32xf32>
    %80 = vector.shape_cast %79 : vector<1x8x32xf32> to vector<8x32xf32>
    %81 = arith.addf %78, %80 : vector<8x32xf32>
    %82 = vector.extract_strided_slice %76 {offsets = [2, 0, 0], sizes = [1, 8, 32], strides = [1, 1, 1]} : vector<4x8x32xf32> to vector<1x8x32xf32>
    %83 = vector.shape_cast %82 : vector<1x8x32xf32> to vector<8x32xf32>
    %84 = arith.addf %81, %83 : vector<8x32xf32>
    %85 = vector.extract_strided_slice %76 {offsets = [3, 0, 0], sizes = [1, 8, 32], strides = [1, 1, 1]} : vector<4x8x32xf32> to vector<1x8x32xf32>
    %86 = vector.shape_cast %85 : vector<1x8x32xf32> to vector<8x32xf32>
    %87 = arith.addf %84, %86 : vector<8x32xf32>
    %88 = arith.addf %10, %87 : vector<8x32xf32>
    %c0_49 = arith.constant 0 : index
    %c0_50 = arith.constant 0 : index
    %c0_51 = arith.constant 0 : index
    %89 = vector.load %arg12[%c0_49, %c0_50, %c0_51] : memref<2x1x32xf32, #tpu.memory_space<vmem>>, vector<1x1x32xf32>
    %90 = vector.shape_cast %89 : vector<1x1x32xf32> to vector<1x32xf32>
    %91 = arith.mulf %88, %88 : vector<8x32xf32>
    %cst_52 = arith.constant dense<0.000000e+00> : vector<8xf32>
    %92 = vector.multi_reduction <add>, %91, %cst_52 [1] : vector<8x32xf32> to vector<8xf32>
    %93 = vector.shape_cast %92 : vector<8xf32> to vector<8x1xf32>
    %cst_53 = arith.constant 3.200000e+01 : f32
    %94 = vector.broadcast %cst_53 : f32 to vector<8x1xf32>
    %95 = arith.divf %93, %94 : vector<8x1xf32>
    %cst_54 = arith.constant 9.99999997E-7 : f32
    %96 = vector.broadcast %cst_54 : f32 to vector<8x1xf32>
    %97 = arith.addf %95, %96 : vector<8x1xf32>
    %98 = math.rsqrt %97 : vector<8x1xf32>
    %99 = vector.broadcast %98 : vector<8x1xf32> to vector<8x32xf32>
    %100 = arith.mulf %88, %99 : vector<8x32xf32>
    %101 = vector.broadcast %90 : vector<1x32xf32> to vector<8x32xf32>
    %102 = arith.mulf %100, %101 : vector<8x32xf32>
    %103 = arith.truncf %102 : vector<8x32xf32> to vector<8x32xbf16>
    %c0_55 = arith.constant 0 : index
    %c0_56 = arith.constant 0 : index
    %c0_57 = arith.constant 0 : index
    %104 = vector.load %arg13[%c0_55, %c0_56, %c0_57] : memref<2x32x128xbf16, #tpu.memory_space<vmem>>, vector<1x32x128xbf16>
    %105 = vector.shape_cast %104 : vector<1x32x128xbf16> to vector<32x128xbf16>
    %cst_58 = arith.constant dense<0.000000e+00> : vector<8x128xf32>
    %106 = tpu.matmul %12, %105, %cst_58 {dimension_numbers = #tpu.dot_dimension_numbers<[1], [0], [0], [1], [0, 0, 1, 1], [], []>} : vector<8x32xbf16>, vector<32x128xbf16>, vector<8x128xf32> -> vector<8x128xf32>
    %107 = arith.truncf %106 : vector<8x128xf32> to vector<8x128xbf16>
    %c0_59 = arith.constant 0 : index
    %c0_60 = arith.constant 0 : index
    %c0_61 = arith.constant 0 : index
    %c0_62 = arith.constant 0 : index
    %108 = vector.load %arg23[%c0_59, %c0_60, %c0_61, %c0_62] : memref<1x2x8x128xbf16, #tpu.memory_space<vmem>>, vector<1x1x8x128xbf16>
    %109 = vector.shape_cast %108 : vector<1x1x8x128xbf16> to vector<8x128xbf16>
    %110 = vector.shape_cast %107 : vector<8x128xbf16> to vector<1x1x8x128xbf16>
    tpu.vector_store %arg23[%c0_59, %c0_60, %c0_61, %c0_62], %110 {strides = array<i32>} : memref<1x2x8x128xbf16, #tpu.memory_space<vmem>>, vector<1x1x8x128xbf16>,
    %111 = vector.shape_cast %103 : vector<8x32xbf16> to vector<1x8x32xbf16>
    %112 = vector.broadcast %111 : vector<1x8x32xbf16> to vector<4x8x32xbf16>
    %c0_63 = arith.constant 0 : index
    %c0_64 = arith.constant 0 : index
    %c0_65 = arith.constant 0 : index
    %c0_66 = arith.constant 0 : index
    %113 = vector.load %arg14[%c0_63, %c0_64, %c0_65, %c0_66] : memref<2x4x32x16xbf16, #tpu.memory_space<vmem>>, vector<1x4x32x16xbf16>
    %114 = vector.shape_cast %113 : vector<1x4x32x16xbf16> to vector<4x32x16xbf16>
    "tpu.trace_start"() <{level = 10 : i32, message = "htd,hde->hte"}> : () -> ()
    %cst_67 = arith.constant dense<0.000000e+00> : vector<4x8x16xf32>
    %115 = tpu.matmul %112, %114, %cst_67 {dimension_numbers = #tpu.dot_dimension_numbers<[2], [1], [1], [2], [0, 0, 0, 1, 1, 2], [0], [0]>} : vector<4x8x32xbf16>, vector<4x32x16xbf16>, vector<4x8x16xf32> -> vector<4x8x16xf32>
    "tpu.trace_stop"() : () -> ()
    %c0_68 = arith.constant 0 : index
    %c0_69 = arith.constant 0 : index
    %c0_70 = arith.constant 0 : index
    %c0_71 = arith.constant 0 : index
    %116 = vector.load %arg15[%c0_68, %c0_69, %c0_70, %c0_71] : memref<2x4x32x16xbf16, #tpu.memory_space<vmem>>, vector<1x4x32x16xbf16>
    %117 = vector.shape_cast %116 : vector<1x4x32x16xbf16> to vector<4x32x16xbf16>
    "tpu.trace_start"() <{level = 10 : i32, message = "hsd,hde->hse"}> : () -> ()
    %cst_72 = arith.constant dense<0.000000e+00> : vector<4x8x16xf32>
    %118 = tpu.matmul %14, %117, %cst_72 {dimension_numbers = #tpu.dot_dimension_numbers<[2], [1], [1], [2], [0, 0, 0, 1, 1, 2], [0], [0]>} : vector<4x8x32xbf16>, vector<4x32x16xbf16>, vector<4x8x16xf32> -> vector<4x8x16xf32>
    "tpu.trace_stop"() : () -> ()
    %c0_73 = arith.constant 0 : index
    %c0_74 = arith.constant 0 : index
    %c0_75 = arith.constant 0 : index
    %c0_76 = arith.constant 0 : index
    %119 = vector.load %arg16[%c0_73, %c0_74, %c0_75, %c0_76] : memref<2x4x32x16xbf16, #tpu.memory_space<vmem>>, vector<1x4x32x16xbf16>
    %120 = vector.shape_cast %119 : vector<1x4x32x16xbf16> to vector<4x32x16xbf16>
    "tpu.trace_start"() <{level = 10 : i32, message = "hsd,hde->hse"}> : () -> ()
    %cst_77 = arith.constant dense<0.000000e+00> : vector<4x8x16xf32>
    %121 = tpu.matmul %14, %120, %cst_77 {dimension_numbers = #tpu.dot_dimension_numbers<[2], [1], [1], [2], [0, 0, 0, 1, 1, 2], [0], [0]>} : vector<4x8x32xbf16>, vector<4x32x16xbf16>, vector<4x8x16xf32> -> vector<4x8x16xf32>
    "tpu.trace_stop"() : () -> ()
    %c0_78 = arith.constant 0 : index
    %c0_79 = arith.constant 0 : index
    %c0_80 = arith.constant 0 : index
    %c0_81 = arith.constant 0 : index
    %122 = vector.load %arg17[%c0_78, %c0_79, %c0_80, %c0_81] : memref<2x4x16x32xbf16, #tpu.memory_space<vmem>>, vector<1x4x16x32xbf16>
    %123 = vector.shape_cast %122 : vector<1x4x16x32xbf16> to vector<4x16x32xbf16>
    %124 = arith.truncf %115 : vector<4x8x16xf32> to vector<4x8x16xbf16>
    %125 = arith.truncf %118 : vector<4x8x16xf32> to vector<4x8x16xbf16>
    "tpu.trace_start"() <{level = 10 : i32, message = "hqd,hkd->hqk"}> : () -> ()
    %cst_82 = arith.constant dense<0.000000e+00> : vector<4x8x8xf32>
    %126 = tpu.matmul %124, %125, %cst_82 {dimension_numbers = #tpu.dot_dimension_numbers<[2], [2], [1], [1], [0, 0, 0, 1, 1, 1], [0], [0]>} : vector<4x8x16xbf16>, vector<4x8x16xbf16>, vector<4x8x8xf32> -> vector<4x8x8xf32>
    "tpu.trace_stop"() : () -> ()
    %cst_83 = arith.constant dense<0xFF800000> : vector<4x8xf32>
    %127 = vector.multi_reduction <maximumf>, %126, %cst_83 [2] : vector<4x8x8xf32> to vector<4x8xf32>
    %128 = vector.shape_cast %127 : vector<4x8xf32> to vector<4x8x1xf32>
    %129 = vector.broadcast %128 : vector<4x8x1xf32> to vector<4x8x8xf32>
    %130 = arith.subf %126, %129 : vector<4x8x8xf32>
    %131 = math.exp %130 : vector<4x8x8xf32>
    %cst_84 = arith.constant dense<0.000000e+00> : vector<4x8xf32>
    %132 = vector.multi_reduction <add>, %131, %cst_84 [2] : vector<4x8x8xf32> to vector<4x8xf32>
    %133 = vector.shape_cast %132 : vector<4x8xf32> to vector<4x8x1xf32>
    %134 = tpu.reciprocal %133 {approx = true} : vector<4x8x1xf32> -> vector<4x8x1xf32>
    %135 = vector.broadcast %134 : vector<4x8x1xf32> to vector<4x8x8xf32>
    %136 = arith.mulf %131, %135 : vector<4x8x8xf32>
    %137 = arith.truncf %136 : vector<4x8x8xf32> to vector<4x8x8xbf16>
    %138 = arith.truncf %121 : vector<4x8x16xf32> to vector<4x8x16xbf16>
    "tpu.trace_start"() <{level = 10 : i32, message = "hqk,hkd->hqd"}> : () -> ()
    %cst_85 = arith.constant dense<0.000000e+00> : vector<4x8x16xf32>
    %139 = tpu.matmul %137, %138, %cst_85 {dimension_numbers = #tpu.dot_dimension_numbers<[2], [1], [1], [2], [0, 0, 0, 1, 1, 2], [0], [0]>} : vector<4x8x8xbf16>, vector<4x8x16xbf16>, vector<4x8x16xf32> -> vector<4x8x16xf32>
    "tpu.trace_stop"() : () -> ()
    %140 = arith.truncf %139 : vector<4x8x16xf32> to vector<4x8x16xbf16>
    "tpu.trace_start"() <{level = 10 : i32, message = "hqd,hdm->hqm"}> : () -> ()
    %cst_86 = arith.constant dense<0.000000e+00> : vector<4x8x32xf32>
    %141 = tpu.matmul %140, %123, %cst_86 {dimension_numbers = #tpu.dot_dimension_numbers<[2], [1], [1], [2], [0, 0, 0, 1, 1, 2], [0], [0]>} : vector<4x8x16xbf16>, vector<4x16x32xbf16>, vector<4x8x32xf32> -> vector<4x8x32xf32>
    "tpu.trace_stop"() : () -> ()
    %142 = vector.extract_strided_slice %141 {offsets = [0, 0, 0], sizes = [1, 8, 32], strides = [1, 1, 1]} : vector<4x8x32xf32> to vector<1x8x32xf32>
    %143 = vector.shape_cast %142 : vector<1x8x32xf32> to vector<8x32xf32>
    %144 = vector.extract_strided_slice %141 {offsets = [1, 0, 0], sizes = [1, 8, 32], strides = [1, 1, 1]} : vector<4x8x32xf32> to vector<1x8x32xf32>
    %145 = vector.shape_cast %144 : vector<1x8x32xf32> to vector<8x32xf32>
    %146 = arith.addf %143, %145 : vector<8x32xf32>
    %147 = vector.extract_strided_slice %141 {offsets = [2, 0, 0], sizes = [1, 8, 32], strides = [1, 1, 1]} : vector<4x8x32xf32> to vector<1x8x32xf32>
    %148 = vector.shape_cast %147 : vector<1x8x32xf32> to vector<8x32xf32>
    %149 = arith.addf %146, %148 : vector<8x32xf32>
    %150 = vector.extract_strided_slice %141 {offsets = [3, 0, 0], sizes = [1, 8, 32], strides = [1, 1, 1]} : vector<4x8x32xf32> to vector<1x8x32xf32>
    %151 = vector.shape_cast %150 : vector<1x8x32xf32> to vector<8x32xf32>
    %152 = arith.addf %149, %151 : vector<8x32xf32>
    %153 = arith.addf %88, %152 : vector<8x32xf32>
    %c0_87 = arith.constant 0 : index
    %c0_88 = arith.constant 0 : index
    %c0_89 = arith.constant 0 : index
    %154 = vector.load %arg18[%c0_87, %c0_88, %c0_89] : memref<2x1x32xf32, #tpu.memory_space<vmem>>, vector<1x1x32xf32>
    %155 = vector.shape_cast %154 : vector<1x1x32xf32> to vector<1x32xf32>
    %156 = arith.mulf %153, %153 : vector<8x32xf32>
    %cst_90 = arith.constant dense<0.000000e+00> : vector<8xf32>
    %157 = vector.multi_reduction <add>, %156, %cst_90 [1] : vector<8x32xf32> to vector<8xf32>
    %158 = vector.shape_cast %157 : vector<8xf32> to vector<8x1xf32>
    %cst_91 = arith.constant 3.200000e+01 : f32
    %159 = vector.broadcast %cst_91 : f32 to vector<8x1xf32>
    %160 = arith.divf %158, %159 : vector<8x1xf32>
    %cst_92 = arith.constant 9.99999997E-7 : f32
    %161 = vector.broadcast %cst_92 : f32 to vector<8x1xf32>
    %162 = arith.addf %160, %161 : vector<8x1xf32>
    %163 = math.rsqrt %162 : vector<8x1xf32>
    %164 = vector.broadcast %163 : vector<8x1xf32> to vector<8x32xf32>
    %165 = arith.mulf %153, %164 : vector<8x32xf32>
    %166 = vector.broadcast %155 : vector<1x32xf32> to vector<8x32xf32>
    %167 = arith.mulf %165, %166 : vector<8x32xf32>
    %168 = arith.truncf %167 : vector<8x32xf32> to vector<8x32xbf16>
    %c0_93 = arith.constant 0 : index
    %c0_94 = arith.constant 0 : index
    %c0_95 = arith.constant 0 : index
    %169 = vector.load %arg19[%c0_93, %c0_94, %c0_95] : memref<2x32x64xbf16, #tpu.memory_space<vmem>>, vector<1x32x64xbf16>
    %170 = vector.shape_cast %169 : vector<1x32x64xbf16> to vector<32x64xbf16>
    %cst_96 = arith.constant dense<0.000000e+00> : vector<8x64xf32>
    %171 = tpu.matmul %168, %170, %cst_96 {dimension_numbers = #tpu.dot_dimension_numbers<[1], [0], [0], [1], [0, 0, 1, 1], [], []>} : vector<8x32xbf16>, vector<32x64xbf16>, vector<8x64xf32> -> vector<8x64xf32>
    %cst_97 = arith.constant 0.000000e+00 : f32
    %172 = vector.broadcast %cst_97 : f32 to vector<8x64xf32>
    %173 = arith.maximumf %171, %172 : vector<8x64xf32>
    %174 = arith.truncf %173 : vector<8x64xf32> to vector<8x64xbf16>
    %c0_98 = arith.constant 0 : index
    %c0_99 = arith.constant 0 : index
    %c0_100 = arith.constant 0 : index
    %175 = vector.load %arg20[%c0_98, %c0_99, %c0_100] : memref<2x64x32xbf16, #tpu.memory_space<vmem>>, vector<1x64x32xbf16>
    %176 = vector.shape_cast %175 : vector<1x64x32xbf16> to vector<64x32xbf16>
    %cst_101 = arith.constant dense<0.000000e+00> : vector<8x32xf32>
    %177 = tpu.matmul %174, %176, %cst_101 {dimension_numbers = #tpu.dot_dimension_numbers<[1], [0], [0], [1], [0, 0, 1, 1], [], []>} : vector<8x64xbf16>, vector<64x32xbf16>, vector<8x32xf32> -> vector<8x32xf32>
    %178 = arith.addf %153, %177 : vector<8x32xf32>
    %c1 = arith.constant 1 : index
    %c0_102 = arith.constant 0 : index
    %c0_103 = arith.constant 0 : index
    %179 = vector.load %arg6[%c1, %c0_102, %c0_103] : memref<2x1x32xf32, #tpu.memory_space<vmem>>, vector<1x1x32xf32>
    %180 = vector.shape_cast %179 : vector<1x1x32xf32> to vector<1x32xf32>
    %181 = arith.mulf %178, %178 : vector<8x32xf32>
    %cst_104 = arith.constant dense<0.000000e+00> : vector<8xf32>
    %182 = vector.multi_reduction <add>, %181, %cst_104 [1] : vector<8x32xf32> to vector<8xf32>
    %183 = vector.shape_cast %182 : vector<8xf32> to vector<8x1xf32>
    %cst_105 = arith.constant 3.200000e+01 : f32
    %184 = vector.broadcast %cst_105 : f32 to vector<8x1xf32>
    %185 = arith.divf %183, %184 : vector<8x1xf32>
    %cst_106 = arith.constant 9.99999997E-7 : f32
    %186 = vector.broadcast %cst_106 : f32 to vector<8x1xf32>
    %187 = arith.addf %185, %186 : vector<8x1xf32>
    %188 = math.rsqrt %187 : vector<8x1xf32>
    %189 = vector.broadcast %188 : vector<8x1xf32> to vector<8x32xf32>
    %190 = arith.mulf %178, %189 : vector<8x32xf32>
    %191 = vector.broadcast %180 : vector<1x32xf32> to vector<8x32xf32>
    %192 = arith.mulf %190, %191 : vector<8x32xf32>
    %193 = arith.truncf %192 : vector<8x32xf32> to vector<8x32xbf16>
    %c1_107 = arith.constant 1 : index
    %c0_108 = arith.constant 0 : index
    %c0_109 = arith.constant 0 : index
    %194 = vector.load %arg7[%c1_107, %c0_108, %c0_109] : memref<2x32x128xbf16, #tpu.memory_space<vmem>>, vector<1x32x128xbf16>
    %195 = vector.shape_cast %194 : vector<1x32x128xbf16> to vector<32x128xbf16>
    %cst_110 = arith.constant dense<0.000000e+00> : vector<8x128xf32>
    %196 = tpu.matmul %193, %195, %cst_110 {dimension_numbers = #tpu.dot_dimension_numbers<[1], [0], [0], [1], [0, 0, 1, 1], [], []>} : vector<8x32xbf16>, vector<32x128xbf16>, vector<8x128xf32> -> vector<8x128xf32>
    %197 = arith.truncf %196 : vector<8x128xf32> to vector<8x128xbf16>
    %c0_111 = arith.constant 0 : index
    %c1_112 = arith.constant 1 : index
    %c0_113 = arith.constant 0 : index
    %c0_114 = arith.constant 0 : index
    %198 = vector.load %arg22[%c0_111, %c1_112, %c0_113, %c0_114] : memref<1x2x8x128xbf16, #tpu.memory_space<vmem>>, vector<1x1x8x128xbf16>
    %199 = vector.shape_cast %198 : vector<1x1x8x128xbf16> to vector<8x128xbf16>
    %200 = vector.shape_cast %197 : vector<8x128xbf16> to vector<1x1x8x128xbf16>
    tpu.vector_store %arg22[%c0_111, %c1_112, %c0_113, %c0_114], %200 {strides = array<i32>} : memref<1x2x8x128xbf16, #tpu.memory_space<vmem>>, vector<1x1x8x128xbf16>,
    %201 = vector.shape_cast %193 : vector<8x32xbf16> to vector<1x8x32xbf16>
    %202 = vector.broadcast %201 : vector<1x8x32xbf16> to vector<4x8x32xbf16>
    %c1_115 = arith.constant 1 : index
    %c0_116 = arith.constant 0 : index
    %c0_117 = arith.constant 0 : index
    %c0_118 = arith.constant 0 : index
    %203 = vector.load %arg8[%c1_115, %c0_116, %c0_117, %c0_118] : memref<2x4x32x16xbf16, #tpu.memory_space<vmem>>, vector<1x4x32x16xbf16>
    %204 = vector.shape_cast %203 : vector<1x4x32x16xbf16> to vector<4x32x16xbf16>
    "tpu.trace_start"() <{level = 10 : i32, message = "htd,hde->hte"}> : () -> ()
    %cst_119 = arith.constant dense<0.000000e+00> : vector<4x8x16xf32>
    %205 = tpu.matmul %202, %204, %cst_119 {dimension_numbers = #tpu.dot_dimension_numbers<[2], [1], [1], [2], [0, 0, 0, 1, 1, 2], [0], [0]>} : vector<4x8x32xbf16>, vector<4x32x16xbf16>, vector<4x8x16xf32> -> vector<4x8x16xf32>
    "tpu.trace_stop"() : () -> ()
    %c1_120 = arith.constant 1 : index
    %c0_121 = arith.constant 0 : index
    %c0_122 = arith.constant 0 : index
    %c0_123 = arith.constant 0 : index
    %206 = vector.load %arg9[%c1_120, %c0_121, %c0_122, %c0_123] : memref<2x4x32x16xbf16, #tpu.memory_space<vmem>>, vector<1x4x32x16xbf16>
    %207 = vector.shape_cast %206 : vector<1x4x32x16xbf16> to vector<4x32x16xbf16>
    "tpu.trace_start"() <{level = 10 : i32, message = "htd,hde->hte"}> : () -> ()
    %cst_124 = arith.constant dense<0.000000e+00> : vector<4x8x16xf32>
    %208 = tpu.matmul %202, %207, %cst_124 {dimension_numbers = #tpu.dot_dimension_numbers<[2], [1], [1], [2], [0, 0, 0, 1, 1, 2], [0], [0]>} : vector<4x8x32xbf16>, vector<4x32x16xbf16>, vector<4x8x16xf32> -> vector<4x8x16xf32>
    "tpu.trace_stop"() : () -> ()
    %c1_125 = arith.constant 1 : index
    %c0_126 = arith.constant 0 : index
    %c0_127 = arith.constant 0 : index
    %c0_128 = arith.constant 0 : index
    %209 = vector.load %arg10[%c1_125, %c0_126, %c0_127, %c0_128] : memref<2x4x32x16xbf16, #tpu.memory_space<vmem>>, vector<1x4x32x16xbf16>
    %210 = vector.shape_cast %209 : vector<1x4x32x16xbf16> to vector<4x32x16xbf16>
    "tpu.trace_start"() <{level = 10 : i32, message = "htd,hde->hte"}> : () -> ()
    %cst_129 = arith.constant dense<0.000000e+00> : vector<4x8x16xf32>
    %211 = tpu.matmul %202, %210, %cst_129 {dimension_numbers = #tpu.dot_dimension_numbers<[2], [1], [1], [2], [0, 0, 0, 1, 1, 2], [0], [0]>} : vector<4x8x32xbf16>, vector<4x32x16xbf16>, vector<4x8x16xf32> -> vector<4x8x16xf32>
    "tpu.trace_stop"() : () -> ()
    %c1_130 = arith.constant 1 : index
    %c0_131 = arith.constant 0 : index
    %c0_132 = arith.constant 0 : index
    %c0_133 = arith.constant 0 : index
    %212 = vector.load %arg11[%c1_130, %c0_131, %c0_132, %c0_133] : memref<2x4x16x32xbf16, #tpu.memory_space<vmem>>, vector<1x4x16x32xbf16>
    %213 = vector.shape_cast %212 : vector<1x4x16x32xbf16> to vector<4x16x32xbf16>
    %214 = vector.shape_cast %20 : vector<8x8xf32> to vector<1x8x8xf32>
    %215 = arith.truncf %205 : vector<4x8x16xf32> to vector<4x8x16xbf16>
    %216 = arith.truncf %208 : vector<4x8x16xf32> to vector<4x8x16xbf16>
    "tpu.trace_start"() <{level = 10 : i32, message = "hqd,hkd->hqk"}> : () -> ()
    %cst_134 = arith.constant dense<0.000000e+00> : vector<4x8x8xf32>
    %217 = tpu.matmul %215, %216, %cst_134 {dimension_numbers = #tpu.dot_dimension_numbers<[2], [2], [1], [1], [0, 0, 0, 1, 1, 1], [0], [0]>} : vector<4x8x16xbf16>, vector<4x8x16xbf16>, vector<4x8x8xf32> -> vector<4x8x8xf32>
    "tpu.trace_stop"() : () -> ()
    %218 = vector.broadcast %214 : vector<1x8x8xf32> to vector<4x8x8xf32>
    %219 = arith.addf %217, %218 : vector<4x8x8xf32>
    %cst_135 = arith.constant dense<0xFF800000> : vector<4x8xf32>
    %220 = vector.multi_reduction <maximumf>, %219, %cst_135 [2] : vector<4x8x8xf32> to vector<4x8xf32>
    %221 = vector.shape_cast %220 : vector<4x8xf32> to vector<4x8x1xf32>
    %222 = vector.broadcast %221 : vector<4x8x1xf32> to vector<4x8x8xf32>
    %223 = arith.subf %219, %222 : vector<4x8x8xf32>
    %224 = math.exp %223 : vector<4x8x8xf32>
    %cst_136 = arith.constant dense<0.000000e+00> : vector<4x8xf32>
    %225 = vector.multi_reduction <add>, %224, %cst_136 [2] : vector<4x8x8xf32> to vector<4x8xf32>
    %226 = vector.shape_cast %225 : vector<4x8xf32> to vector<4x8x1xf32>
    %227 = tpu.reciprocal %226 {approx = true} : vector<4x8x1xf32> -> vector<4x8x1xf32>
    %228 = vector.broadcast %227 : vector<4x8x1xf32> to vector<4x8x8xf32>
    %229 = arith.mulf %224, %228 : vector<4x8x8xf32>
    %230 = arith.truncf %229 : vector<4x8x8xf32> to vector<4x8x8xbf16>
    %231 = arith.truncf %211 : vector<4x8x16xf32> to vector<4x8x16xbf16>
    "tpu.trace_start"() <{level = 10 : i32, message = "hqk,hkd->hqd"}> : () -> ()
    %cst_137 = arith.constant dense<0.000000e+00> : vector<4x8x16xf32>
    %232 = tpu.matmul %230, %231, %cst_137 {dimension_numbers = #tpu.dot_dimension_numbers<[2], [1], [1], [2], [0, 0, 0, 1, 1, 2], [0], [0]>} : vector<4x8x8xbf16>, vector<4x8x16xbf16>, vector<4x8x16xf32> -> vector<4x8x16xf32>
    "tpu.trace_stop"() : () -> ()
    %233 = arith.truncf %232 : vector<4x8x16xf32> to vector<4x8x16xbf16>
    "tpu.trace_start"() <{level = 10 : i32, message = "hqd,hdm->hqm"}> : () -> ()
    %cst_138 = arith.constant dense<0.000000e+00> : vector<4x8x32xf32>
    %234 = tpu.matmul %233, %213, %cst_138 {dimension_numbers = #tpu.dot_dimension_numbers<[2], [1], [1], [2], [0, 0, 0, 1, 1, 2], [0], [0]>} : vector<4x8x16xbf16>, vector<4x16x32xbf16>, vector<4x8x32xf32> -> vector<4x8x32xf32>
    "tpu.trace_stop"() : () -> ()
    %235 = vector.extract_strided_slice %234 {offsets = [0, 0, 0], sizes = [1, 8, 32], strides = [1, 1, 1]} : vector<4x8x32xf32> to vector<1x8x32xf32>
    %236 = vector.shape_cast %235 : vector<1x8x32xf32> to vector<8x32xf32>
    %237 = vector.extract_strided_slice %234 {offsets = [1, 0, 0], sizes = [1, 8, 32], strides = [1, 1, 1]} : vector<4x8x32xf32> to vector<1x8x32xf32>
    %238 = vector.shape_cast %237 : vector<1x8x32xf32> to vector<8x32xf32>
    %239 = arith.addf %236, %238 : vector<8x32xf32>
    %240 = vector.extract_strided_slice %234 {offsets = [2, 0, 0], sizes = [1, 8, 32], strides = [1, 1, 1]} : vector<4x8x32xf32> to vector<1x8x32xf32>
    %241 = vector.shape_cast %240 : vector<1x8x32xf32> to vector<8x32xf32>
    %242 = arith.addf %239, %241 : vector<8x32xf32>
    %243 = vector.extract_strided_slice %234 {offsets = [3, 0, 0], sizes = [1, 8, 32], strides = [1, 1, 1]} : vector<4x8x32xf32> to vector<1x8x32xf32>
    %244 = vector.shape_cast %243 : vector<1x8x32xf32> to vector<8x32xf32>
    %245 = arith.addf %242, %244 : vector<8x32xf32>
    %246 = arith.addf %178, %245 : vector<8x32xf32>
    %c1_139 = arith.constant 1 : index
    %c0_140 = arith.constant 0 : index
    %c0_141 = arith.constant 0 : index
    %247 = vector.load %arg12[%c1_139, %c0_140, %c0_141] : memref<2x1x32xf32, #tpu.memory_space<vmem>>, vector<1x1x32xf32>
    %248 = vector.shape_cast %247 : vector<1x1x32xf32> to vector<1x32xf32>
    %249 = arith.mulf %246, %246 : vector<8x32xf32>
    %cst_142 = arith.constant dense<0.000000e+00> : vector<8xf32>
    %250 = vector.multi_reduction <add>, %249, %cst_142 [1] : vector<8x32xf32> to vector<8xf32>
    %251 = vector.shape_cast %250 : vector<8xf32> to vector<8x1xf32>
    %cst_143 = arith.constant 3.200000e+01 : f32
    %252 = vector.broadcast %cst_143 : f32 to vector<8x1xf32>
    %253 = arith.divf %251, %252 : vector<8x1xf32>
    %cst_144 = arith.constant 9.99999997E-7 : f32
    %254 = vector.broadcast %cst_144 : f32 to vector<8x1xf32>
    %255 = arith.addf %253, %254 : vector<8x1xf32>
    %256 = math.rsqrt %255 : vector<8x1xf32>
    %257 = vector.broadcast %256 : vector<8x1xf32> to vector<8x32xf32>
    %258 = arith.mulf %246, %257 : vector<8x32xf32>
    %259 = vector.broadcast %248 : vector<1x32xf32> to vector<8x32xf32>
    %260 = arith.mulf %258, %259 : vector<8x32xf32>
    %261 = arith.truncf %260 : vector<8x32xf32> to vector<8x32xbf16>
    %c1_145 = arith.constant 1 : index
    %c0_146 = arith.constant 0 : index
    %c0_147 = arith.constant 0 : index
    %262 = vector.load %arg13[%c1_145, %c0_146, %c0_147] : memref<2x32x128xbf16, #tpu.memory_space<vmem>>, vector<1x32x128xbf16>
    %263 = vector.shape_cast %262 : vector<1x32x128xbf16> to vector<32x128xbf16>
    %cst_148 = arith.constant dense<0.000000e+00> : vector<8x128xf32>
    %264 = tpu.matmul %12, %263, %cst_148 {dimension_numbers = #tpu.dot_dimension_numbers<[1], [0], [0], [1], [0, 0, 1, 1], [], []>} : vector<8x32xbf16>, vector<32x128xbf16>, vector<8x128xf32> -> vector<8x128xf32>
    %265 = arith.truncf %264 : vector<8x128xf32> to vector<8x128xbf16>
    %c0_149 = arith.constant 0 : index
    %c1_150 = arith.constant 1 : index
    %c0_151 = arith.constant 0 : index
    %c0_152 = arith.constant 0 : index
    %266 = vector.load %arg23[%c0_149, %c1_150, %c0_151, %c0_152] : memref<1x2x8x128xbf16, #tpu.memory_space<vmem>>, vector<1x1x8x128xbf16>
    %267 = vector.shape_cast %266 : vector<1x1x8x128xbf16> to vector<8x128xbf16>
    %268 = vector.shape_cast %265 : vector<8x128xbf16> to vector<1x1x8x128xbf16>
    tpu.vector_store %arg23[%c0_149, %c1_150, %c0_151, %c0_152], %268 {strides = array<i32>} : memref<1x2x8x128xbf16, #tpu.memory_space<vmem>>, vector<1x1x8x128xbf16>,
    %269 = vector.shape_cast %261 : vector<8x32xbf16> to vector<1x8x32xbf16>
    %270 = vector.broadcast %269 : vector<1x8x32xbf16> to vector<4x8x32xbf16>
    %c1_153 = arith.constant 1 : index
    %c0_154 = arith.constant 0 : index
    %c0_155 = arith.constant 0 : index
    %c0_156 = arith.constant 0 : index
    %271 = vector.load %arg14[%c1_153, %c0_154, %c0_155, %c0_156] : memref<2x4x32x16xbf16, #tpu.memory_space<vmem>>, vector<1x4x32x16xbf16>
    %272 = vector.shape_cast %271 : vector<1x4x32x16xbf16> to vector<4x32x16xbf16>
    "tpu.trace_start"() <{level = 10 : i32, message = "htd,hde->hte"}> : () -> ()
    %cst_157 = arith.constant dense<0.000000e+00> : vector<4x8x16xf32>
    %273 = tpu.matmul %270, %272, %cst_157 {dimension_numbers = #tpu.dot_dimension_numbers<[2], [1], [1], [2], [0, 0, 0, 1, 1, 2], [0], [0]>} : vector<4x8x32xbf16>, vector<4x32x16xbf16>, vector<4x8x16xf32> -> vector<4x8x16xf32>
    "tpu.trace_stop"() : () -> ()
    %c1_158 = arith.constant 1 : index
    %c0_159 = arith.constant 0 : index
    %c0_160 = arith.constant 0 : index
    %c0_161 = arith.constant 0 : index
    %274 = vector.load %arg15[%c1_158, %c0_159, %c0_160, %c0_161] : memref<2x4x32x16xbf16, #tpu.memory_space<vmem>>, vector<1x4x32x16xbf16>
    %275 = vector.shape_cast %274 : vector<1x4x32x16xbf16> to vector<4x32x16xbf16>
    "tpu.trace_start"() <{level = 10 : i32, message = "hsd,hde->hse"}> : () -> ()
    %cst_162 = arith.constant dense<0.000000e+00> : vector<4x8x16xf32>
    %276 = tpu.matmul %14, %275, %cst_162 {dimension_numbers = #tpu.dot_dimension_numbers<[2], [1], [1], [2], [0, 0, 0, 1, 1, 2], [0], [0]>} : vector<4x8x32xbf16>, vector<4x32x16xbf16>, vector<4x8x16xf32> -> vector<4x8x16xf32>
    "tpu.trace_stop"() : () -> ()
    %c1_163 = arith.constant 1 : index
    %c0_164 = arith.constant 0 : index
    %c0_165 = arith.constant 0 : index
    %c0_166 = arith.constant 0 : index
    %277 = vector.load %arg16[%c1_163, %c0_164, %c0_165, %c0_166] : memref<2x4x32x16xbf16, #tpu.memory_space<vmem>>, vector<1x4x32x16xbf16>
    %278 = vector.shape_cast %277 : vector<1x4x32x16xbf16> to vector<4x32x16xbf16>
    "tpu.trace_start"() <{level = 10 : i32, message = "hsd,hde->hse"}> : () -> ()
    %cst_167 = arith.constant dense<0.000000e+00> : vector<4x8x16xf32>
    %279 = tpu.matmul %14, %278, %cst_167 {dimension_numbers = #tpu.dot_dimension_numbers<[2], [1], [1], [2], [0, 0, 0, 1, 1, 2], [0], [0]>} : vector<4x8x32xbf16>, vector<4x32x16xbf16>, vector<4x8x16xf32> -> vector<4x8x16xf32>
    "tpu.trace_stop"() : () -> ()
    %c1_168 = arith.constant 1 : index
    %c0_169 = arith.constant 0 : index
    %c0_170 = arith.constant 0 : index
    %c0_171 = arith.constant 0 : index
    %280 = vector.load %arg17[%c1_168, %c0_169, %c0_170, %c0_171] : memref<2x4x16x32xbf16, #tpu.memory_space<vmem>>, vector<1x4x16x32xbf16>
    %281 = vector.shape_cast %280 : vector<1x4x16x32xbf16> to vector<4x16x32xbf16>
    %282 = arith.truncf %273 : vector<4x8x16xf32> to vector<4x8x16xbf16>
    %283 = arith.truncf %276 : vector<4x8x16xf32> to vector<4x8x16xbf16>
    "tpu.trace_start"() <{level = 10 : i32, message = "hqd,hkd->hqk"}> : () -> ()
    %cst_172 = arith.constant dense<0.000000e+00> : vector<4x8x8xf32>
    %284 = tpu.matmul %282, %283, %cst_172 {dimension_numbers = #tpu.dot_dimension_numbers<[2], [2], [1], [1], [0, 0, 0, 1, 1, 1], [0], [0]>} : vector<4x8x16xbf16>, vector<4x8x16xbf16>, vector<4x8x8xf32> -> vector<4x8x8xf32>
    "tpu.trace_stop"() : () -> ()
    %cst_173 = arith.constant dense<0xFF800000> : vector<4x8xf32>
    %285 = vector.multi_reduction <maximumf>, %284, %cst_173 [2] : vector<4x8x8xf32> to vector<4x8xf32>
    %286 = vector.shape_cast %285 : vector<4x8xf32> to vector<4x8x1xf32>
    %287 = vector.broadcast %286 : vector<4x8x1xf32> to vector<4x8x8xf32>
    %288 = arith.subf %284, %287 : vector<4x8x8xf32>
    %289 = math.exp %288 : vector<4x8x8xf32>
    %cst_174 = arith.constant dense<0.000000e+00> : vector<4x8xf32>
    %290 = vector.multi_reduction <add>, %289, %cst_174 [2] : vector<4x8x8xf32> to vector<4x8xf32>
    %291 = vector.shape_cast %290 : vector<4x8xf32> to vector<4x8x1xf32>
    %292 = tpu.reciprocal %291 {approx = true} : vector<4x8x1xf32> -> vector<4x8x1xf32>
    %293 = vector.broadcast %292 : vector<4x8x1xf32> to vector<4x8x8xf32>
    %294 = arith.mulf %289, %293 : vector<4x8x8xf32>
    %295 = arith.truncf %294 : vector<4x8x8xf32> to vector<4x8x8xbf16>
    %296 = arith.truncf %279 : vector<4x8x16xf32> to vector<4x8x16xbf16>
    "tpu.trace_start"() <{level = 10 : i32, message = "hqk,hkd->hqd"}> : () -> ()
    %cst_175 = arith.constant dense<0.000000e+00> : vector<4x8x16xf32>
    %297 = tpu.matmul %295, %296, %cst_175 {dimension_numbers = #tpu.dot_dimension_numbers<[2], [1], [1], [2], [0, 0, 0, 1, 1, 2], [0], [0]>} : vector<4x8x8xbf16>, vector<4x8x16xbf16>, vector<4x8x16xf32> -> vector<4x8x16xf32>
    "tpu.trace_stop"() : () -> ()
    %298 = arith.truncf %297 : vector<4x8x16xf32> to vector<4x8x16xbf16>
    "tpu.trace_start"() <{level = 10 : i32, message = "hqd,hdm->hqm"}> : () -> ()
    %cst_176 = arith.constant dense<0.000000e+00> : vector<4x8x32xf32>
    %299 = tpu.matmul %298, %281, %cst_176 {dimension_numbers = #tpu.dot_dimension_numbers<[2], [1], [1], [2], [0, 0, 0, 1, 1, 2], [0], [0]>} : vector<4x8x16xbf16>, vector<4x16x32xbf16>, vector<4x8x32xf32> -> vector<4x8x32xf32>
    "tpu.trace_stop"() : () -> ()
    %300 = vector.extract_strided_slice %299 {offsets = [0, 0, 0], sizes = [1, 8, 32], strides = [1, 1, 1]} : vector<4x8x32xf32> to vector<1x8x32xf32>
    %301 = vector.shape_cast %300 : vector<1x8x32xf32> to vector<8x32xf32>
    %302 = vector.extract_strided_slice %299 {offsets = [1, 0, 0], sizes = [1, 8, 32], strides = [1, 1, 1]} : vector<4x8x32xf32> to vector<1x8x32xf32>
    %303 = vector.shape_cast %302 : vector<1x8x32xf32> to vector<8x32xf32>
    %304 = arith.addf %301, %303 : vector<8x32xf32>
    %305 = vector.extract_strided_slice %299 {offsets = [2, 0, 0], sizes = [1, 8, 32], strides = [1, 1, 1]} : vector<4x8x32xf32> to vector<1x8x32xf32>
    %306 = vector.shape_cast %305 : vector<1x8x32xf32> to vector<8x32xf32>
    %307 = arith.addf %304, %306 : vector<8x32xf32>
    %308 = vector.extract_strided_slice %299 {offsets = [3, 0, 0], sizes = [1, 8, 32], strides = [1, 1, 1]} : vector<4x8x32xf32> to vector<1x8x32xf32>
    %309 = vector.shape_cast %308 : vector<1x8x32xf32> to vector<8x32xf32>
    %310 = arith.addf %307, %309 : vector<8x32xf32>
    %311 = arith.addf %246, %310 : vector<8x32xf32>
    %c1_177 = arith.constant 1 : index
    %c0_178 = arith.constant 0 : index
    %c0_179 = arith.constant 0 : index
    %312 = vector.load %arg18[%c1_177, %c0_178, %c0_179] : memref<2x1x32xf32, #tpu.memory_space<vmem>>, vector<1x1x32xf32>
    %313 = vector.shape_cast %312 : vector<1x1x32xf32> to vector<1x32xf32>
    %314 = arith.mulf %311, %311 : vector<8x32xf32>
    %cst_180 = arith.constant dense<0.000000e+00> : vector<8xf32>
    %315 = vector.multi_reduction <add>, %314, %cst_180 [1] : vector<8x32xf32> to vector<8xf32>
    %316 = vector.shape_cast %315 : vector<8xf32> to vector<8x1xf32>
    %cst_181 = arith.constant 3.200000e+01 : f32
    %317 = vector.broadcast %cst_181 : f32 to vector<8x1xf32>
    %318 = arith.divf %316, %317 : vector<8x1xf32>
    %cst_182 = arith.constant 9.99999997E-7 : f32
    %319 = vector.broadcast %cst_182 : f32 to vector<8x1xf32>
    %320 = arith.addf %318, %319 : vector<8x1xf32>
    %321 = math.rsqrt %320 : vector<8x1xf32>
    %322 = vector.broadcast %321 : vector<8x1xf32> to vector<8x32xf32>
    %323 = arith.mulf %311, %322 : vector<8x32xf32>
    %324 = vector.broadcast %313 : vector<1x32xf32> to vector<8x32xf32>
    %325 = arith.mulf %323, %324 : vector<8x32xf32>
    %326 = arith.truncf %325 : vector<8x32xf32> to vector<8x32xbf16>
    %c1_183 = arith.constant 1 : index
    %c0_184 = arith.constant 0 : index
    %c0_185 = arith.constant 0 : index
    %327 = vector.load %arg19[%c1_183, %c0_184, %c0_185] : memref<2x32x64xbf16, #tpu.memory_space<vmem>>, vector<1x32x64xbf16>
    %328 = vector.shape_cast %327 : vector<1x32x64xbf16> to vector<32x64xbf16>
    %cst_186 = arith.constant dense<0.000000e+00> : vector<8x64xf32>
    %329 = tpu.matmul %326, %328, %cst_186 {dimension_numbers = #tpu.dot_dimension_numbers<[1], [0], [0], [1], [0, 0, 1, 1], [], []>} : vector<8x32xbf16>, vector<32x64xbf16>, vector<8x64xf32> -> vector<8x64xf32>
    %cst_187 = arith.constant 0.000000e+00 : f32
    %330 = vector.broadcast %cst_187 : f32 to vector<8x64xf32>
    %331 = arith.maximumf %329, %330 : vector<8x64xf32>
    %332 = arith.truncf %331 : vector<8x64xf32> to vector<8x64xbf16>
    %c1_188 = arith.constant 1 : index
    %c0_189 = arith.constant 0 : index
    %c0_190 = arith.constant 0 : index
    %333 = vector.load %arg20[%c1_188, %c0_189, %c0_190] : memref<2x64x32xbf16, #tpu.memory_space<vmem>>, vector<1x64x32xbf16>
    %334 = vector.shape_cast %333 : vector<1x64x32xbf16> to vector<64x32xbf16>
    %cst_191 = arith.constant dense<0.000000e+00> : vector<8x32xf32>
    %335 = tpu.matmul %332, %334, %cst_191 {dimension_numbers = #tpu.dot_dimension_numbers<[1], [0], [0], [1], [0, 0, 1, 1], [], []>} : vector<8x64xbf16>, vector<64x32xbf16>, vector<8x32xf32> -> vector<8x32xf32>
    %336 = arith.addf %311, %335 : vector<8x32xf32>
    %c0_192 = arith.constant 0 : index
    %c0_193 = arith.constant 0 : index
    %337 = vector.load %arg5[%c0_192, %c0_193] : memref<1x32xf32, #tpu.memory_space<vmem>>, vector<1x32xf32>
    %338 = arith.mulf %336, %336 : vector<8x32xf32>
    %cst_194 = arith.constant dense<0.000000e+00> : vector<8xf32>
    %339 = vector.multi_reduction <add>, %338, %cst_194 [1] : vector<8x32xf32> to vector<8xf32>
    %340 = vector.shape_cast %339 : vector<8xf32> to vector<8x1xf32>
    %cst_195 = arith.constant 3.200000e+01 : f32
    %341 = vector.broadcast %cst_195 : f32 to vector<8x1xf32>
    %342 = arith.divf %340, %341 : vector<8x1xf32>
    %cst_196 = arith.constant 9.99999997E-7 : f32
    %343 = vector.broadcast %cst_196 : f32 to vector<8x1xf32>
    %344 = arith.addf %342, %343 : vector<8x1xf32>
    %345 = math.rsqrt %344 : vector<8x1xf32>
    %346 = vector.broadcast %345 : vector<8x1xf32> to vector<8x32xf32>
    %347 = arith.mulf %336, %346 : vector<8x32xf32>
    %348 = vector.broadcast %337 : vector<1x32xf32> to vector<8x32xf32>
    %349 = arith.mulf %347, %348 : vector<8x32xf32>
    %350 = arith.truncf %349 : vector<8x32xf32> to vector<8x32xbf16>
    %c0_197 = arith.constant 0 : index
    %c0_198 = arith.constant 0 : index
    %351 = vector.load %arg4[%c0_197, %c0_198] : memref<32x256xbf16, #tpu.memory_space<vmem>>, vector<32x256xbf16>
    %cst_199 = arith.constant dense<0.000000e+00> : vector<8x256xf32>
    %352 = tpu.matmul %350, %351, %cst_199 {dimension_numbers = #tpu.dot_dimension_numbers<[1], [0], [0], [1], [0, 0, 1, 1], [], []>} : vector<8x32xbf16>, vector<32x256xbf16>, vector<8x256xf32> -> vector<8x256xf32>
    %c0_200 = arith.constant 0 : index
    %c0_201 = arith.constant 0 : index
    %c0_202 = arith.constant 0 : index
    %353 = vector.load %arg21[%c0_200, %c0_201, %c0_202] : memref<1x8x256xf32, #tpu.memory_space<vmem>>, vector<1x8x256xf32>
    %354 = vector.shape_cast %353 : vector<1x8x256xf32> to vector<8x256xf32>
    %355 = vector.shape_cast %352 : vector<8x256xf32> to vector<1x8x256xf32>
    tpu.vector_store %arg21[%c0_200, %c0_201, %c0_202], %355 {strides = array<i32>} : memref<1x8x256xf32, #tpu.memory_space<vmem>>, vector<1x8x256xf32>,
    return
  }
  func.func @transform_0(%arg0: i32) -> (i32, i32, i32) {
    %c0_i32 = arith.constant 0 : i32
    %c0_i32_0 = arith.constant 0 : i32
    %c0_i32_1 = arith.constant 0 : i32
    return %arg0, %c0_i32, %c0_i32_0 : i32, i32, i32
  }
  func.func @transform_1(%arg0: i32) -> (i32, i32, i32) {
    %c0_i32 = arith.constant 0 : i32
    %c0_i32_0 = arith.constant 0 : i32
    %c0_i32_1 = arith.constant 0 : i32
    return %arg0, %c0_i32, %c0_i32_0 : i32, i32, i32
  }
  func.func @transform_2(%arg0: i32) -> (i32, i32) {
    %c0_i32 = arith.constant 0 : i32
    %c0_i32_0 = arith.constant 0 : i32
    %c0_i32_1 = arith.constant 0 : i32
    return %c0_i32, %c0_i32_0 : i32, i32
  }
  func.func @transform_3(%arg0: i32) -> (i32, i32) {
    %c0_i32 = arith.constant 0 : i32
    %c0_i32_0 = arith.constant 0 : i32
    %c0_i32_1 = arith.constant 0 : i32
    return %c0_i32, %c0_i32_0 : i32, i32
  }
  func.func @transform_4(%arg0: i32) -> (i32, i32) {
    %c0_i32 = arith.constant 0 : i32
    %c0_i32_0 = arith.constant 0 : i32
    %c0_i32_1 = arith.constant 0 : i32
    return %c0_i32, %c0_i32_0 : i32, i32
  }
  func.func @transform_5(%arg0: i32) -> (i32, i32, i32) {
    %c0_i32 = arith.constant 0 : i32
    %c0_i32_0 = arith.constant 0 : i32
    %c0_i32_1 = arith.constant 0 : i32
    %c0_i32_2 = arith.constant 0 : i32
    return %c0_i32, %c0_i32_0, %c0_i32_1 : i32, i32, i32
  }
  func.func @transform_6(%arg0: i32) -> (i32, i32, i32) {
    %c0_i32 = arith.constant 0 : i32
    %c0_i32_0 = arith.constant 0 : i32
    %c0_i32_1 = arith.constant 0 : i32
    %c0_i32_2 = arith.constant 0 : i32
    return %c0_i32, %c0_i32_0, %c0_i32_1 : i32, i32, i32
  }
  func.func @transform_7(%arg0: i32) -> (i32, i32, i32, i32) {
    %c0_i32 = arith.constant 0 : i32
    %c0_i32_0 = arith.constant 0 : i32
    %c0_i32_1 = arith.constant 0 : i32
    %c0_i32_2 = arith.constant 0 : i32
    %c0_i32_3 = arith.constant 0 : i32
    return %c0_i32, %c0_i32_0, %c0_i32_1, %c0_i32_2 : i32, i32, i32, i32
  }
  func.func @transform_8(%arg0: i32) -> (i32, i32, i32, i32) {
    %c0_i32 = arith.constant 0 : i32
    %c0_i32_0 = arith.constant 0 : i32
    %c0_i32_1 = arith.constant 0 : i32
    %c0_i32_2 = arith.constant 0 : i32
    %c0_i32_3 = arith.constant 0 : i32
    return %c0_i32, %c0_i32_0, %c0_i32_1, %c0_i32_2 : i32, i32, i32, i32
  }
  func.func @transform_9(%arg0: i32) -> (i32, i32, i32, i32) {
    %c0_i32 = arith.constant 0 : i32
    %c0_i32_0 = arith.constant 0 : i32
    %c0_i32_1 = arith.constant 0 : i32
    %c0_i32_2 = arith.constant 0 : i32
    %c0_i32_3 = arith.constant 0 : i32
    return %c0_i32, %c0_i32_0, %c0_i32_1, %c0_i32_2 : i32, i32, i32, i32
  }
  func.func @transform_10(%arg0: i32) -> (i32, i32, i32, i32) {
    %c0_i32 = arith.constant 0 : i32
    %c0_i32_0 = arith.constant 0 : i32
    %c0_i32_1 = arith.constant 0 : i32
    %c0_i32_2 = arith.constant 0 : i32
    %c0_i32_3 = arith.constant 0 : i32
    return %c0_i32, %c0_i32_0, %c0_i32_1, %c0_i32_2 : i32, i32, i32, i32
  }
  func.func @transform_11(%arg0: i32) -> (i32, i32, i32) {
    %c0_i32 = arith.constant 0 : i32
    %c0_i32_0 = arith.constant 0 : i32
    %c0_i32_1 = arith.constant 0 : i32
    %c0_i32_2 = arith.constant 0 : i32
    return %c0_i32, %c0_i32_0, %c0_i32_1 : i32, i32, i32
  }
  func.func @transform_12(%arg0: i32) -> (i32, i32, i32) {
    %c0_i32 = arith.constant 0 : i32
    %c0_i32_0 = arith.constant 0 : i32
    %c0_i32_1 = arith.constant 0 : i32
    %c0_i32_2 = arith.constant 0 : i32
    return %c0_i32, %c0_i32_0, %c0_i32_1 : i32, i32, i32
  }
  func.func @transform_13(%arg0: i32) -> (i32, i32, i32, i32) {
    %c0_i32 = arith.constant 0 : i32
    %c0_i32_0 = arith.constant 0 : i32
    %c0_i32_1 = arith.constant 0 : i32
    %c0_i32_2 = arith.constant 0 : i32
    %c0_i32_3 = arith.constant 0 : i32
    return %c0_i32, %c0_i32_0, %c0_i32_1, %c0_i32_2 : i32, i32, i32, i32
  }
  func.func @transform_14(%arg0: i32) -> (i32, i32, i32, i32) {
    %c0_i32 = arith.constant 0 : i32
    %c0_i32_0 = arith.constant 0 : i32
    %c0_i32_1 = arith.constant 0 : i32
    %c0_i32_2 = arith.constant 0 : i32
    %c0_i32_3 = arith.constant 0 : i32
    return %c0_i32, %c0_i32_0, %c0_i32_1, %c0_i32_2 : i32, i32, i32, i32
  }
  func.func @transform_15(%arg0: i32) -> (i32, i32, i32, i32) {
    %c0_i32 = arith.constant 0 : i32
    %c0_i32_0 = arith.constant 0 : i32
    %c0_i32_1 = arith.constant 0 : i32
    %c0_i32_2 = arith.constant 0 : i32
    %c0_i32_3 = arith.constant 0 : i32
    return %c0_i32, %c0_i32_0, %c0_i32_1, %c0_i32_2 : i32, i32, i32, i32
  }
  func.func @transform_16(%arg0: i32) -> (i32, i32, i32, i32) {
    %c0_i32 = arith.constant 0 : i32
    %c0_i32_0 = arith.constant 0 : i32
    %c0_i32_1 = arith.constant 0 : i32
    %c0_i32_2 = arith.constant 0 : i32
    %c0_i32_3 = arith.constant 0 : i32
    return %c0_i32, %c0_i32_0, %c0_i32_1, %c0_i32_2 : i32, i32, i32, i32
  }
  func.func @transform_17(%arg0: i32) -> (i32, i32, i32) {
    %c0_i32 = arith.constant 0 : i32
    %c0_i32_0 = arith.constant 0 : i32
    %c0_i32_1 = arith.constant 0 : i32
    %c0_i32_2 = arith.constant 0 : i32
    return %c0_i32, %c0_i32_0, %c0_i32_1 : i32, i32, i32
  }
  func.func @transform_18(%arg0: i32) -> (i32, i32, i32) {
    %c0_i32 = arith.constant 0 : i32
    %c0_i32_0 = arith.constant 0 : i32
    %c0_i32_1 = arith.constant 0 : i32
    %c0_i32_2 = arith.constant 0 : i32
    return %c0_i32, %c0_i32_0, %c0_i32_1 : i32, i32, i32
  }
  func.func @transform_19(%arg0: i32) -> (i32, i32, i32) {
    %c0_i32 = arith.constant 0 : i32
    %c0_i32_0 = arith.constant 0 : i32
    %c0_i32_1 = arith.constant 0 : i32
    %c0_i32_2 = arith.constant 0 : i32
    return %c0_i32, %c0_i32_0, %c0_i32_1 : i32, i32, i32
  }
  func.func @transform_20(%arg0: i32) -> (i32, i32, i32) {
    %c0_i32 = arith.constant 0 : i32
    %c0_i32_0 = arith.constant 0 : i32
    %c0_i32_1 = arith.constant 0 : i32
    return %arg0, %c0_i32, %c0_i32_0 : i32, i32, i32
  }
  func.func @transform_21(%arg0: i32) -> (i32, i32, i32, i32) {
    %c0_i32 = arith.constant 0 : i32
    %c0_i32_0 = arith.constant 0 : i32
    %c0_i32_1 = arith.constant 0 : i32
    %c0_i32_2 = arith.constant 0 : i32
    return %arg0, %c0_i32, %c0_i32_0, %c0_i32_1 : i32, i32, i32, i32
  }
  func.func @transform_22(%arg0: i32) -> (i32, i32, i32, i32) {
    %c0_i32 = arith.constant 0 : i32
    %c0_i32_0 = arith.constant 0 : i32
    %c0_i32_1 = arith.constant 0 : i32
    %c0_i32_2 = arith.constant 0 : i32
    return %arg0, %c0_i32, %c0_i32_0, %c0_i32_1 : i32, i32, i32, i32
  }
}

</mosaic_0001>

<llo_original>
// kernel: _decoder_apply.1
$region0: #{_decoder_apply.1}
  #allocation0 [shape = 'u32[]', space=smem, size = 0x4, offset = 0x4, fixed_abs, tag = 'smem constant byte address 0x4 - core index']
  #allocation1 [shape = 'u32[144,128]{1,0:T(1,128)}', space=vmem, size = 0x12000, scoped, tag = 'internal scratch']
  %s0 = inlined_call_operand.vmem [shape: s32[2,8,1], index: 0, kind: input, shape index: {}]
  %s1 = inlined_call_operand.vmem [shape: bf16[2,8,32], index: 1, kind: input, shape index: {}]
  %s2 = inlined_call_operand.vmem [shape: bf16[256,32], index: 2, kind: input, shape index: {}]
  %s3 = inlined_call_operand.vmem [shape: bf16[32,256], index: 3, kind: input, shape index: {}]
  %s4 = inlined_call_operand.vmem [shape: f32[1,32], index: 4, kind: input, shape index: {}]
  %s5 = inlined_call_operand.vmem [shape: f32[2,1,32], index: 5, kind: input, shape index: {}]
  %s6 = inlined_call_operand.vmem [shape: bf16[2,32,128], index: 6, kind: input, shape index: {}]
  %s7 = inlined_call_operand.vmem [shape: bf16[2,4,32,16], index: 7, kind: input, shape index: {}]
  %s8 = inlined_call_operand.vmem [shape: bf16[2,4,32,16], index: 8, kind: input, shape index: {}]
  %s9 = inlined_call_operand.vmem [shape: bf16[2,4,32,16], index: 9, kind: input, shape index: {}]
  %s10 = inlined_call_operand.vmem [shape: bf16[2,4,16,32], index: 10, kind: input, shape index: {}]
  %s11 = inlined_call_operand.vmem [shape: f32[2,1,32], index: 11, kind: input, shape index: {}]
  %s12 = inlined_call_operand.vmem [shape: bf16[2,32,128], index: 12, kind: input, shape index: {}]
  %s13 = inlined_call_operand.vmem [shape: bf16[2,4,32,16], index: 13, kind: input, shape index: {}]
  %s14 = inlined_call_operand.vmem [shape: bf16[2,4,32,16], index: 14, kind: input, shape index: {}]
  %s15 = inlined_call_operand.vmem [shape: bf16[2,4,32,16], index: 15, kind: input, shape index: {}]
  %s16 = inlined_call_operand.vmem [shape: bf16[2,4,16,32], index: 16, kind: input, shape index: {}]
  %s17 = inlined_call_operand.vmem [shape: f32[2,1,32], index: 17, kind: input, shape index: {}]
  %s18 = inlined_call_operand.vmem [shape: bf16[2,32,64], index: 18, kind: input, shape index: {}]
  %s19 = inlined_call_operand.vmem [shape: bf16[2,64,32], index: 19, kind: input, shape index: {}]
  %s20 = inlined_call_operand.hbm [shape: f32[2,8,256], index: 20, kind: output, shape index: {0}]
  %s21 = inlined_call_operand.vmem [shape: bf16[2,2,8,128], index: 21, kind: output, shape index: {1}]
  %s22 = inlined_call_operand.vmem [shape: bf16[2,2,8,128], index: 22, kind: output, shape index: {2}]
  %23 = xla_tuple %s20, %s21, %s22
  %s24 = sld [smem:[#allocation0]]
  $region129: #{_decoder_apply.1} parent=0
    _
  %s26 = ssub.s32 1, %s24
  %s27 = scalar_select 0, %s26, %s24
  $region1: #{_decoder_apply.1} parent=0
    #allocation2 [shape = 'u8[16384]{0}', space=vmem, size = 0x4000, scoped, tag = 'output window, operand 0']
    #allocation3 [shape = 's32[2]{0}', space=sflag, size = 0x8, scoped, tag = 'scoped memory for _decoder_apply.1']
    %28 = vsyncpa [#allocation3], 0
    %s29 = scalar_lea.sflag [#allocation3], 1
    %30 = vsyncpa %s29, 0
    loop: start=0, step=1, limit=4
    $region2: #{_decoder_apply.1} parent=1 // loop_pre_header
      _
    $region3: #{_decoder_apply.1} parent=1 // loop_header
      %s32 = sphi 0, %s36
      %p33 = scmp.ge.s32.totalorder %s32, 4
      %s42 = sphi 0, %s44
      %s45 = sphi 0, %s42
      %s46 = sphi 0, %s45
      %s62 = sphi 0, %s46
      %s68 = sphi 0, %s70
      %s71 = sphi 0, %s68
      %s72 = sphi 0, %s71
      %s88 = sphi 0, %s72
      %s92 = sphi 0, %s92
      %s94 = sphi 0, %s92
      %s95 = sphi 0, %s94
      %s109 = sphi 0, %s95
      %s113 = sphi 0, %s113
      %s115 = sphi 0, %s113
      %s116 = sphi 0, %s115
      %s130 = sphi 0, %s116
      %s134 = sphi 0, %s134
      %s136 = sphi 0, %s134
      %s137 = sphi 0, %s136
      %s151 = sphi 0, %s137
      %s155 = sphi 0, %s155
      %s157 = sphi 0, %s155
      %s158 = sphi 0, %s157
      %s172 = sphi 0, %s158
      %s176 = sphi 0, %s176
      %s178 = sphi 0, %s176
      %s179 = sphi 0, %s178
      %s193 = sphi 0, %s179
      %s197 = sphi 0, %s197
      %s199 = sphi 0, %s197
      %s200 = sphi 0, %s199
      %s214 = sphi 0, %s200
      %s218 = sphi 0, %s218
      %s220 = sphi 0, %s218
      %s221 = sphi 0, %s220
      %s235 = sphi 0, %s221
      %s239 = sphi 0, %s239
      %s241 = sphi 0, %s239
      %s242 = sphi 0, %s241
      %s256 = sphi 0, %s242
      %s260 = sphi 0, %s260
      %s262 = sphi 0, %s260
      %s263 = sphi 0, %s262
      %s277 = sphi 0, %s263
      %s281 = sphi 0, %s281
      %s283 = sphi 0, %s281
      %s284 = sphi 0, %s283
      %s298 = sphi 0, %s284
      %s302 = sphi 0, %s302
      %s304 = sphi 0, %s302
      %s305 = sphi 0, %s304
      %s319 = sphi 0, %s305
      %s323 = sphi 0, %s323
      %s325 = sphi 0, %s323
      %s326 = sphi 0, %s325
      %s340 = sphi 0, %s326
      %s344 = sphi 0, %s344
      %s346 = sphi 0, %s344
      %s347 = sphi 0, %s346
      %s361 = sphi 0, %s347
      %s365 = sphi 0, %s365
      %s367 = sphi 0, %s365
      %s368 = sphi 0, %s367
      %s382 = sphi 0, %s368
      %s386 = sphi 0, %s386
      %s388 = sphi 0, %s386
      %s389 = sphi 0, %s388
      %s403 = sphi 0, %s389
      %s407 = sphi 0, %s407
      %s409 = sphi 0, %s407
      %s410 = sphi 0, %s409
      %s424 = sphi 0, %s410
      %s428 = sphi 0, %s428
      %s430 = sphi 0, %s428
      %s431 = sphi 0, %s430
      %s445 = sphi 0, %s431
      %s449 = sphi 0, %s449
      %s451 = sphi 0, %s449
      %s452 = sphi 0, %s451
      %s466 = sphi 0, %s452
      %s472 = sphi 0, %s474
      %s475 = sphi 0, %s472
      %s476 = sphi 0, %s475
      %s492 = sphi 0, %s476
      %s498 = sphi 0, %s500
      %s501 = sphi 0, %s498
      %s502 = sphi 0, %s501
      %s518 = sphi 0, %s502
      %s524 = sphi 0, %s526
      %s527 = sphi 0, %s524
      %s528 = sphi 0, %s527
      %s544 = sphi 0, %s528
    $region4: #{_decoder_apply.1} parent=1 // loop_header_branch
      %35 = sbr.rel (%p33) target = $region8
    $region5: #{_decoder_apply.1} parent=1 // loop_body
      %s37 = ssub.s32 %s32, 1
      %s38 = ssub.s32 %s32, 2
      %s39 = sadd.s32 %s32, 1
      %s40 = ssub.s32 %s32, %s39
      %p41 = scmp.eq.s32.totalorder %s40, 0
      %s43 = sadd.s32 %s42, 1
      %s44 = scalar_select %p41, %s42, %s43
      %p47 = pneg %p41
      %p48 = scmp.eq.s32.totalorder %s32, 1
      %p49 = por %p47, %p48
      %p50 = scmp.ne.s32.totalorder %s42, %s45
      %p51 = scmp.eq.s32.totalorder %s32, 0
      %p52 = por %p50, %p51
      %p53 = scmp.ne.s32.totalorder %s42, %s45
      %p54 = scmp.eq.s32.totalorder %s37, 1
      %p55 = por %p53, %p54
      %p56 = scmp.ne.s32.totalorder %s45, %s46
      %p57 = scmp.eq.s32.totalorder %s37, 0
      %p58 = por %p56, %p57
      %p59 = scmp.ne.s32.totalorder %s45, %s46
      %p60 = scmp.eq.s32.totalorder %s38, 1
      %p61 = por %p59, %p60
      %p63 = scmp.ne.s32.totalorder %s46, %s62
      %p64 = scmp.eq.s32.totalorder %s38, 0
      %p65 = por %p63, %p64
      %s66 = ssub.s32 %s32, %s39
      %p67 = scmp.eq.s32.totalorder %s66, 0
      %s69 = sadd.s32 %s68, 1
      %s70 = scalar_select %p67, %s68, %s69
      %p73 = pneg %p67
      %p74 = scmp.eq.s32.totalorder %s32, 1
      %p75 = por %p73, %p74
      %p76 = scmp.ne.s32.totalorder %s68, %s71
      %p77 = scmp.eq.s32.totalorder %s32, 0
      %p78 = por %p76, %p77
      %p79 = scmp.ne.s32.totalorder %s68, %s71
      %p80 = scmp.eq.s32.totalorder %s37, 1
      %p81 = por %p79, %p80
      %p82 = scmp.ne.s32.totalorder %s71, %s72
      %p83 = scmp.eq.s32.totalorder %s37, 0
      %p84 = por %p82, %p83
      %p85 = scmp.ne.s32.totalorder %s71, %s72
      %p86 = scmp.eq.s32.totalorder %s38, 1
      %p87 = por %p85, %p86
      %p89 = scmp.ne.s32.totalorder %s72, %s88
      %p90 = scmp.eq.s32.totalorder %s38, 0
      %p91 = por %p89, %p90
      %s93 = sadd.s32 %s92, 1
      %p96 = scmp.eq.s32.totalorder %s32, 1
      %p97 = scmp.ne.s32.totalorder %s92, %s94
      %p98 = scmp.eq.s32.totalorder %s32, 0
      %p99 = por %p97, %p98
      %p100 = scmp.ne.s32.totalorder %s92, %s94
      %p101 = scmp.eq.s32.totalorder %s37, 1
      %p102 = por %p100, %p101
      %p103 = scmp.ne.s32.totalorder %s94, %s95
      %p104 = scmp.eq.s32.totalorder %s37, 0
      %p105 = por %p103, %p104
      %p106 = scmp.ne.s32.totalorder %s94, %s95
      %p107 = scmp.eq.s32.totalorder %s38, 1
      %p108 = por %p106, %p107
      %p110 = scmp.ne.s32.totalorder %s95, %s109
      %p111 = scmp.eq.s32.totalorder %s38, 0
      %p112 = por %p110, %p111
      %s114 = sadd.s32 %s113, 1
      %p117 = scmp.eq.s32.totalorder %s32, 1
      %p118 = scmp.ne.s32.totalorder %s113, %s115
      %p119 = scmp.eq.s32.totalorder %s32, 0
      %p120 = por %p118, %p119
      %p121 = scmp.ne.s32.totalorder %s113, %s115
      %p122 = scmp.eq.s32.totalorder %s37, 1
      %p123 = por %p121, %p122
      %p124 = scmp.ne.s32.totalorder %s115, %s116
      %p125 = scmp.eq.s32.totalorder %s37, 0
      %p126 = por %p124, %p125
      %p127 = scmp.ne.s32.totalorder %s115, %s116
      %p128 = scmp.eq.s32.totalorder %s38, 1
      %p129 = por %p127, %p128
      %p131 = scmp.ne.s32.totalorder %s116, %s130
      %p132 = scmp.eq.s32.totalorder %s38, 0
      %p133 = por %p131, %p132
      %s135 = sadd.s32 %s134, 1
      %p138 = scmp.eq.s32.totalorder %s32, 1
      %p139 = scmp.ne.s32.totalorder %s134, %s136
      %p140 = scmp.eq.s32.totalorder %s32, 0
      %p141 = por %p139, %p140
      %p142 = scmp.ne.s32.totalorder %s134, %s136
      %p143 = scmp.eq.s32.totalorder %s37, 1
      %p144 = por %p142, %p143
      %p145 = scmp.ne.s32.totalorder %s136, %s137
      %p146 = scmp.eq.s32.totalorder %s37, 0
      %p147 = por %p145, %p146
      %p148 = scmp.ne.s32.totalorder %s136, %s137
      %p149 = scmp.eq.s32.totalorder %s38, 1
      %p150 = por %p148, %p149
      %p152 = scmp.ne.s32.totalorder %s137, %s151
      %p153 = scmp.eq.s32.totalorder %s38, 0
      %p154 = por %p152, %p153
      %s156 = sadd.s32 %s155, 1
      %p159 = scmp.eq.s32.totalorder %s32, 1
      %p160 = scmp.ne.s32.totalorder %s155, %s157
      %p161 = scmp.eq.s32.totalorder %s32, 0
      %p162 = por %p160, %p161
      %p163 = scmp.ne.s32.totalorder %s155, %s157
      %p164 = scmp.eq.s32.totalorder %s37, 1
      %p165 = por %p163, %p164
      %p166 = scmp.ne.s32.totalorder %s157, %s158
      %p167 = scmp.eq.s32.totalorder %s37, 0
      %p168 = por %p166, %p167
      %p169 = scmp.ne.s32.totalorder %s157, %s158
      %p170 = scmp.eq.s32.totalorder %s38, 1
      %p171 = por %p169, %p170
      %p173 = scmp.ne.s32.totalorder %s158, %s172
      %p174 = scmp.eq.s32.totalorder %s38, 0
      %p175 = por %p173, %p174
      %s177 = sadd.s32 %s176, 1
      %p180 = scmp.eq.s32.totalorder %s32, 1
      %p181 = scmp.ne.s32.totalorder %s176, %s178
      %p182 = scmp.eq.s32.totalorder %s32, 0
      %p183 = por %p181, %p182
      %p184 = scmp.ne.s32.totalorder %s176, %s178
      %p185 = scmp.eq.s32.totalorder %s37, 1
      %p186 = por %p184, %p185
      %p187 = scmp.ne.s32.totalorder %s178, %s179
      %p188 = scmp.eq.s32.totalorder %s37, 0
      %p189 = por %p187, %p188
      %p190 = scmp.ne.s32.totalorder %s178, %s179
      %p191 = scmp.eq.s32.totalorder %s38, 1
      %p192 = por %p190, %p191
      %p194 = scmp.ne.s32.totalorder %s179, %s193
      %p195 = scmp.eq.s32.totalorder %s38, 0
      %p196 = por %p194, %p195
      %s198 = sadd.s32 %s197, 1
      %p201 = scmp.eq.s32.totalorder %s32, 1
      %p202 = scmp.ne.s32.totalorder %s197, %s199
      %p203 = scmp.eq.s32.totalorder %s32, 0
      %p204 = por %p202, %p203
      %p205 = scmp.ne.s32.totalorder %s197, %s199
      %p206 = scmp.eq.s32.totalorder %s37, 1
      %p207 = por %p205, %p206
      %p208 = scmp.ne.s32.totalorder %s199, %s200
      %p209 = scmp.eq.s32.totalorder %s37, 0
      %p210 = por %p208, %p209
      %p211 = scmp.ne.s32.totalorder %s199, %s200
      %p212 = scmp.eq.s32.totalorder %s38, 1
      %p213 = por %p211, %p212
      %p215 = scmp.ne.s32.totalorder %s200, %s214
      %p216 = scmp.eq.s32.totalorder %s38, 0
      %p217 = por %p215, %p216
      %s219 = sadd.s32 %s218, 1
      %p222 = scmp.eq.s32.totalorder %s32, 1
      %p223 = scmp.ne.s32.totalorder %s218, %s220
      %p224 = scmp.eq.s32.totalorder %s32, 0
      %p225 = por %p223, %p224
      %p226 = scmp.ne.s32.totalorder %s218, %s220
      %p227 = scmp.eq.s32.totalorder %s37, 1
      %p228 = por %p226, %p227
      %p229 = scmp.ne.s32.totalorder %s220, %s221
      %p230 = scmp.eq.s32.totalorder %s37, 0
      %p231 = por %p229, %p230
      %p232 = scmp.ne.s32.totalorder %s220, %s221
      %p233 = scmp.eq.s32.totalorder %s38, 1
      %p234 = por %p232, %p233
      %p236 = scmp.ne.s32.totalorder %s221, %s235
      %p237 = scmp.eq.s32.totalorder %s38, 0
      %p238 = por %p236, %p237
      %s240 = sadd.s32 %s239, 1
      %p243 = scmp.eq.s32.totalorder %s32, 1
      %p244 = scmp.ne.s32.totalorder %s239, %s241
      %p245 = scmp.eq.s32.totalorder %s32, 0
      %p246 = por %p244, %p245
      %p247 = scmp.ne.s32.totalorder %s239, %s241
      %p248 = scmp.eq.s32.totalorder %s37, 1
      %p249 = por %p247, %p248
      %p250 = scmp.ne.s32.totalorder %s241, %s242
      %p251 = scmp.eq.s32.totalorder %s37, 0
      %p252 = por %p250, %p251
      %p253 = scmp.ne.s32.totalorder %s241, %s242
      %p254 = scmp.eq.s32.totalorder %s38, 1
      %p255 = por %p253, %p254
      %p257 = scmp.ne.s32.totalorder %s242, %s256
      %p258 = scmp.eq.s32.totalorder %s38, 0
      %p259 = por %p257, %p258
      %s261 = sadd.s32 %s260, 1
      %p264 = scmp.eq.s32.totalorder %s32, 1
      %p265 = scmp.ne.s32.totalorder %s260, %s262
      %p266 = scmp.eq.s32.totalorder %s32, 0
      %p267 = por %p265, %p266
      %p268 = scmp.ne.s32.totalorder %s260, %s262
      %p269 = scmp.eq.s32.totalorder %s37, 1
      %p270 = por %p268, %p269
      %p271 = scmp.ne.s32.totalorder %s262, %s263
      %p272 = scmp.eq.s32.totalorder %s37, 0
      %p273 = por %p271, %p272
      %p274 = scmp.ne.s32.totalorder %s262, %s263
      %p275 = scmp.eq.s32.totalorder %s38, 1
      %p276 = por %p274, %p275
      %p278 = scmp.ne.s32.totalorder %s263, %s277
      %p279 = scmp.eq.s32.totalorder %s38, 0
      %p280 = por %p278, %p279
      %s282 = sadd.s32 %s281, 1
      %p285 = scmp.eq.s32.totalorder %s32, 1
      %p286 = scmp.ne.s32.totalorder %s281, %s283
      %p287 = scmp.eq.s32.totalorder %s32, 0
      %p288 = por %p286, %p287
      %p289 = scmp.ne.s32.totalorder %s281, %s283
      %p290 = scmp.eq.s32.totalorder %s37, 1
      %p291 = por %p289, %p290
      %p292 = scmp.ne.s32.totalorder %s283, %s284
      %p293 = scmp.eq.s32.totalorder %s37, 0
      %p294 = por %p292, %p293
      %p295 = scmp.ne.s32.totalorder %s283, %s284
      %p296 = scmp.eq.s32.totalorder %s38, 1
      %p297 = por %p295, %p296
      %p299 = scmp.ne.s32.totalorder %s284, %s298
      %p300 = scmp.eq.s32.totalorder %s38, 0
      %p301 = por %p299, %p300
      %s303 = sadd.s32 %s302, 1
      %p306 = scmp.eq.s32.totalorder %s32, 1
      %p307 = scmp.ne.s32.totalorder %s302, %s304
      %p308 = scmp.eq.s32.totalorder %s32, 0
      %p309 = por %p307, %p308
      %p310 = scmp.ne.s32.totalorder %s302, %s304
      %p311 = scmp.eq.s32.totalorder %s37, 1
      %p312 = por %p310, %p311
      %p313 = scmp.ne.s32.totalorder %s304, %s305
      %p314 = scmp.eq.s32.totalorder %s37, 0
      %p315 = por %p313, %p314
      %p316 = scmp.ne.s32.totalorder %s304, %s305
      %p317 = scmp.eq.s32.totalorder %s38, 1
      %p318 = por %p316, %p317
      %p320 = scmp.ne.s32.totalorder %s305, %s319
      %p321 = scmp.eq.s32.totalorder %s38, 0
      %p322 = por %p320, %p321
      %s324 = sadd.s32 %s323, 1
      %p327 = scmp.eq.s32.totalorder %s32, 1
      %p328 = scmp.ne.s32.totalorder %s323, %s325
      %p329 = scmp.eq.s32.totalorder %s32, 0
      %p330 = por %p328, %p329
      %p331 = scmp.ne.s32.totalorder %s323, %s325
      %p332 = scmp.eq.s32.totalorder %s37, 1
      %p333 = por %p331, %p332
      %p334 = scmp.ne.s32.totalorder %s325, %s326
      %p335 = scmp.eq.s32.totalorder %s37, 0
      %p336 = por %p334, %p335
      %p337 = scmp.ne.s32.totalorder %s325, %s326
      %p338 = scmp.eq.s32.totalorder %s38, 1
      %p339 = por %p337, %p338
      %p341 = scmp.ne.s32.totalorder %s326, %s340
      %p342 = scmp.eq.s32.totalorder %s38, 0
      %p343 = por %p341, %p342
      %s345 = sadd.s32 %s344, 1
      %p348 = scmp.eq.s32.totalorder %s32, 1
      %p349 = scmp.ne.s32.totalorder %s344, %s346
      %p350 = scmp.eq.s32.totalorder %s32, 0
      %p351 = por %p349, %p350
      %p352 = scmp.ne.s32.totalorder %s344, %s346
      %p353 = scmp.eq.s32.totalorder %s37, 1
      %p354 = por %p352, %p353
      %p355 = scmp.ne.s32.totalorder %s346, %s347
      %p356 = scmp.eq.s32.totalorder %s37, 0
      %p357 = por %p355, %p356
      %p358 = scmp.ne.s32.totalorder %s346, %s347
      %p359 = scmp.eq.s32.totalorder %s38, 1
      %p360 = por %p358, %p359
      %p362 = scmp.ne.s32.totalorder %s347, %s361
      %p363 = scmp.eq.s32.totalorder %s38, 0
      %p364 = por %p362, %p363
      %s366 = sadd.s32 %s365, 1
      %p369 = scmp.eq.s32.totalorder %s32, 1
      %p370 = scmp.ne.s32.totalorder %s365, %s367
      %p371 = scmp.eq.s32.totalorder %s32, 0
      %p372 = por %p370, %p371
      %p373 = scmp.ne.s32.totalorder %s365, %s367
      %p374 = scmp.eq.s32.totalorder %s37, 1
      %p375 = por %p373, %p374
      %p376 = scmp.ne.s32.totalorder %s367, %s368
      %p377 = scmp.eq.s32.totalorder %s37, 0
      %p378 = por %p376, %p377
      %p379 = scmp.ne.s32.totalorder %s367, %s368
      %p380 = scmp.eq.s32.totalorder %s38, 1
      %p381 = por %p379, %p380
      %p383 = scmp.ne.s32.totalorder %s368, %s382
      %p384 = scmp.eq.s32.totalorder %s38, 0
      %p385 = por %p383, %p384
      %s387 = sadd.s32 %s386, 1
      %p390 = scmp.eq.s32.totalorder %s32, 1
      %p391 = scmp.ne.s32.totalorder %s386, %s388
      %p392 = scmp.eq.s32.totalorder %s32, 0
      %p393 = por %p391, %p392
      %p394 = scmp.ne.s32.totalorder %s386, %s388
      %p395 = scmp.eq.s32.totalorder %s37, 1
      %p396 = por %p394, %p395
      %p397 = scmp.ne.s32.totalorder %s388, %s389
      %p398 = scmp.eq.s32.totalorder %s37, 0
      %p399 = por %p397, %p398
      %p400 = scmp.ne.s32.totalorder %s388, %s389
      %p401 = scmp.eq.s32.totalorder %s38, 1
      %p402 = por %p400, %p401
      %p404 = scmp.ne.s32.totalorder %s389, %s403
      %p405 = scmp.eq.s32.totalorder %s38, 0
      %p406 = por %p404, %p405
      %s408 = sadd.s32 %s407, 1
      %p411 = scmp.eq.s32.totalorder %s32, 1
      %p412 = scmp.ne.s32.totalorder %s407, %s409
      %p413 = scmp.eq.s32.totalorder %s32, 0
      %p414 = por %p412, %p413
      %p415 = scmp.ne.s32.totalorder %s407, %s409
      %p416 = scmp.eq.s32.totalorder %s37, 1
      %p417 = por %p415, %p416
      %p418 = scmp.ne.s32.totalorder %s409, %s410
      %p419 = scmp.eq.s32.totalorder %s37, 0
      %p420 = por %p418, %p419
      %p421 = scmp.ne.s32.totalorder %s409, %s410
      %p422 = scmp.eq.s32.totalorder %s38, 1
      %p423 = por %p421, %p422
      %p425 = scmp.ne.s32.totalorder %s410, %s424
      %p426 = scmp.eq.s32.totalorder %s38, 0
      %p427 = por %p425, %p426
      %s429 = sadd.s32 %s428, 1
      %p432 = scmp.eq.s32.totalorder %s32, 1
      %p433 = scmp.ne.s32.totalorder %s428, %s430
      %p434 = scmp.eq.s32.totalorder %s32, 0
      %p435 = por %p433, %p434
      %p436 = scmp.ne.s32.totalorder %s428, %s430
      %p437 = scmp.eq.s32.totalorder %s37, 1
      %p438 = por %p436, %p437
      %p439 = scmp.ne.s32.totalorder %s430, %s431
      %p440 = scmp.eq.s32.totalorder %s37, 0
      %p441 = por %p439, %p440
      %p442 = scmp.ne.s32.totalorder %s430, %s431
      %p443 = scmp.eq.s32.totalorder %s38, 1
      %p444 = por %p442, %p443
      %p446 = scmp.ne.s32.totalorder %s431, %s445
      %p447 = scmp.eq.s32.totalorder %s38, 0
      %p448 = por %p446, %p447
      %s450 = sadd.s32 %s449, 1
      %p453 = scmp.eq.s32.totalorder %s32, 1
      %p454 = scmp.ne.s32.totalorder %s449, %s451
      %p455 = scmp.eq.s32.totalorder %s32, 0
      %p456 = por %p454, %p455
      %p457 = scmp.ne.s32.totalorder %s449, %s451
      %p458 = scmp.eq.s32.totalorder %s37, 1
      %p459 = por %p457, %p458
      %p460 = scmp.ne.s32.totalorder %s451, %s452
      %p461 = scmp.eq.s32.totalorder %s37, 0
      %p462 = por %p460, %p461
      %p463 = scmp.ne.s32.totalorder %s451, %s452
      %p464 = scmp.eq.s32.totalorder %s38, 1
      %p465 = por %p463, %p464
      %p467 = scmp.ne.s32.totalorder %s452, %s466
      %p468 = scmp.eq.s32.totalorder %s38, 0
      %p469 = por %p467, %p468
      %s470 = ssub.s32 %s32, %s39
      %p471 = scmp.eq.s32.totalorder %s470, 0
      %s473 = sadd.s32 %s472, 1
      %s474 = scalar_select %p471, %s472, %s473
      %p477 = pneg %p471
      %p478 = scmp.eq.s32.totalorder %s32, 1
      %p479 = por %p477, %p478
      %p480 = scmp.ne.s32.totalorder %s472, %s475
      %p481 = scmp.eq.s32.totalorder %s32, 0
      %p482 = por %p480, %p481
      %p483 = scmp.ne.s32.totalorder %s472, %s475
      %p484 = scmp.eq.s32.totalorder %s37, 1
      %p485 = por %p483, %p484
      %p486 = scmp.ne.s32.totalorder %s475, %s476
      %p487 = scmp.eq.s32.totalorder %s37, 0
      %p488 = por %p486, %p487
      %p489 = scmp.ne.s32.totalorder %s475, %s476
      %p490 = scmp.eq.s32.totalorder %s38, 1
      %p491 = por %p489, %p490
      %p493 = scmp.ne.s32.totalorder %s476, %s492
      %p494 = scmp.eq.s32.totalorder %s38, 0
      %p495 = por %p493, %p494
      %s496 = ssub.s32 %s32, %s39
      %p497 = scmp.eq.s32.totalorder %s496, 0
      %s499 = sadd.s32 %s498, 1
      %s500 = scalar_select %p497, %s498, %s499
      %p503 = pneg %p497
      %p504 = scmp.eq.s32.totalorder %s32, 1
      %p505 = por %p503, %p504
      %p506 = scmp.ne.s32.totalorder %s498, %s501
      %p507 = scmp.eq.s32.totalorder %s32, 0
      %p508 = por %p506, %p507
      %p509 = scmp.ne.s32.totalorder %s498, %s501
      %p510 = scmp.eq.s32.totalorder %s37, 1
      %p511 = por %p509, %p510
      %p512 = scmp.ne.s32.totalorder %s501, %s502
      %p513 = scmp.eq.s32.totalorder %s37, 0
      %p514 = por %p512, %p513
      %p515 = scmp.ne.s32.totalorder %s501, %s502
      %p516 = scmp.eq.s32.totalorder %s38, 1
      %p517 = por %p515, %p516
      %p519 = scmp.ne.s32.totalorder %s502, %s518
      %p520 = scmp.eq.s32.totalorder %s38, 0
      %p521 = por %p519, %p520
      %s522 = ssub.s32 %s32, %s39
      %p523 = scmp.eq.s32.totalorder %s522, 0
      %s525 = sadd.s32 %s524, 1
      %s526 = scalar_select %p523, %s524, %s525
      %p529 = pneg %p523
      %p530 = scmp.eq.s32.totalorder %s32, 1
      %p531 = por %p529, %p530
      %p532 = scmp.ne.s32.totalorder %s524, %s527
      %p533 = scmp.eq.s32.totalorder %s32, 0
      %p534 = por %p532, %p533
      %p535 = scmp.ne.s32.totalorder %s524, %s527
      %p536 = scmp.eq.s32.totalorder %s37, 1
      %p537 = por %p535, %p536
      %p538 = scmp.ne.s32.totalorder %s527, %s528
      %p539 = scmp.eq.s32.totalorder %s37, 0
      %p540 = por %p538, %p539
      %p541 = scmp.ne.s32.totalorder %s527, %s528
      %p542 = scmp.eq.s32.totalorder %s38, 1
      %p543 = por %p541, %p542
      %p545 = scmp.ne.s32.totalorder %s528, %s544
      %p546 = scmp.eq.s32.totalorder %s38, 0
      %p547 = por %p545, %p546
      %p548 = scmp.le.s32.totalorder 1, %s32
      %p549 = scmp.lt.s32.totalorder %s32, 3
      %p550 = pnand %p548, %p549
      %p551 = pneg %p550
      // Predicated region
      $region9: #{_decoder_apply.1} parent=5 // pred_check
        _
      $region10: #{_decoder_apply.1} parent=5 // pred_check_branch
        %553 = sbr.rel (%p550) target = $region12
      $region11: #{_decoder_apply.1} parent=5 // pred_region
        %s554 = ssub.s32 %s32, 1
        // Predicated region
        $region13: #{_decoder_apply.1} parent=11 // pred_check
          %p555 = pneg %p105
        $region14: #{_decoder_apply.1} parent=11 // pred_check_branch
          %557 = sbr.rel (%p555) target = $region16
        $region15: #{_decoder_apply.1} parent=11 // pred_region
          _
        $region16: #{_decoder_apply.1} parent=11 // pred_fallthru
          _
        // Predicated region
        $region17: #{_decoder_apply.1} parent=11 // pred_check
          %p558 = pneg %p126
        $region18: #{_decoder_apply.1} parent=11 // pred_check_branch
          %560 = sbr.rel (%p558) target = $region20
        $region19: #{_decoder_apply.1} parent=11 // pred_region
          _
        $region20: #{_decoder_apply.1} parent=11 // pred_fallthru
          _
        // Predicated region
        $region21: #{_decoder_apply.1} parent=11 // pred_check
          %p561 = pneg %p147
        $region22: #{_decoder_apply.1} parent=11 // pred_check_branch
          %563 = sbr.rel (%p561) target = $region24
        $region23: #{_decoder_apply.1} parent=11 // pred_region
          _
        $region24: #{_decoder_apply.1} parent=11 // pred_fallthru
          _
        // Predicated region
        $region25: #{_decoder_apply.1} parent=11 // pred_check
          %p564 = pneg %p168
        $region26: #{_decoder_apply.1} parent=11 // pred_check_branch
          %566 = sbr.rel (%p564) target = $region28
        $region27: #{_decoder_apply.1} parent=11 // pred_region
          _
        $region28: #{_decoder_apply.1} parent=11 // pred_fallthru
          _
        // Predicated region
        $region29: #{_decoder_apply.1} parent=11 // pred_check
          %p567 = pneg %p189
        $region30: #{_decoder_apply.1} parent=11 // pred_check_branch
          %569 = sbr.rel (%p567) target = $region32
        $region31: #{_decoder_apply.1} parent=11 // pred_region
          _
        $region32: #{_decoder_apply.1} parent=11 // pred_fallthru
          _
        // Predicated region
        $region33: #{_decoder_apply.1} parent=11 // pred_check
          %p570 = pneg %p210
        $region34: #{_decoder_apply.1} parent=11 // pred_check_branch
          %572 = sbr.rel (%p570) target = $region36
        $region35: #{_decoder_apply.1} parent=11 // pred_region
          _
        $region36: #{_decoder_apply.1} parent=11 // pred_fallthru
          _
        // Predicated region
        $region37: #{_decoder_apply.1} parent=11 // pred_check
          %p573 = pneg %p231
        $region38: #{_decoder_apply.1} parent=11 // pred_check_branch
          %575 = sbr.rel (%p573) target = $region40
        $region39: #{_decoder_apply.1} parent=11 // pred_region
          _
        $region40: #{_decoder_apply.1} parent=11 // pred_fallthru
          _
        // Predicated region
        $region41: #{_decoder_apply.1} parent=11 // pred_check
          %p576 = pneg %p252
        $region42: #{_decoder_apply.1} parent=11 // pred_check_branch
          %578 = sbr.rel (%p576) target = $region44
        $region43: #{_decoder_apply.1} parent=11 // pred_region
          _
        $region44: #{_decoder_apply.1} parent=11 // pred_fallthru
          _
        // Predicated region
        $region45: #{_decoder_apply.1} parent=11 // pred_check
          %p579 = pneg %p273
        $region46: #{_decoder_apply.1} parent=11 // pred_check_branch
          %581 = sbr.rel (%p579) target = $region48
        $region47: #{_decoder_apply.1} parent=11 // pred_region
          _
        $region48: #{_decoder_apply.1} parent=11 // pred_fallthru
          _
        // Predicated region
        $region49: #{_decoder_apply.1} parent=11 // pred_check
          %p582 = pneg %p294
        $region50: #{_decoder_apply.1} parent=11 // pred_check_branch
          %584 = sbr.rel (%p582) target = $region52
        $region51: #{_decoder_apply.1} parent=11 // pred_region
          _
        $region52: #{_decoder_apply.1} parent=11 // pred_fallthru
          _
        // Predicated region
        $region53: #{_decoder_apply.1} parent=11 // pred_check
          %p585 = pneg %p315
        $region54: #{_decoder_apply.1} parent=11 // pred_check_branch
          %587 = sbr.rel (%p585) target = $region56
        $region55: #{_decoder_apply.1} parent=11 // pred_region
          _
        $region56: #{_decoder_apply.1} parent=11 // pred_fallthru
          _
        // Predicated region
        $region57: #{_decoder_apply.1} parent=11 // pred_check
          %p588 = pneg %p336
        $region58: #{_decoder_apply.1} parent=11 // pred_check_branch
          %590 = sbr.rel (%p588) target = $region60
        $region59: #{_decoder_apply.1} parent=11 // pred_region
          _
        $region60: #{_decoder_apply.1} parent=11 // pred_fallthru
          _
        // Predicated region
        $region61: #{_decoder_apply.1} parent=11 // pred_check
          %p591 = pneg %p357
        $region62: #{_decoder_apply.1} parent=11 // pred_check_branch
          %593 = sbr.rel (%p591) target = $region64
        $region63: #{_decoder_apply.1} parent=11 // pred_region
          _
        $region64: #{_decoder_apply.1} parent=11 // pred_fallthru
          _
        // Predicated region
        $region65: #{_decoder_apply.1} parent=11 // pred_check
          %p594 = pneg %p378
        $region66: #{_decoder_apply.1} parent=11 // pred_check_branch
          %596 = sbr.rel (%p594) target = $region68
        $region67: #{_decoder_apply.1} parent=11 // pred_region
          _
        $region68: #{_decoder_apply.1} parent=11 // pred_fallthru
          _
        // Predicated region
        $region69: #{_decoder_apply.1} parent=11 // pred_check
          %p597 = pneg %p399
        $region70: #{_decoder_apply.1} parent=11 // pred_check_branch
          %599 = sbr.rel (%p597) target = $region72
        $region71: #{_decoder_apply.1} parent=11 // pred_region
          _
        $region72: #{_decoder_apply.1} parent=11 // pred_fallthru
          _
        // Predicated region
        $region73: #{_decoder_apply.1} parent=11 // pred_check
          %p600 = pneg %p420
        $region74: #{_decoder_apply.1} parent=11 // pred_check_branch
          %602 = sbr.rel (%p600) target = $region76
        $region75: #{_decoder_apply.1} parent=11 // pred_region
          _
        $region76: #{_decoder_apply.1} parent=11 // pred_fallthru
          _
        // Predicated region
        $region77: #{_decoder_apply.1} parent=11 // pred_check
          %p603 = pneg %p441
        $region78: #{_decoder_apply.1} parent=11 // pred_check_branch
          %605 = sbr.rel (%p603) target = $region80
        $region79: #{_decoder_apply.1} parent=11 // pred_region
          _
        $region80: #{_decoder_apply.1} parent=11 // pred_fallthru
          _
        // Predicated region
        $region81: #{_decoder_apply.1} parent=11 // pred_check
          %p606 = pneg %p462
        $region82: #{_decoder_apply.1} parent=11 // pred_check_branch
          %608 = sbr.rel (%p606) target = $region84
        $region83: #{_decoder_apply.1} parent=11 // pred_region
          _
        $region84: #{_decoder_apply.1} parent=11 // pred_fallthru
          _
      $region12: #{_decoder_apply.1} parent=5 // pred_fallthru
        _
      %p609 = scmp.lt.s32.totalorder %s32, 2
      // Predicated region
      $region85: #{_decoder_apply.1} parent=5 // pred_check
        %p610 = pneg %p609
      $region86: #{_decoder_apply.1} parent=5 // pred_check_branch
        %612 = sbr.rel (%p610) target = $region88
      $region87: #{_decoder_apply.1} parent=5 // pred_region
        // Predicated region
        $region89: #{_decoder_apply.1} parent=87 // pred_check
          %p613 = pneg %p52
        $region90: #{_decoder_apply.1} parent=87 // pred_check_branch
          %615 = sbr.rel (%p613) target = $region92
        $region91: #{_decoder_apply.1} parent=87 // pred_region
          %p616 = scmp.lt.s32.totalorder %s32, 1
          %s617 = scalar_select %p616, %s32, 1
          %s618 = smul.addr %s617, 8
          %s619 = scalar_lea.vmem %s0, %s618
        $region92: #{_decoder_apply.1} parent=87 // pred_fallthru
          _
        // Predicated region
        $region93: #{_decoder_apply.1} parent=87 // pred_check
          %p620 = pneg %p78
        $region94: #{_decoder_apply.1} parent=87 // pred_check_branch
          %622 = sbr.rel (%p620) target = $region96
        $region95: #{_decoder_apply.1} parent=87 // pred_region
          %p623 = scmp.lt.s32.totalorder %s32, 1
          %s624 = scalar_select %p623, %s32, 1
          %s625 = smul.addr %s624, 4
          %s626 = scalar_lea.vmem %s1, %s625
        $region96: #{_decoder_apply.1} parent=87 // pred_fallthru
          _
      $region88: #{_decoder_apply.1} parent=5 // pred_fallthru
        _
      %p627 = scmp.le.s32.totalorder 1, %s32
      %p628 = scmp.lt.s32.totalorder %s32, 3
      %p629 = pnand %p627, %p628
      %p630 = pneg %p629
      // Predicated region
      $region97: #{_decoder_apply.1} parent=5 // pred_check
        _
      $region98: #{_decoder_apply.1} parent=5 // pred_check_branch
        %632 = sbr.rel (%p629) target = $region100
      $region99: #{_decoder_apply.1} parent=5 // pred_region
        %s633 = ssub.s32 %s32, 1
        %p634 = scmp.lt.s32.totalorder %s37, 1
        %s635 = scalar_select %p634, %s37, 1
        %s636 = smul.addr %s635, 8
        %s637 = scalar_lea.vmem %s0, %s636
        %p638 = pneg %p58
        %p639 = pneg %p55
        %p640 = scmp.lt.s32.totalorder %s37, 1
        %s641 = scalar_select %p640, %s37, 1
        %s642 = smul.addr %s641, 4
        %s643 = scalar_lea.vmem %s1, %s642
        %p644 = pneg %p84
        %p645 = pneg %p81
        %p646 = pneg %p105
        %p647 = pneg %p102
        %p648 = pneg %p126
        %p649 = pneg %p123
        %p650 = pneg %p147
        %p651 = pneg %p144
        %p652 = pneg %p168
        %p653 = pneg %p165
        %p654 = pneg %p189
        %p655 = pneg %p186
        %p656 = pneg %p210
        %p657 = pneg %p207
        %p658 = pneg %p231
        %p659 = pneg %p228
        %p660 = pneg %p252
        %p661 = pneg %p249
        %p662 = pneg %p273
        %p663 = pneg %p270
        %p664 = pneg %p294
        %p665 = pneg %p291
        %p666 = pneg %p315
        %p667 = pneg %p312
        %p668 = pneg %p336
        %p669 = pneg %p333
        %p670 = pneg %p357
        %p671 = pneg %p354
        %p672 = pneg %p378
        %p673 = pneg %p375
        %p674 = pneg %p399
        %p675 = pneg %p396
        %p676 = pneg %p420
        %p677 = pneg %p417
        %p678 = pneg %p441
        %p679 = pneg %p438
        %p680 = pneg %p462
        %p681 = pneg %p459
        %p682 = pneg %p488
        %p683 = pneg %p485
        %s684 = sand.u32 %s475, 1
        %s685 = scalar_lea.sflag [#allocation3], %s684
        %s686 = sand.u32 %s475, 1
        %s687 = smul.addr %s686, 16
        %s688 = scalar_lea.vmem [#allocation2], %s687
        %p689 = pneg %p514
        %p690 = pneg %p511
        %p691 = scmp.lt.s32.totalorder %s37, 1
        %s692 = scalar_select %p691, %s37, 1
        %s693 = smul.addr %s692, 2
        %s694 = smul.addr %s693, 4
        %s695 = scalar_lea.vmem %s21, %s694
        %p696 = pneg %p540
        %p697 = pneg %p537
        %p698 = scmp.lt.s32.totalorder %s37, 1
        %s699 = scalar_select %p698, %s37, 1
        %s700 = smul.addr %s699, 2
        %s701 = smul.addr %s700, 4
        %s702 = scalar_lea.vmem %s22, %s701
        %p703 = scmp.lt.s32.totalorder %s37, 1
        %s704 = scalar_select %p703, %s37, 1
        %s705 = smul.addr %s704, 8
        %s706 = scalar_lea.vmem %s0, %s705
        %p707 = scmp.lt.s32.totalorder %s37, 1
        %s708 = scalar_select %p707, %s37, 1
        %s709 = smul.addr %s708, 4
        %s710 = scalar_lea.vmem %s1, %s709
        %p711 = scmp.lt.s32.totalorder %s37, 1
        %s712 = scalar_select %p711, %s37, 1
        %s713 = smul.addr %s712, 2
        %s714 = smul.addr %s713, 4
        %s715 = scalar_lea.vmem %s21, %s714
        %p716 = scmp.lt.s32.totalorder %s37, 1
        %s717 = scalar_select %p716, %s37, 1
        %s718 = smul.addr %s717, 2
        %s719 = smul.addr %s718, 4
        %s720 = scalar_lea.vmem %s22, %s719
        %v722 = vld [vmem:[%s706] sm:$0xff]
        %v723 = vlaneseq
        %v724 = vand.u32 %v723, 127
        %v725 = vadd.s32 %v724, 128
        %726 = vset.pattern.permute.xlu0 0
        %727 = vperm.xlu0 %726, %v722
        %v728 = vpop.permute.xlu0 %727
        %vm729 = vcmp.eq.s32.totalorder %v724, %v728
        %vm730 = vcmp.eq.s32.totalorder %v725, %v728
        %v731 = vsel %vm729, 1.0, 0.0
        %v732 = vsel %vm730, 1.0, 0.0
        %v733 = vpack.c.bf16 %v731, %v731
        %v734 = vpack.c.bf16 %v732, %v732
        %v735 = vld [vmem:[%s2] sm:$0xf]
        %v736 = vld [vmem:[%s2 + $0x4] sm:$0xf]
        %v737 = vld [vmem:[%s2 + $0x8] sm:$0xf]
        %v738 = vld [vmem:[%s2 + $0xc] sm:$0xf]
        %v739 = vld [vmem:[%s2 + $0x10] sm:$0xf]
        %v740 = vld [vmem:[%s2 + $0x14] sm:$0xf]
        %v741 = vld [vmem:[%s2 + $0x18] sm:$0xf]
        %v742 = vld [vmem:[%s2 + $0x1c] sm:$0xf]
        %v743 = vld [vmem:[%s2 + $0x20] sm:$0xf]
        %v744 = vld [vmem:[%s2 + $0x24] sm:$0xf]
        %v745 = vld [vmem:[%s2 + $0x28] sm:$0xf]
        %v746 = vld [vmem:[%s2 + $0x2c] sm:$0xf]
        %v747 = vld [vmem:[%s2 + $0x30] sm:$0xf]
        %v748 = vld [vmem:[%s2 + $0x34] sm:$0xf]
        %v749 = vld [vmem:[%s2 + $0x38] sm:$0xf]
        %v750 = vld [vmem:[%s2 + $0x3c] sm:$0xf]
        %v751 = vld [vmem:[%s2 + $0x40] sm:$0xf]
        %v752 = vld [vmem:[%s2 + $0x44] sm:$0xf]
        %v753 = vld [vmem:[%s2 + $0x48] sm:$0xf]
        %v754 = vld [vmem:[%s2 + $0x4c] sm:$0xf]
        %v755 = vld [vmem:[%s2 + $0x50] sm:$0xf]
        %v756 = vld [vmem:[%s2 + $0x54] sm:$0xf]
        %v757 = vld [vmem:[%s2 + $0x58] sm:$0xf]
        %v758 = vld [vmem:[%s2 + $0x5c] sm:$0xf]
        %v759 = vld [vmem:[%s2 + $0x60] sm:$0xf]
        %v760 = vld [vmem:[%s2 + $0x64] sm:$0xf]
        %v761 = vld [vmem:[%s2 + $0x68] sm:$0xf]
        %v762 = vld [vmem:[%s2 + $0x6c] sm:$0xf]
        %v763 = vld [vmem:[%s2 + $0x70] sm:$0xf]
        %v764 = vld [vmem:[%s2 + $0x74] sm:$0xf]
        %v765 = vld [vmem:[%s2 + $0x78] sm:$0xf]
        %v766 = vld [vmem:[%s2 + $0x7c] sm:$0xf]
        %v799 = vunpack.c.l.b16 %v735
        %v800 = vunpack.c.l.b16 %v736
        %v801 = vunpack.c.l.b16 %v737
        %v802 = vunpack.c.l.b16 %v738
        %v803 = vunpack.c.l.b16 %v739
        %v804 = vunpack.c.l.b16 %v740
        %v805 = vunpack.c.l.b16 %v741
        %v806 = vunpack.c.l.b16 %v742
        %v807 = vunpack.c.l.b16 %v743
        %v808 = vunpack.c.l.b16 %v744
        %v809 = vunpack.c.l.b16 %v745
        %v810 = vunpack.c.l.b16 %v746
        %v811 = vunpack.c.l.b16 %v747
        %v812 = vunpack.c.l.b16 %v748
        %v813 = vunpack.c.l.b16 %v749
        %v814 = vunpack.c.l.b16 %v750
        %v815 = vunpack.c.l.b16 %v751
        %v816 = vunpack.c.l.b16 %v752
        %v817 = vunpack.c.l.b16 %v753
        %v818 = vunpack.c.l.b16 %v754
        %v819 = vunpack.c.l.b16 %v755
        %v820 = vunpack.c.l.b16 %v756
        %v821 = vunpack.c.l.b16 %v757
        %v822 = vunpack.c.l.b16 %v758
        %v823 = vunpack.c.l.b16 %v759
        %v824 = vunpack.c.l.b16 %v760
        %v825 = vunpack.c.l.b16 %v761
        %v826 = vunpack.c.l.b16 %v762
        %v827 = vunpack.c.l.b16 %v763
        %v828 = vunpack.c.l.b16 %v764
        %v829 = vunpack.c.l.b16 %v765
        %v830 = vunpack.c.l.b16 %v766
        %v831 = vpack.c.b16 %v800, %v799
        %v832 = vpack.c.b16 %v802, %v801
        %v833 = vpack.c.b16 %v804, %v803
        %v834 = vpack.c.b16 %v806, %v805
        %v835 = vpack.c.b16 %v808, %v807
        %v836 = vpack.c.b16 %v810, %v809
        %v837 = vpack.c.b16 %v812, %v811
        %v838 = vpack.c.b16 %v814, %v813
        %v839 = vpack.c.b16 %v816, %v815
        %v840 = vpack.c.b16 %v818, %v817
        %v841 = vpack.c.b16 %v820, %v819
        %v842 = vpack.c.b16 %v822, %v821
        %v843 = vpack.c.b16 %v824, %v823
        %v844 = vpack.c.b16 %v826, %v825
        %v845 = vpack.c.b16 %v828, %v827
        %v846 = vpack.c.b16 %v830, %v829
        %863 = vmatprep.subr.bf16.mxu0 0
        %864 = vmatpush1.bf16.msra.mxu0 %v831
        %865 = vmatprep.subr.bf16.mxu0 0
        %866 = vmatpush1.bf16.msra.mxu0 %v832
        %867 = vmatprep.subr.bf16.mxu0 0
        %868 = vmatpush1.bf16.msra.mxu0 %v833
        %869 = vmatprep.subr.bf16.mxu0 0
        %870 = vmatpush1.bf16.msra.mxu0 %v834
        %871 = vmatprep.subr.bf16.mxu0 0
        %872 = vmatpush1.bf16.msra.mxu0 %v835
        %873 = vmatprep.subr.bf16.mxu0 0
        %874 = vmatpush1.bf16.msra.mxu0 %v836
        %875 = vmatprep.subr.bf16.mxu0 0
        %876 = vmatpush1.bf16.msra.mxu0 %v837
        %877 = vmatprep.subr.bf16.mxu0 0
        %878 = vmatpush1.bf16.msra.mxu0 %v838
        %879 = vmatprep.subr.bf16.mxu0 0
        %880 = vmatpush1.bf16.msra.mxu0 %v839
        %881 = vmatprep.subr.bf16.mxu0 0
        %882 = vmatpush1.bf16.msra.mxu0 %v840
        %883 = vmatprep.subr.bf16.mxu0 0
        %884 = vmatpush1.bf16.msra.mxu0 %v841
        %885 = vmatprep.subr.bf16.mxu0 0
        %886 = vmatpush1.bf16.msra.mxu0 %v842
        %887 = vmatprep.subr.bf16.mxu0 0
        %888 = vmatpush1.bf16.msra.mxu0 %v843
        %889 = vmatprep.subr.bf16.mxu0 0
        %890 = vmatpush1.bf16.msra.mxu0 %v844
        %891 = vmatprep.subr.bf16.mxu0 0
        %892 = vmatpush1.bf16.msra.mxu0 %v845
        %893 = vmatprep.subr.bf16.mxu0 0
        %894 = vmatpush1.bf16.msra.mxu0 %v846
        %895 = vmatprep.mubr.bf16.mxu0 %v734
        %896 = vmatmul.mubr.bf16.gmra.mrb[0].mxu0 %v733
        %v897 = vpop.f32.mrb[0].mxu0
        %v898 = vadd.f32 0.0, %v897
        %v899 = vpop.f32.mrb[0].mxu0
        %v900 = vpop.f32.mrb[0].mxu0
        %v901 = vpop.f32.mrb[0].mxu0
        %902 = vdwg.mxu0
        %v903 = vld [vmem:[%s710] sm:$0xf]
        %v904 = vlaneseq
        %v905 = vshrl.u32 %v904, 7
        %vm906 = vcmp.ge.s32.totalorder %v905, %v724
        %v907 = vsel %vm906, 0.0, -1e+09
        %v908 = vld [vmem:[%s5] sm:$0x1]
        %v909 = vmul.f32 %v898, %v898
        %vm910 = vcmask 261120
        %v911 = vsel %vm910, %v909, 0.0
        %912 = vadd.xlane.f32.xlu0 %v911
        %v913 = vpop.xlane.xlu0 %912
        %v914 = vrcp.pop 32.0
        %v915 = vmul.f32 %v913, %v914
        %v916 = vadd.f32 %v915, 1e-06
        %v917 = vrsqrt.pop %v916
        %v918 = vmul.f32 %v898, %v917
        %v920 = vlaneseq
        %v921 = vshrl.u32 %v920, 7
        %v922 = vsub.s32 0, %v921
        %v923 = vrot.slane %v908, %v922
        %v925 = vmul.f32 %v918, %v923
        %v926 = vpack.c.bf16 %v925, %v925
        %v927 = vld [vmem:[%s6] sm:$0xf]
        %v928 = vld [vmem:[%s6 + $0x4] sm:$0xf]
        %v929 = vld [vmem:[%s6 + $0x8] sm:$0xf]
        %v930 = vld [vmem:[%s6 + $0xc] sm:$0xf]
        %v935 = vunpack.c.l.b16 %v927
        %v936 = vunpack.c.l.b16 %v928
        %v937 = vunpack.c.l.b16 %v929
        %v938 = vunpack.c.l.b16 %v930
        %v939 = vpack.c.b16 %v936, %v935
        %v940 = vpack.c.b16 %v938, %v937
        %v944 = vsel %vm910, %v926, 0
        %946 = vmatprep.subr.bf16.mxu0 0
        %947 = vmatpush1.bf16.msra.mxu0 %v939
        %948 = vmatprep.subr.bf16.mxu0 0
        %949 = vmatpush1.bf16.msra.mxu0 %v940
        %950 = vmatprep.subr.bf16.mxu0 0
        %951 = vmatpush1.bf16.msra.mxu0 0
        %952 = vmatprep.subr.bf16.mxu0 0
        %953 = vmatpush1.bf16.msra.mxu0 0
        %954 = vmatprep.subr.bf16.mxu0 0
        %955 = vmatpush1.bf16.msra.mxu0 0
        %956 = vmatprep.subr.bf16.mxu0 0
        %957 = vmatpush1.bf16.msra.mxu0 0
        %958 = vmatprep.subr.bf16.mxu0 0
        %959 = vmatpush1.bf16.msra.mxu0 0
        %960 = vmatprep.subr.bf16.mxu0 0
        %961 = vmatpush1.bf16.msra.mxu0 0
        %962 = vmatprep.subr.bf16.mxu0 0
        %963 = vmatpush1.bf16.msra.mxu0 0
        %964 = vmatprep.subr.bf16.mxu0 0
        %965 = vmatpush1.bf16.msra.mxu0 0
        %966 = vmatprep.subr.bf16.mxu0 0
        %967 = vmatpush1.bf16.msra.mxu0 0
        %968 = vmatprep.subr.bf16.mxu0 0
        %969 = vmatpush1.bf16.msra.mxu0 0
        %970 = vmatprep.subr.bf16.mxu0 0
        %971 = vmatpush1.bf16.msra.mxu0 0
        %972 = vmatprep.subr.bf16.mxu0 0
        %973 = vmatpush1.bf16.msra.mxu0 0
        %974 = vmatprep.subr.bf16.mxu0 0
        %975 = vmatpush1.bf16.msra.mxu0 0
        %976 = vmatprep.subr.bf16.mxu0 0
        %977 = vmatpush1.bf16.msra.mxu0 0
        %978 = vmatprep.mubr.bf16.mxu0 0
        %979 = vmatmul.mubr.bf16.gmra.mrb[0].mxu0 %v944
        %v980 = vpop.f32.mrb[0].mxu0
        %v981 = vadd.f32 0.0, %v980
        %v982 = vpop.f32.mrb[0].mxu0
        %v983 = vpop.f32.mrb[0].mxu0
        %v984 = vpop.f32.mrb[0].mxu0
        %985 = vdwg.mxu0
        %v986 = vpack.c.bf16 %v981, %v981
        %987 = vst [vmem:[%s715] sm:$0xf] %v986
        %v988 = vld [vmem:[%s7] sm:$0xf]
        %v989 = vld [vmem:[%s7 + $0x4] sm:$0xf]
        %v990 = vld [vmem:[%s7 + $0x8] sm:$0xf]
        %v991 = vld [vmem:[%s7 + $0xc] sm:$0xf]
        %v992 = vld [vmem:[%s7 + $0x10] sm:$0xf]
        %v993 = vld [vmem:[%s7 + $0x14] sm:$0xf]
        %v994 = vld [vmem:[%s7 + $0x18] sm:$0xf]
        %v995 = vld [vmem:[%s7 + $0x1c] sm:$0xf]
        %v996 = vld [vmem:[%s7 + $0x20] sm:$0xf]
        %v997 = vld [vmem:[%s7 + $0x24] sm:$0xf]
        %v998 = vld [vmem:[%s7 + $0x28] sm:$0xf]
        %v999 = vld [vmem:[%s7 + $0x2c] sm:$0xf]
        %v1000 = vld [vmem:[%s7 + $0x30] sm:$0xf]
        %v1001 = vld [vmem:[%s7 + $0x34] sm:$0xf]
        %v1002 = vld [vmem:[%s7 + $0x38] sm:$0xf]
        %v1003 = vld [vmem:[%s7 + $0x3c] sm:$0xf]
        %v1008 = vunpack.c.l.b16 %v988
        %v1009 = vunpack.c.l.b16 %v989
        %v1010 = vunpack.c.l.b16 %v990
        %v1011 = vunpack.c.l.b16 %v991
        %v1012 = vpack.c.b16 %v1009, %v1008
        %v1013 = vpack.c.b16 %v1011, %v1010
        %1016 = vmatprep.subr.bf16.mxu0 0
        %1017 = vmatpush1.bf16.msra.mxu0 %v1012
        %1018 = vmatprep.subr.bf16.mxu0 0
        %1019 = vmatpush1.bf16.msra.mxu0 %v1013
        %1020 = vmatprep.subr.bf16.mxu0 0
        %1021 = vmatpush1.bf16.msra.mxu0 0
        %1022 = vmatprep.subr.bf16.mxu0 0
        %1023 = vmatpush1.bf16.msra.mxu0 0
        %1024 = vmatprep.subr.bf16.mxu0 0
        %1025 = vmatpush1.bf16.msra.mxu0 0
        %1026 = vmatprep.subr.bf16.mxu0 0
        %1027 = vmatpush1.bf16.msra.mxu0 0
        %1028 = vmatprep.subr.bf16.mxu0 0
        %1029 = vmatpush1.bf16.msra.mxu0 0
        %1030 = vmatprep.subr.bf16.mxu0 0
        %1031 = vmatpush1.bf16.msra.mxu0 0
        %1032 = vmatprep.subr.bf16.mxu0 0
        %1033 = vmatpush1.bf16.msra.mxu0 0
        %1034 = vmatprep.subr.bf16.mxu0 0
        %1035 = vmatpush1.bf16.msra.mxu0 0
        %1036 = vmatprep.subr.bf16.mxu0 0
        %1037 = vmatpush1.bf16.msra.mxu0 0
        %1038 = vmatprep.subr.bf16.mxu0 0
        %1039 = vmatpush1.bf16.msra.mxu0 0
        %1040 = vmatprep.subr.bf16.mxu0 0
        %1041 = vmatpush1.bf16.msra.mxu0 0
        %1042 = vmatprep.subr.bf16.mxu0 0
        %1043 = vmatpush1.bf16.msra.mxu0 0
        %1044 = vmatprep.subr.bf16.mxu0 0
        %1045 = vmatpush1.bf16.msra.mxu0 0
        %1046 = vmatprep.subr.bf16.mxu0 0
        %1047 = vmatpush1.bf16.msra.mxu0 0
        %1048 = vmatprep.mubr.bf16.mxu0 0
        %1049 = vmatmul.mubr.bf16.gmra.mrb[0].mxu0 %v944
        %v1050 = vpop.f32.mrb[0].mxu0
        %v1051 = vadd.f32 0.0, %v1050
        %v1052 = vpop.f32.mrb[0].mxu0
        %v1053 = vpop.f32.mrb[0].mxu0
        %v1054 = vpop.f32.mrb[0].mxu0
        %1055 = vdwg.mxu0
        %v1060 = vunpack.c.l.b16 %v992
        %v1061 = vunpack.c.l.b16 %v993
        %v1062 = vunpack.c.l.b16 %v994
        %v1063 = vunpack.c.l.b16 %v995
        %v1064 = vpack.c.b16 %v1061, %v1060
        %v1065 = vpack.c.b16 %v1063, %v1062
        %1068 = vmatprep.subr.bf16.mxu0 0
        %1069 = vmatpush1.bf16.msra.mxu0 %v1064
        %1070 = vmatprep.subr.bf16.mxu0 0
        %1071 = vmatpush1.bf16.msra.mxu0 %v1065
        %1072 = vmatprep.subr.bf16.mxu0 0
        %1073 = vmatpush1.bf16.msra.mxu0 0
        %1074 = vmatprep.subr.bf16.mxu0 0
        %1075 = vmatpush1.bf16.msra.mxu0 0
        %1076 = vmatprep.subr.bf16.mxu0 0
        %1077 = vmatpush1.bf16.msra.mxu0 0
        %1078 = vmatprep.subr.bf16.mxu0 0
        %1079 = vmatpush1.bf16.msra.mxu0 0
        %1080 = vmatprep.subr.bf16.mxu0 0
        %1081 = vmatpush1.bf16.msra.mxu0 0
        %1082 = vmatprep.subr.bf16.mxu0 0
        %1083 = vmatpush1.bf16.msra.mxu0 0
        %1084 = vmatprep.subr.bf16.mxu0 0
        %1085 = vmatpush1.bf16.msra.mxu0 0
        %1086 = vmatprep.subr.bf16.mxu0 0
        %1087 = vmatpush1.bf16.msra.mxu0 0
        %1088 = vmatprep.subr.bf16.mxu0 0
        %1089 = vmatpush1.bf16.msra.mxu0 0
        %1090 = vmatprep.subr.bf16.mxu0 0
        %1091 = vmatpush1.bf16.msra.mxu0 0
        %1092 = vmatprep.subr.bf16.mxu0 0
        %1093 = vmatpush1.bf16.msra.mxu0 0
        %1094 = vmatprep.subr.bf16.mxu0 0
        %1095 = vmatpush1.bf16.msra.mxu0 0
        %1096 = vmatprep.subr.bf16.mxu0 0
        %1097 = vmatpush1.bf16.msra.mxu0 0
        %1098 = vmatprep.subr.bf16.mxu0 0
        %1099 = vmatpush1.bf16.msra.mxu0 0
        %1100 = vmatprep.mubr.bf16.mxu0 0
        %1101 = vmatmul.mubr.bf16.gmra.mrb[0].mxu0 %v944
        %v1102 = vpop.f32.mrb[0].mxu0
        %v1103 = vadd.f32 0.0, %v1102
        %v1104 = vpop.f32.mrb[0].mxu0
        %v1105 = vpop.f32.mrb[0].mxu0
        %v1106 = vpop.f32.mrb[0].mxu0
        %1107 = vdwg.mxu0
        %v1112 = vunpack.c.l.b16 %v996
        %v1113 = vunpack.c.l.b16 %v997
        %v1114 = vunpack.c.l.b16 %v998
        %v1115 = vunpack.c.l.b16 %v999
        %v1116 = vpack.c.b16 %v1113, %v1112
        %v1117 = vpack.c.b16 %v1115, %v1114
        %1120 = vmatprep.subr.bf16.mxu0 0
        %1121 = vmatpush1.bf16.msra.mxu0 %v1116
        %1122 = vmatprep.subr.bf16.mxu0 0
        %1123 = vmatpush1.bf16.msra.mxu0 %v1117
        %1124 = vmatprep.subr.bf16.mxu0 0
        %1125 = vmatpush1.bf16.msra.mxu0 0
        %1126 = vmatprep.subr.bf16.mxu0 0
        %1127 = vmatpush1.bf16.msra.mxu0 0
        %1128 = vmatprep.subr.bf16.mxu0 0
        %1129 = vmatpush1.bf16.msra.mxu0 0
        %1130 = vmatprep.subr.bf16.mxu0 0
        %1131 = vmatpush1.bf16.msra.mxu0 0
        %1132 = vmatprep.subr.bf16.mxu0 0
        %1133 = vmatpush1.bf16.msra.mxu0 0
        %1134 = vmatprep.subr.bf16.mxu0 0
        %1135 = vmatpush1.bf16.msra.mxu0 0
        %1136 = vmatprep.subr.bf16.mxu0 0
        %1137 = vmatpush1.bf16.msra.mxu0 0
        %1138 = vmatprep.subr.bf16.mxu0 0
        %1139 = vmatpush1.bf16.msra.mxu0 0
        %1140 = vmatprep.subr.bf16.mxu0 0
        %1141 = vmatpush1.bf16.msra.mxu0 0
        %1142 = vmatprep.subr.bf16.mxu0 0
        %1143 = vmatpush1.bf16.msra.mxu0 0
        %1144 = vmatprep.subr.bf16.mxu0 0
        %1145 = vmatpush1.bf16.msra.mxu0 0
        %1146 = vmatprep.subr.bf16.mxu0 0
        %1147 = vmatpush1.bf16.msra.mxu0 0
        %1148 = vmatprep.subr.bf16.mxu0 0
        %1149 = vmatpush1.bf16.msra.mxu0 0
        %1150 = vmatprep.subr.bf16.mxu0 0
        %1151 = vmatpush1.bf16.msra.mxu0 0
        %1152 = vmatprep.mubr.bf16.mxu0 0
        %1153 = vmatmul.mubr.bf16.gmra.mrb[0].mxu0 %v944
        %v1154 = vpop.f32.mrb[0].mxu0
        %v1155 = vadd.f32 0.0, %v1154
        %v1156 = vpop.f32.mrb[0].mxu0
        %v1157 = vpop.f32.mrb[0].mxu0
        %v1158 = vpop.f32.mrb[0].mxu0
        %1159 = vdwg.mxu0
        %v1164 = vunpack.c.l.b16 %v1000
        %v1165 = vunpack.c.l.b16 %v1001
        %v1166 = vunpack.c.l.b16 %v1002
        %v1167 = vunpack.c.l.b16 %v1003
        %v1168 = vpack.c.b16 %v1165, %v1164
        %v1169 = vpack.c.b16 %v1167, %v1166
        %1172 = vmatprep.subr.bf16.mxu0 0
        %1173 = vmatpush1.bf16.msra.mxu0 %v1168
        %1174 = vmatprep.subr.bf16.mxu0 0
        %1175 = vmatpush1.bf16.msra.mxu0 %v1169
        %1176 = vmatprep.subr.bf16.mxu0 0
        %1177 = vmatpush1.bf16.msra.mxu0 0
        %1178 = vmatprep.subr.bf16.mxu0 0
        %1179 = vmatpush1.bf16.msra.mxu0 0
        %1180 = vmatprep.subr.bf16.mxu0 0
        %1181 = vmatpush1.bf16.msra.mxu0 0
        %1182 = vmatprep.subr.bf16.mxu0 0
        %1183 = vmatpush1.bf16.msra.mxu0 0
        %1184 = vmatprep.subr.bf16.mxu0 0
        %1185 = vmatpush1.bf16.msra.mxu0 0
        %1186 = vmatprep.subr.bf16.mxu0 0
        %1187 = vmatpush1.bf16.msra.mxu0 0
        %1188 = vmatprep.subr.bf16.mxu0 0
        %1189 = vmatpush1.bf16.msra.mxu0 0
        %1190 = vmatprep.subr.bf16.mxu0 0
        %1191 = vmatpush1.bf16.msra.mxu0 0
        %1192 = vmatprep.subr.bf16.mxu0 0
        %1193 = vmatpush1.bf16.msra.mxu0 0
        %1194 = vmatprep.subr.bf16.mxu0 0
        %1195 = vmatpush1.bf16.msra.mxu0 0
        %1196 = vmatprep.subr.bf16.mxu0 0
        %1197 = vmatpush1.bf16.msra.mxu0 0
        %1198 = vmatprep.subr.bf16.mxu0 0
        %1199 = vmatpush1.bf16.msra.mxu0 0
        %1200 = vmatprep.subr.bf16.mxu0 0
        %1201 = vmatpush1.bf16.msra.mxu0 0
        %1202 = vmatprep.subr.bf16.mxu0 0
        %1203 = vmatpush1.bf16.msra.mxu0 0
        %1204 = vmatprep.mubr.bf16.mxu0 0
        %1205 = vmatmul.mubr.bf16.gmra.mrb[0].mxu0 %v944
        %v1206 = vpop.f32.mrb[0].mxu0
        %v1207 = vadd.f32 0.0, %v1206
        %v1208 = vpop.f32.mrb[0].mxu0
        %v1209 = vpop.f32.mrb[0].mxu0
        %v1210 = vpop.f32.mrb[0].mxu0
        %1211 = vdwg.mxu0
        %v1212 = vld [vmem:[%s8] sm:$0xf]
        %v1213 = vld [vmem:[%s8 + $0x4] sm:$0xf]
        %v1214 = vld [vmem:[%s8 + $0x8] sm:$0xf]
        %v1215 = vld [vmem:[%s8 + $0xc] sm:$0xf]
        %v1216 = vld [vmem:[%s8 + $0x10] sm:$0xf]
        %v1217 = vld [vmem:[%s8 + $0x14] sm:$0xf]
        %v1218 = vld [vmem:[%s8 + $0x18] sm:$0xf]
        %v1219 = vld [vmem:[%s8 + $0x1c] sm:$0xf]
        %v1220 = vld [vmem:[%s8 + $0x20] sm:$0xf]
        %v1221 = vld [vmem:[%s8 + $0x24] sm:$0xf]
        %v1222 = vld [vmem:[%s8 + $0x28] sm:$0xf]
        %v1223 = vld [vmem:[%s8 + $0x2c] sm:$0xf]
        %v1224 = vld [vmem:[%s8 + $0x30] sm:$0xf]
        %v1225 = vld [vmem:[%s8 + $0x34] sm:$0xf]
        %v1226 = vld [vmem:[%s8 + $0x38] sm:$0xf]
        %v1227 = vld [vmem:[%s8 + $0x3c] sm:$0xf]
        %v1232 = vunpack.c.l.b16 %v1212
        %v1233 = vunpack.c.l.b16 %v1213
        %v1234 = vunpack.c.l.b16 %v1214
        %v1235 = vunpack.c.l.b16 %v1215
        %v1236 = vpack.c.b16 %v1233, %v1232
        %v1237 = vpack.c.b16 %v1235, %v1234
        %1240 = vmatprep.subr.bf16.mxu0 0
        %1241 = vmatpush1.bf16.msra.mxu0 %v1236
        %1242 = vmatprep.subr.bf16.mxu0 0
        %1243 = vmatpush1.bf16.msra.mxu0 %v1237
        %1244 = vmatprep.subr.bf16.mxu0 0
        %1245 = vmatpush1.bf16.msra.mxu0 0
        %1246 = vmatprep.subr.bf16.mxu0 0
        %1247 = vmatpush1.bf16.msra.mxu0 0
        %1248 = vmatprep.subr.bf16.mxu0 0
        %1249 = vmatpush1.bf16.msra.mxu0 0
        %1250 = vmatprep.subr.bf16.mxu0 0
        %1251 = vmatpush1.bf16.msra.mxu0 0
        %1252 = vmatprep.subr.bf16.mxu0 0
        %1253 = vmatpush1.bf16.msra.mxu0 0
        %1254 = vmatprep.subr.bf16.mxu0 0
        %1255 = vmatpush1.bf16.msra.mxu0 0
        %1256 = vmatprep.subr.bf16.mxu0 0
        %1257 = vmatpush1.bf16.msra.mxu0 0
        %1258 = vmatprep.subr.bf16.mxu0 0
        %1259 = vmatpush1.bf16.msra.mxu0 0
        %1260 = vmatprep.subr.bf16.mxu0 0
        %1261 = vmatpush1.bf16.msra.mxu0 0
        %1262 = vmatprep.subr.bf16.mxu0 0
        %1263 = vmatpush1.bf16.msra.mxu0 0
        %1264 = vmatprep.subr.bf16.mxu0 0
        %1265 = vmatpush1.bf16.msra.mxu0 0
        %1266 = vmatprep.subr.bf16.mxu0 0
        %1267 = vmatpush1.bf16.msra.mxu0 0
        %1268 = vmatprep.subr.bf16.mxu0 0
        %1269 = vmatpush1.bf16.msra.mxu0 0
        %1270 = vmatprep.subr.bf16.mxu0 0
        %1271 = vmatpush1.bf16.msra.mxu0 0
        %1272 = vmatprep.mubr.bf16.mxu0 0
        %1273 = vmatmul.mubr.bf16.gmra.mrb[0].mxu0 %v944
        %v1274 = vpop.f32.mrb[0].mxu0
        %v1275 = vadd.f32 0.0, %v1274
        %v1276 = vpop.f32.mrb[0].mxu0
        %v1277 = vpop.f32.mrb[0].mxu0
        %v1278 = vpop.f32.mrb[0].mxu0
        %1279 = vdwg.mxu0
        %v1284 = vunpack.c.l.b16 %v1216
        %v1285 = vunpack.c.l.b16 %v1217
        %v1286 = vunpack.c.l.b16 %v1218
        %v1287 = vunpack.c.l.b16 %v1219
        %v1288 = vpack.c.b16 %v1285, %v1284
        %v1289 = vpack.c.b16 %v1287, %v1286
        %1292 = vmatprep.subr.bf16.mxu0 0
        %1293 = vmatpush1.bf16.msra.mxu0 %v1288
        %1294 = vmatprep.subr.bf16.mxu0 0
        %1295 = vmatpush1.bf16.msra.mxu0 %v1289
        %1296 = vmatprep.subr.bf16.mxu0 0
        %1297 = vmatpush1.bf16.msra.mxu0 0
        %1298 = vmatprep.subr.bf16.mxu0 0
        %1299 = vmatpush1.bf16.msra.mxu0 0
        %1300 = vmatprep.subr.bf16.mxu0 0
        %1301 = vmatpush1.bf16.msra.mxu0 0
        %1302 = vmatprep.subr.bf16.mxu0 0
        %1303 = vmatpush1.bf16.msra.mxu0 0
        %1304 = vmatprep.subr.bf16.mxu0 0
        %1305 = vmatpush1.bf16.msra.mxu0 0
        %1306 = vmatprep.subr.bf16.mxu0 0
        %1307 = vmatpush1.bf16.msra.mxu0 0
        %1308 = vmatprep.subr.bf16.mxu0 0
        %1309 = vmatpush1.bf16.msra.mxu0 0
        %1310 = vmatprep.subr.bf16.mxu0 0
        %1311 = vmatpush1.bf16.msra.mxu0 0
        %1312 = vmatprep.subr.bf16.mxu0 0
        %1313 = vmatpush1.bf16.msra.mxu0 0
        %1314 = vmatprep.subr.bf16.mxu0 0
        %1315 = vmatpush1.bf16.msra.mxu0 0
        %1316 = vmatprep.subr.bf16.mxu0 0
        %1317 = vmatpush1.bf16.msra.mxu0 0
        %1318 = vmatprep.subr.bf16.mxu0 0
        %1319 = vmatpush1.bf16.msra.mxu0 0
        %1320 = vmatprep.subr.bf16.mxu0 0
        %1321 = vmatpush1.bf16.msra.mxu0 0
        %1322 = vmatprep.subr.bf16.mxu0 0
        %1323 = vmatpush1.bf16.msra.mxu0 0
        %1324 = vmatprep.mubr.bf16.mxu0 0
        %1325 = vmatmul.mubr.bf16.gmra.mrb[0].mxu0 %v944
        %v1326 = vpop.f32.mrb[0].mxu0
        %v1327 = vadd.f32 0.0, %v1326
        %v1328 = vpop.f32.mrb[0].mxu0
        %v1329 = vpop.f32.mrb[0].mxu0
        %v1330 = vpop.f32.mrb[0].mxu0
        %1331 = vdwg.mxu0
        %v1336 = vunpack.c.l.b16 %v1220
        %v1337 = vunpack.c.l.b16 %v1221
        %v1338 = vunpack.c.l.b16 %v1222
        %v1339 = vunpack.c.l.b16 %v1223
        %v1340 = vpack.c.b16 %v1337, %v1336
        %v1341 = vpack.c.b16 %v1339, %v1338
        %1344 = vmatprep.subr.bf16.mxu0 0
        %1345 = vmatpush1.bf16.msra.mxu0 %v1340
        %1346 = vmatprep.subr.bf16.mxu0 0
        %1347 = vmatpush1.bf16.msra.mxu0 %v1341
        %1348 = vmatprep.subr.bf16.mxu0 0
        %1349 = vmatpush1.bf16.msra.mxu0 0
        %1350 = vmatprep.subr.bf16.mxu0 0
        %1351 = vmatpush1.bf16.msra.mxu0 0
        %1352 = vmatprep.subr.bf16.mxu0 0
        %1353 = vmatpush1.bf16.msra.mxu0 0
        %1354 = vmatprep.subr.bf16.mxu0 0
        %1355 = vmatpush1.bf16.msra.mxu0 0
        %1356 = vmatprep.subr.bf16.mxu0 0
        %1357 = vmatpush1.bf16.msra.mxu0 0
        %1358 = vmatprep.subr.bf16.mxu0 0
        %1359 = vmatpush1.bf16.msra.mxu0 0
        %1360 = vmatprep.subr.bf16.mxu0 0
        %1361 = vmatpush1.bf16.msra.mxu0 0
        %1362 = vmatprep.subr.bf16.mxu0 0
        %1363 = vmatpush1.bf16.msra.mxu0 0
        %1364 = vmatprep.subr.bf16.mxu0 0
        %1365 = vmatpush1.bf16.msra.mxu0 0
        %1366 = vmatprep.subr.bf16.mxu0 0
        %1367 = vmatpush1.bf16.msra.mxu0 0
        %1368 = vmatprep.subr.bf16.mxu0 0
        %1369 = vmatpush1.bf16.msra.mxu0 0
        %1370 = vmatprep.subr.bf16.mxu0 0
        %1371 = vmatpush1.bf16.msra.mxu0 0
        %1372 = vmatprep.subr.bf16.mxu0 0
        %1373 = vmatpush1.bf16.msra.mxu0 0
        %1374 = vmatprep.subr.bf16.mxu0 0
        %1375 = vmatpush1.bf16.msra.mxu0 0
        %1376 = vmatprep.mubr.bf16.mxu0 0
        %1377 = vmatmul.mubr.bf16.gmra.mrb[0].mxu0 %v944
        %v1378 = vpop.f32.mrb[0].mxu0
        %v1379 = vadd.f32 0.0, %v1378
        %v1380 = vpop.f32.mrb[0].mxu0
        %v1381 = vpop.f32.mrb[0].mxu0
        %v1382 = vpop.f32.mrb[0].mxu0
        %1383 = vdwg.mxu0
        %v1388 = vunpack.c.l.b16 %v1224
        %v1389 = vunpack.c.l.b16 %v1225
        %v1390 = vunpack.c.l.b16 %v1226
        %v1391 = vunpack.c.l.b16 %v1227
        %v1392 = vpack.c.b16 %v1389, %v1388
        %v1393 = vpack.c.b16 %v1391, %v1390
        %1396 = vmatprep.subr.bf16.mxu0 0
        %1397 = vmatpush1.bf16.msra.mxu0 %v1392
        %1398 = vmatprep.subr.bf16.mxu0 0
        %1399 = vmatpush1.bf16.msra.mxu0 %v1393
        %1400 = vmatprep.subr.bf16.mxu0 0
        %1401 = vmatpush1.bf16.msra.mxu0 0
        %1402 = vmatprep.subr.bf16.mxu0 0
        %1403 = vmatpush1.bf16.msra.mxu0 0
        %1404 = vmatprep.subr.bf16.mxu0 0
        %1405 = vmatpush1.bf16.msra.mxu0 0
        %1406 = vmatprep.subr.bf16.mxu0 0
        %1407 = vmatpush1.bf16.msra.mxu0 0
        %1408 = vmatprep.subr.bf16.mxu0 0
        %1409 = vmatpush1.bf16.msra.mxu0 0
        %1410 = vmatprep.subr.bf16.mxu0 0
        %1411 = vmatpush1.bf16.msra.mxu0 0
        %1412 = vmatprep.subr.bf16.mxu0 0
        %1413 = vmatpush1.bf16.msra.mxu0 0
        %1414 = vmatprep.subr.bf16.mxu0 0
        %1415 = vmatpush1.bf16.msra.mxu0 0
        %1416 = vmatprep.subr.bf16.mxu0 0
        %1417 = vmatpush1.bf16.msra.mxu0 0
        %1418 = vmatprep.subr.bf16.mxu0 0
        %1419 = vmatpush1.bf16.msra.mxu0 0
        %1420 = vmatprep.subr.bf16.mxu0 0
        %1421 = vmatpush1.bf16.msra.mxu0 0
        %1422 = vmatprep.subr.bf16.mxu0 0
        %1423 = vmatpush1.bf16.msra.mxu0 0
        %1424 = vmatprep.subr.bf16.mxu0 0
        %1425 = vmatpush1.bf16.msra.mxu0 0
        %1426 = vmatprep.subr.bf16.mxu0 0
        %1427 = vmatpush1.bf16.msra.mxu0 0
        %1428 = vmatprep.mubr.bf16.mxu0 0
        %1429 = vmatmul.mubr.bf16.gmra.mrb[0].mxu0 %v944
        %v1430 = vpop.f32.mrb[0].mxu0
        %v1431 = vadd.f32 0.0, %v1430
        %v1432 = vpop.f32.mrb[0].mxu0
        %v1433 = vpop.f32.mrb[0].mxu0
        %v1434 = vpop.f32.mrb[0].mxu0
        %1435 = vdwg.mxu0
        %v1436 = vld [vmem:[%s9] sm:$0xf]
        %v1437 = vld [vmem:[%s9 + $0x4] sm:$0xf]
        %v1438 = vld [vmem:[%s9 + $0x8] sm:$0xf]
        %v1439 = vld [vmem:[%s9 + $0xc] sm:$0xf]
        %v1440 = vld [vmem:[%s9 + $0x10] sm:$0xf]
        %v1441 = vld [vmem:[%s9 + $0x14] sm:$0xf]
        %v1442 = vld [vmem:[%s9 + $0x18] sm:$0xf]
        %v1443 = vld [vmem:[%s9 + $0x1c] sm:$0xf]
        %v1444 = vld [vmem:[%s9 + $0x20] sm:$0xf]
        %v1445 = vld [vmem:[%s9 + $0x24] sm:$0xf]
        %v1446 = vld [vmem:[%s9 + $0x28] sm:$0xf]
        %v1447 = vld [vmem:[%s9 + $0x2c] sm:$0xf]
        %v1448 = vld [vmem:[%s9 + $0x30] sm:$0xf]
        %v1449 = vld [vmem:[%s9 + $0x34] sm:$0xf]
        %v1450 = vld [vmem:[%s9 + $0x38] sm:$0xf]
        %v1451 = vld [vmem:[%s9 + $0x3c] sm:$0xf]
        %v1456 = vunpack.c.l.b16 %v1436
        %v1457 = vunpack.c.l.b16 %v1437
        %v1458 = vunpack.c.l.b16 %v1438
        %v1459 = vunpack.c.l.b16 %v1439
        %v1460 = vpack.c.b16 %v1457, %v1456
        %v1461 = vpack.c.b16 %v1459, %v1458
        %1464 = vmatprep.subr.bf16.mxu0 0
        %1465 = vmatpush1.bf16.msra.mxu0 %v1460
        %1466 = vmatprep.subr.bf16.mxu0 0
        %1467 = vmatpush1.bf16.msra.mxu0 %v1461
        %1468 = vmatprep.subr.bf16.mxu0 0
        %1469 = vmatpush1.bf16.msra.mxu0 0
        %1470 = vmatprep.subr.bf16.mxu0 0
        %1471 = vmatpush1.bf16.msra.mxu0 0
        %1472 = vmatprep.subr.bf16.mxu0 0
        %1473 = vmatpush1.bf16.msra.mxu0 0
        %1474 = vmatprep.subr.bf16.mxu0 0
        %1475 = vmatpush1.bf16.msra.mxu0 0
        %1476 = vmatprep.subr.bf16.mxu0 0
        %1477 = vmatpush1.bf16.msra.mxu0 0
        %1478 = vmatprep.subr.bf16.mxu0 0
        %1479 = vmatpush1.bf16.msra.mxu0 0
        %1480 = vmatprep.subr.bf16.mxu0 0
        %1481 = vmatpush1.bf16.msra.mxu0 0
        %1482 = vmatprep.subr.bf16.mxu0 0
        %1483 = vmatpush1.bf16.msra.mxu0 0
        %1484 = vmatprep.subr.bf16.mxu0 0
        %1485 = vmatpush1.bf16.msra.mxu0 0
        %1486 = vmatprep.subr.bf16.mxu0 0
        %1487 = vmatpush1.bf16.msra.mxu0 0
        %1488 = vmatprep.subr.bf16.mxu0 0
        %1489 = vmatpush1.bf16.msra.mxu0 0
        %1490 = vmatprep.subr.bf16.mxu0 0
        %1491 = vmatpush1.bf16.msra.mxu0 0
        %1492 = vmatprep.subr.bf16.mxu0 0
        %1493 = vmatpush1.bf16.msra.mxu0 0
        %1494 = vmatprep.subr.bf16.mxu0 0
        %1495 = vmatpush1.bf16.msra.mxu0 0
        %1496 = vmatprep.mubr.bf16.mxu0 0
        %1497 = vmatmul.mubr.bf16.gmra.mrb[0].mxu0 %v944
        %v1498 = vpop.f32.mrb[0].mxu0
        %v1499 = vadd.f32 0.0, %v1498
        %v1500 = vpop.f32.mrb[0].mxu0
        %v1501 = vpop.f32.mrb[0].mxu0
        %v1502 = vpop.f32.mrb[0].mxu0
        %1503 = vdwg.mxu0
        %v1508 = vunpack.c.l.b16 %v1440
        %v1509 = vunpack.c.l.b16 %v1441
        %v1510 = vunpack.c.l.b16 %v1442
        %v1511 = vunpack.c.l.b16 %v1443
        %v1512 = vpack.c.b16 %v1509, %v1508
        %v1513 = vpack.c.b16 %v1511, %v1510
        %1516 = vmatprep.subr.bf16.mxu0 0
        %1517 = vmatpush1.bf16.msra.mxu0 %v1512
        %1518 = vmatprep.subr.bf16.mxu0 0
        %1519 = vmatpush1.bf16.msra.mxu0 %v1513
        %1520 = vmatprep.subr.bf16.mxu0 0
        %1521 = vmatpush1.bf16.msra.mxu0 0
        %1522 = vmatprep.subr.bf16.mxu0 0
        %1523 = vmatpush1.bf16.msra.mxu0 0
        %1524 = vmatprep.subr.bf16.mxu0 0
        %1525 = vmatpush1.bf16.msra.mxu0 0
        %1526 = vmatprep.subr.bf16.mxu0 0
        %1527 = vmatpush1.bf16.msra.mxu0 0
        %1528 = vmatprep.subr.bf16.mxu0 0
        %1529 = vmatpush1.bf16.msra.mxu0 0
        %1530 = vmatprep.subr.bf16.mxu0 0
        %1531 = vmatpush1.bf16.msra.mxu0 0
        %1532 = vmatprep.subr.bf16.mxu0 0
        %1533 = vmatpush1.bf16.msra.mxu0 0
        %1534 = vmatprep.subr.bf16.mxu0 0
        %1535 = vmatpush1.bf16.msra.mxu0 0
        %1536 = vmatprep.subr.bf16.mxu0 0
        %1537 = vmatpush1.bf16.msra.mxu0 0
        %1538 = vmatprep.subr.bf16.mxu0 0
        %1539 = vmatpush1.bf16.msra.mxu0 0
        %1540 = vmatprep.subr.bf16.mxu0 0
        %1541 = vmatpush1.bf16.msra.mxu0 0
        %1542 = vmatprep.subr.bf16.mxu0 0
        %1543 = vmatpush1.bf16.msra.mxu0 0
        %1544 = vmatprep.subr.bf16.mxu0 0
        %1545 = vmatpush1.bf16.msra.mxu0 0
        %1546 = vmatprep.subr.bf16.mxu0 0
        %1547 = vmatpush1.bf16.msra.mxu0 0
        %1548 = vmatprep.mubr.bf16.mxu0 0
        %1549 = vmatmul.mubr.bf16.gmra.mrb[0].mxu0 %v944
        %v1550 = vpop.f32.mrb[0].mxu0
        %v1551 = vadd.f32 0.0, %v1550
        %v1552 = vpop.f32.mrb[0].mxu0
        %v1553 = vpop.f32.mrb[0].mxu0
        %v1554 = vpop.f32.mrb[0].mxu0
        %1555 = vdwg.mxu0
        %v1560 = vunpack.c.l.b16 %v1444
        %v1561 = vunpack.c.l.b16 %v1445
        %v1562 = vunpack.c.l.b16 %v1446
        %v1563 = vunpack.c.l.b16 %v1447
        %v1564 = vpack.c.b16 %v1561, %v1560
        %v1565 = vpack.c.b16 %v1563, %v1562
        %1568 = vmatprep.subr.bf16.mxu0 0
        %1569 = vmatpush1.bf16.msra.mxu0 %v1564
        %1570 = vmatprep.subr.bf16.mxu0 0
        %1571 = vmatpush1.bf16.msra.mxu0 %v1565
        %1572 = vmatprep.subr.bf16.mxu0 0
        %1573 = vmatpush1.bf16.msra.mxu0 0
        %1574 = vmatprep.subr.bf16.mxu0 0
        %1575 = vmatpush1.bf16.msra.mxu0 0
        %1576 = vmatprep.subr.bf16.mxu0 0
        %1577 = vmatpush1.bf16.msra.mxu0 0
        %1578 = vmatprep.subr.bf16.mxu0 0
        %1579 = vmatpush1.bf16.msra.mxu0 0
        %1580 = vmatprep.subr.bf16.mxu0 0
        %1581 = vmatpush1.bf16.msra.mxu0 0
        %1582 = vmatprep.subr.bf16.mxu0 0
        %1583 = vmatpush1.bf16.msra.mxu0 0
        %1584 = vmatprep.subr.bf16.mxu0 0
        %1585 = vmatpush1.bf16.msra.mxu0 0
        %1586 = vmatprep.subr.bf16.mxu0 0
        %1587 = vmatpush1.bf16.msra.mxu0 0
        %1588 = vmatprep.subr.bf16.mxu0 0
        %1589 = vmatpush1.bf16.msra.mxu0 0
        %1590 = vmatprep.subr.bf16.mxu0 0
        %1591 = vmatpush1.bf16.msra.mxu0 0
        %1592 = vmatprep.subr.bf16.mxu0 0
        %1593 = vmatpush1.bf16.msra.mxu0 0
        %1594 = vmatprep.subr.bf16.mxu0 0
        %1595 = vmatpush1.bf16.msra.mxu0 0
        %1596 = vmatprep.subr.bf16.mxu0 0
        %1597 = vmatpush1.bf16.msra.mxu0 0
        %1598 = vmatprep.subr.bf16.mxu0 0
        %1599 = vmatpush1.bf16.msra.mxu0 0
        %1600 = vmatprep.mubr.bf16.mxu0 0
        %1601 = vmatmul.mubr.bf16.gmra.mrb[0].mxu0 %v944
        %v1602 = vpop.f32.mrb[0].mxu0
        %v1603 = vadd.f32 0.0, %v1602
        %v1604 = vpop.f32.mrb[0].mxu0
        %v1605 = vpop.f32.mrb[0].mxu0
        %v1606 = vpop.f32.mrb[0].mxu0
        %1607 = vdwg.mxu0
        %v1612 = vunpack.c.l.b16 %v1448
        %v1613 = vunpack.c.l.b16 %v1449
        %v1614 = vunpack.c.l.b16 %v1450
        %v1615 = vunpack.c.l.b16 %v1451
        %v1616 = vpack.c.b16 %v1613, %v1612
        %v1617 = vpack.c.b16 %v1615, %v1614
        %1620 = vmatprep.subr.bf16.mxu0 0
        %1621 = vmatpush1.bf16.msra.mxu0 %v1616
        %1622 = vmatprep.subr.bf16.mxu0 0
        %1623 = vmatpush1.bf16.msra.mxu0 %v1617
        %1624 = vmatprep.subr.bf16.mxu0 0
        %1625 = vmatpush1.bf16.msra.mxu0 0
        %1626 = vmatprep.subr.bf16.mxu0 0
        %1627 = vmatpush1.bf16.msra.mxu0 0
        %1628 = vmatprep.subr.bf16.mxu0 0
        %1629 = vmatpush1.bf16.msra.mxu0 0
        %1630 = vmatprep.subr.bf16.mxu0 0
        %1631 = vmatpush1.bf16.msra.mxu0 0
        %1632 = vmatprep.subr.bf16.mxu0 0
        %1633 = vmatpush1.bf16.msra.mxu0 0
        %1634 = vmatprep.subr.bf16.mxu0 0
        %1635 = vmatpush1.bf16.msra.mxu0 0
        %1636 = vmatprep.subr.bf16.mxu0 0
        %1637 = vmatpush1.bf16.msra.mxu0 0
        %1638 = vmatprep.subr.bf16.mxu0 0
        %1639 = vmatpush1.bf16.msra.mxu0 0
        %1640 = vmatprep.subr.bf16.mxu0 0
        %1641 = vmatpush1.bf16.msra.mxu0 0
        %1642 = vmatprep.subr.bf16.mxu0 0
        %1643 = vmatpush1.bf16.msra.mxu0 0
        %1644 = vmatprep.subr.bf16.mxu0 0
        %1645 = vmatpush1.bf16.msra.mxu0 0
        %1646 = vmatprep.subr.bf16.mxu0 0
        %1647 = vmatpush1.bf16.msra.mxu0 0
        %1648 = vmatprep.subr.bf16.mxu0 0
        %1649 = vmatpush1.bf16.msra.mxu0 0
        %1650 = vmatprep.subr.bf16.mxu0 0
        %1651 = vmatpush1.bf16.msra.mxu0 0
        %1652 = vmatprep.mubr.bf16.mxu0 0
        %1653 = vmatmul.mubr.bf16.gmra.mrb[0].mxu0 %v944
        %v1654 = vpop.f32.mrb[0].mxu0
        %v1655 = vadd.f32 0.0, %v1654
        %v1656 = vpop.f32.mrb[0].mxu0
        %v1657 = vpop.f32.mrb[0].mxu0
        %v1658 = vpop.f32.mrb[0].mxu0
        %1659 = vdwg.mxu0
        %v1660 = vld [vmem:[%s10] sm:$0xf]
        %v1661 = vld [vmem:[%s10 + $0x4] sm:$0xf]
        %v1662 = vld [vmem:[%s10 + $0x8] sm:$0xf]
        %v1663 = vld [vmem:[%s10 + $0xc] sm:$0xf]
        %v1664 = vld [vmem:[%s10 + $0x10] sm:$0xf]
        %v1665 = vld [vmem:[%s10 + $0x14] sm:$0xf]
        %v1666 = vld [vmem:[%s10 + $0x18] sm:$0xf]
        %v1667 = vld [vmem:[%s10 + $0x1c] sm:$0xf]
        %v1668 = vpack.c.bf16 %v1051, %v1051
        %v1669 = vpack.c.bf16 %v1103, %v1103
        %v1670 = vpack.c.bf16 %v1155, %v1155
        %v1671 = vpack.c.bf16 %v1207, %v1207
        %v1672 = vpack.c.bf16 %v1275, %v1275
        %v1673 = vpack.c.bf16 %v1327, %v1327
        %v1674 = vpack.c.bf16 %v1379, %v1379
        %v1675 = vpack.c.bf16 %v1431, %v1431
        %vm1676 = vcmask 130048
        %v1678 = vsel %vm1676, %v1668, 0
        %v1681 = vsel %vm1676, %v1672, 0
        %1683 = vmatprep.subr.bf16.mxu0 0
        %1684 = vmatpush1.bf16.xpose.msra.mxu0 %v1681
        %1685 = vmatprep.subr.bf16.mxu0 0
        %1686 = vmatpush1.bf16.xpose.msra.mxu0 0
        %1687 = vmatprep.subr.bf16.mxu0 0
        %1688 = vmatpush1.bf16.xpose.msra.mxu0 0
        %1689 = vmatprep.subr.bf16.mxu0 0
        %1690 = vmatpush1.bf16.xpose.msra.mxu0 0
        %1691 = vmatprep.subr.bf16.mxu0 0
        %1692 = vmatpush1.bf16.xpose.msra.mxu0 0
        %1693 = vmatprep.subr.bf16.mxu0 0
        %1694 = vmatpush1.bf16.xpose.msra.mxu0 0
        %1695 = vmatprep.subr.bf16.mxu0 0
        %1696 = vmatpush1.bf16.xpose.msra.mxu0 0
        %1697 = vmatprep.subr.bf16.mxu0 0
        %1698 = vmatpush1.bf16.xpose.msra.mxu0 0
        %1699 = vmatprep.subr.bf16.mxu0 0
        %1700 = vmatpush1.bf16.xpose.msra.mxu0 0
        %1701 = vmatprep.subr.bf16.mxu0 0
        %1702 = vmatpush1.bf16.xpose.msra.mxu0 0
        %1703 = vmatprep.subr.bf16.mxu0 0
        %1704 = vmatpush1.bf16.xpose.msra.mxu0 0
        %1705 = vmatprep.subr.bf16.mxu0 0
        %1706 = vmatpush1.bf16.xpose.msra.mxu0 0
        %1707 = vmatprep.subr.bf16.mxu0 0
        %1708 = vmatpush1.bf16.xpose.msra.mxu0 0
        %1709 = vmatprep.subr.bf16.mxu0 0
        %1710 = vmatpush1.bf16.xpose.msra.mxu0 0
        %1711 = vmatprep.subr.bf16.mxu0 0
        %1712 = vmatpush1.bf16.xpose.msra.mxu0 0
        %1713 = vmatprep.subr.bf16.mxu0 0
        %1714 = vmatpush1.bf16.xpose.msra.mxu0 0
        %1715 = vmatprep.mubr.bf16.mxu0 0
        %1716 = vmatmul.mubr.bf16.gmra.mrb[0].mxu0 %v1678
        %v1717 = vpop.f32.mrb[0].mxu0
        %v1718 = vadd.f32 %v907, %v1717
        %v1719 = vpop.f32.mrb[0].mxu0
        %v1720 = vpop.f32.mrb[0].mxu0
        %v1721 = vpop.f32.mrb[0].mxu0
        %1722 = vdwg.mxu0
        %v1724 = vsel %vm1676, %v1669, 0
        %v1727 = vsel %vm1676, %v1673, 0
        %1729 = vmatprep.subr.bf16.mxu0 0
        %1730 = vmatpush1.bf16.xpose.msra.mxu0 %v1727
        %1731 = vmatprep.subr.bf16.mxu0 0
        %1732 = vmatpush1.bf16.xpose.msra.mxu0 0
        %1733 = vmatprep.subr.bf16.mxu0 0
        %1734 = vmatpush1.bf16.xpose.msra.mxu0 0
        %1735 = vmatprep.subr.bf16.mxu0 0
        %1736 = vmatpush1.bf16.xpose.msra.mxu0 0
        %1737 = vmatprep.subr.bf16.mxu0 0
        %1738 = vmatpush1.bf16.xpose.msra.mxu0 0
        %1739 = vmatprep.subr.bf16.mxu0 0
        %1740 = vmatpush1.bf16.xpose.msra.mxu0 0
        %1741 = vmatprep.subr.bf16.mxu0 0
        %1742 = vmatpush1.bf16.xpose.msra.mxu0 0
        %1743 = vmatprep.subr.bf16.mxu0 0
        %1744 = vmatpush1.bf16.xpose.msra.mxu0 0
        %1745 = vmatprep.subr.bf16.mxu0 0
        %1746 = vmatpush1.bf16.xpose.msra.mxu0 0
        %1747 = vmatprep.subr.bf16.mxu0 0
        %1748 = vmatpush1.bf16.xpose.msra.mxu0 0
        %1749 = vmatprep.subr.bf16.mxu0 0
        %1750 = vmatpush1.bf16.xpose.msra.mxu0 0
        %1751 = vmatprep.subr.bf16.mxu0 0
        %1752 = vmatpush1.bf16.xpose.msra.mxu0 0
        %1753 = vmatprep.subr.bf16.mxu0 0
        %1754 = vmatpush1.bf16.xpose.msra.mxu0 0
        %1755 = vmatprep.subr.bf16.mxu0 0
        %1756 = vmatpush1.bf16.xpose.msra.mxu0 0
        %1757 = vmatprep.subr.bf16.mxu0 0
        %1758 = vmatpush1.bf16.xpose.msra.mxu0 0
        %1759 = vmatprep.subr.bf16.mxu0 0
        %1760 = vmatpush1.bf16.xpose.msra.mxu0 0
        %1761 = vmatprep.mubr.bf16.mxu0 0
        %1762 = vmatmul.mubr.bf16.gmra.mrb[0].mxu0 %v1724
        %v1763 = vpop.f32.mrb[0].mxu0
        %v1764 = vadd.f32 %v907, %v1763
        %v1765 = vpop.f32.mrb[0].mxu0
        %v1766 = vpop.f32.mrb[0].mxu0
        %v1767 = vpop.f32.mrb[0].mxu0
        %1768 = vdwg.mxu0
        %v1770 = vsel %vm1676, %v1670, 0
        %v1773 = vsel %vm1676, %v1674, 0
        %1775 = vmatprep.subr.bf16.mxu0 0
        %1776 = vmatpush1.bf16.xpose.msra.mxu0 %v1773
        %1777 = vmatprep.subr.bf16.mxu0 0
        %1778 = vmatpush1.bf16.xpose.msra.mxu0 0
        %1779 = vmatprep.subr.bf16.mxu0 0
        %1780 = vmatpush1.bf16.xpose.msra.mxu0 0
        %1781 = vmatprep.subr.bf16.mxu0 0
        %1782 = vmatpush1.bf16.xpose.msra.mxu0 0
        %1783 = vmatprep.subr.bf16.mxu0 0
        %1784 = vmatpush1.bf16.xpose.msra.mxu0 0
        %1785 = vmatprep.subr.bf16.mxu0 0
        %1786 = vmatpush1.bf16.xpose.msra.mxu0 0
        %1787 = vmatprep.subr.bf16.mxu0 0
        %1788 = vmatpush1.bf16.xpose.msra.mxu0 0
        %1789 = vmatprep.subr.bf16.mxu0 0
        %1790 = vmatpush1.bf16.xpose.msra.mxu0 0
        %1791 = vmatprep.subr.bf16.mxu0 0
        %1792 = vmatpush1.bf16.xpose.msra.mxu0 0
        %1793 = vmatprep.subr.bf16.mxu0 0
        %1794 = vmatpush1.bf16.xpose.msra.mxu0 0
        %1795 = vmatprep.subr.bf16.mxu0 0
        %1796 = vmatpush1.bf16.xpose.msra.mxu0 0
        %1797 = vmatprep.subr.bf16.mxu0 0
        %1798 = vmatpush1.bf16.xpose.msra.mxu0 0
        %1799 = vmatprep.subr.bf16.mxu0 0
        %1800 = vmatpush1.bf16.xpose.msra.mxu0 0
        %1801 = vmatprep.subr.bf16.mxu0 0
        %1802 = vmatpush1.bf16.xpose.msra.mxu0 0
        %1803 = vmatprep.subr.bf16.mxu0 0
        %1804 = vmatpush1.bf16.xpose.msra.mxu0 0
        %1805 = vmatprep.subr.bf16.mxu0 0
        %1806 = vmatpush1.bf16.xpose.msra.mxu0 0
        %1807 = vmatprep.mubr.bf16.mxu0 0
        %1808 = vmatmul.mubr.bf16.gmra.mrb[0].mxu0 %v1770
        %v1809 = vpop.f32.mrb[0].mxu0
        %v1810 = vadd.f32 %v907, %v1809
        %v1811 = vpop.f32.mrb[0].mxu0
        %v1812 = vpop.f32.mrb[0].mxu0
        %v1813 = vpop.f32.mrb[0].mxu0
        %1814 = vdwg.mxu0
        %v1816 = vsel %vm1676, %v1671, 0
        %v1819 = vsel %vm1676, %v1675, 0
        %1821 = vmatprep.subr.bf16.mxu0 0
        %1822 = vmatpush1.bf16.xpose.msra.mxu0 %v1819
        %1823 = vmatprep.subr.bf16.mxu0 0
        %1824 = vmatpush1.bf16.xpose.msra.mxu0 0
        %1825 = vmatprep.subr.bf16.mxu0 0
        %1826 = vmatpush1.bf16.xpose.msra.mxu0 0
        %1827 = vmatprep.subr.bf16.mxu0 0
        %1828 = vmatpush1.bf16.xpose.msra.mxu0 0
        %1829 = vmatprep.subr.bf16.mxu0 0
        %1830 = vmatpush1.bf16.xpose.msra.mxu0 0
        %1831 = vmatprep.subr.bf16.mxu0 0
        %1832 = vmatpush1.bf16.xpose.msra.mxu0 0
        %1833 = vmatprep.subr.bf16.mxu0 0
        %1834 = vmatpush1.bf16.xpose.msra.mxu0 0
        %1835 = vmatprep.subr.bf16.mxu0 0
        %1836 = vmatpush1.bf16.xpose.msra.mxu0 0
        %1837 = vmatprep.subr.bf16.mxu0 0
        %1838 = vmatpush1.bf16.xpose.msra.mxu0 0
        %1839 = vmatprep.subr.bf16.mxu0 0
        %1840 = vmatpush1.bf16.xpose.msra.mxu0 0
        %1841 = vmatprep.subr.bf16.mxu0 0
        %1842 = vmatpush1.bf16.xpose.msra.mxu0 0
        %1843 = vmatprep.subr.bf16.mxu0 0
        %1844 = vmatpush1.bf16.xpose.msra.mxu0 0
        %1845 = vmatprep.subr.bf16.mxu0 0
        %1846 = vmatpush1.bf16.xpose.msra.mxu0 0
        %1847 = vmatprep.subr.bf16.mxu0 0
        %1848 = vmatpush1.bf16.xpose.msra.mxu0 0
        %1849 = vmatprep.subr.bf16.mxu0 0
        %1850 = vmatpush1.bf16.xpose.msra.mxu0 0
        %1851 = vmatprep.subr.bf16.mxu0 0
        %1852 = vmatpush1.bf16.xpose.msra.mxu0 0
        %1853 = vmatprep.mubr.bf16.mxu0 0
        %1854 = vmatmul.mubr.bf16.gmra.mrb[0].mxu0 %v1816
        %v1855 = vpop.f32.mrb[0].mxu0
        %v1856 = vadd.f32 %v907, %v1855
        %v1857 = vpop.f32.mrb[0].mxu0
        %v1858 = vpop.f32.mrb[0].mxu0
        %v1859 = vpop.f32.mrb[0].mxu0
        %1860 = vdwg.mxu0
        %vm1861 = vcmask 64512
        %v1862 = vsel %vm1861, %v1718, -inf
        %1863 = vmax.xlane.f32.xlu0 %v1862
        %v1864 = vpop.xlane.xlu0 %1863
        %v1865 = vsel %vm1861, %v1764, -inf
        %1866 = vmax.xlane.f32.xlu0 %v1865
        %v1867 = vpop.xlane.xlu0 %1866
        %v1868 = vsel %vm1861, %v1810, -inf
        %1869 = vmax.xlane.f32.xlu0 %v1868
        %v1870 = vpop.xlane.xlu0 %1869
        %v1871 = vsel %vm1861, %v1856, -inf
        %1872 = vmax.xlane.f32.xlu0 %v1871
        %v1873 = vpop.xlane.xlu0 %1872
        %v1874 = vsub.f32 %v1718, %v1864
        %v1875 = vsub.f32 %v1764, %v1867
        %v1876 = vsub.f32 %v1810, %v1870
        %v1877 = vsub.f32 %v1856, %v1873
        %v1878 = vmul.f32 %v1874, 1.442695
        %v1879 = vpow.pop %v1878
        %v1880 = vmul.f32 %v1875, 1.442695
        %v1881 = vpow.pop %v1880
        %v1882 = vmul.f32 %v1876, 1.442695
        %v1883 = vpow.pop %v1882
        %v1884 = vmul.f32 %v1877, 1.442695
        %v1885 = vpow.pop %v1884
        %v1886 = vsel %vm1861, %v1879, 0.0
        %1887 = vadd.xlane.f32.xlu0 %v1886
        %v1888 = vpop.xlane.xlu0 %1887
        %v1889 = vsel %vm1861, %v1881, 0.0
        %1890 = vadd.xlane.f32.xlu0 %v1889
        %v1891 = vpop.xlane.xlu0 %1890
        %v1892 = vsel %vm1861, %v1883, 0.0
        %1893 = vadd.xlane.f32.xlu0 %v1892
        %v1894 = vpop.xlane.xlu0 %1893
        %v1895 = vsel %vm1861, %v1885, 0.0
        %1896 = vadd.xlane.f32.xlu0 %v1895
        %v1897 = vpop.xlane.xlu0 %1896
        %v1898 = vrcp.pop %v1888
        %v1899 = vrcp.pop %v1891
        %v1900 = vrcp.pop %v1894
        %v1901 = vrcp.pop %v1897
        %v1902 = vmul.f32 %v1879, %v1898
        %v1903 = vmul.f32 %v1881, %v1899
        %v1904 = vmul.f32 %v1883, %v1900
        %v1905 = vmul.f32 %v1885, %v1901
        %v1906 = vpack.c.bf16 %v1902, %v1902
        %v1907 = vpack.c.bf16 %v1903, %v1903
        %v1908 = vpack.c.bf16 %v1904, %v1904
        %v1909 = vpack.c.bf16 %v1905, %v1905
        %v1910 = vpack.c.bf16 %v1499, %v1499
        %v1911 = vpack.c.bf16 %v1551, %v1551
        %v1912 = vpack.c.bf16 %v1603, %v1603
        %v1913 = vpack.c.bf16 %v1655, %v1655
        %v1915 = vsel %vm1861, %v1906, 0
        %vm1917 = vcmask 1043456
        %v1919 = vsel %vm1917, %v1910, 0
        %1921 = vmatprep.subr.bf16.mxu0 0
        %1922 = vmatpush1.bf16.msra.mxu0 %v1919
        %1923 = vmatprep.subr.bf16.mxu0 0
        %1924 = vmatpush1.bf16.msra.mxu0 0
        %1925 = vmatprep.subr.bf16.mxu0 0
        %1926 = vmatpush1.bf16.msra.mxu0 0
        %1927 = vmatprep.subr.bf16.mxu0 0
        %1928 = vmatpush1.bf16.msra.mxu0 0
        %1929 = vmatprep.subr.bf16.mxu0 0
        %1930 = vmatpush1.bf16.msra.mxu0 0
        %1931 = vmatprep.subr.bf16.mxu0 0
        %1932 = vmatpush1.bf16.msra.mxu0 0
        %1933 = vmatprep.subr.bf16.mxu0 0
        %1934 = vmatpush1.bf16.msra.mxu0 0
        %1935 = vmatprep.subr.bf16.mxu0 0
        %1936 = vmatpush1.bf16.msra.mxu0 0
        %1937 = vmatprep.subr.bf16.mxu0 0
        %1938 = vmatpush1.bf16.msra.mxu0 0
        %1939 = vmatprep.subr.bf16.mxu0 0
        %1940 = vmatpush1.bf16.msra.mxu0 0
        %1941 = vmatprep.subr.bf16.mxu0 0
        %1942 = vmatpush1.bf16.msra.mxu0 0
        %1943 = vmatprep.subr.bf16.mxu0 0
        %1944 = vmatpush1.bf16.msra.mxu0 0
        %1945 = vmatprep.subr.bf16.mxu0 0
        %1946 = vmatpush1.bf16.msra.mxu0 0
        %1947 = vmatprep.subr.bf16.mxu0 0
        %1948 = vmatpush1.bf16.msra.mxu0 0
        %1949 = vmatprep.subr.bf16.mxu0 0
        %1950 = vmatpush1.bf16.msra.mxu0 0
        %1951 = vmatprep.subr.bf16.mxu0 0
        %1952 = vmatpush1.bf16.msra.mxu0 0
        %1953 = vmatprep.mubr.bf16.mxu0 0
        %1954 = vmatmul.mubr.bf16.gmra.mrb[0].mxu0 %v1915
        %v1955 = vpop.f32.mrb[0].mxu0
        %v1956 = vadd.f32 0.0, %v1955
        %v1957 = vpop.f32.mrb[0].mxu0
        %v1958 = vpop.f32.mrb[0].mxu0
        %v1959 = vpop.f32.mrb[0].mxu0
        %1960 = vdwg.mxu0
        %v1962 = vsel %vm1861, %v1907, 0
        %v1965 = vsel %vm1917, %v1911, 0
        %1967 = vmatprep.subr.bf16.mxu0 0
        %1968 = vmatpush1.bf16.msra.mxu0 %v1965
        %1969 = vmatprep.subr.bf16.mxu0 0
        %1970 = vmatpush1.bf16.msra.mxu0 0
        %1971 = vmatprep.subr.bf16.mxu0 0
        %1972 = vmatpush1.bf16.msra.mxu0 0
        %1973 = vmatprep.subr.bf16.mxu0 0
        %1974 = vmatpush1.bf16.msra.mxu0 0
        %1975 = vmatprep.subr.bf16.mxu0 0
        %1976 = vmatpush1.bf16.msra.mxu0 0
        %1977 = vmatprep.subr.bf16.mxu0 0
        %1978 = vmatpush1.bf16.msra.mxu0 0
        %1979 = vmatprep.subr.bf16.mxu0 0
        %1980 = vmatpush1.bf16.msra.mxu0 0
        %1981 = vmatprep.subr.bf16.mxu0 0
        %1982 = vmatpush1.bf16.msra.mxu0 0
        %1983 = vmatprep.subr.bf16.mxu0 0
        %1984 = vmatpush1.bf16.msra.mxu0 0
        %1985 = vmatprep.subr.bf16.mxu0 0
        %1986 = vmatpush1.bf16.msra.mxu0 0
        %1987 = vmatprep.subr.bf16.mxu0 0
        %1988 = vmatpush1.bf16.msra.mxu0 0
        %1989 = vmatprep.subr.bf16.mxu0 0
        %1990 = vmatpush1.bf16.msra.mxu0 0
        %1991 = vmatprep.subr.bf16.mxu0 0
        %1992 = vmatpush1.bf16.msra.mxu0 0
        %1993 = vmatprep.subr.bf16.mxu0 0
        %1994 = vmatpush1.bf16.msra.mxu0 0
        %1995 = vmatprep.subr.bf16.mxu0 0
        %1996 = vmatpush1.bf16.msra.mxu0 0
        %1997 = vmatprep.subr.bf16.mxu0 0
        %1998 = vmatpush1.bf16.msra.mxu0 0
        %1999 = vmatprep.mubr.bf16.mxu0 0
        %2000 = vmatmul.mubr.bf16.gmra.mrb[0].mxu0 %v1962
        %v2001 = vpop.f32.mrb[0].mxu0
        %v2002 = vadd.f32 0.0, %v2001
        %v2003 = vpop.f32.mrb[0].mxu0
        %v2004 = vpop.f32.mrb[0].mxu0
        %v2005 = vpop.f32.mrb[0].mxu0
        %2006 = vdwg.mxu0
        %v2008 = vsel %vm1861, %v1908, 0
        %v2011 = vsel %vm1917, %v1912, 0
        %2013 = vmatprep.subr.bf16.mxu0 0
        %2014 = vmatpush1.bf16.msra.mxu0 %v2011
        %2015 = vmatprep.subr.bf16.mxu0 0
        %2016 = vmatpush1.bf16.msra.mxu0 0
        %2017 = vmatprep.subr.bf16.mxu0 0
        %2018 = vmatpush1.bf16.msra.mxu0 0
        %2019 = vmatprep.subr.bf16.mxu0 0
        %2020 = vmatpush1.bf16.msra.mxu0 0
        %2021 = vmatprep.subr.bf16.mxu0 0
        %2022 = vmatpush1.bf16.msra.mxu0 0
        %2023 = vmatprep.subr.bf16.mxu0 0
        %2024 = vmatpush1.bf16.msra.mxu0 0
        %2025 = vmatprep.subr.bf16.mxu0 0
        %2026 = vmatpush1.bf16.msra.mxu0 0
        %2027 = vmatprep.subr.bf16.mxu0 0
        %2028 = vmatpush1.bf16.msra.mxu0 0
        %2029 = vmatprep.subr.bf16.mxu0 0
        %2030 = vmatpush1.bf16.msra.mxu0 0
        %2031 = vmatprep.subr.bf16.mxu0 0
        %2032 = vmatpush1.bf16.msra.mxu0 0
        %2033 = vmatprep.subr.bf16.mxu0 0
        %2034 = vmatpush1.bf16.msra.mxu0 0
        %2035 = vmatprep.subr.bf16.mxu0 0
        %2036 = vmatpush1.bf16.msra.mxu0 0
        %2037 = vmatprep.subr.bf16.mxu0 0
        %2038 = vmatpush1.bf16.msra.mxu0 0
        %2039 = vmatprep.subr.bf16.mxu0 0
        %2040 = vmatpush1.bf16.msra.mxu0 0
        %2041 = vmatprep.subr.bf16.mxu0 0
        %2042 = vmatpush1.bf16.msra.mxu0 0
        %2043 = vmatprep.subr.bf16.mxu0 0
        %2044 = vmatpush1.bf16.msra.mxu0 0
        %2045 = vmatprep.mubr.bf16.mxu0 0
        %2046 = vmatmul.mubr.bf16.gmra.mrb[0].mxu0 %v2008
        %v2047 = vpop.f32.mrb[0].mxu0
        %v2048 = vadd.f32 0.0, %v2047
        %v2049 = vpop.f32.mrb[0].mxu0
        %v2050 = vpop.f32.mrb[0].mxu0
        %v2051 = vpop.f32.mrb[0].mxu0
        %2052 = vdwg.mxu0
        %v2054 = vsel %vm1861, %v1909, 0
        %v2057 = vsel %vm1917, %v1913, 0
        %2059 = vmatprep.subr.bf16.mxu0 0
        %2060 = vmatpush1.bf16.msra.mxu0 %v2057
        %2061 = vmatprep.subr.bf16.mxu0 0
        %2062 = vmatpush1.bf16.msra.mxu0 0
        %2063 = vmatprep.subr.bf16.mxu0 0
        %2064 = vmatpush1.bf16.msra.mxu0 0
        %2065 = vmatprep.subr.bf16.mxu0 0
        %2066 = vmatpush1.bf16.msra.mxu0 0
        %2067 = vmatprep.subr.bf16.mxu0 0
        %2068 = vmatpush1.bf16.msra.mxu0 0
        %2069 = vmatprep.subr.bf16.mxu0 0
        %2070 = vmatpush1.bf16.msra.mxu0 0
        %2071 = vmatprep.subr.bf16.mxu0 0
        %2072 = vmatpush1.bf16.msra.mxu0 0
        %2073 = vmatprep.subr.bf16.mxu0 0
        %2074 = vmatpush1.bf16.msra.mxu0 0
        %2075 = vmatprep.subr.bf16.mxu0 0
        %2076 = vmatpush1.bf16.msra.mxu0 0
        %2077 = vmatprep.subr.bf16.mxu0 0
        %2078 = vmatpush1.bf16.msra.mxu0 0
        %2079 = vmatprep.subr.bf16.mxu0 0
        %2080 = vmatpush1.bf16.msra.mxu0 0
        %2081 = vmatprep.subr.bf16.mxu0 0
        %2082 = vmatpush1.bf16.msra.mxu0 0
        %2083 = vmatprep.subr.bf16.mxu0 0
        %2084 = vmatpush1.bf16.msra.mxu0 0
        %2085 = vmatprep.subr.bf16.mxu0 0
        %2086 = vmatpush1.bf16.msra.mxu0 0
        %2087 = vmatprep.subr.bf16.mxu0 0
        %2088 = vmatpush1.bf16.msra.mxu0 0
        %2089 = vmatprep.subr.bf16.mxu0 0
        %2090 = vmatpush1.bf16.msra.mxu0 0
        %2091 = vmatprep.mubr.bf16.mxu0 0
        %2092 = vmatmul.mubr.bf16.gmra.mrb[0].mxu0 %v2054
        %v2093 = vpop.f32.mrb[0].mxu0
        %v2094 = vadd.f32 0.0, %v2093
        %v2095 = vpop.f32.mrb[0].mxu0
        %v2096 = vpop.f32.mrb[0].mxu0
        %v2097 = vpop.f32.mrb[0].mxu0
        %2098 = vdwg.mxu0
        %v2099 = vpack.c.bf16 %v1956, %v1956
        %v2100 = vpack.c.bf16 %v2002, %v2002
        %v2101 = vpack.c.bf16 %v2048, %v2048
        %v2102 = vpack.c.bf16 %v2094, %v2094
        %v2105 = vunpack.c.l.b16 %v1660
        %v2106 = vunpack.c.l.b16 %v1661
        %v2107 = vpack.c.b16 %v2106, %v2105
        %v2110 = vsel %vm1676, %v2099, 0
        %2112 = vmatprep.subr.bf16.mxu0 0
        %2113 = vmatpush1.bf16.msra.mxu0 %v2107
        %2114 = vmatprep.subr.bf16.mxu0 0
        %2115 = vmatpush1.bf16.msra.mxu0 0
        %2116 = vmatprep.subr.bf16.mxu0 0
        %2117 = vmatpush1.bf16.msra.mxu0 0
        %2118 = vmatprep.subr.bf16.mxu0 0
        %2119 = vmatpush1.bf16.msra.mxu0 0
        %2120 = vmatprep.subr.bf16.mxu0 0
        %2121 = vmatpush1.bf16.msra.mxu0 0
        %2122 = vmatprep.subr.bf16.mxu0 0
        %2123 = vmatpush1.bf16.msra.mxu0 0
        %2124 = vmatprep.subr.bf16.mxu0 0
        %2125 = vmatpush1.bf16.msra.mxu0 0
        %2126 = vmatprep.subr.bf16.mxu0 0
        %2127 = vmatpush1.bf16.msra.mxu0 0
        %2128 = vmatprep.subr.bf16.mxu0 0
        %2129 = vmatpush1.bf16.msra.mxu0 0
        %2130 = vmatprep.subr.bf16.mxu0 0
        %2131 = vmatpush1.bf16.msra.mxu0 0
        %2132 = vmatprep.subr.bf16.mxu0 0
        %2133 = vmatpush1.bf16.msra.mxu0 0
        %2134 = vmatprep.subr.bf16.mxu0 0
        %2135 = vmatpush1.bf16.msra.mxu0 0
        %2136 = vmatprep.subr.bf16.mxu0 0
        %2137 = vmatpush1.bf16.msra.mxu0 0
        %2138 = vmatprep.subr.bf16.mxu0 0
        %2139 = vmatpush1.bf16.msra.mxu0 0
        %2140 = vmatprep.subr.bf16.mxu0 0
        %2141 = vmatpush1.bf16.msra.mxu0 0
        %2142 = vmatprep.subr.bf16.mxu0 0
        %2143 = vmatpush1.bf16.msra.mxu0 0
        %2144 = vmatprep.mubr.bf16.mxu0 0
        %2145 = vmatmul.mubr.bf16.gmra.mrb[0].mxu0 %v2110
        %v2146 = vpop.f32.mrb[0].mxu0
        %v2147 = vadd.f32 0.0, %v2146
        %v2148 = vpop.f32.mrb[0].mxu0
        %v2149 = vpop.f32.mrb[0].mxu0
        %v2150 = vpop.f32.mrb[0].mxu0
        %2151 = vdwg.mxu0
        %v2154 = vunpack.c.l.b16 %v1662
        %v2155 = vunpack.c.l.b16 %v1663
        %v2156 = vpack.c.b16 %v2155, %v2154
        %v2159 = vsel %vm1676, %v2100, 0
        %2161 = vmatprep.subr.bf16.mxu0 0
        %2162 = vmatpush1.bf16.msra.mxu0 %v2156
        %2163 = vmatprep.subr.bf16.mxu0 0
        %2164 = vmatpush1.bf16.msra.mxu0 0
        %2165 = vmatprep.subr.bf16.mxu0 0
        %2166 = vmatpush1.bf16.msra.mxu0 0
        %2167 = vmatprep.subr.bf16.mxu0 0
        %2168 = vmatpush1.bf16.msra.mxu0 0
        %2169 = vmatprep.subr.bf16.mxu0 0
        %2170 = vmatpush1.bf16.msra.mxu0 0
        %2171 = vmatprep.subr.bf16.mxu0 0
        %2172 = vmatpush1.bf16.msra.mxu0 0
        %2173 = vmatprep.subr.bf16.mxu0 0
        %2174 = vmatpush1.bf16.msra.mxu0 0
        %2175 = vmatprep.subr.bf16.mxu0 0
        %2176 = vmatpush1.bf16.msra.mxu0 0
        %2177 = vmatprep.subr.bf16.mxu0 0
        %2178 = vmatpush1.bf16.msra.mxu0 0
        %2179 = vmatprep.subr.bf16.mxu0 0
        %2180 = vmatpush1.bf16.msra.mxu0 0
        %2181 = vmatprep.subr.bf16.mxu0 0
        %2182 = vmatpush1.bf16.msra.mxu0 0
        %2183 = vmatprep.subr.bf16.mxu0 0
        %2184 = vmatpush1.bf16.msra.mxu0 0
        %2185 = vmatprep.subr.bf16.mxu0 0
        %2186 = vmatpush1.bf16.msra.mxu0 0
        %2187 = vmatprep.subr.bf16.mxu0 0
        %2188 = vmatpush1.bf16.msra.mxu0 0
        %2189 = vmatprep.subr.bf16.mxu0 0
        %2190 = vmatpush1.bf16.msra.mxu0 0
        %2191 = vmatprep.subr.bf16.mxu0 0
        %2192 = vmatpush1.bf16.msra.mxu0 0
        %2193 = vmatprep.mubr.bf16.mxu0 0
        %2194 = vmatmul.mubr.bf16.gmra.mrb[0].mxu0 %v2159
        %v2195 = vpop.f32.mrb[0].mxu0
        %v2196 = vadd.f32 0.0, %v2195
        %v2197 = vpop.f32.mrb[0].mxu0
        %v2198 = vpop.f32.mrb[0].mxu0
        %v2199 = vpop.f32.mrb[0].mxu0
        %2200 = vdwg.mxu0
        %v2203 = vunpack.c.l.b16 %v1664
        %v2204 = vunpack.c.l.b16 %v1665
        %v2205 = vpack.c.b16 %v2204, %v2203
        %v2208 = vsel %vm1676, %v2101, 0
        %2210 = vmatprep.subr.bf16.mxu0 0
        %2211 = vmatpush1.bf16.msra.mxu0 %v2205
        %2212 = vmatprep.subr.bf16.mxu0 0
        %2213 = vmatpush1.bf16.msra.mxu0 0
        %2214 = vmatprep.subr.bf16.mxu0 0
        %2215 = vmatpush1.bf16.msra.mxu0 0
        %2216 = vmatprep.subr.bf16.mxu0 0
        %2217 = vmatpush1.bf16.msra.mxu0 0
        %2218 = vmatprep.subr.bf16.mxu0 0
        %2219 = vmatpush1.bf16.msra.mxu0 0
        %2220 = vmatprep.subr.bf16.mxu0 0
        %2221 = vmatpush1.bf16.msra.mxu0 0
        %2222 = vmatprep.subr.bf16.mxu0 0
        %2223 = vmatpush1.bf16.msra.mxu0 0
        %2224 = vmatprep.subr.bf16.mxu0 0
        %2225 = vmatpush1.bf16.msra.mxu0 0
        %2226 = vmatprep.subr.bf16.mxu0 0
        %2227 = vmatpush1.bf16.msra.mxu0 0
        %2228 = vmatprep.subr.bf16.mxu0 0
        %2229 = vmatpush1.bf16.msra.mxu0 0
        %2230 = vmatprep.subr.bf16.mxu0 0
        %2231 = vmatpush1.bf16.msra.mxu0 0
        %2232 = vmatprep.subr.bf16.mxu0 0
        %2233 = vmatpush1.bf16.msra.mxu0 0
        %2234 = vmatprep.subr.bf16.mxu0 0
        %2235 = vmatpush1.bf16.msra.mxu0 0
        %2236 = vmatprep.subr.bf16.mxu0 0
        %2237 = vmatpush1.bf16.msra.mxu0 0
        %2238 = vmatprep.subr.bf16.mxu0 0
        %2239 = vmatpush1.bf16.msra.mxu0 0
        %2240 = vmatprep.subr.bf16.mxu0 0
        %2241 = vmatpush1.bf16.msra.mxu0 0
        %2242 = vmatprep.mubr.bf16.mxu0 0
        %2243 = vmatmul.mubr.bf16.gmra.mrb[0].mxu0 %v2208
        %v2244 = vpop.f32.mrb[0].mxu0
        %v2245 = vadd.f32 0.0, %v2244
        %v2246 = vpop.f32.mrb[0].mxu0
        %v2247 = vpop.f32.mrb[0].mxu0
        %v2248 = vpop.f32.mrb[0].mxu0
        %2249 = vdwg.mxu0
        %v2252 = vunpack.c.l.b16 %v1666
        %v2253 = vunpack.c.l.b16 %v1667
        %v2254 = vpack.c.b16 %v2253, %v2252
        %v2257 = vsel %vm1676, %v2102, 0
        %2259 = vmatprep.subr.bf16.mxu0 0
        %2260 = vmatpush1.bf16.msra.mxu0 %v2254
        %2261 = vmatprep.subr.bf16.mxu0 0
        %2262 = vmatpush1.bf16.msra.mxu0 0
        %2263 = vmatprep.subr.bf16.mxu0 0
        %2264 = vmatpush1.bf16.msra.mxu0 0
        %2265 = vmatprep.subr.bf16.mxu0 0
        %2266 = vmatpush1.bf16.msra.mxu0 0
        %2267 = vmatprep.subr.bf16.mxu0 0
        %2268 = vmatpush1.bf16.msra.mxu0 0
        %2269 = vmatprep.subr.bf16.mxu0 0
        %2270 = vmatpush1.bf16.msra.mxu0 0
        %2271 = vmatprep.subr.bf16.mxu0 0
        %2272 = vmatpush1.bf16.msra.mxu0 0
        %2273 = vmatprep.subr.bf16.mxu0 0
        %2274 = vmatpush1.bf16.msra.mxu0 0
        %2275 = vmatprep.subr.bf16.mxu0 0
        %2276 = vmatpush1.bf16.msra.mxu0 0
        %2277 = vmatprep.subr.bf16.mxu0 0
        %2278 = vmatpush1.bf16.msra.mxu0 0
        %2279 = vmatprep.subr.bf16.mxu0 0
        %2280 = vmatpush1.bf16.msra.mxu0 0
        %2281 = vmatprep.subr.bf16.mxu0 0
        %2282 = vmatpush1.bf16.msra.mxu0 0
        %2283 = vmatprep.subr.bf16.mxu0 0
        %2284 = vmatpush1.bf16.msra.mxu0 0
        %2285 = vmatprep.subr.bf16.mxu0 0
        %2286 = vmatpush1.bf16.msra.mxu0 0
        %2287 = vmatprep.subr.bf16.mxu0 0
        %2288 = vmatpush1.bf16.msra.mxu0 0
        %2289 = vmatprep.subr.bf16.mxu0 0
        %2290 = vmatpush1.bf16.msra.mxu0 0
        %2291 = vmatprep.mubr.bf16.mxu0 0
        %2292 = vmatmul.mubr.bf16.gmra.mrb[0].mxu0 %v2257
        %v2293 = vpop.f32.mrb[0].mxu0
        %v2294 = vadd.f32 0.0, %v2293
        %v2295 = vpop.f32.mrb[0].mxu0
        %v2296 = vpop.f32.mrb[0].mxu0
        %v2297 = vpop.f32.mrb[0].mxu0
        %2298 = vdwg.mxu0
        %v2299 = vadd.f32 %v2147, %v2196
        %v2300 = vadd.f32 %v2299, %v2245
        %v2301 = vadd.f32 %v2300, %v2294
        %v2302 = vadd.f32 %v898, %v2301
        %v2303 = vld [vmem:[%s11] sm:$0x1]
        %v2304 = vmul.f32 %v2302, %v2302
        %v2305 = vsel %vm910, %v2304, 0.0
        %2306 = vadd.xlane.f32.xlu0 %v2305
        %v2307 = vpop.xlane.xlu0 %2306
        %v2308 = vmul.f32 %v2307, %v914
        %v2309 = vadd.f32 %v2308, 1e-06
        %v2310 = vrsqrt.pop %v2309
        %v2311 = vmul.f32 %v2302, %v2310
        %v2313 = vlaneseq
        %v2314 = vshrl.u32 %v2313, 7
        %v2315 = vsub.s32 0, %v2314
        %v2316 = vrot.slane %v2303, %v2315
        %v2318 = vmul.f32 %v2311, %v2316
        %v2319 = vpack.c.bf16 %v2318, %v2318
        %v2320 = vld [vmem:[%s12] sm:$0xf]
        %v2321 = vld [vmem:[%s12 + $0x4] sm:$0xf]
        %v2322 = vld [vmem:[%s12 + $0x8] sm:$0xf]
        %v2323 = vld [vmem:[%s12 + $0xc] sm:$0xf]
        %v2328 = vunpack.c.l.b16 %v2320
        %v2329 = vunpack.c.l.b16 %v2321
        %v2330 = vunpack.c.l.b16 %v2322
        %v2331 = vunpack.c.l.b16 %v2323
        %v2332 = vpack.c.b16 %v2329, %v2328
        %v2333 = vpack.c.b16 %v2331, %v2330
        %v2337 = vsel %vm910, %v903, 0
        %2339 = vmatprep.subr.bf16.mxu0 0
        %2340 = vmatpush1.bf16.msra.mxu0 %v2332
        %2341 = vmatprep.subr.bf16.mxu0 0
        %2342 = vmatpush1.bf16.msra.mxu0 %v2333
        %2343 = vmatprep.subr.bf16.mxu0 0
        %2344 = vmatpush1.bf16.msra.mxu0 0
        %2345 = vmatprep.subr.bf16.mxu0 0
        %2346 = vmatpush1.bf16.msra.mxu0 0
        %2347 = vmatprep.subr.bf16.mxu0 0
        %2348 = vmatpush1.bf16.msra.mxu0 0
        %2349 = vmatprep.subr.bf16.mxu0 0
        %2350 = vmatpush1.bf16.msra.mxu0 0
        %2351 = vmatprep.subr.bf16.mxu0 0
        %2352 = vmatpush1.bf16.msra.mxu0 0
        %2353 = vmatprep.subr.bf16.mxu0 0
        %2354 = vmatpush1.bf16.msra.mxu0 0
        %2355 = vmatprep.subr.bf16.mxu0 0
        %2356 = vmatpush1.bf16.msra.mxu0 0
        %2357 = vmatprep.subr.bf16.mxu0 0
        %2358 = vmatpush1.bf16.msra.mxu0 0
        %2359 = vmatprep.subr.bf16.mxu0 0
        %2360 = vmatpush1.bf16.msra.mxu0 0
        %2361 = vmatprep.subr.bf16.mxu0 0
        %2362 = vmatpush1.bf16.msra.mxu0 0
        %2363 = vmatprep.subr.bf16.mxu0 0
        %2364 = vmatpush1.bf16.msra.mxu0 0
        %2365 = vmatprep.subr.bf16.mxu0 0
        %2366 = vmatpush1.bf16.msra.mxu0 0
        %2367 = vmatprep.subr.bf16.mxu0 0
        %2368 = vmatpush1.bf16.msra.mxu0 0
        %2369 = vmatprep.subr.bf16.mxu0 0
        %2370 = vmatpush1.bf16.msra.mxu0 0
        %2371 = vmatprep.mubr.bf16.mxu0 0
        %2372 = vmatmul.mubr.bf16.gmra.mrb[0].mxu0 %v2337
        %v2373 = vpop.f32.mrb[0].mxu0
        %v2374 = vadd.f32 0.0, %v2373
        %v2375 = vpop.f32.mrb[0].mxu0
        %v2376 = vpop.f32.mrb[0].mxu0
        %v2377 = vpop.f32.mrb[0].mxu0
        %2378 = vdwg.mxu0
        %v2379 = vpack.c.bf16 %v2374, %v2374
        %2380 = vst [vmem:[%s720] sm:$0xf] %v2379
        %v2381 = vld [vmem:[%s13] sm:$0xf]
        %v2382 = vld [vmem:[%s13 + $0x4] sm:$0xf]
        %v2383 = vld [vmem:[%s13 + $0x8] sm:$0xf]
        %v2384 = vld [vmem:[%s13 + $0xc] sm:$0xf]
        %v2385 = vld [vmem:[%s13 + $0x10] sm:$0xf]
        %v2386 = vld [vmem:[%s13 + $0x14] sm:$0xf]
        %v2387 = vld [vmem:[%s13 + $0x18] sm:$0xf]
        %v2388 = vld [vmem:[%s13 + $0x1c] sm:$0xf]
        %v2389 = vld [vmem:[%s13 + $0x20] sm:$0xf]
        %v2390 = vld [vmem:[%s13 + $0x24] sm:$0xf]
        %v2391 = vld [vmem:[%s13 + $0x28] sm:$0xf]
        %v2392 = vld [vmem:[%s13 + $0x2c] sm:$0xf]
        %v2393 = vld [vmem:[%s13 + $0x30] sm:$0xf]
        %v2394 = vld [vmem:[%s13 + $0x34] sm:$0xf]
        %v2395 = vld [vmem:[%s13 + $0x38] sm:$0xf]
        %v2396 = vld [vmem:[%s13 + $0x3c] sm:$0xf]
        %v2401 = vunpack.c.l.b16 %v2381
        %v2402 = vunpack.c.l.b16 %v2382
        %v2403 = vunpack.c.l.b16 %v2383
        %v2404 = vunpack.c.l.b16 %v2384
        %v2405 = vpack.c.b16 %v2402, %v2401
        %v2406 = vpack.c.b16 %v2404, %v2403
        %v2410 = vsel %vm910, %v2319, 0
        %2412 = vmatprep.subr.bf16.mxu0 0
        %2413 = vmatpush1.bf16.msra.mxu0 %v2405
        %2414 = vmatprep.subr.bf16.mxu0 0
        %2415 = vmatpush1.bf16.msra.mxu0 %v2406
        %2416 = vmatprep.subr.bf16.mxu0 0
        %2417 = vmatpush1.bf16.msra.mxu0 0
        %2418 = vmatprep.subr.bf16.mxu0 0
        %2419 = vmatpush1.bf16.msra.mxu0 0
        %2420 = vmatprep.subr.bf16.mxu0 0
        %2421 = vmatpush1.bf16.msra.mxu0 0
        %2422 = vmatprep.subr.bf16.mxu0 0
        %2423 = vmatpush1.bf16.msra.mxu0 0
        %2424 = vmatprep.subr.bf16.mxu0 0
        %2425 = vmatpush1.bf16.msra.mxu0 0
        %2426 = vmatprep.subr.bf16.mxu0 0
        %2427 = vmatpush1.bf16.msra.mxu0 0
        %2428 = vmatprep.subr.bf16.mxu0 0
        %2429 = vmatpush1.bf16.msra.mxu0 0
        %2430 = vmatprep.subr.bf16.mxu0 0
        %2431 = vmatpush1.bf16.msra.mxu0 0
        %2432 = vmatprep.subr.bf16.mxu0 0
        %2433 = vmatpush1.bf16.msra.mxu0 0
        %2434 = vmatprep.subr.bf16.mxu0 0
        %2435 = vmatpush1.bf16.msra.mxu0 0
        %2436 = vmatprep.subr.bf16.mxu0 0
        %2437 = vmatpush1.bf16.msra.mxu0 0
        %2438 = vmatprep.subr.bf16.mxu0 0
        %2439 = vmatpush1.bf16.msra.mxu0 0
        %2440 = vmatprep.subr.bf16.mxu0 0
        %2441 = vmatpush1.bf16.msra.mxu0 0
        %2442 = vmatprep.subr.bf16.mxu0 0
        %2443 = vmatpush1.bf16.msra.mxu0 0
        %2444 = vmatprep.mubr.bf16.mxu0 0
        %2445 = vmatmul.mubr.bf16.gmra.mrb[0].mxu0 %v2410
        %v2446 = vpop.f32.mrb[0].mxu0
        %v2447 = vadd.f32 0.0, %v2446
        %v2448 = vpop.f32.mrb[0].mxu0
        %v2449 = vpop.f32.mrb[0].mxu0
        %v2450 = vpop.f32.mrb[0].mxu0
        %2451 = vdwg.mxu0
        %v2456 = vunpack.c.l.b16 %v2385
        %v2457 = vunpack.c.l.b16 %v2386
        %v2458 = vunpack.c.l.b16 %v2387
        %v2459 = vunpack.c.l.b16 %v2388
        %v2460 = vpack.c.b16 %v2457, %v2456
        %v2461 = vpack.c.b16 %v2459, %v2458
        %2464 = vmatprep.subr.bf16.mxu0 0
        %2465 = vmatpush1.bf16.msra.mxu0 %v2460
        %2466 = vmatprep.subr.bf16.mxu0 0
        %2467 = vmatpush1.bf16.msra.mxu0 %v2461
        %2468 = vmatprep.subr.bf16.mxu0 0
        %2469 = vmatpush1.bf16.msra.mxu0 0
        %2470 = vmatprep.subr.bf16.mxu0 0
        %2471 = vmatpush1.bf16.msra.mxu0 0
        %2472 = vmatprep.subr.bf16.mxu0 0
        %2473 = vmatpush1.bf16.msra.mxu0 0
        %2474 = vmatprep.subr.bf16.mxu0 0
        %2475 = vmatpush1.bf16.msra.mxu0 0
        %2476 = vmatprep.subr.bf16.mxu0 0
        %2477 = vmatpush1.bf16.msra.mxu0 0
        %2478 = vmatprep.subr.bf16.mxu0 0
        %2479 = vmatpush1.bf16.msra.mxu0 0
        %2480 = vmatprep.subr.bf16.mxu0 0
        %2481 = vmatpush1.bf16.msra.mxu0 0
        %2482 = vmatprep.subr.bf16.mxu0 0
        %2483 = vmatpush1.bf16.msra.mxu0 0
        %2484 = vmatprep.subr.bf16.mxu0 0
        %2485 = vmatpush1.bf16.msra.mxu0 0
        %2486 = vmatprep.subr.bf16.mxu0 0
        %2487 = vmatpush1.bf16.msra.mxu0 0
        %2488 = vmatprep.subr.bf16.mxu0 0
        %2489 = vmatpush1.bf16.msra.mxu0 0
        %2490 = vmatprep.subr.bf16.mxu0 0
        %2491 = vmatpush1.bf16.msra.mxu0 0
        %2492 = vmatprep.subr.bf16.mxu0 0
        %2493 = vmatpush1.bf16.msra.mxu0 0
        %2494 = vmatprep.subr.bf16.mxu0 0
        %2495 = vmatpush1.bf16.msra.mxu0 0
        %2496 = vmatprep.mubr.bf16.mxu0 0
        %2497 = vmatmul.mubr.bf16.gmra.mrb[0].mxu0 %v2410
        %v2498 = vpop.f32.mrb[0].mxu0
        %v2499 = vadd.f32 0.0, %v2498
        %v2500 = vpop.f32.mrb[0].mxu0
        %v2501 = vpop.f32.mrb[0].mxu0
        %v2502 = vpop.f32.mrb[0].mxu0
        %2503 = vdwg.mxu0
        %v2508 = vunpack.c.l.b16 %v2389
        %v2509 = vunpack.c.l.b16 %v2390
        %v2510 = vunpack.c.l.b16 %v2391
        %v2511 = vunpack.c.l.b16 %v2392
        %v2512 = vpack.c.b16 %v2509, %v2508
        %v2513 = vpack.c.b16 %v2511, %v2510
        %2516 = vmatprep.subr.bf16.mxu0 0
        %2517 = vmatpush1.bf16.msra.mxu0 %v2512
        %2518 = vmatprep.subr.bf16.mxu0 0
        %2519 = vmatpush1.bf16.msra.mxu0 %v2513
        %2520 = vmatprep.subr.bf16.mxu0 0
        %2521 = vmatpush1.bf16.msra.mxu0 0
        %2522 = vmatprep.subr.bf16.mxu0 0
        %2523 = vmatpush1.bf16.msra.mxu0 0
        %2524 = vmatprep.subr.bf16.mxu0 0
        %2525 = vmatpush1.bf16.msra.mxu0 0
        %2526 = vmatprep.subr.bf16.mxu0 0
        %2527 = vmatpush1.bf16.msra.mxu0 0
        %2528 = vmatprep.subr.bf16.mxu0 0
        %2529 = vmatpush1.bf16.msra.mxu0 0
        %2530 = vmatprep.subr.bf16.mxu0 0
        %2531 = vmatpush1.bf16.msra.mxu0 0
        %2532 = vmatprep.subr.bf16.mxu0 0
        %2533 = vmatpush1.bf16.msra.mxu0 0
        %2534 = vmatprep.subr.bf16.mxu0 0
        %2535 = vmatpush1.bf16.msra.mxu0 0
        %2536 = vmatprep.subr.bf16.mxu0 0
        %2537 = vmatpush1.bf16.msra.mxu0 0
        %2538 = vmatprep.subr.bf16.mxu0 0
        %2539 = vmatpush1.bf16.msra.mxu0 0
        %2540 = vmatprep.subr.bf16.mxu0 0
        %2541 = vmatpush1.bf16.msra.mxu0 0
        %2542 = vmatprep.subr.bf16.mxu0 0
        %2543 = vmatpush1.bf16.msra.mxu0 0
        %2544 = vmatprep.subr.bf16.mxu0 0
        %2545 = vmatpush1.bf16.msra.mxu0 0
        %2546 = vmatprep.subr.bf16.mxu0 0
        %2547 = vmatpush1.bf16.msra.mxu0 0
        %2548 = vmatprep.mubr.bf16.mxu0 0
        %2549 = vmatmul.mubr.bf16.gmra.mrb[0].mxu0 %v2410
        %v2550 = vpop.f32.mrb[0].mxu0
        %v2551 = vadd.f32 0.0, %v2550
        %v2552 = vpop.f32.mrb[0].mxu0
        %v2553 = vpop.f32.mrb[0].mxu0
        %v2554 = vpop.f32.mrb[0].mxu0
        %2555 = vdwg.mxu0
        %v2560 = vunpack.c.l.b16 %v2393
        %v2561 = vunpack.c.l.b16 %v2394
        %v2562 = vunpack.c.l.b16 %v2395
        %v2563 = vunpack.c.l.b16 %v2396
        %v2564 = vpack.c.b16 %v2561, %v2560
        %v2565 = vpack.c.b16 %v2563, %v2562
        %2568 = vmatprep.subr.bf16.mxu0 0
        %2569 = vmatpush1.bf16.msra.mxu0 %v2564
        %2570 = vmatprep.subr.bf16.mxu0 0
        %2571 = vmatpush1.bf16.msra.mxu0 %v2565
        %2572 = vmatprep.subr.bf16.mxu0 0
        %2573 = vmatpush1.bf16.msra.mxu0 0
        %2574 = vmatprep.subr.bf16.mxu0 0
        %2575 = vmatpush1.bf16.msra.mxu0 0
        %2576 = vmatprep.subr.bf16.mxu0 0
        %2577 = vmatpush1.bf16.msra.mxu0 0
        %2578 = vmatprep.subr.bf16.mxu0 0
        %2579 = vmatpush1.bf16.msra.mxu0 0
        %2580 = vmatprep.subr.bf16.mxu0 0
        %2581 = vmatpush1.bf16.msra.mxu0 0
        %2582 = vmatprep.subr.bf16.mxu0 0
        %2583 = vmatpush1.bf16.msra.mxu0 0
        %2584 = vmatprep.subr.bf16.mxu0 0
        %2585 = vmatpush1.bf16.msra.mxu0 0
        %2586 = vmatprep.subr.bf16.mxu0 0
        %2587 = vmatpush1.bf16.msra.mxu0 0
        %2588 = vmatprep.subr.bf16.mxu0 0
        %2589 = vmatpush1.bf16.msra.mxu0 0
        %2590 = vmatprep.subr.bf16.mxu0 0
        %2591 = vmatpush1.bf16.msra.mxu0 0
        %2592 = vmatprep.subr.bf16.mxu0 0
        %2593 = vmatpush1.bf16.msra.mxu0 0
        %2594 = vmatprep.subr.bf16.mxu0 0
        %2595 = vmatpush1.bf16.msra.mxu0 0
        %2596 = vmatprep.subr.bf16.mxu0 0
        %2597 = vmatpush1.bf16.msra.mxu0 0
        %2598 = vmatprep.subr.bf16.mxu0 0
        %2599 = vmatpush1.bf16.msra.mxu0 0
        %2600 = vmatprep.mubr.bf16.mxu0 0
        %2601 = vmatmul.mubr.bf16.gmra.mrb[0].mxu0 %v2410
        %v2602 = vpop.f32.mrb[0].mxu0
        %v2603 = vadd.f32 0.0, %v2602
        %v2604 = vpop.f32.mrb[0].mxu0
        %v2605 = vpop.f32.mrb[0].mxu0
        %v2606 = vpop.f32.mrb[0].mxu0
        %2607 = vdwg.mxu0
        %v2608 = vld [vmem:[%s14] sm:$0xf]
        %v2609 = vld [vmem:[%s14 + $0x4] sm:$0xf]
        %v2610 = vld [vmem:[%s14 + $0x8] sm:$0xf]
        %v2611 = vld [vmem:[%s14 + $0xc] sm:$0xf]
        %v2612 = vld [vmem:[%s14 + $0x10] sm:$0xf]
        %v2613 = vld [vmem:[%s14 + $0x14] sm:$0xf]
        %v2614 = vld [vmem:[%s14 + $0x18] sm:$0xf]
        %v2615 = vld [vmem:[%s14 + $0x1c] sm:$0xf]
        %v2616 = vld [vmem:[%s14 + $0x20] sm:$0xf]
        %v2617 = vld [vmem:[%s14 + $0x24] sm:$0xf]
        %v2618 = vld [vmem:[%s14 + $0x28] sm:$0xf]
        %v2619 = vld [vmem:[%s14 + $0x2c] sm:$0xf]
        %v2620 = vld [vmem:[%s14 + $0x30] sm:$0xf]
        %v2621 = vld [vmem:[%s14 + $0x34] sm:$0xf]
        %v2622 = vld [vmem:[%s14 + $0x38] sm:$0xf]
        %v2623 = vld [vmem:[%s14 + $0x3c] sm:$0xf]
        %v2628 = vunpack.c.l.b16 %v2608
        %v2629 = vunpack.c.l.b16 %v2609
        %v2630 = vunpack.c.l.b16 %v2610
        %v2631 = vunpack.c.l.b16 %v2611
        %v2632 = vpack.c.b16 %v2629, %v2628
        %v2633 = vpack.c.b16 %v2631, %v2630
        %2636 = vmatprep.subr.bf16.mxu0 0
        %2637 = vmatpush1.bf16.msra.mxu0 %v2632
        %2638 = vmatprep.subr.bf16.mxu0 0
        %2639 = vmatpush1.bf16.msra.mxu0 %v2633
        %2640 = vmatprep.subr.bf16.mxu0 0
        %2641 = vmatpush1.bf16.msra.mxu0 0
        %2642 = vmatprep.subr.bf16.mxu0 0
        %2643 = vmatpush1.bf16.msra.mxu0 0
        %2644 = vmatprep.subr.bf16.mxu0 0
        %2645 = vmatpush1.bf16.msra.mxu0 0
        %2646 = vmatprep.subr.bf16.mxu0 0
        %2647 = vmatpush1.bf16.msra.mxu0 0
        %2648 = vmatprep.subr.bf16.mxu0 0
        %2649 = vmatpush1.bf16.msra.mxu0 0
        %2650 = vmatprep.subr.bf16.mxu0 0
        %2651 = vmatpush1.bf16.msra.mxu0 0
        %2652 = vmatprep.subr.bf16.mxu0 0
        %2653 = vmatpush1.bf16.msra.mxu0 0
        %2654 = vmatprep.subr.bf16.mxu0 0
        %2655 = vmatpush1.bf16.msra.mxu0 0
        %2656 = vmatprep.subr.bf16.mxu0 0
        %2657 = vmatpush1.bf16.msra.mxu0 0
        %2658 = vmatprep.subr.bf16.mxu0 0
        %2659 = vmatpush1.bf16.msra.mxu0 0
        %2660 = vmatprep.subr.bf16.mxu0 0
        %2661 = vmatpush1.bf16.msra.mxu0 0
        %2662 = vmatprep.subr.bf16.mxu0 0
        %2663 = vmatpush1.bf16.msra.mxu0 0
        %2664 = vmatprep.subr.bf16.mxu0 0
        %2665 = vmatpush1.bf16.msra.mxu0 0
        %2666 = vmatprep.subr.bf16.mxu0 0
        %2667 = vmatpush1.bf16.msra.mxu0 0
        %2668 = vmatprep.mubr.bf16.mxu0 0
        %2669 = vmatmul.mubr.bf16.gmra.mrb[0].mxu0 %v2337
        %v2670 = vpop.f32.mrb[0].mxu0
        %v2671 = vadd.f32 0.0, %v2670
        %v2672 = vpop.f32.mrb[0].mxu0
        %v2673 = vpop.f32.mrb[0].mxu0
        %v2674 = vpop.f32.mrb[0].mxu0
        %2675 = vdwg.mxu0
        %v2680 = vunpack.c.l.b16 %v2612
        %v2681 = vunpack.c.l.b16 %v2613
        %v2682 = vunpack.c.l.b16 %v2614
        %v2683 = vunpack.c.l.b16 %v2615
        %v2684 = vpack.c.b16 %v2681, %v2680
        %v2685 = vpack.c.b16 %v2683, %v2682
        %2688 = vmatprep.subr.bf16.mxu0 0
        %2689 = vmatpush1.bf16.msra.mxu0 %v2684
        %2690 = vmatprep.subr.bf16.mxu0 0
        %2691 = vmatpush1.bf16.msra.mxu0 %v2685
        %2692 = vmatprep.subr.bf16.mxu0 0
        %2693 = vmatpush1.bf16.msra.mxu0 0
        %2694 = vmatprep.subr.bf16.mxu0 0
        %2695 = vmatpush1.bf16.msra.mxu0 0
        %2696 = vmatprep.subr.bf16.mxu0 0
        %2697 = vmatpush1.bf16.msra.mxu0 0
        %2698 = vmatprep.subr.bf16.mxu0 0
        %2699 = vmatpush1.bf16.msra.mxu0 0
        %2700 = vmatprep.subr.bf16.mxu0 0
        %2701 = vmatpush1.bf16.msra.mxu0 0
        %2702 = vmatprep.subr.bf16.mxu0 0
        %2703 = vmatpush1.bf16.msra.mxu0 0
        %2704 = vmatprep.subr.bf16.mxu0 0
        %2705 = vmatpush1.bf16.msra.mxu0 0
        %2706 = vmatprep.subr.bf16.mxu0 0
        %2707 = vmatpush1.bf16.msra.mxu0 0
        %2708 = vmatprep.subr.bf16.mxu0 0
        %2709 = vmatpush1.bf16.msra.mxu0 0
        %2710 = vmatprep.subr.bf16.mxu0 0
        %2711 = vmatpush1.bf16.msra.mxu0 0
        %2712 = vmatprep.subr.bf16.mxu0 0
        %2713 = vmatpush1.bf16.msra.mxu0 0
        %2714 = vmatprep.subr.bf16.mxu0 0
        %2715 = vmatpush1.bf16.msra.mxu0 0
        %2716 = vmatprep.subr.bf16.mxu0 0
        %2717 = vmatpush1.bf16.msra.mxu0 0
        %2718 = vmatprep.subr.bf16.mxu0 0
        %2719 = vmatpush1.bf16.msra.mxu0 0
        %2720 = vmatprep.mubr.bf16.mxu0 0
        %2721 = vmatmul.mubr.bf16.gmra.mrb[0].mxu0 %v2337
        %v2722 = vpop.f32.mrb[0].mxu0
        %v2723 = vadd.f32 0.0, %v2722
        %v2724 = vpop.f32.mrb[0].mxu0
        %v2725 = vpop.f32.mrb[0].mxu0
        %v2726 = vpop.f32.mrb[0].mxu0
        %2727 = vdwg.mxu0
        %v2732 = vunpack.c.l.b16 %v2616
        %v2733 = vunpack.c.l.b16 %v2617
        %v2734 = vunpack.c.l.b16 %v2618
        %v2735 = vunpack.c.l.b16 %v2619
        %v2736 = vpack.c.b16 %v2733, %v2732
        %v2737 = vpack.c.b16 %v2735, %v2734
        %2740 = vmatprep.subr.bf16.mxu0 0
        %2741 = vmatpush1.bf16.msra.mxu0 %v2736
        %2742 = vmatprep.subr.bf16.mxu0 0
        %2743 = vmatpush1.bf16.msra.mxu0 %v2737
        %2744 = vmatprep.subr.bf16.mxu0 0
        %2745 = vmatpush1.bf16.msra.mxu0 0
        %2746 = vmatprep.subr.bf16.mxu0 0
        %2747 = vmatpush1.bf16.msra.mxu0 0
        %2748 = vmatprep.subr.bf16.mxu0 0
        %2749 = vmatpush1.bf16.msra.mxu0 0
        %2750 = vmatprep.subr.bf16.mxu0 0
        %2751 = vmatpush1.bf16.msra.mxu0 0
        %2752 = vmatprep.subr.bf16.mxu0 0
        %2753 = vmatpush1.bf16.msra.mxu0 0
        %2754 = vmatprep.subr.bf16.mxu0 0
        %2755 = vmatpush1.bf16.msra.mxu0 0
        %2756 = vmatprep.subr.bf16.mxu0 0
        %2757 = vmatpush1.bf16.msra.mxu0 0
        %2758 = vmatprep.subr.bf16.mxu0 0
        %2759 = vmatpush1.bf16.msra.mxu0 0
        %2760 = vmatprep.subr.bf16.mxu0 0
        %2761 = vmatpush1.bf16.msra.mxu0 0
        %2762 = vmatprep.subr.bf16.mxu0 0
        %2763 = vmatpush1.bf16.msra.mxu0 0
        %2764 = vmatprep.subr.bf16.mxu0 0
        %2765 = vmatpush1.bf16.msra.mxu0 0
        %2766 = vmatprep.subr.bf16.mxu0 0
        %2767 = vmatpush1.bf16.msra.mxu0 0
        %2768 = vmatprep.subr.bf16.mxu0 0
        %2769 = vmatpush1.bf16.msra.mxu0 0
        %2770 = vmatprep.subr.bf16.mxu0 0
        %2771 = vmatpush1.bf16.msra.mxu0 0
        %2772 = vmatprep.mubr.bf16.mxu0 0
        %2773 = vmatmul.mubr.bf16.gmra.mrb[0].mxu0 %v2337
        %v2774 = vpop.f32.mrb[0].mxu0
        %v2775 = vadd.f32 0.0, %v2774
        %v2776 = vpop.f32.mrb[0].mxu0
        %v2777 = vpop.f32.mrb[0].mxu0
        %v2778 = vpop.f32.mrb[0].mxu0
        %2779 = vdwg.mxu0
        %v2784 = vunpack.c.l.b16 %v2620
        %v2785 = vunpack.c.l.b16 %v2621
        %v2786 = vunpack.c.l.b16 %v2622
        %v2787 = vunpack.c.l.b16 %v2623
        %v2788 = vpack.c.b16 %v2785, %v2784
        %v2789 = vpack.c.b16 %v2787, %v2786
        %2792 = vmatprep.subr.bf16.mxu0 0
        %2793 = vmatpush1.bf16.msra.mxu0 %v2788
        %2794 = vmatprep.subr.bf16.mxu0 0
        %2795 = vmatpush1.bf16.msra.mxu0 %v2789
        %2796 = vmatprep.subr.bf16.mxu0 0
        %2797 = vmatpush1.bf16.msra.mxu0 0
        %2798 = vmatprep.subr.bf16.mxu0 0
        %2799 = vmatpush1.bf16.msra.mxu0 0
        %2800 = vmatprep.subr.bf16.mxu0 0
        %2801 = vmatpush1.bf16.msra.mxu0 0
        %2802 = vmatprep.subr.bf16.mxu0 0
        %2803 = vmatpush1.bf16.msra.mxu0 0
        %2804 = vmatprep.subr.bf16.mxu0 0
        %2805 = vmatpush1.bf16.msra.mxu0 0
        %2806 = vmatprep.subr.bf16.mxu0 0
        %2807 = vmatpush1.bf16.msra.mxu0 0
        %2808 = vmatprep.subr.bf16.mxu0 0
        %2809 = vmatpush1.bf16.msra.mxu0 0
        %2810 = vmatprep.subr.bf16.mxu0 0
        %2811 = vmatpush1.bf16.msra.mxu0 0
        %2812 = vmatprep.subr.bf16.mxu0 0
        %2813 = vmatpush1.bf16.msra.mxu0 0
        %2814 = vmatprep.subr.bf16.mxu0 0
        %2815 = vmatpush1.bf16.msra.mxu0 0
        %2816 = vmatprep.subr.bf16.mxu0 0
        %2817 = vmatpush1.bf16.msra.mxu0 0
        %2818 = vmatprep.subr.bf16.mxu0 0
        %2819 = vmatpush1.bf16.msra.mxu0 0
        %2820 = vmatprep.subr.bf16.mxu0 0
        %2821 = vmatpush1.bf16.msra.mxu0 0
        %2822 = vmatprep.subr.bf16.mxu0 0
        %2823 = vmatpush1.bf16.msra.mxu0 0
        %2824 = vmatprep.mubr.bf16.mxu0 0
        %2825 = vmatmul.mubr.bf16.gmra.mrb[0].mxu0 %v2337
        %v2826 = vpop.f32.mrb[0].mxu0
        %v2827 = vadd.f32 0.0, %v2826
        %v2828 = vpop.f32.mrb[0].mxu0
        %v2829 = vpop.f32.mrb[0].mxu0
        %v2830 = vpop.f32.mrb[0].mxu0
        %2831 = vdwg.mxu0
        %v2832 = vld [vmem:[%s15] sm:$0xf]
        %v2833 = vld [vmem:[%s15 + $0x4] sm:$0xf]
        %v2834 = vld [vmem:[%s15 + $0x8] sm:$0xf]
        %v2835 = vld [vmem:[%s15 + $0xc] sm:$0xf]
        %v2836 = vld [vmem:[%s15 + $0x10] sm:$0xf]
        %v2837 = vld [vmem:[%s15 + $0x14] sm:$0xf]
        %v2838 = vld [vmem:[%s15 + $0x18] sm:$0xf]
        %v2839 = vld [vmem:[%s15 + $0x1c] sm:$0xf]
        %v2840 = vld [vmem:[%s15 + $0x20] sm:$0xf]
        %v2841 = vld [vmem:[%s15 + $0x24] sm:$0xf]
        %v2842 = vld [vmem:[%s15 + $0x28] sm:$0xf]
        %v2843 = vld [vmem:[%s15 + $0x2c] sm:$0xf]
        %v2844 = vld [vmem:[%s15 + $0x30] sm:$0xf]
        %v2845 = vld [vmem:[%s15 + $0x34] sm:$0xf]
        %v2846 = vld [vmem:[%s15 + $0x38] sm:$0xf]
        %v2847 = vld [vmem:[%s15 + $0x3c] sm:$0xf]
        %v2852 = vunpack.c.l.b16 %v2832
        %v2853 = vunpack.c.l.b16 %v2833
        %v2854 = vunpack.c.l.b16 %v2834
        %v2855 = vunpack.c.l.b16 %v2835
        %v2856 = vpack.c.b16 %v2853, %v2852
        %v2857 = vpack.c.b16 %v2855, %v2854
        %2860 = vmatprep.subr.bf16.mxu0 0
        %2861 = vmatpush1.bf16.msra.mxu0 %v2856
        %2862 = vmatprep.subr.bf16.mxu0 0
        %2863 = vmatpush1.bf16.msra.mxu0 %v2857
        %2864 = vmatprep.subr.bf16.mxu0 0
        %2865 = vmatpush1.bf16.msra.mxu0 0
        %2866 = vmatprep.subr.bf16.mxu0 0
        %2867 = vmatpush1.bf16.msra.mxu0 0
        %2868 = vmatprep.subr.bf16.mxu0 0
        %2869 = vmatpush1.bf16.msra.mxu0 0
        %2870 = vmatprep.subr.bf16.mxu0 0
        %2871 = vmatpush1.bf16.msra.mxu0 0
        %2872 = vmatprep.subr.bf16.mxu0 0
        %2873 = vmatpush1.bf16.msra.mxu0 0
        %2874 = vmatprep.subr.bf16.mxu0 0
        %2875 = vmatpush1.bf16.msra.mxu0 0
        %2876 = vmatprep.subr.bf16.mxu0 0
        %2877 = vmatpush1.bf16.msra.mxu0 0
        %2878 = vmatprep.subr.bf16.mxu0 0
        %2879 = vmatpush1.bf16.msra.mxu0 0
        %2880 = vmatprep.subr.bf16.mxu0 0
        %2881 = vmatpush1.bf16.msra.mxu0 0
        %2882 = vmatprep.subr.bf16.mxu0 0
        %2883 = vmatpush1.bf16.msra.mxu0 0
        %2884 = vmatprep.subr.bf16.mxu0 0
        %2885 = vmatpush1.bf16.msra.mxu0 0
        %2886 = vmatprep.subr.bf16.mxu0 0
        %2887 = vmatpush1.bf16.msra.mxu0 0
        %2888 = vmatprep.subr.bf16.mxu0 0
        %2889 = vmatpush1.bf16.msra.mxu0 0
        %2890 = vmatprep.subr.bf16.mxu0 0
        %2891 = vmatpush1.bf16.msra.mxu0 0
        %2892 = vmatprep.mubr.bf16.mxu0 0
        %2893 = vmatmul.mubr.bf16.gmra.mrb[0].mxu0 %v2337
        %v2894 = vpop.f32.mrb[0].mxu0
        %v2895 = vadd.f32 0.0, %v2894
        %v2896 = vpop.f32.mrb[0].mxu0
        %v2897 = vpop.f32.mrb[0].mxu0
        %v2898 = vpop.f32.mrb[0].mxu0
        %2899 = vdwg.mxu0
        %v2904 = vunpack.c.l.b16 %v2836
        %v2905 = vunpack.c.l.b16 %v2837
        %v2906 = vunpack.c.l.b16 %v2838
        %v2907 = vunpack.c.l.b16 %v2839
        %v2908 = vpack.c.b16 %v2905, %v2904
        %v2909 = vpack.c.b16 %v2907, %v2906
        %2912 = vmatprep.subr.bf16.mxu0 0
        %2913 = vmatpush1.bf16.msra.mxu0 %v2908
        %2914 = vmatprep.subr.bf16.mxu0 0
        %2915 = vmatpush1.bf16.msra.mxu0 %v2909
        %2916 = vmatprep.subr.bf16.mxu0 0
        %2917 = vmatpush1.bf16.msra.mxu0 0
        %2918 = vmatprep.subr.bf16.mxu0 0
        %2919 = vmatpush1.bf16.msra.mxu0 0
        %2920 = vmatprep.subr.bf16.mxu0 0
        %2921 = vmatpush1.bf16.msra.mxu0 0
        %2922 = vmatprep.subr.bf16.mxu0 0
        %2923 = vmatpush1.bf16.msra.mxu0 0
        %2924 = vmatprep.subr.bf16.mxu0 0
        %2925 = vmatpush1.bf16.msra.mxu0 0
        %2926 = vmatprep.subr.bf16.mxu0 0
        %2927 = vmatpush1.bf16.msra.mxu0 0
        %2928 = vmatprep.subr.bf16.mxu0 0
        %2929 = vmatpush1.bf16.msra.mxu0 0
        %2930 = vmatprep.subr.bf16.mxu0 0
        %2931 = vmatpush1.bf16.msra.mxu0 0
        %2932 = vmatprep.subr.bf16.mxu0 0
        %2933 = vmatpush1.bf16.msra.mxu0 0
        %2934 = vmatprep.subr.bf16.mxu0 0
        %2935 = vmatpush1.bf16.msra.mxu0 0
        %2936 = vmatprep.subr.bf16.mxu0 0
        %2937 = vmatpush1.bf16.msra.mxu0 0
        %2938 = vmatprep.subr.bf16.mxu0 0
        %2939 = vmatpush1.bf16.msra.mxu0 0
        %2940 = vmatprep.subr.bf16.mxu0 0
        %2941 = vmatpush1.bf16.msra.mxu0 0
        %2942 = vmatprep.subr.bf16.mxu0 0
        %2943 = vmatpush1.bf16.msra.mxu0 0
        %2944 = vmatprep.mubr.bf16.mxu0 0
        %2945 = vmatmul.mubr.bf16.gmra.mrb[0].mxu0 %v2337
        %v2946 = vpop.f32.mrb[0].mxu0
        %v2947 = vadd.f32 0.0, %v2946
        %v2948 = vpop.f32.mrb[0].mxu0
        %v2949 = vpop.f32.mrb[0].mxu0
        %v2950 = vpop.f32.mrb[0].mxu0
        %2951 = vdwg.mxu0
        %v2956 = vunpack.c.l.b16 %v2840
        %v2957 = vunpack.c.l.b16 %v2841
        %v2958 = vunpack.c.l.b16 %v2842
        %v2959 = vunpack.c.l.b16 %v2843
        %v2960 = vpack.c.b16 %v2957, %v2956
        %v2961 = vpack.c.b16 %v2959, %v2958
        %2964 = vmatprep.subr.bf16.mxu0 0
        %2965 = vmatpush1.bf16.msra.mxu0 %v2960
        %2966 = vmatprep.subr.bf16.mxu0 0
        %2967 = vmatpush1.bf16.msra.mxu0 %v2961
        %2968 = vmatprep.subr.bf16.mxu0 0
        %2969 = vmatpush1.bf16.msra.mxu0 0
        %2970 = vmatprep.subr.bf16.mxu0 0
        %2971 = vmatpush1.bf16.msra.mxu0 0
        %2972 = vmatprep.subr.bf16.mxu0 0
        %2973 = vmatpush1.bf16.msra.mxu0 0
        %2974 = vmatprep.subr.bf16.mxu0 0
        %2975 = vmatpush1.bf16.msra.mxu0 0
        %2976 = vmatprep.subr.bf16.mxu0 0
        %2977 = vmatpush1.bf16.msra.mxu0 0
        %2978 = vmatprep.subr.bf16.mxu0 0
        %2979 = vmatpush1.bf16.msra.mxu0 0
        %2980 = vmatprep.subr.bf16.mxu0 0
        %2981 = vmatpush1.bf16.msra.mxu0 0
        %2982 = vmatprep.subr.bf16.mxu0 0
        %2983 = vmatpush1.bf16.msra.mxu0 0
        %2984 = vmatprep.subr.bf16.mxu0 0
        %2985 = vmatpush1.bf16.msra.mxu0 0
        %2986 = vmatprep.subr.bf16.mxu0 0
        %2987 = vmatpush1.bf16.msra.mxu0 0
        %2988 = vmatprep.subr.bf16.mxu0 0
        %2989 = vmatpush1.bf16.msra.mxu0 0
        %2990 = vmatprep.subr.bf16.mxu0 0
        %2991 = vmatpush1.bf16.msra.mxu0 0
        %2992 = vmatprep.subr.bf16.mxu0 0
        %2993 = vmatpush1.bf16.msra.mxu0 0
        %2994 = vmatprep.subr.bf16.mxu0 0
        %2995 = vmatpush1.bf16.msra.mxu0 0
        %2996 = vmatprep.mubr.bf16.mxu0 0
        %2997 = vmatmul.mubr.bf16.gmra.mrb[0].mxu0 %v2337
        %v2998 = vpop.f32.mrb[0].mxu0
        %v2999 = vadd.f32 0.0, %v2998
        %v3000 = vpop.f32.mrb[0].mxu0
        %v3001 = vpop.f32.mrb[0].mxu0
        %v3002 = vpop.f32.mrb[0].mxu0
        %3003 = vdwg.mxu0
        %v3008 = vunpack.c.l.b16 %v2844
        %v3009 = vunpack.c.l.b16 %v2845
        %v3010 = vunpack.c.l.b16 %v2846
        %v3011 = vunpack.c.l.b16 %v2847
        %v3012 = vpack.c.b16 %v3009, %v3008
        %v3013 = vpack.c.b16 %v3011, %v3010
        %3016 = vmatprep.subr.bf16.mxu0 0
        %3017 = vmatpush1.bf16.msra.mxu0 %v3012
        %3018 = vmatprep.subr.bf16.mxu0 0
        %3019 = vmatpush1.bf16.msra.mxu0 %v3013
        %3020 = vmatprep.subr.bf16.mxu0 0
        %3021 = vmatpush1.bf16.msra.mxu0 0
        %3022 = vmatprep.subr.bf16.mxu0 0
        %3023 = vmatpush1.bf16.msra.mxu0 0
        %3024 = vmatprep.subr.bf16.mxu0 0
        %3025 = vmatpush1.bf16.msra.mxu0 0
        %3026 = vmatprep.subr.bf16.mxu0 0
        %3027 = vmatpush1.bf16.msra.mxu0 0
        %3028 = vmatprep.subr.bf16.mxu0 0
        %3029 = vmatpush1.bf16.msra.mxu0 0
        %3030 = vmatprep.subr.bf16.mxu0 0
        %3031 = vmatpush1.bf16.msra.mxu0 0
        %3032 = vmatprep.subr.bf16.mxu0 0
        %3033 = vmatpush1.bf16.msra.mxu0 0
        %3034 = vmatprep.subr.bf16.mxu0 0
        %3035 = vmatpush1.bf16.msra.mxu0 0
        %3036 = vmatprep.subr.bf16.mxu0 0
        %3037 = vmatpush1.bf16.msra.mxu0 0
        %3038 = vmatprep.subr.bf16.mxu0 0
        %3039 = vmatpush1.bf16.msra.mxu0 0
        %3040 = vmatprep.subr.bf16.mxu0 0
        %3041 = vmatpush1.bf16.msra.mxu0 0
        %3042 = vmatprep.subr.bf16.mxu0 0
        %3043 = vmatpush1.bf16.msra.mxu0 0
        %3044 = vmatprep.subr.bf16.mxu0 0
        %3045 = vmatpush1.bf16.msra.mxu0 0
        %3046 = vmatprep.subr.bf16.mxu0 0
        %3047 = vmatpush1.bf16.msra.mxu0 0
        %3048 = vmatprep.mubr.bf16.mxu0 0
        %3049 = vmatmul.mubr.bf16.gmra.mrb[0].mxu0 %v2337
        %v3050 = vpop.f32.mrb[0].mxu0
        %v3051 = vadd.f32 0.0, %v3050
        %v3052 = vpop.f32.mrb[0].mxu0
        %v3053 = vpop.f32.mrb[0].mxu0
        %v3054 = vpop.f32.mrb[0].mxu0
        %3055 = vdwg.mxu0
        %v3056 = vld [vmem:[%s16] sm:$0xf]
        %v3057 = vld [vmem:[%s16 + $0x4] sm:$0xf]
        %v3058 = vld [vmem:[%s16 + $0x8] sm:$0xf]
        %v3059 = vld [vmem:[%s16 + $0xc] sm:$0xf]
        %v3060 = vld [vmem:[%s16 + $0x10] sm:$0xf]
        %v3061 = vld [vmem:[%s16 + $0x14] sm:$0xf]
        %v3062 = vld [vmem:[%s16 + $0x18] sm:$0xf]
        %v3063 = vld [vmem:[%s16 + $0x1c] sm:$0xf]
        %v3064 = vpack.c.bf16 %v2447, %v2447
        %v3065 = vpack.c.bf16 %v2499, %v2499
        %v3066 = vpack.c.bf16 %v2551, %v2551
        %v3067 = vpack.c.bf16 %v2603, %v2603
        %v3068 = vpack.c.bf16 %v2671, %v2671
        %v3069 = vpack.c.bf16 %v2723, %v2723
        %v3070 = vpack.c.bf16 %v2775, %v2775
        %v3071 = vpack.c.bf16 %v2827, %v2827
        %v3073 = vsel %vm1676, %v3064, 0
        %v3076 = vsel %vm1676, %v3068, 0
        %3078 = vmatprep.subr.bf16.mxu0 0
        %3079 = vmatpush1.bf16.xpose.msra.mxu0 %v3076
        %3080 = vmatprep.subr.bf16.mxu0 0
        %3081 = vmatpush1.bf16.xpose.msra.mxu0 0
        %3082 = vmatprep.subr.bf16.mxu0 0
        %3083 = vmatpush1.bf16.xpose.msra.mxu0 0
        %3084 = vmatprep.subr.bf16.mxu0 0
        %3085 = vmatpush1.bf16.xpose.msra.mxu0 0
        %3086 = vmatprep.subr.bf16.mxu0 0
        %3087 = vmatpush1.bf16.xpose.msra.mxu0 0
        %3088 = vmatprep.subr.bf16.mxu0 0
        %3089 = vmatpush1.bf16.xpose.msra.mxu0 0
        %3090 = vmatprep.subr.bf16.mxu0 0
        %3091 = vmatpush1.bf16.xpose.msra.mxu0 0
        %3092 = vmatprep.subr.bf16.mxu0 0
        %3093 = vmatpush1.bf16.xpose.msra.mxu0 0
        %3094 = vmatprep.subr.bf16.mxu0 0
        %3095 = vmatpush1.bf16.xpose.msra.mxu0 0
        %3096 = vmatprep.subr.bf16.mxu0 0
        %3097 = vmatpush1.bf16.xpose.msra.mxu0 0
        %3098 = vmatprep.subr.bf16.mxu0 0
        %3099 = vmatpush1.bf16.xpose.msra.mxu0 0
        %3100 = vmatprep.subr.bf16.mxu0 0
        %3101 = vmatpush1.bf16.xpose.msra.mxu0 0
        %3102 = vmatprep.subr.bf16.mxu0 0
        %3103 = vmatpush1.bf16.xpose.msra.mxu0 0
        %3104 = vmatprep.subr.bf16.mxu0 0
        %3105 = vmatpush1.bf16.xpose.msra.mxu0 0
        %3106 = vmatprep.subr.bf16.mxu0 0
        %3107 = vmatpush1.bf16.xpose.msra.mxu0 0
        %3108 = vmatprep.subr.bf16.mxu0 0
        %3109 = vmatpush1.bf16.xpose.msra.mxu0 0
        %3110 = vmatprep.mubr.bf16.mxu0 0
        %3111 = vmatmul.mubr.bf16.gmra.mrb[0].mxu0 %v3073
        %v3112 = vpop.f32.mrb[0].mxu0
        %v3113 = vadd.f32 0.0, %v3112
        %v3114 = vpop.f32.mrb[0].mxu0
        %v3115 = vpop.f32.mrb[0].mxu0
        %v3116 = vpop.f32.mrb[0].mxu0
        %3117 = vdwg.mxu0
        %v3119 = vsel %vm1676, %v3065, 0
        %v3122 = vsel %vm1676, %v3069, 0
        %3124 = vmatprep.subr.bf16.mxu0 0
        %3125 = vmatpush1.bf16.xpose.msra.mxu0 %v3122
        %3126 = vmatprep.subr.bf16.mxu0 0
        %3127 = vmatpush1.bf16.xpose.msra.mxu0 0
        %3128 = vmatprep.subr.bf16.mxu0 0
        %3129 = vmatpush1.bf16.xpose.msra.mxu0 0
        %3130 = vmatprep.subr.bf16.mxu0 0
        %3131 = vmatpush1.bf16.xpose.msra.mxu0 0
        %3132 = vmatprep.subr.bf16.mxu0 0
        %3133 = vmatpush1.bf16.xpose.msra.mxu0 0
        %3134 = vmatprep.subr.bf16.mxu0 0
        %3135 = vmatpush1.bf16.xpose.msra.mxu0 0
        %3136 = vmatprep.subr.bf16.mxu0 0
        %3137 = vmatpush1.bf16.xpose.msra.mxu0 0
        %3138 = vmatprep.subr.bf16.mxu0 0
        %3139 = vmatpush1.bf16.xpose.msra.mxu0 0
        %3140 = vmatprep.subr.bf16.mxu0 0
        %3141 = vmatpush1.bf16.xpose.msra.mxu0 0
        %3142 = vmatprep.subr.bf16.mxu0 0
        %3143 = vmatpush1.bf16.xpose.msra.mxu0 0
        %3144 = vmatprep.subr.bf16.mxu0 0
        %3145 = vmatpush1.bf16.xpose.msra.mxu0 0
        %3146 = vmatprep.subr.bf16.mxu0 0
        %3147 = vmatpush1.bf16.xpose.msra.mxu0 0
        %3148 = vmatprep.subr.bf16.mxu0 0
        %3149 = vmatpush1.bf16.xpose.msra.mxu0 0
        %3150 = vmatprep.subr.bf16.mxu0 0
        %3151 = vmatpush1.bf16.xpose.msra.mxu0 0
        %3152 = vmatprep.subr.bf16.mxu0 0
        %3153 = vmatpush1.bf16.xpose.msra.mxu0 0
        %3154 = vmatprep.subr.bf16.mxu0 0
        %3155 = vmatpush1.bf16.xpose.msra.mxu0 0
        %3156 = vmatprep.mubr.bf16.mxu0 0
        %3157 = vmatmul.mubr.bf16.gmra.mrb[0].mxu0 %v3119
        %v3158 = vpop.f32.mrb[0].mxu0
        %v3159 = vadd.f32 0.0, %v3158
        %v3160 = vpop.f32.mrb[0].mxu0
        %v3161 = vpop.f32.mrb[0].mxu0
        %v3162 = vpop.f32.mrb[0].mxu0
        %3163 = vdwg.mxu0
        %v3165 = vsel %vm1676, %v3066, 0
        %v3168 = vsel %vm1676, %v3070, 0
        %3170 = vmatprep.subr.bf16.mxu0 0
        %3171 = vmatpush1.bf16.xpose.msra.mxu0 %v3168
        %3172 = vmatprep.subr.bf16.mxu0 0
        %3173 = vmatpush1.bf16.xpose.msra.mxu0 0
        %3174 = vmatprep.subr.bf16.mxu0 0
        %3175 = vmatpush1.bf16.xpose.msra.mxu0 0
        %3176 = vmatprep.subr.bf16.mxu0 0
        %3177 = vmatpush1.bf16.xpose.msra.mxu0 0
        %3178 = vmatprep.subr.bf16.mxu0 0
        %3179 = vmatpush1.bf16.xpose.msra.mxu0 0
        %3180 = vmatprep.subr.bf16.mxu0 0
        %3181 = vmatpush1.bf16.xpose.msra.mxu0 0
        %3182 = vmatprep.subr.bf16.mxu0 0
        %3183 = vmatpush1.bf16.xpose.msra.mxu0 0
        %3184 = vmatprep.subr.bf16.mxu0 0
        %3185 = vmatpush1.bf16.xpose.msra.mxu0 0
        %3186 = vmatprep.subr.bf16.mxu0 0
        %3187 = vmatpush1.bf16.xpose.msra.mxu0 0
        %3188 = vmatprep.subr.bf16.mxu0 0
        %3189 = vmatpush1.bf16.xpose.msra.mxu0 0
        %3190 = vmatprep.subr.bf16.mxu0 0
        %3191 = vmatpush1.bf16.xpose.msra.mxu0 0
        %3192 = vmatprep.subr.bf16.mxu0 0
        %3193 = vmatpush1.bf16.xpose.msra.mxu0 0
        %3194 = vmatprep.subr.bf16.mxu0 0
        %3195 = vmatpush1.bf16.xpose.msra.mxu0 0
        %3196 = vmatprep.subr.bf16.mxu0 0
        %3197 = vmatpush1.bf16.xpose.msra.mxu0 0
        %3198 = vmatprep.subr.bf16.mxu0 0
        %3199 = vmatpush1.bf16.xpose.msra.mxu0 0
        %3200 = vmatprep.subr.bf16.mxu0 0
        %3201 = vmatpush1.bf16.xpose.msra.mxu0 0
        %3202 = vmatprep.mubr.bf16.mxu0 0
        %3203 = vmatmul.mubr.bf16.gmra.mrb[0].mxu0 %v3165
        %v3204 = vpop.f32.mrb[0].mxu0
        %v3205 = vadd.f32 0.0, %v3204
        %v3206 = vpop.f32.mrb[0].mxu0
        %v3207 = vpop.f32.mrb[0].mxu0
        %v3208 = vpop.f32.mrb[0].mxu0
        %3209 = vdwg.mxu0
        %v3211 = vsel %vm1676, %v3067, 0
        %v3214 = vsel %vm1676, %v3071, 0
        %3216 = vmatprep.subr.bf16.mxu0 0
        %3217 = vmatpush1.bf16.xpose.msra.mxu0 %v3214
        %3218 = vmatprep.subr.bf16.mxu0 0
        %3219 = vmatpush1.bf16.xpose.msra.mxu0 0
        %3220 = vmatprep.subr.bf16.mxu0 0
        %3221 = vmatpush1.bf16.xpose.msra.mxu0 0
        %3222 = vmatprep.subr.bf16.mxu0 0
        %3223 = vmatpush1.bf16.xpose.msra.mxu0 0
        %3224 = vmatprep.subr.bf16.mxu0 0
        %3225 = vmatpush1.bf16.xpose.msra.mxu0 0
        %3226 = vmatprep.subr.bf16.mxu0 0
        %3227 = vmatpush1.bf16.xpose.msra.mxu0 0
        %3228 = vmatprep.subr.bf16.mxu0 0
        %3229 = vmatpush1.bf16.xpose.msra.mxu0 0
        %3230 = vmatprep.subr.bf16.mxu0 0
        %3231 = vmatpush1.bf16.xpose.msra.mxu0 0
        %3232 = vmatprep.subr.bf16.mxu0 0
        %3233 = vmatpush1.bf16.xpose.msra.mxu0 0
        %3234 = vmatprep.subr.bf16.mxu0 0
        %3235 = vmatpush1.bf16.xpose.msra.mxu0 0
        %3236 = vmatprep.subr.bf16.mxu0 0
        %3237 = vmatpush1.bf16.xpose.msra.mxu0 0
        %3238 = vmatprep.subr.bf16.mxu0 0
        %3239 = vmatpush1.bf16.xpose.msra.mxu0 0
        %3240 = vmatprep.subr.bf16.mxu0 0
        %3241 = vmatpush1.bf16.xpose.msra.mxu0 0
        %3242 = vmatprep.subr.bf16.mxu0 0
        %3243 = vmatpush1.bf16.xpose.msra.mxu0 0
        %3244 = vmatprep.subr.bf16.mxu0 0
        %3245 = vmatpush1.bf16.xpose.msra.mxu0 0
        %3246 = vmatprep.subr.bf16.mxu0 0
        %3247 = vmatpush1.bf16.xpose.msra.mxu0 0
        %3248 = vmatprep.mubr.bf16.mxu0 0
        %3249 = vmatmul.mubr.bf16.gmra.mrb[0].mxu0 %v3211
        %v3250 = vpop.f32.mrb[0].mxu0
        %v3251 = vadd.f32 0.0, %v3250
        %v3252 = vpop.f32.mrb[0].mxu0
        %v3253 = vpop.f32.mrb[0].mxu0
        %v3254 = vpop.f32.mrb[0].mxu0
        %3255 = vdwg.mxu0
        %v3256 = vsel %vm1861, %v3113, -inf
        %3257 = vmax.xlane.f32.xlu0 %v3256
        %v3258 = vpop.xlane.xlu0 %3257
        %v3259 = vsel %vm1861, %v3159, -inf
        %3260 = vmax.xlane.f32.xlu0 %v3259
        %v3261 = vpop.xlane.xlu0 %3260
        %v3262 = vsel %vm1861, %v3205, -inf
        %3263 = vmax.xlane.f32.xlu0 %v3262
        %v3264 = vpop.xlane.xlu0 %3263
        %v3265 = vsel %vm1861, %v3251, -inf
        %3266 = vmax.xlane.f32.xlu0 %v3265
        %v3267 = vpop.xlane.xlu0 %3266
        %v3268 = vsub.f32 %v3113, %v3258
        %v3269 = vsub.f32 %v3159, %v3261
        %v3270 = vsub.f32 %v3205, %v3264
        %v3271 = vsub.f32 %v3251, %v3267
        %v3272 = vmul.f32 %v3268, 1.442695
        %v3273 = vpow.pop %v3272
        %v3274 = vmul.f32 %v3269, 1.442695
        %v3275 = vpow.pop %v3274
        %v3276 = vmul.f32 %v3270, 1.442695
        %v3277 = vpow.pop %v3276
        %v3278 = vmul.f32 %v3271, 1.442695
        %v3279 = vpow.pop %v3278
        %v3280 = vsel %vm1861, %v3273, 0.0
        %3281 = vadd.xlane.f32.xlu0 %v3280
        %v3282 = vpop.xlane.xlu0 %3281
        %v3283 = vsel %vm1861, %v3275, 0.0
        %3284 = vadd.xlane.f32.xlu0 %v3283
        %v3285 = vpop.xlane.xlu0 %3284
        %v3286 = vsel %vm1861, %v3277, 0.0
        %3287 = vadd.xlane.f32.xlu0 %v3286
        %v3288 = vpop.xlane.xlu0 %3287
        %v3289 = vsel %vm1861, %v3279, 0.0
        %3290 = vadd.xlane.f32.xlu0 %v3289
        %v3291 = vpop.xlane.xlu0 %3290
        %v3292 = vrcp.pop %v3282
        %v3293 = vrcp.pop %v3285
        %v3294 = vrcp.pop %v3288
        %v3295 = vrcp.pop %v3291
        %v3296 = vmul.f32 %v3273, %v3292
        %v3297 = vmul.f32 %v3275, %v3293
        %v3298 = vmul.f32 %v3277, %v3294
        %v3299 = vmul.f32 %v3279, %v3295
        %v3300 = vpack.c.bf16 %v3296, %v3296
        %v3301 = vpack.c.bf16 %v3297, %v3297
        %v3302 = vpack.c.bf16 %v3298, %v3298
        %v3303 = vpack.c.bf16 %v3299, %v3299
        %v3304 = vpack.c.bf16 %v2895, %v2895
        %v3305 = vpack.c.bf16 %v2947, %v2947
        %v3306 = vpack.c.bf16 %v2999, %v2999
        %v3307 = vpack.c.bf16 %v3051, %v3051
        %v3309 = vsel %vm1861, %v3300, 0
        %v3312 = vsel %vm1917, %v3304, 0
        %3314 = vmatprep.subr.bf16.mxu0 0
        %3315 = vmatpush1.bf16.msra.mxu0 %v3312
        %3316 = vmatprep.subr.bf16.mxu0 0
        %3317 = vmatpush1.bf16.msra.mxu0 0
        %3318 = vmatprep.subr.bf16.mxu0 0
        %3319 = vmatpush1.bf16.msra.mxu0 0
        %3320 = vmatprep.subr.bf16.mxu0 0
        %3321 = vmatpush1.bf16.msra.mxu0 0
        %3322 = vmatprep.subr.bf16.mxu0 0
        %3323 = vmatpush1.bf16.msra.mxu0 0
        %3324 = vmatprep.subr.bf16.mxu0 0
        %3325 = vmatpush1.bf16.msra.mxu0 0
        %3326 = vmatprep.subr.bf16.mxu0 0
        %3327 = vmatpush1.bf16.msra.mxu0 0
        %3328 = vmatprep.subr.bf16.mxu0 0
        %3329 = vmatpush1.bf16.msra.mxu0 0
        %3330 = vmatprep.subr.bf16.mxu0 0
        %3331 = vmatpush1.bf16.msra.mxu0 0
        %3332 = vmatprep.subr.bf16.mxu0 0
        %3333 = vmatpush1.bf16.msra.mxu0 0
        %3334 = vmatprep.subr.bf16.mxu0 0
        %3335 = vmatpush1.bf16.msra.mxu0 0
        %3336 = vmatprep.subr.bf16.mxu0 0
        %3337 = vmatpush1.bf16.msra.mxu0 0
        %3338 = vmatprep.subr.bf16.mxu0 0
        %3339 = vmatpush1.bf16.msra.mxu0 0
        %3340 = vmatprep.subr.bf16.mxu0 0
        %3341 = vmatpush1.bf16.msra.mxu0 0
        %3342 = vmatprep.subr.bf16.mxu0 0
        %3343 = vmatpush1.bf16.msra.mxu0 0
        %3344 = vmatprep.subr.bf16.mxu0 0
        %3345 = vmatpush1.bf16.msra.mxu0 0
        %3346 = vmatprep.mubr.bf16.mxu0 0
        %3347 = vmatmul.mubr.bf16.gmra.mrb[0].mxu0 %v3309
        %v3348 = vpop.f32.mrb[0].mxu0
        %v3349 = vadd.f32 0.0, %v3348
        %v3350 = vpop.f32.mrb[0].mxu0
        %v3351 = vpop.f32.mrb[0].mxu0
        %v3352 = vpop.f32.mrb[0].mxu0
        %3353 = vdwg.mxu0
        %v3355 = vsel %vm1861, %v3301, 0
        %v3358 = vsel %vm1917, %v3305, 0
        %3360 = vmatprep.subr.bf16.mxu0 0
        %3361 = vmatpush1.bf16.msra.mxu0 %v3358
        %3362 = vmatprep.subr.bf16.mxu0 0
        %3363 = vmatpush1.bf16.msra.mxu0 0
        %3364 = vmatprep.subr.bf16.mxu0 0
        %3365 = vmatpush1.bf16.msra.mxu0 0
        %3366 = vmatprep.subr.bf16.mxu0 0
        %3367 = vmatpush1.bf16.msra.mxu0 0
        %3368 = vmatprep.subr.bf16.mxu0 0
        %3369 = vmatpush1.bf16.msra.mxu0 0
        %3370 = vmatprep.subr.bf16.mxu0 0
        %3371 = vmatpush1.bf16.msra.mxu0 0
        %3372 = vmatprep.subr.bf16.mxu0 0
        %3373 = vmatpush1.bf16.msra.mxu0 0
        %3374 = vmatprep.subr.bf16.mxu0 0
        %3375 = vmatpush1.bf16.msra.mxu0 0
        %3376 = vmatprep.subr.bf16.mxu0 0
        %3377 = vmatpush1.bf16.msra.mxu0 0
        %3378 = vmatprep.subr.bf16.mxu0 0
        %3379 = vmatpush1.bf16.msra.mxu0 0
        %3380 = vmatprep.subr.bf16.mxu0 0
        %3381 = vmatpush1.bf16.msra.mxu0 0
        %3382 = vmatprep.subr.bf16.mxu0 0
        %3383 = vmatpush1.bf16.msra.mxu0 0
        %3384 = vmatprep.subr.bf16.mxu0 0
        %3385 = vmatpush1.bf16.msra.mxu0 0
        %3386 = vmatprep.subr.bf16.mxu0 0
        %3387 = vmatpush1.bf16.msra.mxu0 0
        %3388 = vmatprep.subr.bf16.mxu0 0
        %3389 = vmatpush1.bf16.msra.mxu0 0
        %3390 = vmatprep.subr.bf16.mxu0 0
        %3391 = vmatpush1.bf16.msra.mxu0 0
        %3392 = vmatprep.mubr.bf16.mxu0 0
        %3393 = vmatmul.mubr.bf16.gmra.mrb[0].mxu0 %v3355
        %v3394 = vpop.f32.mrb[0].mxu0
        %v3395 = vadd.f32 0.0, %v3394
        %v3396 = vpop.f32.mrb[0].mxu0
        %v3397 = vpop.f32.mrb[0].mxu0
        %v3398 = vpop.f32.mrb[0].mxu0
        %3399 = vdwg.mxu0
        %v3401 = vsel %vm1861, %v3302, 0
        %v3404 = vsel %vm1917, %v3306, 0
        %3406 = vmatprep.subr.bf16.mxu0 0
        %3407 = vmatpush1.bf16.msra.mxu0 %v3404
        %3408 = vmatprep.subr.bf16.mxu0 0
        %3409 = vmatpush1.bf16.msra.mxu0 0
        %3410 = vmatprep.subr.bf16.mxu0 0
        %3411 = vmatpush1.bf16.msra.mxu0 0
        %3412 = vmatprep.subr.bf16.mxu0 0
        %3413 = vmatpush1.bf16.msra.mxu0 0
        %3414 = vmatprep.subr.bf16.mxu0 0
        %3415 = vmatpush1.bf16.msra.mxu0 0
        %3416 = vmatprep.subr.bf16.mxu0 0
        %3417 = vmatpush1.bf16.msra.mxu0 0
        %3418 = vmatprep.subr.bf16.mxu0 0
        %3419 = vmatpush1.bf16.msra.mxu0 0
        %3420 = vmatprep.subr.bf16.mxu0 0
        %3421 = vmatpush1.bf16.msra.mxu0 0
        %3422 = vmatprep.subr.bf16.mxu0 0
        %3423 = vmatpush1.bf16.msra.mxu0 0
        %3424 = vmatprep.subr.bf16.mxu0 0
        %3425 = vmatpush1.bf16.msra.mxu0 0
        %3426 = vmatprep.subr.bf16.mxu0 0
        %3427 = vmatpush1.bf16.msra.mxu0 0
        %3428 = vmatprep.subr.bf16.mxu0 0
        %3429 = vmatpush1.bf16.msra.mxu0 0
        %3430 = vmatprep.subr.bf16.mxu0 0
        %3431 = vmatpush1.bf16.msra.mxu0 0
        %3432 = vmatprep.subr.bf16.mxu0 0
        %3433 = vmatpush1.bf16.msra.mxu0 0
        %3434 = vmatprep.subr.bf16.mxu0 0
        %3435 = vmatpush1.bf16.msra.mxu0 0
        %3436 = vmatprep.subr.bf16.mxu0 0
        %3437 = vmatpush1.bf16.msra.mxu0 0
        %3438 = vmatprep.mubr.bf16.mxu0 0
        %3439 = vmatmul.mubr.bf16.gmra.mrb[0].mxu0 %v3401
        %v3440 = vpop.f32.mrb[0].mxu0
        %v3441 = vadd.f32 0.0, %v3440
        %v3442 = vpop.f32.mrb[0].mxu0
        %v3443 = vpop.f32.mrb[0].mxu0
        %v3444 = vpop.f32.mrb[0].mxu0
        %3445 = vdwg.mxu0
        %v3447 = vsel %vm1861, %v3303, 0
        %v3450 = vsel %vm1917, %v3307, 0
        %3452 = vmatprep.subr.bf16.mxu0 0
        %3453 = vmatpush1.bf16.msra.mxu0 %v3450
        %3454 = vmatprep.subr.bf16.mxu0 0
        %3455 = vmatpush1.bf16.msra.mxu0 0
        %3456 = vmatprep.subr.bf16.mxu0 0
        %3457 = vmatpush1.bf16.msra.mxu0 0
        %3458 = vmatprep.subr.bf16.mxu0 0
        %3459 = vmatpush1.bf16.msra.mxu0 0
        %3460 = vmatprep.subr.bf16.mxu0 0
        %3461 = vmatpush1.bf16.msra.mxu0 0
        %3462 = vmatprep.subr.bf16.mxu0 0
        %3463 = vmatpush1.bf16.msra.mxu0 0
        %3464 = vmatprep.subr.bf16.mxu0 0
        %3465 = vmatpush1.bf16.msra.mxu0 0
        %3466 = vmatprep.subr.bf16.mxu0 0
        %3467 = vmatpush1.bf16.msra.mxu0 0
        %3468 = vmatprep.subr.bf16.mxu0 0
        %3469 = vmatpush1.bf16.msra.mxu0 0
        %3470 = vmatprep.subr.bf16.mxu0 0
        %3471 = vmatpush1.bf16.msra.mxu0 0
        %3472 = vmatprep.subr.bf16.mxu0 0
        %3473 = vmatpush1.bf16.msra.mxu0 0
        %3474 = vmatprep.subr.bf16.mxu0 0
        %3475 = vmatpush1.bf16.msra.mxu0 0
        %3476 = vmatprep.subr.bf16.mxu0 0
        %3477 = vmatpush1.bf16.msra.mxu0 0
        %3478 = vmatprep.subr.bf16.mxu0 0
        %3479 = vmatpush1.bf16.msra.mxu0 0
        %3480 = vmatprep.subr.bf16.mxu0 0
        %3481 = vmatpush1.bf16.msra.mxu0 0
        %3482 = vmatprep.subr.bf16.mxu0 0
        %3483 = vmatpush1.bf16.msra.mxu0 0
        %3484 = vmatprep.mubr.bf16.mxu0 0
        %3485 = vmatmul.mubr.bf16.gmra.mrb[0].mxu0 %v3447
        %v3486 = vpop.f32.mrb[0].mxu0
        %v3487 = vadd.f32 0.0, %v3486
        %v3488 = vpop.f32.mrb[0].mxu0
        %v3489 = vpop.f32.mrb[0].mxu0
        %v3490 = vpop.f32.mrb[0].mxu0
        %3491 = vdwg.mxu0
        %v3492 = vpack.c.bf16 %v3349, %v3349
        %v3493 = vpack.c.bf16 %v3395, %v3395
        %v3494 = vpack.c.bf16 %v3441, %v3441
        %v3495 = vpack.c.bf16 %v3487, %v3487
        %v3498 = vunpack.c.l.b16 %v3056
        %v3499 = vunpack.c.l.b16 %v3057
        %v3500 = vpack.c.b16 %v3499, %v3498
        %v3503 = vsel %vm1676, %v3492, 0
        %3505 = vmatprep.subr.bf16.mxu0 0
        %3506 = vmatpush1.bf16.msra.mxu0 %v3500
        %3507 = vmatprep.subr.bf16.mxu0 0
        %3508 = vmatpush1.bf16.msra.mxu0 0
        %3509 = vmatprep.subr.bf16.mxu0 0
        %3510 = vmatpush1.bf16.msra.mxu0 0
        %3511 = vmatprep.subr.bf16.mxu0 0
        %3512 = vmatpush1.bf16.msra.mxu0 0
        %3513 = vmatprep.subr.bf16.mxu0 0
        %3514 = vmatpush1.bf16.msra.mxu0 0
        %3515 = vmatprep.subr.bf16.mxu0 0
        %3516 = vmatpush1.bf16.msra.mxu0 0
        %3517 = vmatprep.subr.bf16.mxu0 0
        %3518 = vmatpush1.bf16.msra.mxu0 0
        %3519 = vmatprep.subr.bf16.mxu0 0
        %3520 = vmatpush1.bf16.msra.mxu0 0
        %3521 = vmatprep.subr.bf16.mxu0 0
        %3522 = vmatpush1.bf16.msra.mxu0 0
        %3523 = vmatprep.subr.bf16.mxu0 0
        %3524 = vmatpush1.bf16.msra.mxu0 0
        %3525 = vmatprep.subr.bf16.mxu0 0
        %3526 = vmatpush1.bf16.msra.mxu0 0
        %3527 = vmatprep.subr.bf16.mxu0 0
        %3528 = vmatpush1.bf16.msra.mxu0 0
        %3529 = vmatprep.subr.bf16.mxu0 0
        %3530 = vmatpush1.bf16.msra.mxu0 0
        %3531 = vmatprep.subr.bf16.mxu0 0
        %3532 = vmatpush1.bf16.msra.mxu0 0
        %3533 = vmatprep.subr.bf16.mxu0 0
        %3534 = vmatpush1.bf16.msra.mxu0 0
        %3535 = vmatprep.subr.bf16.mxu0 0
        %3536 = vmatpush1.bf16.msra.mxu0 0
        %3537 = vmatprep.mubr.bf16.mxu0 0
        %3538 = vmatmul.mubr.bf16.gmra.mrb[0].mxu0 %v3503
        %v3539 = vpop.f32.mrb[0].mxu0
        %v3540 = vadd.f32 0.0, %v3539
        %v3541 = vpop.f32.mrb[0].mxu0
        %v3542 = vpop.f32.mrb[0].mxu0
        %v3543 = vpop.f32.mrb[0].mxu0
        %3544 = vdwg.mxu0
        %v3547 = vunpack.c.l.b16 %v3058
        %v3548 = vunpack.c.l.b16 %v3059
        %v3549 = vpack.c.b16 %v3548, %v3547
        %v3552 = vsel %vm1676, %v3493, 0
        %3554 = vmatprep.subr.bf16.mxu0 0
        %3555 = vmatpush1.bf16.msra.mxu0 %v3549
        %3556 = vmatprep.subr.bf16.mxu0 0
        %3557 = vmatpush1.bf16.msra.mxu0 0
        %3558 = vmatprep.subr.bf16.mxu0 0
        %3559 = vmatpush1.bf16.msra.mxu0 0
        %3560 = vmatprep.subr.bf16.mxu0 0
        %3561 = vmatpush1.bf16.msra.mxu0 0
        %3562 = vmatprep.subr.bf16.mxu0 0
        %3563 = vmatpush1.bf16.msra.mxu0 0
        %3564 = vmatprep.subr.bf16.mxu0 0
        %3565 = vmatpush1.bf16.msra.mxu0 0
        %3566 = vmatprep.subr.bf16.mxu0 0
        %3567 = vmatpush1.bf16.msra.mxu0 0
        %3568 = vmatprep.subr.bf16.mxu0 0
        %3569 = vmatpush1.bf16.msra.mxu0 0
        %3570 = vmatprep.subr.bf16.mxu0 0
        %3571 = vmatpush1.bf16.msra.mxu0 0
        %3572 = vmatprep.subr.bf16.mxu0 0
        %3573 = vmatpush1.bf16.msra.mxu0 0
        %3574 = vmatprep.subr.bf16.mxu0 0
        %3575 = vmatpush1.bf16.msra.mxu0 0
        %3576 = vmatprep.subr.bf16.mxu0 0
        %3577 = vmatpush1.bf16.msra.mxu0 0
        %3578 = vmatprep.subr.bf16.mxu0 0
        %3579 = vmatpush1.bf16.msra.mxu0 0
        %3580 = vmatprep.subr.bf16.mxu0 0
        %3581 = vmatpush1.bf16.msra.mxu0 0
        %3582 = vmatprep.subr.bf16.mxu0 0
        %3583 = vmatpush1.bf16.msra.mxu0 0
        %3584 = vmatprep.subr.bf16.mxu0 0
        %3585 = vmatpush1.bf16.msra.mxu0 0
        %3586 = vmatprep.mubr.bf16.mxu0 0
        %3587 = vmatmul.mubr.bf16.gmra.mrb[0].mxu0 %v3552
        %v3588 = vpop.f32.mrb[0].mxu0
        %v3589 = vadd.f32 0.0, %v3588
        %v3590 = vpop.f32.mrb[0].mxu0
        %v3591 = vpop.f32.mrb[0].mxu0
        %v3592 = vpop.f32.mrb[0].mxu0
        %3593 = vdwg.mxu0
        %v3596 = vunpack.c.l.b16 %v3060
        %v3597 = vunpack.c.l.b16 %v3061
        %v3598 = vpack.c.b16 %v3597, %v3596
        %v3601 = vsel %vm1676, %v3494, 0
        %3603 = vmatprep.subr.bf16.mxu0 0
        %3604 = vmatpush1.bf16.msra.mxu0 %v3598
        %3605 = vmatprep.subr.bf16.mxu0 0
        %3606 = vmatpush1.bf16.msra.mxu0 0
        %3607 = vmatprep.subr.bf16.mxu0 0
        %3608 = vmatpush1.bf16.msra.mxu0 0
        %3609 = vmatprep.subr.bf16.mxu0 0
        %3610 = vmatpush1.bf16.msra.mxu0 0
        %3611 = vmatprep.subr.bf16.mxu0 0
        %3612 = vmatpush1.bf16.msra.mxu0 0
        %3613 = vmatprep.subr.bf16.mxu0 0
        %3614 = vmatpush1.bf16.msra.mxu0 0
        %3615 = vmatprep.subr.bf16.mxu0 0
        %3616 = vmatpush1.bf16.msra.mxu0 0
        %3617 = vmatprep.subr.bf16.mxu0 0
        %3618 = vmatpush1.bf16.msra.mxu0 0
        %3619 = vmatprep.subr.bf16.mxu0 0
        %3620 = vmatpush1.bf16.msra.mxu0 0
        %3621 = vmatprep.subr.bf16.mxu0 0
        %3622 = vmatpush1.bf16.msra.mxu0 0
        %3623 = vmatprep.subr.bf16.mxu0 0
        %3624 = vmatpush1.bf16.msra.mxu0 0
        %3625 = vmatprep.subr.bf16.mxu0 0
        %3626 = vmatpush1.bf16.msra.mxu0 0
        %3627 = vmatprep.subr.bf16.mxu0 0
        %3628 = vmatpush1.bf16.msra.mxu0 0
        %3629 = vmatprep.subr.bf16.mxu0 0
        %3630 = vmatpush1.bf16.msra.mxu0 0
        %3631 = vmatprep.subr.bf16.mxu0 0
        %3632 = vmatpush1.bf16.msra.mxu0 0
        %3633 = vmatprep.subr.bf16.mxu0 0
        %3634 = vmatpush1.bf16.msra.mxu0 0
        %3635 = vmatprep.mubr.bf16.mxu0 0
        %3636 = vmatmul.mubr.bf16.gmra.mrb[0].mxu0 %v3601
        %v3637 = vpop.f32.mrb[0].mxu0
        %v3638 = vadd.f32 0.0, %v3637
        %v3639 = vpop.f32.mrb[0].mxu0
        %v3640 = vpop.f32.mrb[0].mxu0
        %v3641 = vpop.f32.mrb[0].mxu0
        %3642 = vdwg.mxu0
        %v3645 = vunpack.c.l.b16 %v3062
        %v3646 = vunpack.c.l.b16 %v3063
        %v3647 = vpack.c.b16 %v3646, %v3645
        %v3650 = vsel %vm1676, %v3495, 0
        %3652 = vmatprep.subr.bf16.mxu0 0
        %3653 = vmatpush1.bf16.msra.mxu0 %v3647
        %3654 = vmatprep.subr.bf16.mxu0 0
        %3655 = vmatpush1.bf16.msra.mxu0 0
        %3656 = vmatprep.subr.bf16.mxu0 0
        %3657 = vmatpush1.bf16.msra.mxu0 0
        %3658 = vmatprep.subr.bf16.mxu0 0
        %3659 = vmatpush1.bf16.msra.mxu0 0
        %3660 = vmatprep.subr.bf16.mxu0 0
        %3661 = vmatpush1.bf16.msra.mxu0 0
        %3662 = vmatprep.subr.bf16.mxu0 0
        %3663 = vmatpush1.bf16.msra.mxu0 0
        %3664 = vmatprep.subr.bf16.mxu0 0
        %3665 = vmatpush1.bf16.msra.mxu0 0
        %3666 = vmatprep.subr.bf16.mxu0 0
        %3667 = vmatpush1.bf16.msra.mxu0 0
        %3668 = vmatprep.subr.bf16.mxu0 0
        %3669 = vmatpush1.bf16.msra.mxu0 0
        %3670 = vmatprep.subr.bf16.mxu0 0
        %3671 = vmatpush1.bf16.msra.mxu0 0
        %3672 = vmatprep.subr.bf16.mxu0 0
        %3673 = vmatpush1.bf16.msra.mxu0 0
        %3674 = vmatprep.subr.bf16.mxu0 0
        %3675 = vmatpush1.bf16.msra.mxu0 0
        %3676 = vmatprep.subr.bf16.mxu0 0
        %3677 = vmatpush1.bf16.msra.mxu0 0
        %3678 = vmatprep.subr.bf16.mxu0 0
        %3679 = vmatpush1.bf16.msra.mxu0 0
        %3680 = vmatprep.subr.bf16.mxu0 0
        %3681 = vmatpush1.bf16.msra.mxu0 0
        %3682 = vmatprep.subr.bf16.mxu0 0
        %3683 = vmatpush1.bf16.msra.mxu0 0
        %3684 = vmatprep.mubr.bf16.mxu0 0
        %3685 = vmatmul.mubr.bf16.gmra.mrb[0].mxu0 %v3650
        %v3686 = vpop.f32.mrb[0].mxu0
        %v3687 = vadd.f32 0.0, %v3686
        %v3688 = vpop.f32.mrb[0].mxu0
        %v3689 = vpop.f32.mrb[0].mxu0
        %v3690 = vpop.f32.mrb[0].mxu0
        %3691 = vdwg.mxu0
        %v3692 = vadd.f32 %v3540, %v3589
        %v3693 = vadd.f32 %v3692, %v3638
        %v3694 = vadd.f32 %v3693, %v3687
        %v3695 = vadd.f32 %v2302, %v3694
        %v3696 = vld [vmem:[%s17] sm:$0x1]
        %v3697 = vmul.f32 %v3695, %v3695
        %v3698 = vsel %vm910, %v3697, 0.0
        %3699 = vadd.xlane.f32.xlu0 %v3698
        %v3700 = vpop.xlane.xlu0 %3699
        %v3701 = vmul.f32 %v3700, %v914
        %v3702 = vadd.f32 %v3701, 1e-06
        %v3703 = vrsqrt.pop %v3702
        %v3704 = vmul.f32 %v3695, %v3703
        %v3706 = vlaneseq
        %v3707 = vshrl.u32 %v3706, 7
        %v3708 = vsub.s32 0, %v3707
        %v3709 = vrot.slane %v3696, %v3708
        %v3711 = vmul.f32 %v3704, %v3709
        %v3712 = vpack.c.bf16 %v3711, %v3711
        %v3713 = vld [vmem:[%s18] sm:$0xf]
        %v3714 = vld [vmem:[%s18 + $0x4] sm:$0xf]
        %v3715 = vld [vmem:[%s18 + $0x8] sm:$0xf]
        %v3716 = vld [vmem:[%s18 + $0xc] sm:$0xf]
        %v3721 = vunpack.c.l.b16 %v3713
        %v3722 = vunpack.c.l.b16 %v3714
        %v3723 = vunpack.c.l.b16 %v3715
        %v3724 = vunpack.c.l.b16 %v3716
        %v3725 = vpack.c.b16 %v3722, %v3721
        %v3726 = vpack.c.b16 %v3724, %v3723
        %v3730 = vsel %vm910, %v3712, 0
        %3732 = vmatprep.subr.bf16.mxu0 0
        %3733 = vmatpush1.bf16.msra.mxu0 %v3725
        %3734 = vmatprep.subr.bf16.mxu0 0
        %3735 = vmatpush1.bf16.msra.mxu0 %v3726
        %3736 = vmatprep.subr.bf16.mxu0 0
        %3737 = vmatpush1.bf16.msra.mxu0 0
        %3738 = vmatprep.subr.bf16.mxu0 0
        %3739 = vmatpush1.bf16.msra.mxu0 0
        %3740 = vmatprep.subr.bf16.mxu0 0
        %3741 = vmatpush1.bf16.msra.mxu0 0
        %3742 = vmatprep.subr.bf16.mxu0 0
        %3743 = vmatpush1.bf16.msra.mxu0 0
        %3744 = vmatprep.subr.bf16.mxu0 0
        %3745 = vmatpush1.bf16.msra.mxu0 0
        %3746 = vmatprep.subr.bf16.mxu0 0
        %3747 = vmatpush1.bf16.msra.mxu0 0
        %3748 = vmatprep.subr.bf16.mxu0 0
        %3749 = vmatpush1.bf16.msra.mxu0 0
        %3750 = vmatprep.subr.bf16.mxu0 0
        %3751 = vmatpush1.bf16.msra.mxu0 0
        %3752 = vmatprep.subr.bf16.mxu0 0
        %3753 = vmatpush1.bf16.msra.mxu0 0
        %3754 = vmatprep.subr.bf16.mxu0 0
        %3755 = vmatpush1.bf16.msra.mxu0 0
        %3756 = vmatprep.subr.bf16.mxu0 0
        %3757 = vmatpush1.bf16.msra.mxu0 0
        %3758 = vmatprep.subr.bf16.mxu0 0
        %3759 = vmatpush1.bf16.msra.mxu0 0
        %3760 = vmatprep.subr.bf16.mxu0 0
        %3761 = vmatpush1.bf16.msra.mxu0 0
        %3762 = vmatprep.subr.bf16.mxu0 0
        %3763 = vmatpush1.bf16.msra.mxu0 0
        %3764 = vmatprep.mubr.bf16.mxu0 0
        %3765 = vmatmul.mubr.bf16.gmra.mrb[0].mxu0 %v3730
        %v3766 = vpop.f32.mrb[0].mxu0
        %v3767 = vadd.f32 0.0, %v3766
        %v3768 = vpop.f32.mrb[0].mxu0
        %v3769 = vpop.f32.mrb[0].mxu0
        %v3770 = vpop.f32.mrb[0].mxu0
        %3771 = vdwg.mxu0
        %v3772 = vmax.f32 %v3767, 0.0
        %v3773 = vpack.c.bf16 %v3772, %v3772
        %v3774 = vld [vmem:[%s19] sm:$0xf]
        %v3775 = vld [vmem:[%s19 + $0x4] sm:$0xf]
        %v3776 = vld [vmem:[%s19 + $0x8] sm:$0xf]
        %v3777 = vld [vmem:[%s19 + $0xc] sm:$0xf]
        %v3778 = vld [vmem:[%s19 + $0x10] sm:$0xf]
        %v3779 = vld [vmem:[%s19 + $0x14] sm:$0xf]
        %v3780 = vld [vmem:[%s19 + $0x18] sm:$0xf]
        %v3781 = vld [vmem:[%s19 + $0x1c] sm:$0xf]
        %v3790 = vunpack.c.l.b16 %v3774
        %v3791 = vunpack.c.l.b16 %v3775
        %v3792 = vunpack.c.l.b16 %v3776
        %v3793 = vunpack.c.l.b16 %v3777
        %v3794 = vunpack.c.l.b16 %v3778
        %v3795 = vunpack.c.l.b16 %v3779
        %v3796 = vunpack.c.l.b16 %v3780
        %v3797 = vunpack.c.l.b16 %v3781
        %v3798 = vpack.c.b16 %v3791, %v3790
        %v3799 = vpack.c.b16 %v3793, %v3792
        %v3800 = vpack.c.b16 %v3795, %v3794
        %v3801 = vpack.c.b16 %v3797, %v3796
        %vm3806 = vcmask 523264
        %v3808 = vsel %vm3806, %v3773, 0
        %3810 = vmatprep.subr.bf16.mxu0 0
        %3811 = vmatpush1.bf16.msra.mxu0 %v3798
        %3812 = vmatprep.subr.bf16.mxu0 0
        %3813 = vmatpush1.bf16.msra.mxu0 %v3799
        %3814 = vmatprep.subr.bf16.mxu0 0
        %3815 = vmatpush1.bf16.msra.mxu0 %v3800
        %3816 = vmatprep.subr.bf16.mxu0 0
        %3817 = vmatpush1.bf16.msra.mxu0 %v3801
        %3818 = vmatprep.subr.bf16.mxu0 0
        %3819 = vmatpush1.bf16.msra.mxu0 0
        %3820 = vmatprep.subr.bf16.mxu0 0
        %3821 = vmatpush1.bf16.msra.mxu0 0
        %3822 = vmatprep.subr.bf16.mxu0 0
        %3823 = vmatpush1.bf16.msra.mxu0 0
        %3824 = vmatprep.subr.bf16.mxu0 0
        %3825 = vmatpush1.bf16.msra.mxu0 0
        %3826 = vmatprep.subr.bf16.mxu0 0
        %3827 = vmatpush1.bf16.msra.mxu0 0
        %3828 = vmatprep.subr.bf16.mxu0 0
        %3829 = vmatpush1.bf16.msra.mxu0 0
        %3830 = vmatprep.subr.bf16.mxu0 0
        %3831 = vmatpush1.bf16.msra.mxu0 0
        %3832 = vmatprep.subr.bf16.mxu0 0
        %3833 = vmatpush1.bf16.msra.mxu0 0
        %3834 = vmatprep.subr.bf16.mxu0 0
        %3835 = vmatpush1.bf16.msra.mxu0 0
        %3836 = vmatprep.subr.bf16.mxu0 0
        %3837 = vmatpush1.bf16.msra.mxu0 0
        %3838 = vmatprep.subr.bf16.mxu0 0
        %3839 = vmatpush1.bf16.msra.mxu0 0
        %3840 = vmatprep.subr.bf16.mxu0 0
        %3841 = vmatpush1.bf16.msra.mxu0 0
        %3842 = vmatprep.mubr.bf16.mxu0 0
        %3843 = vmatmul.mubr.bf16.gmra.mrb[0].mxu0 %v3808
        %v3844 = vpop.f32.mrb[0].mxu0
        %v3845 = vadd.f32 0.0, %v3844
        %v3846 = vpop.f32.mrb[0].mxu0
        %v3847 = vpop.f32.mrb[0].mxu0
        %v3848 = vpop.f32.mrb[0].mxu0
        %3849 = vdwg.mxu0
        %v3850 = vadd.f32 %v3695, %v3845
        %s3851 = scalar_lea.vmem %s5, 1
        %v3852 = vld [vmem:[%s3851] sm:$0x1]
        %v3853 = vmul.f32 %v3850, %v3850
        %v3854 = vsel %vm910, %v3853, 0.0
        %3855 = vadd.xlane.f32.xlu0 %v3854
        %v3856 = vpop.xlane.xlu0 %3855
        %v3857 = vmul.f32 %v3856, %v914
        %v3858 = vadd.f32 %v3857, 1e-06
        %v3859 = vrsqrt.pop %v3858
        %v3860 = vmul.f32 %v3850, %v3859
        %v3862 = vlaneseq
        %v3863 = vshrl.u32 %v3862, 7
        %v3864 = vsub.s32 0, %v3863
        %v3865 = vrot.slane %v3852, %v3864
        %v3867 = vmul.f32 %v3860, %v3865
        %v3868 = vpack.c.bf16 %v3867, %v3867
        %s3869 = scalar_lea.vmem %s6, 16
        %v3870 = vld [vmem:[%s3869] sm:$0xf]
        %v3871 = vld [vmem:[%s3869 + $0x4] sm:$0xf]
        %v3872 = vld [vmem:[%s3869 + $0x8] sm:$0xf]
        %v3873 = vld [vmem:[%s3869 + $0xc] sm:$0xf]
        %v3878 = vunpack.c.l.b16 %v3870
        %v3879 = vunpack.c.l.b16 %v3871
        %v3880 = vunpack.c.l.b16 %v3872
        %v3881 = vunpack.c.l.b16 %v3873
        %v3882 = vpack.c.b16 %v3879, %v3878
        %v3883 = vpack.c.b16 %v3881, %v3880
        %v3887 = vsel %vm910, %v3868, 0
        %3889 = vmatprep.subr.bf16.mxu0 0
        %3890 = vmatpush1.bf16.msra.mxu0 %v3882
        %3891 = vmatprep.subr.bf16.mxu0 0
        %3892 = vmatpush1.bf16.msra.mxu0 %v3883
        %3893 = vmatprep.subr.bf16.mxu0 0
        %3894 = vmatpush1.bf16.msra.mxu0 0
        %3895 = vmatprep.subr.bf16.mxu0 0
        %3896 = vmatpush1.bf16.msra.mxu0 0
        %3897 = vmatprep.subr.bf16.mxu0 0
        %3898 = vmatpush1.bf16.msra.mxu0 0
        %3899 = vmatprep.subr.bf16.mxu0 0
        %3900 = vmatpush1.bf16.msra.mxu0 0
        %3901 = vmatprep.subr.bf16.mxu0 0
        %3902 = vmatpush1.bf16.msra.mxu0 0
        %3903 = vmatprep.subr.bf16.mxu0 0
        %3904 = vmatpush1.bf16.msra.mxu0 0
        %3905 = vmatprep.subr.bf16.mxu0 0
        %3906 = vmatpush1.bf16.msra.mxu0 0
        %3907 = vmatprep.subr.bf16.mxu0 0
        %3908 = vmatpush1.bf16.msra.mxu0 0
        %3909 = vmatprep.subr.bf16.mxu0 0
        %3910 = vmatpush1.bf16.msra.mxu0 0
        %3911 = vmatprep.subr.bf16.mxu0 0
        %3912 = vmatpush1.bf16.msra.mxu0 0
        %3913 = vmatprep.subr.bf16.mxu0 0
        %3914 = vmatpush1.bf16.msra.mxu0 0
        %3915 = vmatprep.subr.bf16.mxu0 0
        %3916 = vmatpush1.bf16.msra.mxu0 0
        %3917 = vmatprep.subr.bf16.mxu0 0
        %3918 = vmatpush1.bf16.msra.mxu0 0
        %3919 = vmatprep.subr.bf16.mxu0 0
        %3920 = vmatpush1.bf16.msra.mxu0 0
        %3921 = vmatprep.mubr.bf16.mxu0 0
        %3922 = vmatmul.mubr.bf16.gmra.mrb[0].mxu0 %v3887
        %v3923 = vpop.f32.mrb[0].mxu0
        %v3924 = vadd.f32 0.0, %v3923
        %v3925 = vpop.f32.mrb[0].mxu0
        %v3926 = vpop.f32.mrb[0].mxu0
        %v3927 = vpop.f32.mrb[0].mxu0
        %3928 = vdwg.mxu0
        %v3929 = vpack.c.bf16 %v3924, %v3924
        %s3930 = scalar_lea.vmem %s715, 4
        %3931 = vst [vmem:[%s3930] sm:$0xf] %v3929
        %s3932 = scalar_lea.vmem %s7, 64
        %v3933 = vld [vmem:[%s3932] sm:$0xf]
        %v3934 = vld [vmem:[%s3932 + $0x4] sm:$0xf]
        %v3935 = vld [vmem:[%s3932 + $0x8] sm:$0xf]
        %v3936 = vld [vmem:[%s3932 + $0xc] sm:$0xf]
        %v3937 = vld [vmem:[%s3932 + $0x10] sm:$0xf]
        %v3938 = vld [vmem:[%s3932 + $0x14] sm:$0xf]
        %v3939 = vld [vmem:[%s3932 + $0x18] sm:$0xf]
        %v3940 = vld [vmem:[%s3932 + $0x1c] sm:$0xf]
        %v3941 = vld [vmem:[%s3932 + $0x20] sm:$0xf]
        %v3942 = vld [vmem:[%s3932 + $0x24] sm:$0xf]
        %v3943 = vld [vmem:[%s3932 + $0x28] sm:$0xf]
        %v3944 = vld [vmem:[%s3932 + $0x2c] sm:$0xf]
        %v3945 = vld [vmem:[%s3932 + $0x30] sm:$0xf]
        %v3946 = vld [vmem:[%s3932 + $0x34] sm:$0xf]
        %v3947 = vld [vmem:[%s3932 + $0x38] sm:$0xf]
        %v3948 = vld [vmem:[%s3932 + $0x3c] sm:$0xf]
        %v3953 = vunpack.c.l.b16 %v3933
        %v3954 = vunpack.c.l.b16 %v3934
        %v3955 = vunpack.c.l.b16 %v3935
        %v3956 = vunpack.c.l.b16 %v3936
        %v3957 = vpack.c.b16 %v3954, %v3953
        %v3958 = vpack.c.b16 %v3956, %v3955
        %3961 = vmatprep.subr.bf16.mxu0 0
        %3962 = vmatpush1.bf16.msra.mxu0 %v3957
        %3963 = vmatprep.subr.bf16.mxu0 0
        %3964 = vmatpush1.bf16.msra.mxu0 %v3958
        %3965 = vmatprep.subr.bf16.mxu0 0
        %3966 = vmatpush1.bf16.msra.mxu0 0
        %3967 = vmatprep.subr.bf16.mxu0 0
        %3968 = vmatpush1.bf16.msra.mxu0 0
        %3969 = vmatprep.subr.bf16.mxu0 0
        %3970 = vmatpush1.bf16.msra.mxu0 0
        %3971 = vmatprep.subr.bf16.mxu0 0
        %3972 = vmatpush1.bf16.msra.mxu0 0
        %3973 = vmatprep.subr.bf16.mxu0 0
        %3974 = vmatpush1.bf16.msra.mxu0 0
        %3975 = vmatprep.subr.bf16.mxu0 0
        %3976 = vmatpush1.bf16.msra.mxu0 0
        %3977 = vmatprep.subr.bf16.mxu0 0
        %3978 = vmatpush1.bf16.msra.mxu0 0
        %3979 = vmatprep.subr.bf16.mxu0 0
        %3980 = vmatpush1.bf16.msra.mxu0 0
        %3981 = vmatprep.subr.bf16.mxu0 0
        %3982 = vmatpush1.bf16.msra.mxu0 0
        %3983 = vmatprep.subr.bf16.mxu0 0
        %3984 = vmatpush1.bf16.msra.mxu0 0
        %3985 = vmatprep.subr.bf16.mxu0 0
        %3986 = vmatpush1.bf16.msra.mxu0 0
        %3987 = vmatprep.subr.bf16.mxu0 0
        %3988 = vmatpush1.bf16.msra.mxu0 0
        %3989 = vmatprep.subr.bf16.mxu0 0
        %3990 = vmatpush1.bf16.msra.mxu0 0
        %3991 = vmatprep.subr.bf16.mxu0 0
        %3992 = vmatpush1.bf16.msra.mxu0 0
        %3993 = vmatprep.mubr.bf16.mxu0 0
        %3994 = vmatmul.mubr.bf16.gmra.mrb[0].mxu0 %v3887
        %v3995 = vpop.f32.mrb[0].mxu0
        %v3996 = vadd.f32 0.0, %v3995
        %v3997 = vpop.f32.mrb[0].mxu0
        %v3998 = vpop.f32.mrb[0].mxu0
        %v3999 = vpop.f32.mrb[0].mxu0
        %4000 = vdwg.mxu0
        %v4005 = vunpack.c.l.b16 %v3937
        %v4006 = vunpack.c.l.b16 %v3938
        %v4007 = vunpack.c.l.b16 %v3939
        %v4008 = vunpack.c.l.b16 %v3940
        %v4009 = vpack.c.b16 %v4006, %v4005
        %v4010 = vpack.c.b16 %v4008, %v4007
        %4013 = vmatprep.subr.bf16.mxu0 0
        %4014 = vmatpush1.bf16.msra.mxu0 %v4009
        %4015 = vmatprep.subr.bf16.mxu0 0
        %4016 = vmatpush1.bf16.msra.mxu0 %v4010
        %4017 = vmatprep.subr.bf16.mxu0 0
        %4018 = vmatpush1.bf16.msra.mxu0 0
        %4019 = vmatprep.subr.bf16.mxu0 0
        %4020 = vmatpush1.bf16.msra.mxu0 0
        %4021 = vmatprep.subr.bf16.mxu0 0
        %4022 = vmatpush1.bf16.msra.mxu0 0
        %4023 = vmatprep.subr.bf16.mxu0 0
        %4024 = vmatpush1.bf16.msra.mxu0 0
        %4025 = vmatprep.subr.bf16.mxu0 0
        %4026 = vmatpush1.bf16.msra.mxu0 0
        %4027 = vmatprep.subr.bf16.mxu0 0
        %4028 = vmatpush1.bf16.msra.mxu0 0
        %4029 = vmatprep.subr.bf16.mxu0 0
        %4030 = vmatpush1.bf16.msra.mxu0 0
        %4031 = vmatprep.subr.bf16.mxu0 0
        %4032 = vmatpush1.bf16.msra.mxu0 0
        %4033 = vmatprep.subr.bf16.mxu0 0
        %4034 = vmatpush1.bf16.msra.mxu0 0
        %4035 = vmatprep.subr.bf16.mxu0 0
        %4036 = vmatpush1.bf16.msra.mxu0 0
        %4037 = vmatprep.subr.bf16.mxu0 0
        %4038 = vmatpush1.bf16.msra.mxu0 0
        %4039 = vmatprep.subr.bf16.mxu0 0
        %4040 = vmatpush1.bf16.msra.mxu0 0
        %4041 = vmatprep.subr.bf16.mxu0 0
        %4042 = vmatpush1.bf16.msra.mxu0 0
        %4043 = vmatprep.subr.bf16.mxu0 0
        %4044 = vmatpush1.bf16.msra.mxu0 0
        %4045 = vmatprep.mubr.bf16.mxu0 0
        %4046 = vmatmul.mubr.bf16.gmra.mrb[0].mxu0 %v3887
        %v4047 = vpop.f32.mrb[0].mxu0
        %v4048 = vadd.f32 0.0, %v4047
        %v4049 = vpop.f32.mrb[0].mxu0
        %v4050 = vpop.f32.mrb[0].mxu0
        %v4051 = vpop.f32.mrb[0].mxu0
        %4052 = vdwg.mxu0
        %v4057 = vunpack.c.l.b16 %v3941
        %v4058 = vunpack.c.l.b16 %v3942
        %v4059 = vunpack.c.l.b16 %v3943
        %v4060 = vunpack.c.l.b16 %v3944
        %v4061 = vpack.c.b16 %v4058, %v4057
        %v4062 = vpack.c.b16 %v4060, %v4059
        %4065 = vmatprep.subr.bf16.mxu0 0
        %4066 = vmatpush1.bf16.msra.mxu0 %v4061
        %4067 = vmatprep.subr.bf16.mxu0 0
        %4068 = vmatpush1.bf16.msra.mxu0 %v4062
        %4069 = vmatprep.subr.bf16.mxu0 0
        %4070 = vmatpush1.bf16.msra.mxu0 0
        %4071 = vmatprep.subr.bf16.mxu0 0
        %4072 = vmatpush1.bf16.msra.mxu0 0
        %4073 = vmatprep.subr.bf16.mxu0 0
        %4074 = vmatpush1.bf16.msra.mxu0 0
        %4075 = vmatprep.subr.bf16.mxu0 0
        %4076 = vmatpush1.bf16.msra.mxu0 0
        %4077 = vmatprep.subr.bf16.mxu0 0
        %4078 = vmatpush1.bf16.msra.mxu0 0
        %4079 = vmatprep.subr.bf16.mxu0 0
        %4080 = vmatpush1.bf16.msra.mxu0 0
        %4081 = vmatprep.subr.bf16.mxu0 0
        %4082 = vmatpush1.bf16.msra.mxu0 0
        %4083 = vmatprep.subr.bf16.mxu0 0
        %4084 = vmatpush1.bf16.msra.mxu0 0
        %4085 = vmatprep.subr.bf16.mxu0 0
        %4086 = vmatpush1.bf16.msra.mxu0 0
        %4087 = vmatprep.subr.bf16.mxu0 0
        %4088 = vmatpush1.bf16.msra.mxu0 0
        %4089 = vmatprep.subr.bf16.mxu0 0
        %4090 = vmatpush1.bf16.msra.mxu0 0
        %4091 = vmatprep.subr.bf16.mxu0 0
        %4092 = vmatpush1.bf16.msra.mxu0 0
        %4093 = vmatprep.subr.bf16.mxu0 0
        %4094 = vmatpush1.bf16.msra.mxu0 0
        %4095 = vmatprep.subr.bf16.mxu0 0
        %4096 = vmatpush1.bf16.msra.mxu0 0
        %4097 = vmatprep.mubr.bf16.mxu0 0
        %4098 = vmatmul.mubr.bf16.gmra.mrb[0].mxu0 %v3887
        %v4099 = vpop.f32.mrb[0].mxu0
        %v4100 = vadd.f32 0.0, %v4099
        %v4101 = vpop.f32.mrb[0].mxu0
        %v4102 = vpop.f32.mrb[0].mxu0
        %v4103 = vpop.f32.mrb[0].mxu0
        %4104 = vdwg.mxu0
        %v4109 = vunpack.c.l.b16 %v3945
        %v4110 = vunpack.c.l.b16 %v3946
        %v4111 = vunpack.c.l.b16 %v3947
        %v4112 = vunpack.c.l.b16 %v3948
        %v4113 = vpack.c.b16 %v4110, %v4109
        %v4114 = vpack.c.b16 %v4112, %v4111
        %4117 = vmatprep.subr.bf16.mxu0 0
        %4118 = vmatpush1.bf16.msra.mxu0 %v4113
        %4119 = vmatprep.subr.bf16.mxu0 0
        %4120 = vmatpush1.bf16.msra.mxu0 %v4114
        %4121 = vmatprep.subr.bf16.mxu0 0
        %4122 = vmatpush1.bf16.msra.mxu0 0
        %4123 = vmatprep.subr.bf16.mxu0 0
        %4124 = vmatpush1.bf16.msra.mxu0 0
        %4125 = vmatprep.subr.bf16.mxu0 0
        %4126 = vmatpush1.bf16.msra.mxu0 0
        %4127 = vmatprep.subr.bf16.mxu0 0
        %4128 = vmatpush1.bf16.msra.mxu0 0
        %4129 = vmatprep.subr.bf16.mxu0 0
        %4130 = vmatpush1.bf16.msra.mxu0 0
        %4131 = vmatprep.subr.bf16.mxu0 0
        %4132 = vmatpush1.bf16.msra.mxu0 0
        %4133 = vmatprep.subr.bf16.mxu0 0
        %4134 = vmatpush1.bf16.msra.mxu0 0
        %4135 = vmatprep.subr.bf16.mxu0 0
        %4136 = vmatpush1.bf16.msra.mxu0 0
        %4137 = vmatprep.subr.bf16.mxu0 0
        %4138 = vmatpush1.bf16.msra.mxu0 0
        %4139 = vmatprep.subr.bf16.mxu0 0
        %4140 = vmatpush1.bf16.msra.mxu0 0
        %4141 = vmatprep.subr.bf16.mxu0 0
        %4142 = vmatpush1.bf16.msra.mxu0 0
        %4143 = vmatprep.subr.bf16.mxu0 0
        %4144 = vmatpush1.bf16.msra.mxu0 0
        %4145 = vmatprep.subr.bf16.mxu0 0
        %4146 = vmatpush1.bf16.msra.mxu0 0
        %4147 = vmatprep.subr.bf16.mxu0 0
        %4148 = vmatpush1.bf16.msra.mxu0 0
        %4149 = vmatprep.mubr.bf16.mxu0 0
        %4150 = vmatmul.mubr.bf16.gmra.mrb[0].mxu0 %v3887
        %v4151 = vpop.f32.mrb[0].mxu0
        %v4152 = vadd.f32 0.0, %v4151
        %v4153 = vpop.f32.mrb[0].mxu0
        %v4154 = vpop.f32.mrb[0].mxu0
        %v4155 = vpop.f32.mrb[0].mxu0
        %4156 = vdwg.mxu0
        %s4157 = scalar_lea.vmem %s8, 64
        %v4158 = vld [vmem:[%s4157] sm:$0xf]
        %v4159 = vld [vmem:[%s4157 + $0x4] sm:$0xf]
        %v4160 = vld [vmem:[%s4157 + $0x8] sm:$0xf]
        %v4161 = vld [vmem:[%s4157 + $0xc] sm:$0xf]
        %v4162 = vld [vmem:[%s4157 + $0x10] sm:$0xf]
        %v4163 = vld [vmem:[%s4157 + $0x14] sm:$0xf]
        %v4164 = vld [vmem:[%s4157 + $0x18] sm:$0xf]
        %v4165 = vld [vmem:[%s4157 + $0x1c] sm:$0xf]
        %v4166 = vld [vmem:[%s4157 + $0x20] sm:$0xf]
        %v4167 = vld [vmem:[%s4157 + $0x24] sm:$0xf]
        %v4168 = vld [vmem:[%s4157 + $0x28] sm:$0xf]
        %v4169 = vld [vmem:[%s4157 + $0x2c] sm:$0xf]
        %v4170 = vld [vmem:[%s4157 + $0x30] sm:$0xf]
        %v4171 = vld [vmem:[%s4157 + $0x34] sm:$0xf]
        %v4172 = vld [vmem:[%s4157 + $0x38] sm:$0xf]
        %v4173 = vld [vmem:[%s4157 + $0x3c] sm:$0xf]
        %v4178 = vunpack.c.l.b16 %v4158
        %v4179 = vunpack.c.l.b16 %v4159
        %v4180 = vunpack.c.l.b16 %v4160
        %v4181 = vunpack.c.l.b16 %v4161
        %v4182 = vpack.c.b16 %v4179, %v4178
        %v4183 = vpack.c.b16 %v4181, %v4180
        %4186 = vmatprep.subr.bf16.mxu0 0
        %4187 = vmatpush1.bf16.msra.mxu0 %v4182
        %4188 = vmatprep.subr.bf16.mxu0 0
        %4189 = vmatpush1.bf16.msra.mxu0 %v4183
        %4190 = vmatprep.subr.bf16.mxu0 0
        %4191 = vmatpush1.bf16.msra.mxu0 0
        %4192 = vmatprep.subr.bf16.mxu0 0
        %4193 = vmatpush1.bf16.msra.mxu0 0
        %4194 = vmatprep.subr.bf16.mxu0 0
        %4195 = vmatpush1.bf16.msra.mxu0 0
        %4196 = vmatprep.subr.bf16.mxu0 0
        %4197 = vmatpush1.bf16.msra.mxu0 0
        %4198 = vmatprep.subr.bf16.mxu0 0
        %4199 = vmatpush1.bf16.msra.mxu0 0
        %4200 = vmatprep.subr.bf16.mxu0 0
        %4201 = vmatpush1.bf16.msra.mxu0 0
        %4202 = vmatprep.subr.bf16.mxu0 0
        %4203 = vmatpush1.bf16.msra.mxu0 0
        %4204 = vmatprep.subr.bf16.mxu0 0
        %4205 = vmatpush1.bf16.msra.mxu0 0
        %4206 = vmatprep.subr.bf16.mxu0 0
        %4207 = vmatpush1.bf16.msra.mxu0 0
        %4208 = vmatprep.subr.bf16.mxu0 0
        %4209 = vmatpush1.bf16.msra.mxu0 0
        %4210 = vmatprep.subr.bf16.mxu0 0
        %4211 = vmatpush1.bf16.msra.mxu0 0
        %4212 = vmatprep.subr.bf16.mxu0 0
        %4213 = vmatpush1.bf16.msra.mxu0 0
        %4214 = vmatprep.subr.bf16.mxu0 0
        %4215 = vmatpush1.bf16.msra.mxu0 0
        %4216 = vmatprep.subr.bf16.mxu0 0
        %4217 = vmatpush1.bf16.msra.mxu0 0
        %4218 = vmatprep.mubr.bf16.mxu0 0
        %4219 = vmatmul.mubr.bf16.gmra.mrb[0].mxu0 %v3887
        %v4220 = vpop.f32.mrb[0].mxu0
        %v4221 = vadd.f32 0.0, %v4220
        %v4222 = vpop.f32.mrb[0].mxu0
        %v4223 = vpop.f32.mrb[0].mxu0
        %v4224 = vpop.f32.mrb[0].mxu0
        %4225 = vdwg.mxu0
        %v4230 = vunpack.c.l.b16 %v4162
        %v4231 = vunpack.c.l.b16 %v4163
        %v4232 = vunpack.c.l.b16 %v4164
        %v4233 = vunpack.c.l.b16 %v4165
        %v4234 = vpack.c.b16 %v4231, %v4230
        %v4235 = vpack.c.b16 %v4233, %v4232
        %4238 = vmatprep.subr.bf16.mxu0 0
        %4239 = vmatpush1.bf16.msra.mxu0 %v4234
        %4240 = vmatprep.subr.bf16.mxu0 0
        %4241 = vmatpush1.bf16.msra.mxu0 %v4235
        %4242 = vmatprep.subr.bf16.mxu0 0
        %4243 = vmatpush1.bf16.msra.mxu0 0
        %4244 = vmatprep.subr.bf16.mxu0 0
        %4245 = vmatpush1.bf16.msra.mxu0 0
        %4246 = vmatprep.subr.bf16.mxu0 0
        %4247 = vmatpush1.bf16.msra.mxu0 0
        %4248 = vmatprep.subr.bf16.mxu0 0
        %4249 = vmatpush1.bf16.msra.mxu0 0
        %4250 = vmatprep.subr.bf16.mxu0 0
        %4251 = vmatpush1.bf16.msra.mxu0 0
        %4252 = vmatprep.subr.bf16.mxu0 0
        %4253 = vmatpush1.bf16.msra.mxu0 0
        %4254 = vmatprep.subr.bf16.mxu0 0
        %4255 = vmatpush1.bf16.msra.mxu0 0
        %4256 = vmatprep.subr.bf16.mxu0 0
        %4257 = vmatpush1.bf16.msra.mxu0 0
        %4258 = vmatprep.subr.bf16.mxu0 0
        %4259 = vmatpush1.bf16.msra.mxu0 0
        %4260 = vmatprep.subr.bf16.mxu0 0
        %4261 = vmatpush1.bf16.msra.mxu0 0
        %4262 = vmatprep.subr.bf16.mxu0 0
        %4263 = vmatpush1.bf16.msra.mxu0 0
        %4264 = vmatprep.subr.bf16.mxu0 0
        %4265 = vmatpush1.bf16.msra.mxu0 0
        %4266 = vmatprep.subr.bf16.mxu0 0
        %4267 = vmatpush1.bf16.msra.mxu0 0
        %4268 = vmatprep.subr.bf16.mxu0 0
        %4269 = vmatpush1.bf16.msra.mxu0 0
        %4270 = vmatprep.mubr.bf16.mxu0 0
        %4271 = vmatmul.mubr.bf16.gmra.mrb[0].mxu0 %v3887
        %v4272 = vpop.f32.mrb[0].mxu0
        %v4273 = vadd.f32 0.0, %v4272
        %v4274 = vpop.f32.mrb[0].mxu0
        %v4275 = vpop.f32.mrb[0].mxu0
        %v4276 = vpop.f32.mrb[0].mxu0
        %4277 = vdwg.mxu0
        %v4282 = vunpack.c.l.b16 %v4166
        %v4283 = vunpack.c.l.b16 %v4167
        %v4284 = vunpack.c.l.b16 %v4168
        %v4285 = vunpack.c.l.b16 %v4169
        %v4286 = vpack.c.b16 %v4283, %v4282
        %v4287 = vpack.c.b16 %v4285, %v4284
        %4290 = vmatprep.subr.bf16.mxu0 0
        %4291 = vmatpush1.bf16.msra.mxu0 %v4286
        %4292 = vmatprep.subr.bf16.mxu0 0
        %4293 = vmatpush1.bf16.msra.mxu0 %v4287
        %4294 = vmatprep.subr.bf16.mxu0 0
        %4295 = vmatpush1.bf16.msra.mxu0 0
        %4296 = vmatprep.subr.bf16.mxu0 0
        %4297 = vmatpush1.bf16.msra.mxu0 0
        %4298 = vmatprep.subr.bf16.mxu0 0
        %4299 = vmatpush1.bf16.msra.mxu0 0
        %4300 = vmatprep.subr.bf16.mxu0 0
        %4301 = vmatpush1.bf16.msra.mxu0 0
        %4302 = vmatprep.subr.bf16.mxu0 0
        %4303 = vmatpush1.bf16.msra.mxu0 0
        %4304 = vmatprep.subr.bf16.mxu0 0
        %4305 = vmatpush1.bf16.msra.mxu0 0
        %4306 = vmatprep.subr.bf16.mxu0 0
        %4307 = vmatpush1.bf16.msra.mxu0 0
        %4308 = vmatprep.subr.bf16.mxu0 0
        %4309 = vmatpush1.bf16.msra.mxu0 0
        %4310 = vmatprep.subr.bf16.mxu0 0
        %4311 = vmatpush1.bf16.msra.mxu0 0
        %4312 = vmatprep.subr.bf16.mxu0 0
        %4313 = vmatpush1.bf16.msra.mxu0 0
        %4314 = vmatprep.subr.bf16.mxu0 0
        %4315 = vmatpush1.bf16.msra.mxu0 0
        %4316 = vmatprep.subr.bf16.mxu0 0
        %4317 = vmatpush1.bf16.msra.mxu0 0
        %4318 = vmatprep.subr.bf16.mxu0 0
        %4319 = vmatpush1.bf16.msra.mxu0 0
        %4320 = vmatprep.subr.bf16.mxu0 0
        %4321 = vmatpush1.bf16.msra.mxu0 0
        %4322 = vmatprep.mubr.bf16.mxu0 0
        %4323 = vmatmul.mubr.bf16.gmra.mrb[0].mxu0 %v3887
        %v4324 = vpop.f32.mrb[0].mxu0
        %v4325 = vadd.f32 0.0, %v4324
        %v4326 = vpop.f32.mrb[0].mxu0
        %v4327 = vpop.f32.mrb[0].mxu0
        %v4328 = vpop.f32.mrb[0].mxu0
        %4329 = vdwg.mxu0
        %v4334 = vunpack.c.l.b16 %v4170
        %v4335 = vunpack.c.l.b16 %v4171
        %v4336 = vunpack.c.l.b16 %v4172
        %v4337 = vunpack.c.l.b16 %v4173
        %v4338 = vpack.c.b16 %v4335, %v4334
        %v4339 = vpack.c.b16 %v4337, %v4336
        %4342 = vmatprep.subr.bf16.mxu0 0
        %4343 = vmatpush1.bf16.msra.mxu0 %v4338
        %4344 = vmatprep.subr.bf16.mxu0 0
        %4345 = vmatpush1.bf16.msra.mxu0 %v4339
        %4346 = vmatprep.subr.bf16.mxu0 0
        %4347 = vmatpush1.bf16.msra.mxu0 0
        %4348 = vmatprep.subr.bf16.mxu0 0
        %4349 = vmatpush1.bf16.msra.mxu0 0
        %4350 = vmatprep.subr.bf16.mxu0 0
        %4351 = vmatpush1.bf16.msra.mxu0 0
        %4352 = vmatprep.subr.bf16.mxu0 0
        %4353 = vmatpush1.bf16.msra.mxu0 0
        %4354 = vmatprep.subr.bf16.mxu0 0
        %4355 = vmatpush1.bf16.msra.mxu0 0
        %4356 = vmatprep.subr.bf16.mxu0 0
        %4357 = vmatpush1.bf16.msra.mxu0 0
        %4358 = vmatprep.subr.bf16.mxu0 0
        %4359 = vmatpush1.bf16.msra.mxu0 0
        %4360 = vmatprep.subr.bf16.mxu0 0
        %4361 = vmatpush1.bf16.msra.mxu0 0
        %4362 = vmatprep.subr.bf16.mxu0 0
        %4363 = vmatpush1.bf16.msra.mxu0 0
        %4364 = vmatprep.subr.bf16.mxu0 0
        %4365 = vmatpush1.bf16.msra.mxu0 0
        %4366 = vmatprep.subr.bf16.mxu0 0
        %4367 = vmatpush1.bf16.msra.mxu0 0
        %4368 = vmatprep.subr.bf16.mxu0 0
        %4369 = vmatpush1.bf16.msra.mxu0 0
        %4370 = vmatprep.subr.bf16.mxu0 0
        %4371 = vmatpush1.bf16.msra.mxu0 0
        %4372 = vmatprep.subr.bf16.mxu0 0
        %4373 = vmatpush1.bf16.msra.mxu0 0
        %4374 = vmatprep.mubr.bf16.mxu0 0
        %4375 = vmatmul.mubr.bf16.gmra.mrb[0].mxu0 %v3887
        %v4376 = vpop.f32.mrb[0].mxu0
        %v4377 = vadd.f32 0.0, %v4376
        %v4378 = vpop.f32.mrb[0].mxu0
        %v4379 = vpop.f32.mrb[0].mxu0
        %v4380 = vpop.f32.mrb[0].mxu0
        %4381 = vdwg.mxu0
        %s4382 = scalar_lea.vmem %s9, 64
        %v4383 = vld [vmem:[%s4382] sm:$0xf]
        %v4384 = vld [vmem:[%s4382 + $0x4] sm:$0xf]
        %v4385 = vld [vmem:[%s4382 + $0x8] sm:$0xf]
        %v4386 = vld [vmem:[%s4382 + $0xc] sm:$0xf]
        %v4387 = vld [vmem:[%s4382 + $0x10] sm:$0xf]
        %v4388 = vld [vmem:[%s4382 + $0x14] sm:$0xf]
        %v4389 = vld [vmem:[%s4382 + $0x18] sm:$0xf]
        %v4390 = vld [vmem:[%s4382 + $0x1c] sm:$0xf]
        %v4391 = vld [vmem:[%s4382 + $0x20] sm:$0xf]
        %v4392 = vld [vmem:[%s4382 + $0x24] sm:$0xf]
        %v4393 = vld [vmem:[%s4382 + $0x28] sm:$0xf]
        %v4394 = vld [vmem:[%s4382 + $0x2c] sm:$0xf]
        %v4395 = vld [vmem:[%s4382 + $0x30] sm:$0xf]
        %v4396 = vld [vmem:[%s4382 + $0x34] sm:$0xf]
        %v4397 = vld [vmem:[%s4382 + $0x38] sm:$0xf]
        %v4398 = vld [vmem:[%s4382 + $0x3c] sm:$0xf]
        %v4403 = vunpack.c.l.b16 %v4383
        %v4404 = vunpack.c.l.b16 %v4384
        %v4405 = vunpack.c.l.b16 %v4385
        %v4406 = vunpack.c.l.b16 %v4386
        %v4407 = vpack.c.b16 %v4404, %v4403
        %v4408 = vpack.c.b16 %v4406, %v4405
        %4411 = vmatprep.subr.bf16.mxu0 0
        %4412 = vmatpush1.bf16.msra.mxu0 %v4407
        %4413 = vmatprep.subr.bf16.mxu0 0
        %4414 = vmatpush1.bf16.msra.mxu0 %v4408
        %4415 = vmatprep.subr.bf16.mxu0 0
        %4416 = vmatpush1.bf16.msra.mxu0 0
        %4417 = vmatprep.subr.bf16.mxu0 0
        %4418 = vmatpush1.bf16.msra.mxu0 0
        %4419 = vmatprep.subr.bf16.mxu0 0
        %4420 = vmatpush1.bf16.msra.mxu0 0
        %4421 = vmatprep.subr.bf16.mxu0 0
        %4422 = vmatpush1.bf16.msra.mxu0 0
        %4423 = vmatprep.subr.bf16.mxu0 0
        %4424 = vmatpush1.bf16.msra.mxu0 0
        %4425 = vmatprep.subr.bf16.mxu0 0
        %4426 = vmatpush1.bf16.msra.mxu0 0
        %4427 = vmatprep.subr.bf16.mxu0 0
        %4428 = vmatpush1.bf16.msra.mxu0 0
        %4429 = vmatprep.subr.bf16.mxu0 0
        %4430 = vmatpush1.bf16.msra.mxu0 0
        %4431 = vmatprep.subr.bf16.mxu0 0
        %4432 = vmatpush1.bf16.msra.mxu0 0
        %4433 = vmatprep.subr.bf16.mxu0 0
        %4434 = vmatpush1.bf16.msra.mxu0 0
        %4435 = vmatprep.subr.bf16.mxu0 0
        %4436 = vmatpush1.bf16.msra.mxu0 0
        %4437 = vmatprep.subr.bf16.mxu0 0
        %4438 = vmatpush1.bf16.msra.mxu0 0
        %4439 = vmatprep.subr.bf16.mxu0 0
        %4440 = vmatpush1.bf16.msra.mxu0 0
        %4441 = vmatprep.subr.bf16.mxu0 0
        %4442 = vmatpush1.bf16.msra.mxu0 0
        %4443 = vmatprep.mubr.bf16.mxu0 0
        %4444 = vmatmul.mubr.bf16.gmra.mrb[0].mxu0 %v3887
        %v4445 = vpop.f32.mrb[0].mxu0
        %v4446 = vadd.f32 0.0, %v4445
        %v4447 = vpop.f32.mrb[0].mxu0
        %v4448 = vpop.f32.mrb[0].mxu0
        %v4449 = vpop.f32.mrb[0].mxu0
        %4450 = vdwg.mxu0
        %v4455 = vunpack.c.l.b16 %v4387
        %v4456 = vunpack.c.l.b16 %v4388
        %v4457 = vunpack.c.l.b16 %v4389
        %v4458 = vunpack.c.l.b16 %v4390
        %v4459 = vpack.c.b16 %v4456, %v4455
        %v4460 = vpack.c.b16 %v4458, %v4457
        %4463 = vmatprep.subr.bf16.mxu0 0
        %4464 = vmatpush1.bf16.msra.mxu0 %v4459
        %4465 = vmatprep.subr.bf16.mxu0 0
        %4466 = vmatpush1.bf16.msra.mxu0 %v4460
        %4467 = vmatprep.subr.bf16.mxu0 0
        %4468 = vmatpush1.bf16.msra.mxu0 0
        %4469 = vmatprep.subr.bf16.mxu0 0
        %4470 = vmatpush1.bf16.msra.mxu0 0
        %4471 = vmatprep.subr.bf16.mxu0 0
        %4472 = vmatpush1.bf16.msra.mxu0 0
        %4473 = vmatprep.subr.bf16.mxu0 0
        %4474 = vmatpush1.bf16.msra.mxu0 0
        %4475 = vmatprep.subr.bf16.mxu0 0
        %4476 = vmatpush1.bf16.msra.mxu0 0
        %4477 = vmatprep.subr.bf16.mxu0 0
        %4478 = vmatpush1.bf16.msra.mxu0 0
        %4479 = vmatprep.subr.bf16.mxu0 0
        %4480 = vmatpush1.bf16.msra.mxu0 0
        %4481 = vmatprep.subr.bf16.mxu0 0
        %4482 = vmatpush1.bf16.msra.mxu0 0
        %4483 = vmatprep.subr.bf16.mxu0 0
        %4484 = vmatpush1.bf16.msra.mxu0 0
        %4485 = vmatprep.subr.bf16.mxu0 0
        %4486 = vmatpush1.bf16.msra.mxu0 0
        %4487 = vmatprep.subr.bf16.mxu0 0
        %4488 = vmatpush1.bf16.msra.mxu0 0
        %4489 = vmatprep.subr.bf16.mxu0 0
        %4490 = vmatpush1.bf16.msra.mxu0 0
        %4491 = vmatprep.subr.bf16.mxu0 0
        %4492 = vmatpush1.bf16.msra.mxu0 0
        %4493 = vmatprep.subr.bf16.mxu0 0
        %4494 = vmatpush1.bf16.msra.mxu0 0
        %4495 = vmatprep.mubr.bf16.mxu0 0
        %4496 = vmatmul.mubr.bf16.gmra.mrb[0].mxu0 %v3887
        %v4497 = vpop.f32.mrb[0].mxu0
        %v4498 = vadd.f32 0.0, %v4497
        %v4499 = vpop.f32.mrb[0].mxu0
        %v4500 = vpop.f32.mrb[0].mxu0
        %v4501 = vpop.f32.mrb[0].mxu0
        %4502 = vdwg.mxu0
        %v4507 = vunpack.c.l.b16 %v4391
        %v4508 = vunpack.c.l.b16 %v4392
        %v4509 = vunpack.c.l.b16 %v4393
        %v4510 = vunpack.c.l.b16 %v4394
        %v4511 = vpack.c.b16 %v4508, %v4507
        %v4512 = vpack.c.b16 %v4510, %v4509
        %4515 = vmatprep.subr.bf16.mxu0 0
        %4516 = vmatpush1.bf16.msra.mxu0 %v4511
        %4517 = vmatprep.subr.bf16.mxu0 0
        %4518 = vmatpush1.bf16.msra.mxu0 %v4512
        %4519 = vmatprep.subr.bf16.mxu0 0
        %4520 = vmatpush1.bf16.msra.mxu0 0
        %4521 = vmatprep.subr.bf16.mxu0 0
        %4522 = vmatpush1.bf16.msra.mxu0 0
        %4523 = vmatprep.subr.bf16.mxu0 0
        %4524 = vmatpush1.bf16.msra.mxu0 0
        %4525 = vmatprep.subr.bf16.mxu0 0
        %4526 = vmatpush1.bf16.msra.mxu0 0
        %4527 = vmatprep.subr.bf16.mxu0 0
        %4528 = vmatpush1.bf16.msra.mxu0 0
        %4529 = vmatprep.subr.bf16.mxu0 0
        %4530 = vmatpush1.bf16.msra.mxu0 0
        %4531 = vmatprep.subr.bf16.mxu0 0
        %4532 = vmatpush1.bf16.msra.mxu0 0
        %4533 = vmatprep.subr.bf16.mxu0 0
        %4534 = vmatpush1.bf16.msra.mxu0 0
        %4535 = vmatprep.subr.bf16.mxu0 0
        %4536 = vmatpush1.bf16.msra.mxu0 0
        %4537 = vmatprep.subr.bf16.mxu0 0
        %4538 = vmatpush1.bf16.msra.mxu0 0
        %4539 = vmatprep.subr.bf16.mxu0 0
        %4540 = vmatpush1.bf16.msra.mxu0 0
        %4541 = vmatprep.subr.bf16.mxu0 0
        %4542 = vmatpush1.bf16.msra.mxu0 0
        %4543 = vmatprep.subr.bf16.mxu0 0
        %4544 = vmatpush1.bf16.msra.mxu0 0
        %4545 = vmatprep.subr.bf16.mxu0 0
        %4546 = vmatpush1.bf16.msra.mxu0 0
        %4547 = vmatprep.mubr.bf16.mxu0 0
        %4548 = vmatmul.mubr.bf16.gmra.mrb[0].mxu0 %v3887
        %v4549 = vpop.f32.mrb[0].mxu0
        %v4550 = vadd.f32 0.0, %v4549
        %v4551 = vpop.f32.mrb[0].mxu0
        %v4552 = vpop.f32.mrb[0].mxu0
        %v4553 = vpop.f32.mrb[0].mxu0
        %4554 = vdwg.mxu0
        %v4559 = vunpack.c.l.b16 %v4395
        %v4560 = vunpack.c.l.b16 %v4396
        %v4561 = vunpack.c.l.b16 %v4397
        %v4562 = vunpack.c.l.b16 %v4398
        %v4563 = vpack.c.b16 %v4560, %v4559
        %v4564 = vpack.c.b16 %v4562, %v4561
        %4567 = vmatprep.subr.bf16.mxu0 0
        %4568 = vmatpush1.bf16.msra.mxu0 %v4563
        %4569 = vmatprep.subr.bf16.mxu0 0
        %4570 = vmatpush1.bf16.msra.mxu0 %v4564
        %4571 = vmatprep.subr.bf16.mxu0 0
        %4572 = vmatpush1.bf16.msra.mxu0 0
        %4573 = vmatprep.subr.bf16.mxu0 0
        %4574 = vmatpush1.bf16.msra.mxu0 0
        %4575 = vmatprep.subr.bf16.mxu0 0
        %4576 = vmatpush1.bf16.msra.mxu0 0
        %4577 = vmatprep.subr.bf16.mxu0 0
        %4578 = vmatpush1.bf16.msra.mxu0 0
        %4579 = vmatprep.subr.bf16.mxu0 0
        %4580 = vmatpush1.bf16.msra.mxu0 0
        %4581 = vmatprep.subr.bf16.mxu0 0
        %4582 = vmatpush1.bf16.msra.mxu0 0
        %4583 = vmatprep.subr.bf16.mxu0 0
        %4584 = vmatpush1.bf16.msra.mxu0 0
        %4585 = vmatprep.subr.bf16.mxu0 0
        %4586 = vmatpush1.bf16.msra.mxu0 0
        %4587 = vmatprep.subr.bf16.mxu0 0
        %4588 = vmatpush1.bf16.msra.mxu0 0
        %4589 = vmatprep.subr.bf16.mxu0 0
        %4590 = vmatpush1.bf16.msra.mxu0 0
        %4591 = vmatprep.subr.bf16.mxu0 0
        %4592 = vmatpush1.bf16.msra.mxu0 0
        %4593 = vmatprep.subr.bf16.mxu0 0
        %4594 = vmatpush1.bf16.msra.mxu0 0
        %4595 = vmatprep.subr.bf16.mxu0 0
        %4596 = vmatpush1.bf16.msra.mxu0 0
        %4597 = vmatprep.subr.bf16.mxu0 0
        %4598 = vmatpush1.bf16.msra.mxu0 0
        %4599 = vmatprep.mubr.bf16.mxu0 0
        %4600 = vmatmul.mubr.bf16.gmra.mrb[0].mxu0 %v3887
        %v4601 = vpop.f32.mrb[0].mxu0
        %v4602 = vadd.f32 0.0, %v4601
        %v4603 = vpop.f32.mrb[0].mxu0
        %v4604 = vpop.f32.mrb[0].mxu0
        %v4605 = vpop.f32.mrb[0].mxu0
        %4606 = vdwg.mxu0
        %s4607 = scalar_lea.vmem %s10, 32
        %v4608 = vld [vmem:[%s4607] sm:$0xf]
        %v4609 = vld [vmem:[%s4607 + $0x4] sm:$0xf]
        %v4610 = vld [vmem:[%s4607 + $0x8] sm:$0xf]
        %v4611 = vld [vmem:[%s4607 + $0xc] sm:$0xf]
        %v4612 = vld [vmem:[%s4607 + $0x10] sm:$0xf]
        %v4613 = vld [vmem:[%s4607 + $0x14] sm:$0xf]
        %v4614 = vld [vmem:[%s4607 + $0x18] sm:$0xf]
        %v4615 = vld [vmem:[%s4607 + $0x1c] sm:$0xf]
        %v4616 = vpack.c.bf16 %v3996, %v3996
        %v4617 = vpack.c.bf16 %v4048, %v4048
        %v4618 = vpack.c.bf16 %v4100, %v4100
        %v4619 = vpack.c.bf16 %v4152, %v4152
        %v4620 = vpack.c.bf16 %v4221, %v4221
        %v4621 = vpack.c.bf16 %v4273, %v4273
        %v4622 = vpack.c.bf16 %v4325, %v4325
        %v4623 = vpack.c.bf16 %v4377, %v4377
        %v4625 = vsel %vm1676, %v4616, 0
        %v4628 = vsel %vm1676, %v4620, 0
        %4630 = vmatprep.subr.bf16.mxu0 0
        %4631 = vmatpush1.bf16.xpose.msra.mxu0 %v4628
        %4632 = vmatprep.subr.bf16.mxu0 0
        %4633 = vmatpush1.bf16.xpose.msra.mxu0 0
        %4634 = vmatprep.subr.bf16.mxu0 0
        %4635 = vmatpush1.bf16.xpose.msra.mxu0 0
        %4636 = vmatprep.subr.bf16.mxu0 0
        %4637 = vmatpush1.bf16.xpose.msra.mxu0 0
        %4638 = vmatprep.subr.bf16.mxu0 0
        %4639 = vmatpush1.bf16.xpose.msra.mxu0 0
        %4640 = vmatprep.subr.bf16.mxu0 0
        %4641 = vmatpush1.bf16.xpose.msra.mxu0 0
        %4642 = vmatprep.subr.bf16.mxu0 0
        %4643 = vmatpush1.bf16.xpose.msra.mxu0 0
        %4644 = vmatprep.subr.bf16.mxu0 0
        %4645 = vmatpush1.bf16.xpose.msra.mxu0 0
        %4646 = vmatprep.subr.bf16.mxu0 0
        %4647 = vmatpush1.bf16.xpose.msra.mxu0 0
        %4648 = vmatprep.subr.bf16.mxu0 0
        %4649 = vmatpush1.bf16.xpose.msra.mxu0 0
        %4650 = vmatprep.subr.bf16.mxu0 0
        %4651 = vmatpush1.bf16.xpose.msra.mxu0 0
        %4652 = vmatprep.subr.bf16.mxu0 0
        %4653 = vmatpush1.bf16.xpose.msra.mxu0 0
        %4654 = vmatprep.subr.bf16.mxu0 0
        %4655 = vmatpush1.bf16.xpose.msra.mxu0 0
        %4656 = vmatprep.subr.bf16.mxu0 0
        %4657 = vmatpush1.bf16.xpose.msra.mxu0 0
        %4658 = vmatprep.subr.bf16.mxu0 0
        %4659 = vmatpush1.bf16.xpose.msra.mxu0 0
        %4660 = vmatprep.subr.bf16.mxu0 0
        %4661 = vmatpush1.bf16.xpose.msra.mxu0 0
        %4662 = vmatprep.mubr.bf16.mxu0 0
        %4663 = vmatmul.mubr.bf16.gmra.mrb[0].mxu0 %v4625
        %v4664 = vpop.f32.mrb[0].mxu0
        %v4665 = vadd.f32 %v907, %v4664
        %v4666 = vpop.f32.mrb[0].mxu0
        %v4667 = vpop.f32.mrb[0].mxu0
        %v4668 = vpop.f32.mrb[0].mxu0
        %4669 = vdwg.mxu0
        %v4671 = vsel %vm1676, %v4617, 0
        %v4674 = vsel %vm1676, %v4621, 0
        %4676 = vmatprep.subr.bf16.mxu0 0
        %4677 = vmatpush1.bf16.xpose.msra.mxu0 %v4674
        %4678 = vmatprep.subr.bf16.mxu0 0
        %4679 = vmatpush1.bf16.xpose.msra.mxu0 0
        %4680 = vmatprep.subr.bf16.mxu0 0
        %4681 = vmatpush1.bf16.xpose.msra.mxu0 0
        %4682 = vmatprep.subr.bf16.mxu0 0
        %4683 = vmatpush1.bf16.xpose.msra.mxu0 0
        %4684 = vmatprep.subr.bf16.mxu0 0
        %4685 = vmatpush1.bf16.xpose.msra.mxu0 0
        %4686 = vmatprep.subr.bf16.mxu0 0
        %4687 = vmatpush1.bf16.xpose.msra.mxu0 0
        %4688 = vmatprep.subr.bf16.mxu0 0
        %4689 = vmatpush1.bf16.xpose.msra.mxu0 0
        %4690 = vmatprep.subr.bf16.mxu0 0
        %4691 = vmatpush1.bf16.xpose.msra.mxu0 0
        %4692 = vmatprep.subr.bf16.mxu0 0
        %4693 = vmatpush1.bf16.xpose.msra.mxu0 0
        %4694 = vmatprep.subr.bf16.mxu0 0
        %4695 = vmatpush1.bf16.xpose.msra.mxu0 0
        %4696 = vmatprep.subr.bf16.mxu0 0
        %4697 = vmatpush1.bf16.xpose.msra.mxu0 0
        %4698 = vmatprep.subr.bf16.mxu0 0
        %4699 = vmatpush1.bf16.xpose.msra.mxu0 0
        %4700 = vmatprep.subr.bf16.mxu0 0
        %4701 = vmatpush1.bf16.xpose.msra.mxu0 0
        %4702 = vmatprep.subr.bf16.mxu0 0
        %4703 = vmatpush1.bf16.xpose.msra.mxu0 0
        %4704 = vmatprep.subr.bf16.mxu0 0
        %4705 = vmatpush1.bf16.xpose.msra.mxu0 0
        %4706 = vmatprep.subr.bf16.mxu0 0
        %4707 = vmatpush1.bf16.xpose.msra.mxu0 0
        %4708 = vmatprep.mubr.bf16.mxu0 0
        %4709 = vmatmul.mubr.bf16.gmra.mrb[0].mxu0 %v4671
        %v4710 = vpop.f32.mrb[0].mxu0
        %v4711 = vadd.f32 %v907, %v4710
        %v4712 = vpop.f32.mrb[0].mxu0
        %v4713 = vpop.f32.mrb[0].mxu0
        %v4714 = vpop.f32.mrb[0].mxu0
        %4715 = vdwg.mxu0
        %v4717 = vsel %vm1676, %v4618, 0
        %v4720 = vsel %vm1676, %v4622, 0
        %4722 = vmatprep.subr.bf16.mxu0 0
        %4723 = vmatpush1.bf16.xpose.msra.mxu0 %v4720
        %4724 = vmatprep.subr.bf16.mxu0 0
        %4725 = vmatpush1.bf16.xpose.msra.mxu0 0
        %4726 = vmatprep.subr.bf16.mxu0 0
        %4727 = vmatpush1.bf16.xpose.msra.mxu0 0
        %4728 = vmatprep.subr.bf16.mxu0 0
        %4729 = vmatpush1.bf16.xpose.msra.mxu0 0
        %4730 = vmatprep.subr.bf16.mxu0 0
        %4731 = vmatpush1.bf16.xpose.msra.mxu0 0
        %4732 = vmatprep.subr.bf16.mxu0 0
        %4733 = vmatpush1.bf16.xpose.msra.mxu0 0
        %4734 = vmatprep.subr.bf16.mxu0 0
        %4735 = vmatpush1.bf16.xpose.msra.mxu0 0
        %4736 = vmatprep.subr.bf16.mxu0 0
        %4737 = vmatpush1.bf16.xpose.msra.mxu0 0
        %4738 = vmatprep.subr.bf16.mxu0 0
        %4739 = vmatpush1.bf16.xpose.msra.mxu0 0
        %4740 = vmatprep.subr.bf16.mxu0 0
        %4741 = vmatpush1.bf16.xpose.msra.mxu0 0
        %4742 = vmatprep.subr.bf16.mxu0 0
        %4743 = vmatpush1.bf16.xpose.msra.mxu0 0
        %4744 = vmatprep.subr.bf16.mxu0 0
        %4745 = vmatpush1.bf16.xpose.msra.mxu0 0
        %4746 = vmatprep.subr.bf16.mxu0 0
        %4747 = vmatpush1.bf16.xpose.msra.mxu0 0
        %4748 = vmatprep.subr.bf16.mxu0 0
        %4749 = vmatpush1.bf16.xpose.msra.mxu0 0
        %4750 = vmatprep.subr.bf16.mxu0 0
        %4751 = vmatpush1.bf16.xpose.msra.mxu0 0
        %4752 = vmatprep.subr.bf16.mxu0 0
        %4753 = vmatpush1.bf16.xpose.msra.mxu0 0
        %4754 = vmatprep.mubr.bf16.mxu0 0
        %4755 = vmatmul.mubr.bf16.gmra.mrb[0].mxu0 %v4717
        %v4756 = vpop.f32.mrb[0].mxu0
        %v4757 = vadd.f32 %v907, %v4756
        %v4758 = vpop.f32.mrb[0].mxu0
        %v4759 = vpop.f32.mrb[0].mxu0
        %v4760 = vpop.f32.mrb[0].mxu0
        %4761 = vdwg.mxu0
        %v4763 = vsel %vm1676, %v4619, 0
        %v4766 = vsel %vm1676, %v4623, 0
        %4768 = vmatprep.subr.bf16.mxu0 0
        %4769 = vmatpush1.bf16.xpose.msra.mxu0 %v4766
        %4770 = vmatprep.subr.bf16.mxu0 0
        %4771 = vmatpush1.bf16.xpose.msra.mxu0 0
        %4772 = vmatprep.subr.bf16.mxu0 0
        %4773 = vmatpush1.bf16.xpose.msra.mxu0 0
        %4774 = vmatprep.subr.bf16.mxu0 0
        %4775 = vmatpush1.bf16.xpose.msra.mxu0 0
        %4776 = vmatprep.subr.bf16.mxu0 0
        %4777 = vmatpush1.bf16.xpose.msra.mxu0 0
        %4778 = vmatprep.subr.bf16.mxu0 0
        %4779 = vmatpush1.bf16.xpose.msra.mxu0 0
        %4780 = vmatprep.subr.bf16.mxu0 0
        %4781 = vmatpush1.bf16.xpose.msra.mxu0 0
        %4782 = vmatprep.subr.bf16.mxu0 0
        %4783 = vmatpush1.bf16.xpose.msra.mxu0 0
        %4784 = vmatprep.subr.bf16.mxu0 0
        %4785 = vmatpush1.bf16.xpose.msra.mxu0 0
        %4786 = vmatprep.subr.bf16.mxu0 0
        %4787 = vmatpush1.bf16.xpose.msra.mxu0 0
        %4788 = vmatprep.subr.bf16.mxu0 0
        %4789 = vmatpush1.bf16.xpose.msra.mxu0 0
        %4790 = vmatprep.subr.bf16.mxu0 0
        %4791 = vmatpush1.bf16.xpose.msra.mxu0 0
        %4792 = vmatprep.subr.bf16.mxu0 0
        %4793 = vmatpush1.bf16.xpose.msra.mxu0 0
        %4794 = vmatprep.subr.bf16.mxu0 0
        %4795 = vmatpush1.bf16.xpose.msra.mxu0 0
        %4796 = vmatprep.subr.bf16.mxu0 0
        %4797 = vmatpush1.bf16.xpose.msra.mxu0 0
        %4798 = vmatprep.subr.bf16.mxu0 0
        %4799 = vmatpush1.bf16.xpose.msra.mxu0 0
        %4800 = vmatprep.mubr.bf16.mxu0 0
        %4801 = vmatmul.mubr.bf16.gmra.mrb[0].mxu0 %v4763
        %v4802 = vpop.f32.mrb[0].mxu0
        %v4803 = vadd.f32 %v907, %v4802
        %v4804 = vpop.f32.mrb[0].mxu0
        %v4805 = vpop.f32.mrb[0].mxu0
        %v4806 = vpop.f32.mrb[0].mxu0
        %4807 = vdwg.mxu0
        %v4808 = vsel %vm1861, %v4665, -inf
        %4809 = vmax.xlane.f32.xlu0 %v4808
        %v4810 = vpop.xlane.xlu0 %4809
        %v4811 = vsel %vm1861, %v4711, -inf
        %4812 = vmax.xlane.f32.xlu0 %v4811
        %v4813 = vpop.xlane.xlu0 %4812
        %v4814 = vsel %vm1861, %v4757, -inf
        %4815 = vmax.xlane.f32.xlu0 %v4814
        %v4816 = vpop.xlane.xlu0 %4815
        %v4817 = vsel %vm1861, %v4803, -inf
        %4818 = vmax.xlane.f32.xlu0 %v4817
        %v4819 = vpop.xlane.xlu0 %4818
        %v4820 = vsub.f32 %v4665, %v4810
        %v4821 = vsub.f32 %v4711, %v4813
        %v4822 = vsub.f32 %v4757, %v4816
        %v4823 = vsub.f32 %v4803, %v4819
        %v4824 = vmul.f32 %v4820, 1.442695
        %v4825 = vpow.pop %v4824
        %v4826 = vmul.f32 %v4821, 1.442695
        %v4827 = vpow.pop %v4826
        %v4828 = vmul.f32 %v4822, 1.442695
        %v4829 = vpow.pop %v4828
        %v4830 = vmul.f32 %v4823, 1.442695
        %v4831 = vpow.pop %v4830
        %v4832 = vsel %vm1861, %v4825, 0.0
        %4833 = vadd.xlane.f32.xlu0 %v4832
        %v4834 = vpop.xlane.xlu0 %4833
        %v4835 = vsel %vm1861, %v4827, 0.0
        %4836 = vadd.xlane.f32.xlu0 %v4835
        %v4837 = vpop.xlane.xlu0 %4836
        %v4838 = vsel %vm1861, %v4829, 0.0
        %4839 = vadd.xlane.f32.xlu0 %v4838
        %v4840 = vpop.xlane.xlu0 %4839
        %v4841 = vsel %vm1861, %v4831, 0.0
        %4842 = vadd.xlane.f32.xlu0 %v4841
        %v4843 = vpop.xlane.xlu0 %4842
        %v4844 = vrcp.pop %v4834
        %v4845 = vrcp.pop %v4837
        %v4846 = vrcp.pop %v4840
        %v4847 = vrcp.pop %v4843
        %v4848 = vmul.f32 %v4825, %v4844
        %v4849 = vmul.f32 %v4827, %v4845
        %v4850 = vmul.f32 %v4829, %v4846
        %v4851 = vmul.f32 %v4831, %v4847
        %v4852 = vpack.c.bf16 %v4848, %v4848
        %v4853 = vpack.c.bf16 %v4849, %v4849
        %v4854 = vpack.c.bf16 %v4850, %v4850
        %v4855 = vpack.c.bf16 %v4851, %v4851
        %v4856 = vpack.c.bf16 %v4446, %v4446
        %v4857 = vpack.c.bf16 %v4498, %v4498
        %v4858 = vpack.c.bf16 %v4550, %v4550
        %v4859 = vpack.c.bf16 %v4602, %v4602
        %v4861 = vsel %vm1861, %v4852, 0
        %v4864 = vsel %vm1917, %v4856, 0
        %4866 = vmatprep.subr.bf16.mxu0 0
        %4867 = vmatpush1.bf16.msra.mxu0 %v4864
        %4868 = vmatprep.subr.bf16.mxu0 0
        %4869 = vmatpush1.bf16.msra.mxu0 0
        %4870 = vmatprep.subr.bf16.mxu0 0
        %4871 = vmatpush1.bf16.msra.mxu0 0
        %4872 = vmatprep.subr.bf16.mxu0 0
        %4873 = vmatpush1.bf16.msra.mxu0 0
        %4874 = vmatprep.subr.bf16.mxu0 0
        %4875 = vmatpush1.bf16.msra.mxu0 0
        %4876 = vmatprep.subr.bf16.mxu0 0
        %4877 = vmatpush1.bf16.msra.mxu0 0
        %4878 = vmatprep.subr.bf16.mxu0 0
        %4879 = vmatpush1.bf16.msra.mxu0 0
        %4880 = vmatprep.subr.bf16.mxu0 0
        %4881 = vmatpush1.bf16.msra.mxu0 0
        %4882 = vmatprep.subr.bf16.mxu0 0
        %4883 = vmatpush1.bf16.msra.mxu0 0
        %4884 = vmatprep.subr.bf16.mxu0 0
        %4885 = vmatpush1.bf16.msra.mxu0 0
        %4886 = vmatprep.subr.bf16.mxu0 0
        %4887 = vmatpush1.bf16.msra.mxu0 0
        %4888 = vmatprep.subr.bf16.mxu0 0
        %4889 = vmatpush1.bf16.msra.mxu0 0
        %4890 = vmatprep.subr.bf16.mxu0 0
        %4891 = vmatpush1.bf16.msra.mxu0 0
        %4892 = vmatprep.subr.bf16.mxu0 0
        %4893 = vmatpush1.bf16.msra.mxu0 0
        %4894 = vmatprep.subr.bf16.mxu0 0
        %4895 = vmatpush1.bf16.msra.mxu0 0
        %4896 = vmatprep.subr.bf16.mxu0 0
        %4897 = vmatpush1.bf16.msra.mxu0 0
        %4898 = vmatprep.mubr.bf16.mxu0 0
        %4899 = vmatmul.mubr.bf16.gmra.mrb[0].mxu0 %v4861
        %v4900 = vpop.f32.mrb[0].mxu0
        %v4901 = vadd.f32 0.0, %v4900
        %v4902 = vpop.f32.mrb[0].mxu0
        %v4903 = vpop.f32.mrb[0].mxu0
        %v4904 = vpop.f32.mrb[0].mxu0
        %4905 = vdwg.mxu0
        %v4907 = vsel %vm1861, %v4853, 0
        %v4910 = vsel %vm1917, %v4857, 0
        %4912 = vmatprep.subr.bf16.mxu0 0
        %4913 = vmatpush1.bf16.msra.mxu0 %v4910
        %4914 = vmatprep.subr.bf16.mxu0 0
        %4915 = vmatpush1.bf16.msra.mxu0 0
        %4916 = vmatprep.subr.bf16.mxu0 0
        %4917 = vmatpush1.bf16.msra.mxu0 0
        %4918 = vmatprep.subr.bf16.mxu0 0
        %4919 = vmatpush1.bf16.msra.mxu0 0
        %4920 = vmatprep.subr.bf16.mxu0 0
        %4921 = vmatpush1.bf16.msra.mxu0 0
        %4922 = vmatprep.subr.bf16.mxu0 0
        %4923 = vmatpush1.bf16.msra.mxu0 0
        %4924 = vmatprep.subr.bf16.mxu0 0
        %4925 = vmatpush1.bf16.msra.mxu0 0
        %4926 = vmatprep.subr.bf16.mxu0 0
        %4927 = vmatpush1.bf16.msra.mxu0 0
        %4928 = vmatprep.subr.bf16.mxu0 0
        %4929 = vmatpush1.bf16.msra.mxu0 0
        %4930 = vmatprep.subr.bf16.mxu0 0
        %4931 = vmatpush1.bf16.msra.mxu0 0
        %4932 = vmatprep.subr.bf16.mxu0 0
        %4933 = vmatpush1.bf16.msra.mxu0 0
        %4934 = vmatprep.subr.bf16.mxu0 0
        %4935 = vmatpush1.bf16.msra.mxu0 0
        %4936 = vmatprep.subr.bf16.mxu0 0
        %4937 = vmatpush1.bf16.msra.mxu0 0
        %4938 = vmatprep.subr.bf16.mxu0 0
        %4939 = vmatpush1.bf16.msra.mxu0 0
        %4940 = vmatprep.subr.bf16.mxu0 0
        %4941 = vmatpush1.bf16.msra.mxu0 0
        %4942 = vmatprep.subr.bf16.mxu0 0
        %4943 = vmatpush1.bf16.msra.mxu0 0
        %4944 = vmatprep.mubr.bf16.mxu0 0
        %4945 = vmatmul.mubr.bf16.gmra.mrb[0].mxu0 %v4907
        %v4946 = vpop.f32.mrb[0].mxu0
        %v4947 = vadd.f32 0.0, %v4946
        %v4948 = vpop.f32.mrb[0].mxu0
        %v4949 = vpop.f32.mrb[0].mxu0
        %v4950 = vpop.f32.mrb[0].mxu0
        %4951 = vdwg.mxu0
        %v4953 = vsel %vm1861, %v4854, 0
        %v4956 = vsel %vm1917, %v4858, 0
        %4958 = vmatprep.subr.bf16.mxu0 0
        %4959 = vmatpush1.bf16.msra.mxu0 %v4956
        %4960 = vmatprep.subr.bf16.mxu0 0
        %4961 = vmatpush1.bf16.msra.mxu0 0
        %4962 = vmatprep.subr.bf16.mxu0 0
        %4963 = vmatpush1.bf16.msra.mxu0 0
        %4964 = vmatprep.subr.bf16.mxu0 0
        %4965 = vmatpush1.bf16.msra.mxu0 0
        %4966 = vmatprep.subr.bf16.mxu0 0
        %4967 = vmatpush1.bf16.msra.mxu0 0
        %4968 = vmatprep.subr.bf16.mxu0 0
        %4969 = vmatpush1.bf16.msra.mxu0 0
        %4970 = vmatprep.subr.bf16.mxu0 0
        %4971 = vmatpush1.bf16.msra.mxu0 0
        %4972 = vmatprep.subr.bf16.mxu0 0
        %4973 = vmatpush1.bf16.msra.mxu0 0
        %4974 = vmatprep.subr.bf16.mxu0 0
        %4975 = vmatpush1.bf16.msra.mxu0 0
        %4976 = vmatprep.subr.bf16.mxu0 0
        %4977 = vmatpush1.bf16.msra.mxu0 0
        %4978 = vmatprep.subr.bf16.mxu0 0
        %4979 = vmatpush1.bf16.msra.mxu0 0
        %4980 = vmatprep.subr.bf16.mxu0 0
        %4981 = vmatpush1.bf16.msra.mxu0 0
        %4982 = vmatprep.subr.bf16.mxu0 0
        %4983 = vmatpush1.bf16.msra.mxu0 0
        %4984 = vmatprep.subr.bf16.mxu0 0
        %4985 = vmatpush1.bf16.msra.mxu0 0
        %4986 = vmatprep.subr.bf16.mxu0 0
        %4987 = vmatpush1.bf16.msra.mxu0 0
        %4988 = vmatprep.subr.bf16.mxu0 0
        %4989 = vmatpush1.bf16.msra.mxu0 0
        %4990 = vmatprep.mubr.bf16.mxu0 0
        %4991 = vmatmul.mubr.bf16.gmra.mrb[0].mxu0 %v4953
        %v4992 = vpop.f32.mrb[0].mxu0
        %v4993 = vadd.f32 0.0, %v4992
        %v4994 = vpop.f32.mrb[0].mxu0
        %v4995 = vpop.f32.mrb[0].mxu0
        %v4996 = vpop.f32.mrb[0].mxu0
        %4997 = vdwg.mxu0
        %v4999 = vsel %vm1861, %v4855, 0
        %v5002 = vsel %vm1917, %v4859, 0
        %5004 = vmatprep.subr.bf16.mxu0 0
        %5005 = vmatpush1.bf16.msra.mxu0 %v5002
        %5006 = vmatprep.subr.bf16.mxu0 0
        %5007 = vmatpush1.bf16.msra.mxu0 0
        %5008 = vmatprep.subr.bf16.mxu0 0
        %5009 = vmatpush1.bf16.msra.mxu0 0
        %5010 = vmatprep.subr.bf16.mxu0 0
        %5011 = vmatpush1.bf16.msra.mxu0 0
        %5012 = vmatprep.subr.bf16.mxu0 0
        %5013 = vmatpush1.bf16.msra.mxu0 0
        %5014 = vmatprep.subr.bf16.mxu0 0
        %5015 = vmatpush1.bf16.msra.mxu0 0
        %5016 = vmatprep.subr.bf16.mxu0 0
        %5017 = vmatpush1.bf16.msra.mxu0 0
        %5018 = vmatprep.subr.bf16.mxu0 0
        %5019 = vmatpush1.bf16.msra.mxu0 0
        %5020 = vmatprep.subr.bf16.mxu0 0
        %5021 = vmatpush1.bf16.msra.mxu0 0
        %5022 = vmatprep.subr.bf16.mxu0 0
        %5023 = vmatpush1.bf16.msra.mxu0 0
        %5024 = vmatprep.subr.bf16.mxu0 0
        %5025 = vmatpush1.bf16.msra.mxu0 0
        %5026 = vmatprep.subr.bf16.mxu0 0
        %5027 = vmatpush1.bf16.msra.mxu0 0
        %5028 = vmatprep.subr.bf16.mxu0 0
        %5029 = vmatpush1.bf16.msra.mxu0 0
        %5030 = vmatprep.subr.bf16.mxu0 0
        %5031 = vmatpush1.bf16.msra.mxu0 0
        %5032 = vmatprep.subr.bf16.mxu0 0
        %5033 = vmatpush1.bf16.msra.mxu0 0
        %5034 = vmatprep.subr.bf16.mxu0 0
        %5035 = vmatpush1.bf16.msra.mxu0 0
        %5036 = vmatprep.mubr.bf16.mxu0 0
        %5037 = vmatmul.mubr.bf16.gmra.mrb[0].mxu0 %v4999
        %v5038 = vpop.f32.mrb[0].mxu0
        %v5039 = vadd.f32 0.0, %v5038
        %v5040 = vpop.f32.mrb[0].mxu0
        %v5041 = vpop.f32.mrb[0].mxu0
        %v5042 = vpop.f32.mrb[0].mxu0
        %5043 = vdwg.mxu0
        %v5044 = vpack.c.bf16 %v4901, %v4901
        %v5045 = vpack.c.bf16 %v4947, %v4947
        %v5046 = vpack.c.bf16 %v4993, %v4993
        %v5047 = vpack.c.bf16 %v5039, %v5039
        %v5050 = vunpack.c.l.b16 %v4608
        %v5051 = vunpack.c.l.b16 %v4609
        %v5052 = vpack.c.b16 %v5051, %v5050
        %v5055 = vsel %vm1676, %v5044, 0
        %5057 = vmatprep.subr.bf16.mxu0 0
        %5058 = vmatpush1.bf16.msra.mxu0 %v5052
        %5059 = vmatprep.subr.bf16.mxu0 0
        %5060 = vmatpush1.bf16.msra.mxu0 0
        %5061 = vmatprep.subr.bf16.mxu0 0
        %5062 = vmatpush1.bf16.msra.mxu0 0
        %5063 = vmatprep.subr.bf16.mxu0 0
        %5064 = vmatpush1.bf16.msra.mxu0 0
        %5065 = vmatprep.subr.bf16.mxu0 0
        %5066 = vmatpush1.bf16.msra.mxu0 0
        %5067 = vmatprep.subr.bf16.mxu0 0
        %5068 = vmatpush1.bf16.msra.mxu0 0
        %5069 = vmatprep.subr.bf16.mxu0 0
        %5070 = vmatpush1.bf16.msra.mxu0 0
        %5071 = vmatprep.subr.bf16.mxu0 0
        %5072 = vmatpush1.bf16.msra.mxu0 0
        %5073 = vmatprep.subr.bf16.mxu0 0
        %5074 = vmatpush1.bf16.msra.mxu0 0
        %5075 = vmatprep.subr.bf16.mxu0 0
        %5076 = vmatpush1.bf16.msra.mxu0 0
        %5077 = vmatprep.subr.bf16.mxu0 0
        %5078 = vmatpush1.bf16.msra.mxu0 0
        %5079 = vmatprep.subr.bf16.mxu0 0
        %5080 = vmatpush1.bf16.msra.mxu0 0
        %5081 = vmatprep.subr.bf16.mxu0 0
        %5082 = vmatpush1.bf16.msra.mxu0 0
        %5083 = vmatprep.subr.bf16.mxu0 0
        %5084 = vmatpush1.bf16.msra.mxu0 0
        %5085 = vmatprep.subr.bf16.mxu0 0
        %5086 = vmatpush1.bf16.msra.mxu0 0
        %5087 = vmatprep.subr.bf16.mxu0 0
        %5088 = vmatpush1.bf16.msra.mxu0 0
        %5089 = vmatprep.mubr.bf16.mxu0 0
        %5090 = vmatmul.mubr.bf16.gmra.mrb[0].mxu0 %v5055
        %v5091 = vpop.f32.mrb[0].mxu0
        %v5092 = vadd.f32 0.0, %v5091
        %v5093 = vpop.f32.mrb[0].mxu0
        %v5094 = vpop.f32.mrb[0].mxu0
        %v5095 = vpop.f32.mrb[0].mxu0
        %5096 = vdwg.mxu0
        %v5099 = vunpack.c.l.b16 %v4610
        %v5100 = vunpack.c.l.b16 %v4611
        %v5101 = vpack.c.b16 %v5100, %v5099
        %v5104 = vsel %vm1676, %v5045, 0
        %5106 = vmatprep.subr.bf16.mxu0 0
        %5107 = vmatpush1.bf16.msra.mxu0 %v5101
        %5108 = vmatprep.subr.bf16.mxu0 0
        %5109 = vmatpush1.bf16.msra.mxu0 0
        %5110 = vmatprep.subr.bf16.mxu0 0
        %5111 = vmatpush1.bf16.msra.mxu0 0
        %5112 = vmatprep.subr.bf16.mxu0 0
        %5113 = vmatpush1.bf16.msra.mxu0 0
        %5114 = vmatprep.subr.bf16.mxu0 0
        %5115 = vmatpush1.bf16.msra.mxu0 0
        %5116 = vmatprep.subr.bf16.mxu0 0
        %5117 = vmatpush1.bf16.msra.mxu0 0
        %5118 = vmatprep.subr.bf16.mxu0 0
        %5119 = vmatpush1.bf16.msra.mxu0 0
        %5120 = vmatprep.subr.bf16.mxu0 0
        %5121 = vmatpush1.bf16.msra.mxu0 0
        %5122 = vmatprep.subr.bf16.mxu0 0
        %5123 = vmatpush1.bf16.msra.mxu0 0
        %5124 = vmatprep.subr.bf16.mxu0 0
        %5125 = vmatpush1.bf16.msra.mxu0 0
        %5126 = vmatprep.subr.bf16.mxu0 0
        %5127 = vmatpush1.bf16.msra.mxu0 0
        %5128 = vmatprep.subr.bf16.mxu0 0
        %5129 = vmatpush1.bf16.msra.mxu0 0
        %5130 = vmatprep.subr.bf16.mxu0 0
        %5131 = vmatpush1.bf16.msra.mxu0 0
        %5132 = vmatprep.subr.bf16.mxu0 0
        %5133 = vmatpush1.bf16.msra.mxu0 0
        %5134 = vmatprep.subr.bf16.mxu0 0
        %5135 = vmatpush1.bf16.msra.mxu0 0
        %5136 = vmatprep.subr.bf16.mxu0 0
        %5137 = vmatpush1.bf16.msra.mxu0 0
        %5138 = vmatprep.mubr.bf16.mxu0 0
        %5139 = vmatmul.mubr.bf16.gmra.mrb[0].mxu0 %v5104
        %v5140 = vpop.f32.mrb[0].mxu0
        %v5141 = vadd.f32 0.0, %v5140
        %v5142 = vpop.f32.mrb[0].mxu0
        %v5143 = vpop.f32.mrb[0].mxu0
        %v5144 = vpop.f32.mrb[0].mxu0
        %5145 = vdwg.mxu0
        %v5148 = vunpack.c.l.b16 %v4612
        %v5149 = vunpack.c.l.b16 %v4613
        %v5150 = vpack.c.b16 %v5149, %v5148
        %v5153 = vsel %vm1676, %v5046, 0
        %5155 = vmatprep.subr.bf16.mxu0 0
        %5156 = vmatpush1.bf16.msra.mxu0 %v5150
        %5157 = vmatprep.subr.bf16.mxu0 0
        %5158 = vmatpush1.bf16.msra.mxu0 0
        %5159 = vmatprep.subr.bf16.mxu0 0
        %5160 = vmatpush1.bf16.msra.mxu0 0
        %5161 = vmatprep.subr.bf16.mxu0 0
        %5162 = vmatpush1.bf16.msra.mxu0 0
        %5163 = vmatprep.subr.bf16.mxu0 0
        %5164 = vmatpush1.bf16.msra.mxu0 0
        %5165 = vmatprep.subr.bf16.mxu0 0
        %5166 = vmatpush1.bf16.msra.mxu0 0
        %5167 = vmatprep.subr.bf16.mxu0 0
        %5168 = vmatpush1.bf16.msra.mxu0 0
        %5169 = vmatprep.subr.bf16.mxu0 0
        %5170 = vmatpush1.bf16.msra.mxu0 0
        %5171 = vmatprep.subr.bf16.mxu0 0
        %5172 = vmatpush1.bf16.msra.mxu0 0
        %5173 = vmatprep.subr.bf16.mxu0 0
        %5174 = vmatpush1.bf16.msra.mxu0 0
        %5175 = vmatprep.subr.bf16.mxu0 0
        %5176 = vmatpush1.bf16.msra.mxu0 0
        %5177 = vmatprep.subr.bf16.mxu0 0
        %5178 = vmatpush1.bf16.msra.mxu0 0
        %5179 = vmatprep.subr.bf16.mxu0 0
        %5180 = vmatpush1.bf16.msra.mxu0 0
        %5181 = vmatprep.subr.bf16.mxu0 0
        %5182 = vmatpush1.bf16.msra.mxu0 0
        %5183 = vmatprep.subr.bf16.mxu0 0
        %5184 = vmatpush1.bf16.msra.mxu0 0
        %5185 = vmatprep.subr.bf16.mxu0 0
        %5186 = vmatpush1.bf16.msra.mxu0 0
        %5187 = vmatprep.mubr.bf16.mxu0 0
        %5188 = vmatmul.mubr.bf16.gmra.mrb[0].mxu0 %v5153
        %v5189 = vpop.f32.mrb[0].mxu0
        %v5190 = vadd.f32 0.0, %v5189
        %v5191 = vpop.f32.mrb[0].mxu0
        %v5192 = vpop.f32.mrb[0].mxu0
        %v5193 = vpop.f32.mrb[0].mxu0
        %5194 = vdwg.mxu0
        %v5197 = vunpack.c.l.b16 %v4614
        %v5198 = vunpack.c.l.b16 %v4615
        %v5199 = vpack.c.b16 %v5198, %v5197
        %v5202 = vsel %vm1676, %v5047, 0
        %5204 = vmatprep.subr.bf16.mxu0 0
        %5205 = vmatpush1.bf16.msra.mxu0 %v5199
        %5206 = vmatprep.subr.bf16.mxu0 0
        %5207 = vmatpush1.bf16.msra.mxu0 0
        %5208 = vmatprep.subr.bf16.mxu0 0
        %5209 = vmatpush1.bf16.msra.mxu0 0
        %5210 = vmatprep.subr.bf16.mxu0 0
        %5211 = vmatpush1.bf16.msra.mxu0 0
        %5212 = vmatprep.subr.bf16.mxu0 0
        %5213 = vmatpush1.bf16.msra.mxu0 0
        %5214 = vmatprep.subr.bf16.mxu0 0
        %5215 = vmatpush1.bf16.msra.mxu0 0
        %5216 = vmatprep.subr.bf16.mxu0 0
        %5217 = vmatpush1.bf16.msra.mxu0 0
        %5218 = vmatprep.subr.bf16.mxu0 0
        %5219 = vmatpush1.bf16.msra.mxu0 0
        %5220 = vmatprep.subr.bf16.mxu0 0
        %5221 = vmatpush1.bf16.msra.mxu0 0
        %5222 = vmatprep.subr.bf16.mxu0 0
        %5223 = vmatpush1.bf16.msra.mxu0 0
        %5224 = vmatprep.subr.bf16.mxu0 0
        %5225 = vmatpush1.bf16.msra.mxu0 0
        %5226 = vmatprep.subr.bf16.mxu0 0
        %5227 = vmatpush1.bf16.msra.mxu0 0
        %5228 = vmatprep.subr.bf16.mxu0 0
        %5229 = vmatpush1.bf16.msra.mxu0 0
        %5230 = vmatprep.subr.bf16.mxu0 0
        %5231 = vmatpush1.bf16.msra.mxu0 0
        %5232 = vmatprep.subr.bf16.mxu0 0
        %5233 = vmatpush1.bf16.msra.mxu0 0
        %5234 = vmatprep.subr.bf16.mxu0 0
        %5235 = vmatpush1.bf16.msra.mxu0 0
        %5236 = vmatprep.mubr.bf16.mxu0 0
        %5237 = vmatmul.mubr.bf16.gmra.mrb[0].mxu0 %v5202
        %v5238 = vpop.f32.mrb[0].mxu0
        %v5239 = vadd.f32 0.0, %v5238
        %v5240 = vpop.f32.mrb[0].mxu0
        %v5241 = vpop.f32.mrb[0].mxu0
        %v5242 = vpop.f32.mrb[0].mxu0
        %5243 = vdwg.mxu0
        %v5244 = vadd.f32 %v5092, %v5141
        %v5245 = vadd.f32 %v5244, %v5190
        %v5246 = vadd.f32 %v5245, %v5239
        %v5247 = vadd.f32 %v3850, %v5246
        %s5248 = scalar_lea.vmem %s11, 1
        %v5249 = vld [vmem:[%s5248] sm:$0x1]
        %v5250 = vmul.f32 %v5247, %v5247
        %v5251 = vsel %vm910, %v5250, 0.0
        %5252 = vadd.xlane.f32.xlu0 %v5251
        %v5253 = vpop.xlane.xlu0 %5252
        %v5254 = vmul.f32 %v5253, %v914
        %v5255 = vadd.f32 %v5254, 1e-06
        %v5256 = vrsqrt.pop %v5255
        %v5257 = vmul.f32 %v5247, %v5256
        %v5259 = vlaneseq
        %v5260 = vshrl.u32 %v5259, 7
        %v5261 = vsub.s32 0, %v5260
        %v5262 = vrot.slane %v5249, %v5261
        %v5264 = vmul.f32 %v5257, %v5262
        %v5265 = vpack.c.bf16 %v5264, %v5264
        %s5266 = scalar_lea.vmem %s12, 16
        %v5267 = vld [vmem:[%s5266] sm:$0xf]
        %v5268 = vld [vmem:[%s5266 + $0x4] sm:$0xf]
        %v5269 = vld [vmem:[%s5266 + $0x8] sm:$0xf]
        %v5270 = vld [vmem:[%s5266 + $0xc] sm:$0xf]
        %v5275 = vunpack.c.l.b16 %v5267
        %v5276 = vunpack.c.l.b16 %v5268
        %v5277 = vunpack.c.l.b16 %v5269
        %v5278 = vunpack.c.l.b16 %v5270
        %v5279 = vpack.c.b16 %v5276, %v5275
        %v5280 = vpack.c.b16 %v5278, %v5277
        %5283 = vmatprep.subr.bf16.mxu0 0
        %5284 = vmatpush1.bf16.msra.mxu0 %v5279
        %5285 = vmatprep.subr.bf16.mxu0 0
        %5286 = vmatpush1.bf16.msra.mxu0 %v5280
        %5287 = vmatprep.subr.bf16.mxu0 0
        %5288 = vmatpush1.bf16.msra.mxu0 0
        %5289 = vmatprep.subr.bf16.mxu0 0
        %5290 = vmatpush1.bf16.msra.mxu0 0
        %5291 = vmatprep.subr.bf16.mxu0 0
        %5292 = vmatpush1.bf16.msra.mxu0 0
        %5293 = vmatprep.subr.bf16.mxu0 0
        %5294 = vmatpush1.bf16.msra.mxu0 0
        %5295 = vmatprep.subr.bf16.mxu0 0
        %5296 = vmatpush1.bf16.msra.mxu0 0
        %5297 = vmatprep.subr.bf16.mxu0 0
        %5298 = vmatpush1.bf16.msra.mxu0 0
        %5299 = vmatprep.subr.bf16.mxu0 0
        %5300 = vmatpush1.bf16.msra.mxu0 0
        %5301 = vmatprep.subr.bf16.mxu0 0
        %5302 = vmatpush1.bf16.msra.mxu0 0
        %5303 = vmatprep.subr.bf16.mxu0 0
        %5304 = vmatpush1.bf16.msra.mxu0 0
        %5305 = vmatprep.subr.bf16.mxu0 0
        %5306 = vmatpush1.bf16.msra.mxu0 0
        %5307 = vmatprep.subr.bf16.mxu0 0
        %5308 = vmatpush1.bf16.msra.mxu0 0
        %5309 = vmatprep.subr.bf16.mxu0 0
        %5310 = vmatpush1.bf16.msra.mxu0 0
        %5311 = vmatprep.subr.bf16.mxu0 0
        %5312 = vmatpush1.bf16.msra.mxu0 0
        %5313 = vmatprep.subr.bf16.mxu0 0
        %5314 = vmatpush1.bf16.msra.mxu0 0
        %5315 = vmatprep.mubr.bf16.mxu0 0
        %5316 = vmatmul.mubr.bf16.gmra.mrb[0].mxu0 %v2337
        %v5317 = vpop.f32.mrb[0].mxu0
        %v5318 = vadd.f32 0.0, %v5317
        %v5319 = vpop.f32.mrb[0].mxu0
        %v5320 = vpop.f32.mrb[0].mxu0
        %v5321 = vpop.f32.mrb[0].mxu0
        %5322 = vdwg.mxu0
        %v5323 = vpack.c.bf16 %v5318, %v5318
        %s5324 = scalar_lea.vmem %s720, 4
        %5325 = vst [vmem:[%s5324] sm:$0xf] %v5323
        %s5326 = scalar_lea.vmem %s13, 64
        %v5327 = vld [vmem:[%s5326] sm:$0xf]
        %v5328 = vld [vmem:[%s5326 + $0x4] sm:$0xf]
        %v5329 = vld [vmem:[%s5326 + $0x8] sm:$0xf]
        %v5330 = vld [vmem:[%s5326 + $0xc] sm:$0xf]
        %v5331 = vld [vmem:[%s5326 + $0x10] sm:$0xf]
        %v5332 = vld [vmem:[%s5326 + $0x14] sm:$0xf]
        %v5333 = vld [vmem:[%s5326 + $0x18] sm:$0xf]
        %v5334 = vld [vmem:[%s5326 + $0x1c] sm:$0xf]
        %v5335 = vld [vmem:[%s5326 + $0x20] sm:$0xf]
        %v5336 = vld [vmem:[%s5326 + $0x24] sm:$0xf]
        %v5337 = vld [vmem:[%s5326 + $0x28] sm:$0xf]
        %v5338 = vld [vmem:[%s5326 + $0x2c] sm:$0xf]
        %v5339 = vld [vmem:[%s5326 + $0x30] sm:$0xf]
        %v5340 = vld [vmem:[%s5326 + $0x34] sm:$0xf]
        %v5341 = vld [vmem:[%s5326 + $0x38] sm:$0xf]
        %v5342 = vld [vmem:[%s5326 + $0x3c] sm:$0xf]
        %v5347 = vunpack.c.l.b16 %v5327
        %v5348 = vunpack.c.l.b16 %v5328
        %v5349 = vunpack.c.l.b16 %v5329
        %v5350 = vunpack.c.l.b16 %v5330
        %v5351 = vpack.c.b16 %v5348, %v5347
        %v5352 = vpack.c.b16 %v5350, %v5349
        %v5356 = vsel %vm910, %v5265, 0
        %5358 = vmatprep.subr.bf16.mxu0 0
        %5359 = vmatpush1.bf16.msra.mxu0 %v5351
        %5360 = vmatprep.subr.bf16.mxu0 0
        %5361 = vmatpush1.bf16.msra.mxu0 %v5352
        %5362 = vmatprep.subr.bf16.mxu0 0
        %5363 = vmatpush1.bf16.msra.mxu0 0
        %5364 = vmatprep.subr.bf16.mxu0 0
        %5365 = vmatpush1.bf16.msra.mxu0 0
        %5366 = vmatprep.subr.bf16.mxu0 0
        %5367 = vmatpush1.bf16.msra.mxu0 0
        %5368 = vmatprep.subr.bf16.mxu0 0
        %5369 = vmatpush1.bf16.msra.mxu0 0
        %5370 = vmatprep.subr.bf16.mxu0 0
        %5371 = vmatpush1.bf16.msra.mxu0 0
        %5372 = vmatprep.subr.bf16.mxu0 0
        %5373 = vmatpush1.bf16.msra.mxu0 0
        %5374 = vmatprep.subr.bf16.mxu0 0
        %5375 = vmatpush1.bf16.msra.mxu0 0
        %5376 = vmatprep.subr.bf16.mxu0 0
        %5377 = vmatpush1.bf16.msra.mxu0 0
        %5378 = vmatprep.subr.bf16.mxu0 0
        %5379 = vmatpush1.bf16.msra.mxu0 0
        %5380 = vmatprep.subr.bf16.mxu0 0
        %5381 = vmatpush1.bf16.msra.mxu0 0
        %5382 = vmatprep.subr.bf16.mxu0 0
        %5383 = vmatpush1.bf16.msra.mxu0 0
        %5384 = vmatprep.subr.bf16.mxu0 0
        %5385 = vmatpush1.bf16.msra.mxu0 0
        %5386 = vmatprep.subr.bf16.mxu0 0
        %5387 = vmatpush1.bf16.msra.mxu0 0
        %5388 = vmatprep.subr.bf16.mxu0 0
        %5389 = vmatpush1.bf16.msra.mxu0 0
        %5390 = vmatprep.mubr.bf16.mxu0 0
        %5391 = vmatmul.mubr.bf16.gmra.mrb[0].mxu0 %v5356
        %v5392 = vpop.f32.mrb[0].mxu0
        %v5393 = vadd.f32 0.0, %v5392
        %v5394 = vpop.f32.mrb[0].mxu0
        %v5395 = vpop.f32.mrb[0].mxu0
        %v5396 = vpop.f32.mrb[0].mxu0
        %5397 = vdwg.mxu0
        %v5402 = vunpack.c.l.b16 %v5331
        %v5403 = vunpack.c.l.b16 %v5332
        %v5404 = vunpack.c.l.b16 %v5333
        %v5405 = vunpack.c.l.b16 %v5334
        %v5406 = vpack.c.b16 %v5403, %v5402
        %v5407 = vpack.c.b16 %v5405, %v5404
        %5410 = vmatprep.subr.bf16.mxu0 0
        %5411 = vmatpush1.bf16.msra.mxu0 %v5406
        %5412 = vmatprep.subr.bf16.mxu0 0
        %5413 = vmatpush1.bf16.msra.mxu0 %v5407
        %5414 = vmatprep.subr.bf16.mxu0 0
        %5415 = vmatpush1.bf16.msra.mxu0 0
        %5416 = vmatprep.subr.bf16.mxu0 0
        %5417 = vmatpush1.bf16.msra.mxu0 0
        %5418 = vmatprep.subr.bf16.mxu0 0
        %5419 = vmatpush1.bf16.msra.mxu0 0
        %5420 = vmatprep.subr.bf16.mxu0 0
        %5421 = vmatpush1.bf16.msra.mxu0 0
        %5422 = vmatprep.subr.bf16.mxu0 0
        %5423 = vmatpush1.bf16.msra.mxu0 0
        %5424 = vmatprep.subr.bf16.mxu0 0
        %5425 = vmatpush1.bf16.msra.mxu0 0
        %5426 = vmatprep.subr.bf16.mxu0 0
        %5427 = vmatpush1.bf16.msra.mxu0 0
        %5428 = vmatprep.subr.bf16.mxu0 0
        %5429 = vmatpush1.bf16.msra.mxu0 0
        %5430 = vmatprep.subr.bf16.mxu0 0
        %5431 = vmatpush1.bf16.msra.mxu0 0
        %5432 = vmatprep.subr.bf16.mxu0 0
        %5433 = vmatpush1.bf16.msra.mxu0 0
        %5434 = vmatprep.subr.bf16.mxu0 0
        %5435 = vmatpush1.bf16.msra.mxu0 0
        %5436 = vmatprep.subr.bf16.mxu0 0
        %5437 = vmatpush1.bf16.msra.mxu0 0
        %5438 = vmatprep.subr.bf16.mxu0 0
        %5439 = vmatpush1.bf16.msra.mxu0 0
        %5440 = vmatprep.subr.bf16.mxu0 0
        %5441 = vmatpush1.bf16.msra.mxu0 0
        %5442 = vmatprep.mubr.bf16.mxu0 0
        %5443 = vmatmul.mubr.bf16.gmra.mrb[0].mxu0 %v5356
        %v5444 = vpop.f32.mrb[0].mxu0
        %v5445 = vadd.f32 0.0, %v5444
        %v5446 = vpop.f32.mrb[0].mxu0
        %v5447 = vpop.f32.mrb[0].mxu0
        %v5448 = vpop.f32.mrb[0].mxu0
        %5449 = vdwg.mxu0
        %v5454 = vunpack.c.l.b16 %v5335
        %v5455 = vunpack.c.l.b16 %v5336
        %v5456 = vunpack.c.l.b16 %v5337
        %v5457 = vunpack.c.l.b16 %v5338
        %v5458 = vpack.c.b16 %v5455, %v5454
        %v5459 = vpack.c.b16 %v5457, %v5456
        %5462 = vmatprep.subr.bf16.mxu0 0
        %5463 = vmatpush1.bf16.msra.mxu0 %v5458
        %5464 = vmatprep.subr.bf16.mxu0 0
        %5465 = vmatpush1.bf16.msra.mxu0 %v5459
        %5466 = vmatprep.subr.bf16.mxu0 0
        %5467 = vmatpush1.bf16.msra.mxu0 0
        %5468 = vmatprep.subr.bf16.mxu0 0
        %5469 = vmatpush1.bf16.msra.mxu0 0
        %5470 = vmatprep.subr.bf16.mxu0 0
        %5471 = vmatpush1.bf16.msra.mxu0 0
        %5472 = vmatprep.subr.bf16.mxu0 0
        %5473 = vmatpush1.bf16.msra.mxu0 0
        %5474 = vmatprep.subr.bf16.mxu0 0
        %5475 = vmatpush1.bf16.msra.mxu0 0
        %5476 = vmatprep.subr.bf16.mxu0 0
        %5477 = vmatpush1.bf16.msra.mxu0 0
        %5478 = vmatprep.subr.bf16.mxu0 0
        %5479 = vmatpush1.bf16.msra.mxu0 0
        %5480 = vmatprep.subr.bf16.mxu0 0
        %5481 = vmatpush1.bf16.msra.mxu0 0
        %5482 = vmatprep.subr.bf16.mxu0 0
        %5483 = vmatpush1.bf16.msra.mxu0 0
        %5484 = vmatprep.subr.bf16.mxu0 0
        %5485 = vmatpush1.bf16.msra.mxu0 0
        %5486 = vmatprep.subr.bf16.mxu0 0
        %5487 = vmatpush1.bf16.msra.mxu0 0
        %5488 = vmatprep.subr.bf16.mxu0 0
        %5489 = vmatpush1.bf16.msra.mxu0 0
        %5490 = vmatprep.subr.bf16.mxu0 0
        %5491 = vmatpush1.bf16.msra.mxu0 0
        %5492 = vmatprep.subr.bf16.mxu0 0
        %5493 = vmatpush1.bf16.msra.mxu0 0
        %5494 = vmatprep.mubr.bf16.mxu0 0
        %5495 = vmatmul.mubr.bf16.gmra.mrb[0].mxu0 %v5356
        %v5496 = vpop.f32.mrb[0].mxu0
        %v5497 = vadd.f32 0.0, %v5496
        %v5498 = vpop.f32.mrb[0].mxu0
        %v5499 = vpop.f32.mrb[0].mxu0
        %v5500 = vpop.f32.mrb[0].mxu0
        %5501 = vdwg.mxu0
        %v5506 = vunpack.c.l.b16 %v5339
        %v5507 = vunpack.c.l.b16 %v5340
        %v5508 = vunpack.c.l.b16 %v5341
        %v5509 = vunpack.c.l.b16 %v5342
        %v5510 = vpack.c.b16 %v5507, %v5506
        %v5511 = vpack.c.b16 %v5509, %v5508
        %5514 = vmatprep.subr.bf16.mxu0 0
        %5515 = vmatpush1.bf16.msra.mxu0 %v5510
        %5516 = vmatprep.subr.bf16.mxu0 0
        %5517 = vmatpush1.bf16.msra.mxu0 %v5511
        %5518 = vmatprep.subr.bf16.mxu0 0
        %5519 = vmatpush1.bf16.msra.mxu0 0
        %5520 = vmatprep.subr.bf16.mxu0 0
        %5521 = vmatpush1.bf16.msra.mxu0 0
        %5522 = vmatprep.subr.bf16.mxu0 0
        %5523 = vmatpush1.bf16.msra.mxu0 0
        %5524 = vmatprep.subr.bf16.mxu0 0
        %5525 = vmatpush1.bf16.msra.mxu0 0
        %5526 = vmatprep.subr.bf16.mxu0 0
        %5527 = vmatpush1.bf16.msra.mxu0 0
        %5528 = vmatprep.subr.bf16.mxu0 0
        %5529 = vmatpush1.bf16.msra.mxu0 0
        %5530 = vmatprep.subr.bf16.mxu0 0
        %5531 = vmatpush1.bf16.msra.mxu0 0
        %5532 = vmatprep.subr.bf16.mxu0 0
        %5533 = vmatpush1.bf16.msra.mxu0 0
        %5534 = vmatprep.subr.bf16.mxu0 0
        %5535 = vmatpush1.bf16.msra.mxu0 0
        %5536 = vmatprep.subr.bf16.mxu0 0
        %5537 = vmatpush1.bf16.msra.mxu0 0
        %5538 = vmatprep.subr.bf16.mxu0 0
        %5539 = vmatpush1.bf16.msra.mxu0 0
        %5540 = vmatprep.subr.bf16.mxu0 0
        %5541 = vmatpush1.bf16.msra.mxu0 0
        %5542 = vmatprep.subr.bf16.mxu0 0
        %5543 = vmatpush1.bf16.msra.mxu0 0
        %5544 = vmatprep.subr.bf16.mxu0 0
        %5545 = vmatpush1.bf16.msra.mxu0 0
        %5546 = vmatprep.mubr.bf16.mxu0 0
        %5547 = vmatmul.mubr.bf16.gmra.mrb[0].mxu0 %v5356
        %v5548 = vpop.f32.mrb[0].mxu0
        %v5549 = vadd.f32 0.0, %v5548
        %v5550 = vpop.f32.mrb[0].mxu0
        %v5551 = vpop.f32.mrb[0].mxu0
        %v5552 = vpop.f32.mrb[0].mxu0
        %5553 = vdwg.mxu0
        %s5554 = scalar_lea.vmem %s14, 64
        %v5555 = vld [vmem:[%s5554] sm:$0xf]
        %v5556 = vld [vmem:[%s5554 + $0x4] sm:$0xf]
        %v5557 = vld [vmem:[%s5554 + $0x8] sm:$0xf]
        %v5558 = vld [vmem:[%s5554 + $0xc] sm:$0xf]
        %v5559 = vld [vmem:[%s5554 + $0x10] sm:$0xf]
        %v5560 = vld [vmem:[%s5554 + $0x14] sm:$0xf]
        %v5561 = vld [vmem:[%s5554 + $0x18] sm:$0xf]
        %v5562 = vld [vmem:[%s5554 + $0x1c] sm:$0xf]
        %v5563 = vld [vmem:[%s5554 + $0x20] sm:$0xf]
        %v5564 = vld [vmem:[%s5554 + $0x24] sm:$0xf]
        %v5565 = vld [vmem:[%s5554 + $0x28] sm:$0xf]
        %v5566 = vld [vmem:[%s5554 + $0x2c] sm:$0xf]
        %v5567 = vld [vmem:[%s5554 + $0x30] sm:$0xf]
        %v5568 = vld [vmem:[%s5554 + $0x34] sm:$0xf]
        %v5569 = vld [vmem:[%s5554 + $0x38] sm:$0xf]
        %v5570 = vld [vmem:[%s5554 + $0x3c] sm:$0xf]
        %v5575 = vunpack.c.l.b16 %v5555
        %v5576 = vunpack.c.l.b16 %v5556
        %v5577 = vunpack.c.l.b16 %v5557
        %v5578 = vunpack.c.l.b16 %v5558
        %v5579 = vpack.c.b16 %v5576, %v5575
        %v5580 = vpack.c.b16 %v5578, %v5577
        %5583 = vmatprep.subr.bf16.mxu0 0
        %5584 = vmatpush1.bf16.msra.mxu0 %v5579
        %5585 = vmatprep.subr.bf16.mxu0 0
        %5586 = vmatpush1.bf16.msra.mxu0 %v5580
        %5587 = vmatprep.subr.bf16.mxu0 0
        %5588 = vmatpush1.bf16.msra.mxu0 0
        %5589 = vmatprep.subr.bf16.mxu0 0
        %5590 = vmatpush1.bf16.msra.mxu0 0
        %5591 = vmatprep.subr.bf16.mxu0 0
        %5592 = vmatpush1.bf16.msra.mxu0 0
        %5593 = vmatprep.subr.bf16.mxu0 0
        %5594 = vmatpush1.bf16.msra.mxu0 0
        %5595 = vmatprep.subr.bf16.mxu0 0
        %5596 = vmatpush1.bf16.msra.mxu0 0
        %5597 = vmatprep.subr.bf16.mxu0 0
        %5598 = vmatpush1.bf16.msra.mxu0 0
        %5599 = vmatprep.subr.bf16.mxu0 0
        %5600 = vmatpush1.bf16.msra.mxu0 0
        %5601 = vmatprep.subr.bf16.mxu0 0
        %5602 = vmatpush1.bf16.msra.mxu0 0
        %5603 = vmatprep.subr.bf16.mxu0 0
        %5604 = vmatpush1.bf16.msra.mxu0 0
        %5605 = vmatprep.subr.bf16.mxu0 0
        %5606 = vmatpush1.bf16.msra.mxu0 0
        %5607 = vmatprep.subr.bf16.mxu0 0
        %5608 = vmatpush1.bf16.msra.mxu0 0
        %5609 = vmatprep.subr.bf16.mxu0 0
        %5610 = vmatpush1.bf16.msra.mxu0 0
        %5611 = vmatprep.subr.bf16.mxu0 0
        %5612 = vmatpush1.bf16.msra.mxu0 0
        %5613 = vmatprep.subr.bf16.mxu0 0
        %5614 = vmatpush1.bf16.msra.mxu0 0
        %5615 = vmatprep.mubr.bf16.mxu0 0
        %5616 = vmatmul.mubr.bf16.gmra.mrb[0].mxu0 %v2337
        %v5617 = vpop.f32.mrb[0].mxu0
        %v5618 = vadd.f32 0.0, %v5617
        %v5619 = vpop.f32.mrb[0].mxu0
        %v5620 = vpop.f32.mrb[0].mxu0
        %v5621 = vpop.f32.mrb[0].mxu0
        %5622 = vdwg.mxu0
        %v5627 = vunpack.c.l.b16 %v5559
        %v5628 = vunpack.c.l.b16 %v5560
        %v5629 = vunpack.c.l.b16 %v5561
        %v5630 = vunpack.c.l.b16 %v5562
        %v5631 = vpack.c.b16 %v5628, %v5627
        %v5632 = vpack.c.b16 %v5630, %v5629
        %5635 = vmatprep.subr.bf16.mxu0 0
        %5636 = vmatpush1.bf16.msra.mxu0 %v5631
        %5637 = vmatprep.subr.bf16.mxu0 0
        %5638 = vmatpush1.bf16.msra.mxu0 %v5632
        %5639 = vmatprep.subr.bf16.mxu0 0
        %5640 = vmatpush1.bf16.msra.mxu0 0
        %5641 = vmatprep.subr.bf16.mxu0 0
        %5642 = vmatpush1.bf16.msra.mxu0 0
        %5643 = vmatprep.subr.bf16.mxu0 0
        %5644 = vmatpush1.bf16.msra.mxu0 0
        %5645 = vmatprep.subr.bf16.mxu0 0
        %5646 = vmatpush1.bf16.msra.mxu0 0
        %5647 = vmatprep.subr.bf16.mxu0 0
        %5648 = vmatpush1.bf16.msra.mxu0 0
        %5649 = vmatprep.subr.bf16.mxu0 0
        %5650 = vmatpush1.bf16.msra.mxu0 0
        %5651 = vmatprep.subr.bf16.mxu0 0
        %5652 = vmatpush1.bf16.msra.mxu0 0
        %5653 = vmatprep.subr.bf16.mxu0 0
        %5654 = vmatpush1.bf16.msra.mxu0 0
        %5655 = vmatprep.subr.bf16.mxu0 0
        %5656 = vmatpush1.bf16.msra.mxu0 0
        %5657 = vmatprep.subr.bf16.mxu0 0
        %5658 = vmatpush1.bf16.msra.mxu0 0
        %5659 = vmatprep.subr.bf16.mxu0 0
        %5660 = vmatpush1.bf16.msra.mxu0 0
        %5661 = vmatprep.subr.bf16.mxu0 0
        %5662 = vmatpush1.bf16.msra.mxu0 0
        %5663 = vmatprep.subr.bf16.mxu0 0
        %5664 = vmatpush1.bf16.msra.mxu0 0
        %5665 = vmatprep.subr.bf16.mxu0 0
        %5666 = vmatpush1.bf16.msra.mxu0 0
        %5667 = vmatprep.mubr.bf16.mxu0 0
        %5668 = vmatmul.mubr.bf16.gmra.mrb[0].mxu0 %v2337
        %v5669 = vpop.f32.mrb[0].mxu0
        %v5670 = vadd.f32 0.0, %v5669
        %v5671 = vpop.f32.mrb[0].mxu0
        %v5672 = vpop.f32.mrb[0].mxu0
        %v5673 = vpop.f32.mrb[0].mxu0
        %5674 = vdwg.mxu0
        %v5679 = vunpack.c.l.b16 %v5563
        %v5680 = vunpack.c.l.b16 %v5564
        %v5681 = vunpack.c.l.b16 %v5565
        %v5682 = vunpack.c.l.b16 %v5566
        %v5683 = vpack.c.b16 %v5680, %v5679
        %v5684 = vpack.c.b16 %v5682, %v5681
        %5687 = vmatprep.subr.bf16.mxu0 0
        %5688 = vmatpush1.bf16.msra.mxu0 %v5683
        %5689 = vmatprep.subr.bf16.mxu0 0
        %5690 = vmatpush1.bf16.msra.mxu0 %v5684
        %5691 = vmatprep.subr.bf16.mxu0 0
        %5692 = vmatpush1.bf16.msra.mxu0 0
        %5693 = vmatprep.subr.bf16.mxu0 0
        %5694 = vmatpush1.bf16.msra.mxu0 0
        %5695 = vmatprep.subr.bf16.mxu0 0
        %5696 = vmatpush1.bf16.msra.mxu0 0
        %5697 = vmatprep.subr.bf16.mxu0 0
        %5698 = vmatpush1.bf16.msra.mxu0 0
        %5699 = vmatprep.subr.bf16.mxu0 0
        %5700 = vmatpush1.bf16.msra.mxu0 0
        %5701 = vmatprep.subr.bf16.mxu0 0
        %5702 = vmatpush1.bf16.msra.mxu0 0
        %5703 = vmatprep.subr.bf16.mxu0 0
        %5704 = vmatpush1.bf16.msra.mxu0 0
        %5705 = vmatprep.subr.bf16.mxu0 0
        %5706 = vmatpush1.bf16.msra.mxu0 0
        %5707 = vmatprep.subr.bf16.mxu0 0
        %5708 = vmatpush1.bf16.msra.mxu0 0
        %5709 = vmatprep.subr.bf16.mxu0 0
        %5710 = vmatpush1.bf16.msra.mxu0 0
        %5711 = vmatprep.subr.bf16.mxu0 0
        %5712 = vmatpush1.bf16.msra.mxu0 0
        %5713 = vmatprep.subr.bf16.mxu0 0
        %5714 = vmatpush1.bf16.msra.mxu0 0
        %5715 = vmatprep.subr.bf16.mxu0 0
        %5716 = vmatpush1.bf16.msra.mxu0 0
        %5717 = vmatprep.subr.bf16.mxu0 0
        %5718 = vmatpush1.bf16.msra.mxu0 0
        %5719 = vmatprep.mubr.bf16.mxu0 0
        %5720 = vmatmul.mubr.bf16.gmra.mrb[0].mxu0 %v2337
        %v5721 = vpop.f32.mrb[0].mxu0
        %v5722 = vadd.f32 0.0, %v5721
        %v5723 = vpop.f32.mrb[0].mxu0
        %v5724 = vpop.f32.mrb[0].mxu0
        %v5725 = vpop.f32.mrb[0].mxu0
        %5726 = vdwg.mxu0
        %v5731 = vunpack.c.l.b16 %v5567
        %v5732 = vunpack.c.l.b16 %v5568
        %v5733 = vunpack.c.l.b16 %v5569
        %v5734 = vunpack.c.l.b16 %v5570
        %v5735 = vpack.c.b16 %v5732, %v5731
        %v5736 = vpack.c.b16 %v5734, %v5733
        %5739 = vmatprep.subr.bf16.mxu0 0
        %5740 = vmatpush1.bf16.msra.mxu0 %v5735
        %5741 = vmatprep.subr.bf16.mxu0 0
        %5742 = vmatpush1.bf16.msra.mxu0 %v5736
        %5743 = vmatprep.subr.bf16.mxu0 0
        %5744 = vmatpush1.bf16.msra.mxu0 0
        %5745 = vmatprep.subr.bf16.mxu0 0
        %5746 = vmatpush1.bf16.msra.mxu0 0
        %5747 = vmatprep.subr.bf16.mxu0 0
        %5748 = vmatpush1.bf16.msra.mxu0 0
        %5749 = vmatprep.subr.bf16.mxu0 0
        %5750 = vmatpush1.bf16.msra.mxu0 0
        %5751 = vmatprep.subr.bf16.mxu0 0
        %5752 = vmatpush1.bf16.msra.mxu0 0
        %5753 = vmatprep.subr.bf16.mxu0 0
        %5754 = vmatpush1.bf16.msra.mxu0 0
        %5755 = vmatprep.subr.bf16.mxu0 0
        %5756 = vmatpush1.bf16.msra.mxu0 0
        %5757 = vmatprep.subr.bf16.mxu0 0
        %5758 = vmatpush1.bf16.msra.mxu0 0
        %5759 = vmatprep.subr.bf16.mxu0 0
        %5760 = vmatpush1.bf16.msra.mxu0 0
        %5761 = vmatprep.subr.bf16.mxu0 0
        %5762 = vmatpush1.bf16.msra.mxu0 0
        %5763 = vmatprep.subr.bf16.mxu0 0
        %5764 = vmatpush1.bf16.msra.mxu0 0
        %5765 = vmatprep.subr.bf16.mxu0 0
        %5766 = vmatpush1.bf16.msra.mxu0 0
        %5767 = vmatprep.subr.bf16.mxu0 0
        %5768 = vmatpush1.bf16.msra.mxu0 0
        %5769 = vmatprep.subr.bf16.mxu0 0
        %5770 = vmatpush1.bf16.msra.mxu0 0
        %5771 = vmatprep.mubr.bf16.mxu0 0
        %5772 = vmatmul.mubr.bf16.gmra.mrb[0].mxu0 %v2337
        %v5773 = vpop.f32.mrb[0].mxu0
        %v5774 = vadd.f32 0.0, %v5773
        %v5775 = vpop.f32.mrb[0].mxu0
        %v5776 = vpop.f32.mrb[0].mxu0
        %v5777 = vpop.f32.mrb[0].mxu0
        %5778 = vdwg.mxu0
        %s5779 = scalar_lea.vmem %s15, 64
        %v5780 = vld [vmem:[%s5779] sm:$0xf]
        %v5781 = vld [vmem:[%s5779 + $0x4] sm:$0xf]
        %v5782 = vld [vmem:[%s5779 + $0x8] sm:$0xf]
        %v5783 = vld [vmem:[%s5779 + $0xc] sm:$0xf]
        %v5784 = vld [vmem:[%s5779 + $0x10] sm:$0xf]
        %v5785 = vld [vmem:[%s5779 + $0x14] sm:$0xf]
        %v5786 = vld [vmem:[%s5779 + $0x18] sm:$0xf]
        %v5787 = vld [vmem:[%s5779 + $0x1c] sm:$0xf]
        %v5788 = vld [vmem:[%s5779 + $0x20] sm:$0xf]
        %v5789 = vld [vmem:[%s5779 + $0x24] sm:$0xf]
        %v5790 = vld [vmem:[%s5779 + $0x28] sm:$0xf]
        %v5791 = vld [vmem:[%s5779 + $0x2c] sm:$0xf]
        %v5792 = vld [vmem:[%s5779 + $0x30] sm:$0xf]
        %v5793 = vld [vmem:[%s5779 + $0x34] sm:$0xf]
        %v5794 = vld [vmem:[%s5779 + $0x38] sm:$0xf]
        %v5795 = vld [vmem:[%s5779 + $0x3c] sm:$0xf]
        %v5800 = vunpack.c.l.b16 %v5780
        %v5801 = vunpack.c.l.b16 %v5781
        %v5802 = vunpack.c.l.b16 %v5782
        %v5803 = vunpack.c.l.b16 %v5783
        %v5804 = vpack.c.b16 %v5801, %v5800
        %v5805 = vpack.c.b16 %v5803, %v5802
        %5808 = vmatprep.subr.bf16.mxu0 0
        %5809 = vmatpush1.bf16.msra.mxu0 %v5804
        %5810 = vmatprep.subr.bf16.mxu0 0
        %5811 = vmatpush1.bf16.msra.mxu0 %v5805
        %5812 = vmatprep.subr.bf16.mxu0 0
        %5813 = vmatpush1.bf16.msra.mxu0 0
        %5814 = vmatprep.subr.bf16.mxu0 0
        %5815 = vmatpush1.bf16.msra.mxu0 0
        %5816 = vmatprep.subr.bf16.mxu0 0
        %5817 = vmatpush1.bf16.msra.mxu0 0
        %5818 = vmatprep.subr.bf16.mxu0 0
        %5819 = vmatpush1.bf16.msra.mxu0 0
        %5820 = vmatprep.subr.bf16.mxu0 0
        %5821 = vmatpush1.bf16.msra.mxu0 0
        %5822 = vmatprep.subr.bf16.mxu0 0
        %5823 = vmatpush1.bf16.msra.mxu0 0
        %5824 = vmatprep.subr.bf16.mxu0 0
        %5825 = vmatpush1.bf16.msra.mxu0 0
        %5826 = vmatprep.subr.bf16.mxu0 0
        %5827 = vmatpush1.bf16.msra.mxu0 0
        %5828 = vmatprep.subr.bf16.mxu0 0
        %5829 = vmatpush1.bf16.msra.mxu0 0
        %5830 = vmatprep.subr.bf16.mxu0 0
        %5831 = vmatpush1.bf16.msra.mxu0 0
        %5832 = vmatprep.subr.bf16.mxu0 0
        %5833 = vmatpush1.bf16.msra.mxu0 0
        %5834 = vmatprep.subr.bf16.mxu0 0
        %5835 = vmatpush1.bf16.msra.mxu0 0
        %5836 = vmatprep.subr.bf16.mxu0 0
        %5837 = vmatpush1.bf16.msra.mxu0 0
        %5838 = vmatprep.subr.bf16.mxu0 0
        %5839 = vmatpush1.bf16.msra.mxu0 0
        %5840 = vmatprep.mubr.bf16.mxu0 0
        %5841 = vmatmul.mubr.bf16.gmra.mrb[0].mxu0 %v2337
        %v5842 = vpop.f32.mrb[0].mxu0
        %v5843 = vadd.f32 0.0, %v5842
        %v5844 = vpop.f32.mrb[0].mxu0
        %v5845 = vpop.f32.mrb[0].mxu0
        %v5846 = vpop.f32.mrb[0].mxu0
        %5847 = vdwg.mxu0
        %v5852 = vunpack.c.l.b16 %v5784
        %v5853 = vunpack.c.l.b16 %v5785
        %v5854 = vunpack.c.l.b16 %v5786
        %v5855 = vunpack.c.l.b16 %v5787
        %v5856 = vpack.c.b16 %v5853, %v5852
        %v5857 = vpack.c.b16 %v5855, %v5854
        %5860 = vmatprep.subr.bf16.mxu0 0
        %5861 = vmatpush1.bf16.msra.mxu0 %v5856
        %5862 = vmatprep.subr.bf16.mxu0 0
        %5863 = vmatpush1.bf16.msra.mxu0 %v5857
        %5864 = vmatprep.subr.bf16.mxu0 0
        %5865 = vmatpush1.bf16.msra.mxu0 0
        %5866 = vmatprep.subr.bf16.mxu0 0
        %5867 = vmatpush1.bf16.msra.mxu0 0
        %5868 = vmatprep.subr.bf16.mxu0 0
        %5869 = vmatpush1.bf16.msra.mxu0 0
        %5870 = vmatprep.subr.bf16.mxu0 0
        %5871 = vmatpush1.bf16.msra.mxu0 0
        %5872 = vmatprep.subr.bf16.mxu0 0
        %5873 = vmatpush1.bf16.msra.mxu0 0
        %5874 = vmatprep.subr.bf16.mxu0 0
        %5875 = vmatpush1.bf16.msra.mxu0 0
        %5876 = vmatprep.subr.bf16.mxu0 0
        %5877 = vmatpush1.bf16.msra.mxu0 0
        %5878 = vmatprep.subr.bf16.mxu0 0
        %5879 = vmatpush1.bf16.msra.mxu0 0
        %5880 = vmatprep.subr.bf16.mxu0 0
        %5881 = vmatpush1.bf16.msra.mxu0 0
        %5882 = vmatprep.subr.bf16.mxu0 0
        %5883 = vmatpush1.bf16.msra.mxu0 0
        %5884 = vmatprep.subr.bf16.mxu0 0
        %5885 = vmatpush1.bf16.msra.mxu0 0
        %5886 = vmatprep.subr.bf16.mxu0 0
        %5887 = vmatpush1.bf16.msra.mxu0 0
        %5888 = vmatprep.subr.bf16.mxu0 0
        %5889 = vmatpush1.bf16.msra.mxu0 0
        %5890 = vmatprep.subr.bf16.mxu0 0
        %5891 = vmatpush1.bf16.msra.mxu0 0
        %5892 = vmatprep.mubr.bf16.mxu0 0
        %5893 = vmatmul.mubr.bf16.gmra.mrb[0].mxu0 %v2337
        %v5894 = vpop.f32.mrb[0].mxu0
        %v5895 = vadd.f32 0.0, %v5894
        %v5896 = vpop.f32.mrb[0].mxu0
        %v5897 = vpop.f32.mrb[0].mxu0
        %v5898 = vpop.f32.mrb[0].mxu0
        %5899 = vdwg.mxu0
        %v5904 = vunpack.c.l.b16 %v5788
        %v5905 = vunpack.c.l.b16 %v5789
        %v5906 = vunpack.c.l.b16 %v5790
        %v5907 = vunpack.c.l.b16 %v5791
        %v5908 = vpack.c.b16 %v5905, %v5904
        %v5909 = vpack.c.b16 %v5907, %v5906
        %5912 = vmatprep.subr.bf16.mxu0 0
        %5913 = vmatpush1.bf16.msra.mxu0 %v5908
        %5914 = vmatprep.subr.bf16.mxu0 0
        %5915 = vmatpush1.bf16.msra.mxu0 %v5909
        %5916 = vmatprep.subr.bf16.mxu0 0
        %5917 = vmatpush1.bf16.msra.mxu0 0
        %5918 = vmatprep.subr.bf16.mxu0 0
        %5919 = vmatpush1.bf16.msra.mxu0 0
        %5920 = vmatprep.subr.bf16.mxu0 0
        %5921 = vmatpush1.bf16.msra.mxu0 0
        %5922 = vmatprep.subr.bf16.mxu0 0
        %5923 = vmatpush1.bf16.msra.mxu0 0
        %5924 = vmatprep.subr.bf16.mxu0 0
        %5925 = vmatpush1.bf16.msra.mxu0 0
        %5926 = vmatprep.subr.bf16.mxu0 0
        %5927 = vmatpush1.bf16.msra.mxu0 0
        %5928 = vmatprep.subr.bf16.mxu0 0
        %5929 = vmatpush1.bf16.msra.mxu0 0
        %5930 = vmatprep.subr.bf16.mxu0 0
        %5931 = vmatpush1.bf16.msra.mxu0 0
        %5932 = vmatprep.subr.bf16.mxu0 0
        %5933 = vmatpush1.bf16.msra.mxu0 0
        %5934 = vmatprep.subr.bf16.mxu0 0
        %5935 = vmatpush1.bf16.msra.mxu0 0
        %5936 = vmatprep.subr.bf16.mxu0 0
        %5937 = vmatpush1.bf16.msra.mxu0 0
        %5938 = vmatprep.subr.bf16.mxu0 0
        %5939 = vmatpush1.bf16.msra.mxu0 0
        %5940 = vmatprep.subr.bf16.mxu0 0
        %5941 = vmatpush1.bf16.msra.mxu0 0
        %5942 = vmatprep.subr.bf16.mxu0 0
        %5943 = vmatpush1.bf16.msra.mxu0 0
        %5944 = vmatprep.mubr.bf16.mxu0 0
        %5945 = vmatmul.mubr.bf16.gmra.mrb[0].mxu0 %v2337
        %v5946 = vpop.f32.mrb[0].mxu0
        %v5947 = vadd.f32 0.0, %v5946
        %v5948 = vpop.f32.mrb[0].mxu0
        %v5949 = vpop.f32.mrb[0].mxu0
        %v5950 = vpop.f32.mrb[0].mxu0
        %5951 = vdwg.mxu0
        %v5956 = vunpack.c.l.b16 %v5792
        %v5957 = vunpack.c.l.b16 %v5793
        %v5958 = vunpack.c.l.b16 %v5794
        %v5959 = vunpack.c.l.b16 %v5795
        %v5960 = vpack.c.b16 %v5957, %v5956
        %v5961 = vpack.c.b16 %v5959, %v5958
        %5964 = vmatprep.subr.bf16.mxu0 0
        %5965 = vmatpush1.bf16.msra.mxu0 %v5960
        %5966 = vmatprep.subr.bf16.mxu0 0
        %5967 = vmatpush1.bf16.msra.mxu0 %v5961
        %5968 = vmatprep.subr.bf16.mxu0 0
        %5969 = vmatpush1.bf16.msra.mxu0 0
        %5970 = vmatprep.subr.bf16.mxu0 0
        %5971 = vmatpush1.bf16.msra.mxu0 0
        %5972 = vmatprep.subr.bf16.mxu0 0
        %5973 = vmatpush1.bf16.msra.mxu0 0
        %5974 = vmatprep.subr.bf16.mxu0 0
        %5975 = vmatpush1.bf16.msra.mxu0 0
        %5976 = vmatprep.subr.bf16.mxu0 0
        %5977 = vmatpush1.bf16.msra.mxu0 0
        %5978 = vmatprep.subr.bf16.mxu0 0
        %5979 = vmatpush1.bf16.msra.mxu0 0
        %5980 = vmatprep.subr.bf16.mxu0 0
        %5981 = vmatpush1.bf16.msra.mxu0 0
        %5982 = vmatprep.subr.bf16.mxu0 0
        %5983 = vmatpush1.bf16.msra.mxu0 0
        %5984 = vmatprep.subr.bf16.mxu0 0
        %5985 = vmatpush1.bf16.msra.mxu0 0
        %5986 = vmatprep.subr.bf16.mxu0 0
        %5987 = vmatpush1.bf16.msra.mxu0 0
        %5988 = vmatprep.subr.bf16.mxu0 0
        %5989 = vmatpush1.bf16.msra.mxu0 0
        %5990 = vmatprep.subr.bf16.mxu0 0
        %5991 = vmatpush1.bf16.msra.mxu0 0
        %5992 = vmatprep.subr.bf16.mxu0 0
        %5993 = vmatpush1.bf16.msra.mxu0 0
        %5994 = vmatprep.subr.bf16.mxu0 0
        %5995 = vmatpush1.bf16.msra.mxu0 0
        %5996 = vmatprep.mubr.bf16.mxu0 0
        %5997 = vmatmul.mubr.bf16.gmra.mrb[0].mxu0 %v2337
        %v5998 = vpop.f32.mrb[0].mxu0
        %v5999 = vadd.f32 0.0, %v5998
        %v6000 = vpop.f32.mrb[0].mxu0
        %v6001 = vpop.f32.mrb[0].mxu0
        %v6002 = vpop.f32.mrb[0].mxu0
        %6003 = vdwg.mxu0
        %s6004 = scalar_lea.vmem %s16, 32
        %v6005 = vld [vmem:[%s6004] sm:$0xf]
        %v6006 = vld [vmem:[%s6004 + $0x4] sm:$0xf]
        %v6007 = vld [vmem:[%s6004 + $0x8] sm:$0xf]
        %v6008 = vld [vmem:[%s6004 + $0xc] sm:$0xf]
        %v6009 = vld [vmem:[%s6004 + $0x10] sm:$0xf]
        %v6010 = vld [vmem:[%s6004 + $0x14] sm:$0xf]
        %v6011 = vld [vmem:[%s6004 + $0x18] sm:$0xf]
        %v6012 = vld [vmem:[%s6004 + $0x1c] sm:$0xf]
        %v6013 = vpack.c.bf16 %v5393, %v5393
        %v6014 = vpack.c.bf16 %v5445, %v5445
        %v6015 = vpack.c.bf16 %v5497, %v5497
        %v6016 = vpack.c.bf16 %v5549, %v5549
        %v6017 = vpack.c.bf16 %v5618, %v5618
        %v6018 = vpack.c.bf16 %v5670, %v5670
        %v6019 = vpack.c.bf16 %v5722, %v5722
        %v6020 = vpack.c.bf16 %v5774, %v5774
        %v6022 = vsel %vm1676, %v6013, 0
        %v6025 = vsel %vm1676, %v6017, 0
        %6027 = vmatprep.subr.bf16.mxu0 0
        %6028 = vmatpush1.bf16.xpose.msra.mxu0 %v6025
        %6029 = vmatprep.subr.bf16.mxu0 0
        %6030 = vmatpush1.bf16.xpose.msra.mxu0 0
        %6031 = vmatprep.subr.bf16.mxu0 0
        %6032 = vmatpush1.bf16.xpose.msra.mxu0 0
        %6033 = vmatprep.subr.bf16.mxu0 0
        %6034 = vmatpush1.bf16.xpose.msra.mxu0 0
        %6035 = vmatprep.subr.bf16.mxu0 0
        %6036 = vmatpush1.bf16.xpose.msra.mxu0 0
        %6037 = vmatprep.subr.bf16.mxu0 0
        %6038 = vmatpush1.bf16.xpose.msra.mxu0 0
        %6039 = vmatprep.subr.bf16.mxu0 0
        %6040 = vmatpush1.bf16.xpose.msra.mxu0 0
        %6041 = vmatprep.subr.bf16.mxu0 0
        %6042 = vmatpush1.bf16.xpose.msra.mxu0 0
        %6043 = vmatprep.subr.bf16.mxu0 0
        %6044 = vmatpush1.bf16.xpose.msra.mxu0 0
        %6045 = vmatprep.subr.bf16.mxu0 0
        %6046 = vmatpush1.bf16.xpose.msra.mxu0 0
        %6047 = vmatprep.subr.bf16.mxu0 0
        %6048 = vmatpush1.bf16.xpose.msra.mxu0 0
        %6049 = vmatprep.subr.bf16.mxu0 0
        %6050 = vmatpush1.bf16.xpose.msra.mxu0 0
        %6051 = vmatprep.subr.bf16.mxu0 0
        %6052 = vmatpush1.bf16.xpose.msra.mxu0 0
        %6053 = vmatprep.subr.bf16.mxu0 0
        %6054 = vmatpush1.bf16.xpose.msra.mxu0 0
        %6055 = vmatprep.subr.bf16.mxu0 0
        %6056 = vmatpush1.bf16.xpose.msra.mxu0 0
        %6057 = vmatprep.subr.bf16.mxu0 0
        %6058 = vmatpush1.bf16.xpose.msra.mxu0 0
        %6059 = vmatprep.mubr.bf16.mxu0 0
        %6060 = vmatmul.mubr.bf16.gmra.mrb[0].mxu0 %v6022
        %v6061 = vpop.f32.mrb[0].mxu0
        %v6062 = vadd.f32 0.0, %v6061
        %v6063 = vpop.f32.mrb[0].mxu0
        %v6064 = vpop.f32.mrb[0].mxu0
        %v6065 = vpop.f32.mrb[0].mxu0
        %6066 = vdwg.mxu0
        %v6068 = vsel %vm1676, %v6014, 0
        %v6071 = vsel %vm1676, %v6018, 0
        %6073 = vmatprep.subr.bf16.mxu0 0
        %6074 = vmatpush1.bf16.xpose.msra.mxu0 %v6071
        %6075 = vmatprep.subr.bf16.mxu0 0
        %6076 = vmatpush1.bf16.xpose.msra.mxu0 0
        %6077 = vmatprep.subr.bf16.mxu0 0
        %6078 = vmatpush1.bf16.xpose.msra.mxu0 0
        %6079 = vmatprep.subr.bf16.mxu0 0
        %6080 = vmatpush1.bf16.xpose.msra.mxu0 0
        %6081 = vmatprep.subr.bf16.mxu0 0
        %6082 = vmatpush1.bf16.xpose.msra.mxu0 0
        %6083 = vmatprep.subr.bf16.mxu0 0
        %6084 = vmatpush1.bf16.xpose.msra.mxu0 0
        %6085 = vmatprep.subr.bf16.mxu0 0
        %6086 = vmatpush1.bf16.xpose.msra.mxu0 0
        %6087 = vmatprep.subr.bf16.mxu0 0
        %6088 = vmatpush1.bf16.xpose.msra.mxu0 0
        %6089 = vmatprep.subr.bf16.mxu0 0
        %6090 = vmatpush1.bf16.xpose.msra.mxu0 0
        %6091 = vmatprep.subr.bf16.mxu0 0
        %6092 = vmatpush1.bf16.xpose.msra.mxu0 0
        %6093 = vmatprep.subr.bf16.mxu0 0
        %6094 = vmatpush1.bf16.xpose.msra.mxu0 0
        %6095 = vmatprep.subr.bf16.mxu0 0
        %6096 = vmatpush1.bf16.xpose.msra.mxu0 0
        %6097 = vmatprep.subr.bf16.mxu0 0
        %6098 = vmatpush1.bf16.xpose.msra.mxu0 0
        %6099 = vmatprep.subr.bf16.mxu0 0
        %6100 = vmatpush1.bf16.xpose.msra.mxu0 0
        %6101 = vmatprep.subr.bf16.mxu0 0
        %6102 = vmatpush1.bf16.xpose.msra.mxu0 0
        %6103 = vmatprep.subr.bf16.mxu0 0
        %6104 = vmatpush1.bf16.xpose.msra.mxu0 0
        %6105 = vmatprep.mubr.bf16.mxu0 0
        %6106 = vmatmul.mubr.bf16.gmra.mrb[0].mxu0 %v6068
        %v6107 = vpop.f32.mrb[0].mxu0
        %v6108 = vadd.f32 0.0, %v6107
        %v6109 = vpop.f32.mrb[0].mxu0
        %v6110 = vpop.f32.mrb[0].mxu0
        %v6111 = vpop.f32.mrb[0].mxu0
        %6112 = vdwg.mxu0
        %v6114 = vsel %vm1676, %v6015, 0
        %v6117 = vsel %vm1676, %v6019, 0
        %6119 = vmatprep.subr.bf16.mxu0 0
        %6120 = vmatpush1.bf16.xpose.msra.mxu0 %v6117
        %6121 = vmatprep.subr.bf16.mxu0 0
        %6122 = vmatpush1.bf16.xpose.msra.mxu0 0
        %6123 = vmatprep.subr.bf16.mxu0 0
        %6124 = vmatpush1.bf16.xpose.msra.mxu0 0
        %6125 = vmatprep.subr.bf16.mxu0 0
        %6126 = vmatpush1.bf16.xpose.msra.mxu0 0
        %6127 = vmatprep.subr.bf16.mxu0 0
        %6128 = vmatpush1.bf16.xpose.msra.mxu0 0
        %6129 = vmatprep.subr.bf16.mxu0 0
        %6130 = vmatpush1.bf16.xpose.msra.mxu0 0
        %6131 = vmatprep.subr.bf16.mxu0 0
        %6132 = vmatpush1.bf16.xpose.msra.mxu0 0
        %6133 = vmatprep.subr.bf16.mxu0 0
        %6134 = vmatpush1.bf16.xpose.msra.mxu0 0
        %6135 = vmatprep.subr.bf16.mxu0 0
        %6136 = vmatpush1.bf16.xpose.msra.mxu0 0
        %6137 = vmatprep.subr.bf16.mxu0 0
        %6138 = vmatpush1.bf16.xpose.msra.mxu0 0
        %6139 = vmatprep.subr.bf16.mxu0 0
        %6140 = vmatpush1.bf16.xpose.msra.mxu0 0
        %6141 = vmatprep.subr.bf16.mxu0 0
        %6142 = vmatpush1.bf16.xpose.msra.mxu0 0
        %6143 = vmatprep.subr.bf16.mxu0 0
        %6144 = vmatpush1.bf16.xpose.msra.mxu0 0
        %6145 = vmatprep.subr.bf16.mxu0 0
        %6146 = vmatpush1.bf16.xpose.msra.mxu0 0
        %6147 = vmatprep.subr.bf16.mxu0 0
        %6148 = vmatpush1.bf16.xpose.msra.mxu0 0
        %6149 = vmatprep.subr.bf16.mxu0 0
        %6150 = vmatpush1.bf16.xpose.msra.mxu0 0
        %6151 = vmatprep.mubr.bf16.mxu0 0
        %6152 = vmatmul.mubr.bf16.gmra.mrb[0].mxu0 %v6114
        %v6153 = vpop.f32.mrb[0].mxu0
        %v6154 = vadd.f32 0.0, %v6153
        %v6155 = vpop.f32.mrb[0].mxu0
        %v6156 = vpop.f32.mrb[0].mxu0
        %v6157 = vpop.f32.mrb[0].mxu0
        %6158 = vdwg.mxu0
        %v6160 = vsel %vm1676, %v6016, 0
        %v6163 = vsel %vm1676, %v6020, 0
        %6165 = vmatprep.subr.bf16.mxu0 0
        %6166 = vmatpush1.bf16.xpose.msra.mxu0 %v6163
        %6167 = vmatprep.subr.bf16.mxu0 0
        %6168 = vmatpush1.bf16.xpose.msra.mxu0 0
        %6169 = vmatprep.subr.bf16.mxu0 0
        %6170 = vmatpush1.bf16.xpose.msra.mxu0 0
        %6171 = vmatprep.subr.bf16.mxu0 0
        %6172 = vmatpush1.bf16.xpose.msra.mxu0 0
        %6173 = vmatprep.subr.bf16.mxu0 0
        %6174 = vmatpush1.bf16.xpose.msra.mxu0 0
        %6175 = vmatprep.subr.bf16.mxu0 0
        %6176 = vmatpush1.bf16.xpose.msra.mxu0 0
        %6177 = vmatprep.subr.bf16.mxu0 0
        %6178 = vmatpush1.bf16.xpose.msra.mxu0 0
        %6179 = vmatprep.subr.bf16.mxu0 0
        %6180 = vmatpush1.bf16.xpose.msra.mxu0 0
        %6181 = vmatprep.subr.bf16.mxu0 0
        %6182 = vmatpush1.bf16.xpose.msra.mxu0 0
        %6183 = vmatprep.subr.bf16.mxu0 0
        %6184 = vmatpush1.bf16.xpose.msra.mxu0 0
        %6185 = vmatprep.subr.bf16.mxu0 0
        %6186 = vmatpush1.bf16.xpose.msra.mxu0 0
        %6187 = vmatprep.subr.bf16.mxu0 0
        %6188 = vmatpush1.bf16.xpose.msra.mxu0 0
        %6189 = vmatprep.subr.bf16.mxu0 0
        %6190 = vmatpush1.bf16.xpose.msra.mxu0 0
        %6191 = vmatprep.subr.bf16.mxu0 0
        %6192 = vmatpush1.bf16.xpose.msra.mxu0 0
        %6193 = vmatprep.subr.bf16.mxu0 0
        %6194 = vmatpush1.bf16.xpose.msra.mxu0 0
        %6195 = vmatprep.subr.bf16.mxu0 0
        %6196 = vmatpush1.bf16.xpose.msra.mxu0 0
        %6197 = vmatprep.mubr.bf16.mxu0 0
        %6198 = vmatmul.mubr.bf16.gmra.mrb[0].mxu0 %v6160
        %v6199 = vpop.f32.mrb[0].mxu0
        %v6200 = vadd.f32 0.0, %v6199
        %v6201 = vpop.f32.mrb[0].mxu0
        %v6202 = vpop.f32.mrb[0].mxu0
        %v6203 = vpop.f32.mrb[0].mxu0
        %6204 = vdwg.mxu0
        %v6205 = vsel %vm1861, %v6062, -inf
        %6206 = vmax.xlane.f32.xlu0 %v6205
        %v6207 = vpop.xlane.xlu0 %6206
        %v6208 = vsel %vm1861, %v6108, -inf
        %6209 = vmax.xlane.f32.xlu0 %v6208
        %v6210 = vpop.xlane.xlu0 %6209
        %v6211 = vsel %vm1861, %v6154, -inf
        %6212 = vmax.xlane.f32.xlu0 %v6211
        %v6213 = vpop.xlane.xlu0 %6212
        %v6214 = vsel %vm1861, %v6200, -inf
        %6215 = vmax.xlane.f32.xlu0 %v6214
        %v6216 = vpop.xlane.xlu0 %6215
        %v6217 = vsub.f32 %v6062, %v6207
        %v6218 = vsub.f32 %v6108, %v6210
        %v6219 = vsub.f32 %v6154, %v6213
        %v6220 = vsub.f32 %v6200, %v6216
        %v6221 = vmul.f32 %v6217, 1.442695
        %v6222 = vpow.pop %v6221
        %v6223 = vmul.f32 %v6218, 1.442695
        %v6224 = vpow.pop %v6223
        %v6225 = vmul.f32 %v6219, 1.442695
        %v6226 = vpow.pop %v6225
        %v6227 = vmul.f32 %v6220, 1.442695
        %v6228 = vpow.pop %v6227
        %v6229 = vsel %vm1861, %v6222, 0.0
        %6230 = vadd.xlane.f32.xlu0 %v6229
        %v6231 = vpop.xlane.xlu0 %6230
        %v6232 = vsel %vm1861, %v6224, 0.0
        %6233 = vadd.xlane.f32.xlu0 %v6232
        %v6234 = vpop.xlane.xlu0 %6233
        %v6235 = vsel %vm1861, %v6226, 0.0
        %6236 = vadd.xlane.f32.xlu0 %v6235
        %v6237 = vpop.xlane.xlu0 %6236
        %v6238 = vsel %vm1861, %v6228, 0.0
        %6239 = vadd.xlane.f32.xlu0 %v6238
        %v6240 = vpop.xlane.xlu0 %6239
        %v6241 = vrcp.pop %v6231
        %v6242 = vrcp.pop %v6234
        %v6243 = vrcp.pop %v6237
        %v6244 = vrcp.pop %v6240
        %v6245 = vmul.f32 %v6222, %v6241
        %v6246 = vmul.f32 %v6224, %v6242
        %v6247 = vmul.f32 %v6226, %v6243
        %v6248 = vmul.f32 %v6228, %v6244
        %v6249 = vpack.c.bf16 %v6245, %v6245
        %v6250 = vpack.c.bf16 %v6246, %v6246
        %v6251 = vpack.c.bf16 %v6247, %v6247
        %v6252 = vpack.c.bf16 %v6248, %v6248
        %v6253 = vpack.c.bf16 %v5843, %v5843
        %v6254 = vpack.c.bf16 %v5895, %v5895
        %v6255 = vpack.c.bf16 %v5947, %v5947
        %v6256 = vpack.c.bf16 %v5999, %v5999
        %v6258 = vsel %vm1861, %v6249, 0
        %v6261 = vsel %vm1917, %v6253, 0
        %6263 = vmatprep.subr.bf16.mxu0 0
        %6264 = vmatpush1.bf16.msra.mxu0 %v6261
        %6265 = vmatprep.subr.bf16.mxu0 0
        %6266 = vmatpush1.bf16.msra.mxu0 0
        %6267 = vmatprep.subr.bf16.mxu0 0
        %6268 = vmatpush1.bf16.msra.mxu0 0
        %6269 = vmatprep.subr.bf16.mxu0 0
        %6270 = vmatpush1.bf16.msra.mxu0 0
        %6271 = vmatprep.subr.bf16.mxu0 0
        %6272 = vmatpush1.bf16.msra.mxu0 0
        %6273 = vmatprep.subr.bf16.mxu0 0
        %6274 = vmatpush1.bf16.msra.mxu0 0
        %6275 = vmatprep.subr.bf16.mxu0 0
        %6276 = vmatpush1.bf16.msra.mxu0 0
        %6277 = vmatprep.subr.bf16.mxu0 0
        %6278 = vmatpush1.bf16.msra.mxu0 0
        %6279 = vmatprep.subr.bf16.mxu0 0
        %6280 = vmatpush1.bf16.msra.mxu0 0
        %6281 = vmatprep.subr.bf16.mxu0 0
        %6282 = vmatpush1.bf16.msra.mxu0 0
        %6283 = vmatprep.subr.bf16.mxu0 0
        %6284 = vmatpush1.bf16.msra.mxu0 0
        %6285 = vmatprep.subr.bf16.mxu0 0
        %6286 = vmatpush1.bf16.msra.mxu0 0
        %6287 = vmatprep.subr.bf16.mxu0 0
        %6288 = vmatpush1.bf16.msra.mxu0 0
        %6289 = vmatprep.subr.bf16.mxu0 0
        %6290 = vmatpush1.bf16.msra.mxu0 0
        %6291 = vmatprep.subr.bf16.mxu0 0
        %6292 = vmatpush1.bf16.msra.mxu0 0
        %6293 = vmatprep.subr.bf16.mxu0 0
        %6294 = vmatpush1.bf16.msra.mxu0 0
        %6295 = vmatprep.mubr.bf16.mxu0 0
        %6296 = vmatmul.mubr.bf16.gmra.mrb[0].mxu0 %v6258
        %v6297 = vpop.f32.mrb[0].mxu0
        %v6298 = vadd.f32 0.0, %v6297
        %v6299 = vpop.f32.mrb[0].mxu0
        %v6300 = vpop.f32.mrb[0].mxu0
        %v6301 = vpop.f32.mrb[0].mxu0
        %6302 = vdwg.mxu0
        %v6304 = vsel %vm1861, %v6250, 0
        %v6307 = vsel %vm1917, %v6254, 0
        %6309 = vmatprep.subr.bf16.mxu0 0
        %6310 = vmatpush1.bf16.msra.mxu0 %v6307
        %6311 = vmatprep.subr.bf16.mxu0 0
        %6312 = vmatpush1.bf16.msra.mxu0 0
        %6313 = vmatprep.subr.bf16.mxu0 0
        %6314 = vmatpush1.bf16.msra.mxu0 0
        %6315 = vmatprep.subr.bf16.mxu0 0
        %6316 = vmatpush1.bf16.msra.mxu0 0
        %6317 = vmatprep.subr.bf16.mxu0 0
        %6318 = vmatpush1.bf16.msra.mxu0 0
        %6319 = vmatprep.subr.bf16.mxu0 0
        %6320 = vmatpush1.bf16.msra.mxu0 0
        %6321 = vmatprep.subr.bf16.mxu0 0
        %6322 = vmatpush1.bf16.msra.mxu0 0
        %6323 = vmatprep.subr.bf16.mxu0 0
        %6324 = vmatpush1.bf16.msra.mxu0 0
        %6325 = vmatprep.subr.bf16.mxu0 0
        %6326 = vmatpush1.bf16.msra.mxu0 0
        %6327 = vmatprep.subr.bf16.mxu0 0
        %6328 = vmatpush1.bf16.msra.mxu0 0
        %6329 = vmatprep.subr.bf16.mxu0 0
        %6330 = vmatpush1.bf16.msra.mxu0 0
        %6331 = vmatprep.subr.bf16.mxu0 0
        %6332 = vmatpush1.bf16.msra.mxu0 0
        %6333 = vmatprep.subr.bf16.mxu0 0
        %6334 = vmatpush1.bf16.msra.mxu0 0
        %6335 = vmatprep.subr.bf16.mxu0 0
        %6336 = vmatpush1.bf16.msra.mxu0 0
        %6337 = vmatprep.subr.bf16.mxu0 0
        %6338 = vmatpush1.bf16.msra.mxu0 0
        %6339 = vmatprep.subr.bf16.mxu0 0
        %6340 = vmatpush1.bf16.msra.mxu0 0
        %6341 = vmatprep.mubr.bf16.mxu0 0
        %6342 = vmatmul.mubr.bf16.gmra.mrb[0].mxu0 %v6304
        %v6343 = vpop.f32.mrb[0].mxu0
        %v6344 = vadd.f32 0.0, %v6343
        %v6345 = vpop.f32.mrb[0].mxu0
        %v6346 = vpop.f32.mrb[0].mxu0
        %v6347 = vpop.f32.mrb[0].mxu0
        %6348 = vdwg.mxu0
        %v6350 = vsel %vm1861, %v6251, 0
        %v6353 = vsel %vm1917, %v6255, 0
        %6355 = vmatprep.subr.bf16.mxu0 0
        %6356 = vmatpush1.bf16.msra.mxu0 %v6353
        %6357 = vmatprep.subr.bf16.mxu0 0
        %6358 = vmatpush1.bf16.msra.mxu0 0
        %6359 = vmatprep.subr.bf16.mxu0 0
        %6360 = vmatpush1.bf16.msra.mxu0 0
        %6361 = vmatprep.subr.bf16.mxu0 0
        %6362 = vmatpush1.bf16.msra.mxu0 0
        %6363 = vmatprep.subr.bf16.mxu0 0
        %6364 = vmatpush1.bf16.msra.mxu0 0
        %6365 = vmatprep.subr.bf16.mxu0 0
        %6366 = vmatpush1.bf16.msra.mxu0 0
        %6367 = vmatprep.subr.bf16.mxu0 0
        %6368 = vmatpush1.bf16.msra.mxu0 0
        %6369 = vmatprep.subr.bf16.mxu0 0
        %6370 = vmatpush1.bf16.msra.mxu0 0
        %6371 = vmatprep.subr.bf16.mxu0 0
        %6372 = vmatpush1.bf16.msra.mxu0 0
        %6373 = vmatprep.subr.bf16.mxu0 0
        %6374 = vmatpush1.bf16.msra.mxu0 0
        %6375 = vmatprep.subr.bf16.mxu0 0
        %6376 = vmatpush1.bf16.msra.mxu0 0
        %6377 = vmatprep.subr.bf16.mxu0 0
        %6378 = vmatpush1.bf16.msra.mxu0 0
        %6379 = vmatprep.subr.bf16.mxu0 0
        %6380 = vmatpush1.bf16.msra.mxu0 0
        %6381 = vmatprep.subr.bf16.mxu0 0
        %6382 = vmatpush1.bf16.msra.mxu0 0
        %6383 = vmatprep.subr.bf16.mxu0 0
        %6384 = vmatpush1.bf16.msra.mxu0 0
        %6385 = vmatprep.subr.bf16.mxu0 0
        %6386 = vmatpush1.bf16.msra.mxu0 0
        %6387 = vmatprep.mubr.bf16.mxu0 0
        %6388 = vmatmul.mubr.bf16.gmra.mrb[0].mxu0 %v6350
        %v6389 = vpop.f32.mrb[0].mxu0
        %v6390 = vadd.f32 0.0, %v6389
        %v6391 = vpop.f32.mrb[0].mxu0
        %v6392 = vpop.f32.mrb[0].mxu0
        %v6393 = vpop.f32.mrb[0].mxu0
        %6394 = vdwg.mxu0
        %v6396 = vsel %vm1861, %v6252, 0
        %v6399 = vsel %vm1917, %v6256, 0
        %6401 = vmatprep.subr.bf16.mxu0 0
        %6402 = vmatpush1.bf16.msra.mxu0 %v6399
        %6403 = vmatprep.subr.bf16.mxu0 0
        %6404 = vmatpush1.bf16.msra.mxu0 0
        %6405 = vmatprep.subr.bf16.mxu0 0
        %6406 = vmatpush1.bf16.msra.mxu0 0
        %6407 = vmatprep.subr.bf16.mxu0 0
        %6408 = vmatpush1.bf16.msra.mxu0 0
        %6409 = vmatprep.subr.bf16.mxu0 0
        %6410 = vmatpush1.bf16.msra.mxu0 0
        %6411 = vmatprep.subr.bf16.mxu0 0
        %6412 = vmatpush1.bf16.msra.mxu0 0
        %6413 = vmatprep.subr.bf16.mxu0 0
        %6414 = vmatpush1.bf16.msra.mxu0 0
        %6415 = vmatprep.subr.bf16.mxu0 0
        %6416 = vmatpush1.bf16.msra.mxu0 0
        %6417 = vmatprep.subr.bf16.mxu0 0
        %6418 = vmatpush1.bf16.msra.mxu0 0
        %6419 = vmatprep.subr.bf16.mxu0 0
        %6420 = vmatpush1.bf16.msra.mxu0 0
        %6421 = vmatprep.subr.bf16.mxu0 0
        %6422 = vmatpush1.bf16.msra.mxu0 0
        %6423 = vmatprep.subr.bf16.mxu0 0
        %6424 = vmatpush1.bf16.msra.mxu0 0
        %6425 = vmatprep.subr.bf16.mxu0 0
        %6426 = vmatpush1.bf16.msra.mxu0 0
        %6427 = vmatprep.subr.bf16.mxu0 0
        %6428 = vmatpush1.bf16.msra.mxu0 0
        %6429 = vmatprep.subr.bf16.mxu0 0
        %6430 = vmatpush1.bf16.msra.mxu0 0
        %6431 = vmatprep.subr.bf16.mxu0 0
        %6432 = vmatpush1.bf16.msra.mxu0 0
        %6433 = vmatprep.mubr.bf16.mxu0 0
        %6434 = vmatmul.mubr.bf16.gmra.mrb[0].mxu0 %v6396
        %v6435 = vpop.f32.mrb[0].mxu0
        %v6436 = vadd.f32 0.0, %v6435
        %v6437 = vpop.f32.mrb[0].mxu0
        %v6438 = vpop.f32.mrb[0].mxu0
        %v6439 = vpop.f32.mrb[0].mxu0
        %6440 = vdwg.mxu0
        %v6441 = vpack.c.bf16 %v6298, %v6298
        %v6442 = vpack.c.bf16 %v6344, %v6344
        %v6443 = vpack.c.bf16 %v6390, %v6390
        %v6444 = vpack.c.bf16 %v6436, %v6436
        %v6447 = vunpack.c.l.b16 %v6005
        %v6448 = vunpack.c.l.b16 %v6006
        %v6449 = vpack.c.b16 %v6448, %v6447
        %v6452 = vsel %vm1676, %v6441, 0
        %6454 = vmatprep.subr.bf16.mxu0 0
        %6455 = vmatpush1.bf16.msra.mxu0 %v6449
        %6456 = vmatprep.subr.bf16.mxu0 0
        %6457 = vmatpush1.bf16.msra.mxu0 0
        %6458 = vmatprep.subr.bf16.mxu0 0
        %6459 = vmatpush1.bf16.msra.mxu0 0
        %6460 = vmatprep.subr.bf16.mxu0 0
        %6461 = vmatpush1.bf16.msra.mxu0 0
        %6462 = vmatprep.subr.bf16.mxu0 0
        %6463 = vmatpush1.bf16.msra.mxu0 0
        %6464 = vmatprep.subr.bf16.mxu0 0
        %6465 = vmatpush1.bf16.msra.mxu0 0
        %6466 = vmatprep.subr.bf16.mxu0 0
        %6467 = vmatpush1.bf16.msra.mxu0 0
        %6468 = vmatprep.subr.bf16.mxu0 0
        %6469 = vmatpush1.bf16.msra.mxu0 0
        %6470 = vmatprep.subr.bf16.mxu0 0
        %6471 = vmatpush1.bf16.msra.mxu0 0
        %6472 = vmatprep.subr.bf16.mxu0 0
        %6473 = vmatpush1.bf16.msra.mxu0 0
        %6474 = vmatprep.subr.bf16.mxu0 0
        %6475 = vmatpush1.bf16.msra.mxu0 0
        %6476 = vmatprep.subr.bf16.mxu0 0
        %6477 = vmatpush1.bf16.msra.mxu0 0
        %6478 = vmatprep.subr.bf16.mxu0 0
        %6479 = vmatpush1.bf16.msra.mxu0 0
        %6480 = vmatprep.subr.bf16.mxu0 0
        %6481 = vmatpush1.bf16.msra.mxu0 0
        %6482 = vmatprep.subr.bf16.mxu0 0
        %6483 = vmatpush1.bf16.msra.mxu0 0
        %6484 = vmatprep.subr.bf16.mxu0 0
        %6485 = vmatpush1.bf16.msra.mxu0 0
        %6486 = vmatprep.mubr.bf16.mxu0 0
        %6487 = vmatmul.mubr.bf16.gmra.mrb[0].mxu0 %v6452
        %v6488 = vpop.f32.mrb[0].mxu0
        %v6489 = vadd.f32 0.0, %v6488
        %v6490 = vpop.f32.mrb[0].mxu0
        %v6491 = vpop.f32.mrb[0].mxu0
        %v6492 = vpop.f32.mrb[0].mxu0
        %6493 = vdwg.mxu0
        %v6496 = vunpack.c.l.b16 %v6007
        %v6497 = vunpack.c.l.b16 %v6008
        %v6498 = vpack.c.b16 %v6497, %v6496
        %v6501 = vsel %vm1676, %v6442, 0
        %6503 = vmatprep.subr.bf16.mxu0 0
        %6504 = vmatpush1.bf16.msra.mxu0 %v6498
        %6505 = vmatprep.subr.bf16.mxu0 0
        %6506 = vmatpush1.bf16.msra.mxu0 0
        %6507 = vmatprep.subr.bf16.mxu0 0
        %6508 = vmatpush1.bf16.msra.mxu0 0
        %6509 = vmatprep.subr.bf16.mxu0 0
        %6510 = vmatpush1.bf16.msra.mxu0 0
        %6511 = vmatprep.subr.bf16.mxu0 0
        %6512 = vmatpush1.bf16.msra.mxu0 0
        %6513 = vmatprep.subr.bf16.mxu0 0
        %6514 = vmatpush1.bf16.msra.mxu0 0
        %6515 = vmatprep.subr.bf16.mxu0 0
        %6516 = vmatpush1.bf16.msra.mxu0 0
        %6517 = vmatprep.subr.bf16.mxu0 0
        %6518 = vmatpush1.bf16.msra.mxu0 0
        %6519 = vmatprep.subr.bf16.mxu0 0
        %6520 = vmatpush1.bf16.msra.mxu0 0
        %6521 = vmatprep.subr.bf16.mxu0 0
        %6522 = vmatpush1.bf16.msra.mxu0 0
        %6523 = vmatprep.subr.bf16.mxu0 0
        %6524 = vmatpush1.bf16.msra.mxu0 0
        %6525 = vmatprep.subr.bf16.mxu0 0
        %6526 = vmatpush1.bf16.msra.mxu0 0
        %6527 = vmatprep.subr.bf16.mxu0 0
        %6528 = vmatpush1.bf16.msra.mxu0 0
        %6529 = vmatprep.subr.bf16.mxu0 0
        %6530 = vmatpush1.bf16.msra.mxu0 0
        %6531 = vmatprep.subr.bf16.mxu0 0
        %6532 = vmatpush1.bf16.msra.mxu0 0
        %6533 = vmatprep.subr.bf16.mxu0 0
        %6534 = vmatpush1.bf16.msra.mxu0 0
        %6535 = vmatprep.mubr.bf16.mxu0 0
        %6536 = vmatmul.mubr.bf16.gmra.mrb[0].mxu0 %v6501
        %v6537 = vpop.f32.mrb[0].mxu0
        %v6538 = vadd.f32 0.0, %v6537
        %v6539 = vpop.f32.mrb[0].mxu0
        %v6540 = vpop.f32.mrb[0].mxu0
        %v6541 = vpop.f32.mrb[0].mxu0
        %6542 = vdwg.mxu0
        %v6545 = vunpack.c.l.b16 %v6009
        %v6546 = vunpack.c.l.b16 %v6010
        %v6547 = vpack.c.b16 %v6546, %v6545
        %v6550 = vsel %vm1676, %v6443, 0
        %6552 = vmatprep.subr.bf16.mxu0 0
        %6553 = vmatpush1.bf16.msra.mxu0 %v6547
        %6554 = vmatprep.subr.bf16.mxu0 0
        %6555 = vmatpush1.bf16.msra.mxu0 0
        %6556 = vmatprep.subr.bf16.mxu0 0
        %6557 = vmatpush1.bf16.msra.mxu0 0
        %6558 = vmatprep.subr.bf16.mxu0 0
        %6559 = vmatpush1.bf16.msra.mxu0 0
        %6560 = vmatprep.subr.bf16.mxu0 0
        %6561 = vmatpush1.bf16.msra.mxu0 0
        %6562 = vmatprep.subr.bf16.mxu0 0
        %6563 = vmatpush1.bf16.msra.mxu0 0
        %6564 = vmatprep.subr.bf16.mxu0 0
        %6565 = vmatpush1.bf16.msra.mxu0 0
        %6566 = vmatprep.subr.bf16.mxu0 0
        %6567 = vmatpush1.bf16.msra.mxu0 0
        %6568 = vmatprep.subr.bf16.mxu0 0
        %6569 = vmatpush1.bf16.msra.mxu0 0
        %6570 = vmatprep.subr.bf16.mxu0 0
        %6571 = vmatpush1.bf16.msra.mxu0 0
        %6572 = vmatprep.subr.bf16.mxu0 0
        %6573 = vmatpush1.bf16.msra.mxu0 0
        %6574 = vmatprep.subr.bf16.mxu0 0
        %6575 = vmatpush1.bf16.msra.mxu0 0
        %6576 = vmatprep.subr.bf16.mxu0 0
        %6577 = vmatpush1.bf16.msra.mxu0 0
        %6578 = vmatprep.subr.bf16.mxu0 0
        %6579 = vmatpush1.bf16.msra.mxu0 0
        %6580 = vmatprep.subr.bf16.mxu0 0
        %6581 = vmatpush1.bf16.msra.mxu0 0
        %6582 = vmatprep.subr.bf16.mxu0 0
        %6583 = vmatpush1.bf16.msra.mxu0 0
        %6584 = vmatprep.mubr.bf16.mxu0 0
        %6585 = vmatmul.mubr.bf16.gmra.mrb[0].mxu0 %v6550
        %v6586 = vpop.f32.mrb[0].mxu0
        %v6587 = vadd.f32 0.0, %v6586
        %v6588 = vpop.f32.mrb[0].mxu0
        %v6589 = vpop.f32.mrb[0].mxu0
        %v6590 = vpop.f32.mrb[0].mxu0
        %6591 = vdwg.mxu0
        %v6594 = vunpack.c.l.b16 %v6011
        %v6595 = vunpack.c.l.b16 %v6012
        %v6596 = vpack.c.b16 %v6595, %v6594
        %v6599 = vsel %vm1676, %v6444, 0
        %6601 = vmatprep.subr.bf16.mxu0 0
        %6602 = vmatpush1.bf16.msra.mxu0 %v6596
        %6603 = vmatprep.subr.bf16.mxu0 0
        %6604 = vmatpush1.bf16.msra.mxu0 0
        %6605 = vmatprep.subr.bf16.mxu0 0
        %6606 = vmatpush1.bf16.msra.mxu0 0
        %6607 = vmatprep.subr.bf16.mxu0 0
        %6608 = vmatpush1.bf16.msra.mxu0 0
        %6609 = vmatprep.subr.bf16.mxu0 0
        %6610 = vmatpush1.bf16.msra.mxu0 0
        %6611 = vmatprep.subr.bf16.mxu0 0
        %6612 = vmatpush1.bf16.msra.mxu0 0
        %6613 = vmatprep.subr.bf16.mxu0 0
        %6614 = vmatpush1.bf16.msra.mxu0 0
        %6615 = vmatprep.subr.bf16.mxu0 0
        %6616 = vmatpush1.bf16.msra.mxu0 0
        %6617 = vmatprep.subr.bf16.mxu0 0
        %6618 = vmatpush1.bf16.msra.mxu0 0
        %6619 = vmatprep.subr.bf16.mxu0 0
        %6620 = vmatpush1.bf16.msra.mxu0 0
        %6621 = vmatprep.subr.bf16.mxu0 0
        %6622 = vmatpush1.bf16.msra.mxu0 0
        %6623 = vmatprep.subr.bf16.mxu0 0
        %6624 = vmatpush1.bf16.msra.mxu0 0
        %6625 = vmatprep.subr.bf16.mxu0 0
        %6626 = vmatpush1.bf16.msra.mxu0 0
        %6627 = vmatprep.subr.bf16.mxu0 0
        %6628 = vmatpush1.bf16.msra.mxu0 0
        %6629 = vmatprep.subr.bf16.mxu0 0
        %6630 = vmatpush1.bf16.msra.mxu0 0
        %6631 = vmatprep.subr.bf16.mxu0 0
        %6632 = vmatpush1.bf16.msra.mxu0 0
        %6633 = vmatprep.mubr.bf16.mxu0 0
        %6634 = vmatmul.mubr.bf16.gmra.mrb[0].mxu0 %v6599
        %v6635 = vpop.f32.mrb[0].mxu0
        %v6636 = vadd.f32 0.0, %v6635
        %v6637 = vpop.f32.mrb[0].mxu0
        %v6638 = vpop.f32.mrb[0].mxu0
        %v6639 = vpop.f32.mrb[0].mxu0
        %6640 = vdwg.mxu0
        %v6641 = vadd.f32 %v6489, %v6538
        %v6642 = vadd.f32 %v6641, %v6587
        %v6643 = vadd.f32 %v6642, %v6636
        %v6644 = vadd.f32 %v5247, %v6643
        %s6645 = scalar_lea.vmem %s17, 1
        %v6646 = vld [vmem:[%s6645] sm:$0x1]
        %v6647 = vmul.f32 %v6644, %v6644
        %v6648 = vsel %vm910, %v6647, 0.0
        %6649 = vadd.xlane.f32.xlu0 %v6648
        %v6650 = vpop.xlane.xlu0 %6649
        %v6651 = vmul.f32 %v6650, %v914
        %v6652 = vadd.f32 %v6651, 1e-06
        %v6653 = vrsqrt.pop %v6652
        %v6654 = vmul.f32 %v6644, %v6653
        %v6656 = vlaneseq
        %v6657 = vshrl.u32 %v6656, 7
        %v6658 = vsub.s32 0, %v6657
        %v6659 = vrot.slane %v6646, %v6658
        %v6661 = vmul.f32 %v6654, %v6659
        %v6662 = vpack.c.bf16 %v6661, %v6661
        %s6663 = scalar_lea.vmem %s18, 16
        %v6664 = vld [vmem:[%s6663] sm:$0xf]
        %v6665 = vld [vmem:[%s6663 + $0x4] sm:$0xf]
        %v6666 = vld [vmem:[%s6663 + $0x8] sm:$0xf]
        %v6667 = vld [vmem:[%s6663 + $0xc] sm:$0xf]
        %v6672 = vunpack.c.l.b16 %v6664
        %v6673 = vunpack.c.l.b16 %v6665
        %v6674 = vunpack.c.l.b16 %v6666
        %v6675 = vunpack.c.l.b16 %v6667
        %v6676 = vpack.c.b16 %v6673, %v6672
        %v6677 = vpack.c.b16 %v6675, %v6674
        %v6681 = vsel %vm910, %v6662, 0
        %6683 = vmatprep.subr.bf16.mxu0 0
        %6684 = vmatpush1.bf16.msra.mxu0 %v6676
        %6685 = vmatprep.subr.bf16.mxu0 0
        %6686 = vmatpush1.bf16.msra.mxu0 %v6677
        %6687 = vmatprep.subr.bf16.mxu0 0
        %6688 = vmatpush1.bf16.msra.mxu0 0
        %6689 = vmatprep.subr.bf16.mxu0 0
        %6690 = vmatpush1.bf16.msra.mxu0 0
        %6691 = vmatprep.subr.bf16.mxu0 0
        %6692 = vmatpush1.bf16.msra.mxu0 0
        %6693 = vmatprep.subr.bf16.mxu0 0
        %6694 = vmatpush1.bf16.msra.mxu0 0
        %6695 = vmatprep.subr.bf16.mxu0 0
        %6696 = vmatpush1.bf16.msra.mxu0 0
        %6697 = vmatprep.subr.bf16.mxu0 0
        %6698 = vmatpush1.bf16.msra.mxu0 0
        %6699 = vmatprep.subr.bf16.mxu0 0
        %6700 = vmatpush1.bf16.msra.mxu0 0
        %6701 = vmatprep.subr.bf16.mxu0 0
        %6702 = vmatpush1.bf16.msra.mxu0 0
        %6703 = vmatprep.subr.bf16.mxu0 0
        %6704 = vmatpush1.bf16.msra.mxu0 0
        %6705 = vmatprep.subr.bf16.mxu0 0
        %6706 = vmatpush1.bf16.msra.mxu0 0
        %6707 = vmatprep.subr.bf16.mxu0 0
        %6708 = vmatpush1.bf16.msra.mxu0 0
        %6709 = vmatprep.subr.bf16.mxu0 0
        %6710 = vmatpush1.bf16.msra.mxu0 0
        %6711 = vmatprep.subr.bf16.mxu0 0
        %6712 = vmatpush1.bf16.msra.mxu0 0
        %6713 = vmatprep.subr.bf16.mxu0 0
        %6714 = vmatpush1.bf16.msra.mxu0 0
        %6715 = vmatprep.mubr.bf16.mxu0 0
        %6716 = vmatmul.mubr.bf16.gmra.mrb[0].mxu0 %v6681
        %v6717 = vpop.f32.mrb[0].mxu0
        %v6718 = vadd.f32 0.0, %v6717
        %v6719 = vpop.f32.mrb[0].mxu0
        %v6720 = vpop.f32.mrb[0].mxu0
        %v6721 = vpop.f32.mrb[0].mxu0
        %6722 = vdwg.mxu0
        %v6723 = vmax.f32 %v6718, 0.0
        %v6724 = vpack.c.bf16 %v6723, %v6723
        %s6725 = scalar_lea.vmem %s19, 32
        %v6726 = vld [vmem:[%s6725] sm:$0xf]
        %v6727 = vld [vmem:[%s6725 + $0x4] sm:$0xf]
        %v6728 = vld [vmem:[%s6725 + $0x8] sm:$0xf]
        %v6729 = vld [vmem:[%s6725 + $0xc] sm:$0xf]
        %v6730 = vld [vmem:[%s6725 + $0x10] sm:$0xf]
        %v6731 = vld [vmem:[%s6725 + $0x14] sm:$0xf]
        %v6732 = vld [vmem:[%s6725 + $0x18] sm:$0xf]
        %v6733 = vld [vmem:[%s6725 + $0x1c] sm:$0xf]
        %v6742 = vunpack.c.l.b16 %v6726
        %v6743 = vunpack.c.l.b16 %v6727
        %v6744 = vunpack.c.l.b16 %v6728
        %v6745 = vunpack.c.l.b16 %v6729
        %v6746 = vunpack.c.l.b16 %v6730
        %v6747 = vunpack.c.l.b16 %v6731
        %v6748 = vunpack.c.l.b16 %v6732
        %v6749 = vunpack.c.l.b16 %v6733
        %v6750 = vpack.c.b16 %v6743, %v6742
        %v6751 = vpack.c.b16 %v6745, %v6744
        %v6752 = vpack.c.b16 %v6747, %v6746
        %v6753 = vpack.c.b16 %v6749, %v6748
        %v6759 = vsel %vm3806, %v6724, 0
        %6761 = vmatprep.subr.bf16.mxu0 0
        %6762 = vmatpush1.bf16.msra.mxu0 %v6750
        %6763 = vmatprep.subr.bf16.mxu0 0
        %6764 = vmatpush1.bf16.msra.mxu0 %v6751
        %6765 = vmatprep.subr.bf16.mxu0 0
        %6766 = vmatpush1.bf16.msra.mxu0 %v6752
        %6767 = vmatprep.subr.bf16.mxu0 0
        %6768 = vmatpush1.bf16.msra.mxu0 %v6753
        %6769 = vmatprep.subr.bf16.mxu0 0
        %6770 = vmatpush1.bf16.msra.mxu0 0
        %6771 = vmatprep.subr.bf16.mxu0 0
        %6772 = vmatpush1.bf16.msra.mxu0 0
        %6773 = vmatprep.subr.bf16.mxu0 0
        %6774 = vmatpush1.bf16.msra.mxu0 0
        %6775 = vmatprep.subr.bf16.mxu0 0
        %6776 = vmatpush1.bf16.msra.mxu0 0
        %6777 = vmatprep.subr.bf16.mxu0 0
        %6778 = vmatpush1.bf16.msra.mxu0 0
        %6779 = vmatprep.subr.bf16.mxu0 0
        %6780 = vmatpush1.bf16.msra.mxu0 0
        %6781 = vmatprep.subr.bf16.mxu0 0
        %6782 = vmatpush1.bf16.msra.mxu0 0
        %6783 = vmatprep.subr.bf16.mxu0 0
        %6784 = vmatpush1.bf16.msra.mxu0 0
        %6785 = vmatprep.subr.bf16.mxu0 0
        %6786 = vmatpush1.bf16.msra.mxu0 0
        %6787 = vmatprep.subr.bf16.mxu0 0
        %6788 = vmatpush1.bf16.msra.mxu0 0
        %6789 = vmatprep.subr.bf16.mxu0 0
        %6790 = vmatpush1.bf16.msra.mxu0 0
        %6791 = vmatprep.subr.bf16.mxu0 0
        %6792 = vmatpush1.bf16.msra.mxu0 0
        %6793 = vmatprep.mubr.bf16.mxu0 0
        %6794 = vmatmul.mubr.bf16.gmra.mrb[0].mxu0 %v6759
        %v6795 = vpop.f32.mrb[0].mxu0
        %v6796 = vadd.f32 0.0, %v6795
        %v6797 = vpop.f32.mrb[0].mxu0
        %v6798 = vpop.f32.mrb[0].mxu0
        %v6799 = vpop.f32.mrb[0].mxu0
        %6800 = vdwg.mxu0
        %v6801 = vadd.f32 %v6644, %v6796
        %v6802 = vld [vmem:[%s4] sm:$0x1]
        %v6803 = vmul.f32 %v6801, %v6801
        %v6804 = vsel %vm910, %v6803, 0.0
        %6805 = vadd.xlane.f32.xlu0 %v6804
        %v6806 = vpop.xlane.xlu0 %6805
        %v6807 = vmul.f32 %v6806, %v914
        %v6808 = vadd.f32 %v6807, 1e-06
        %v6809 = vrsqrt.pop %v6808
        %v6810 = vmul.f32 %v6801, %v6809
        %v6812 = vlaneseq
        %v6813 = vshrl.u32 %v6812, 7
        %v6814 = vsub.s32 0, %v6813
        %v6815 = vrot.slane %v6802, %v6814
        %v6817 = vmul.f32 %v6810, %v6815
        %v6818 = vpack.c.bf16 %v6817, %v6817
        %v6819 = vld [vmem:[%s3] sm:$0xff]
        %v6820 = vld [vmem:[%s3 + $0x8] sm:$0xff]
        %v6821 = vld [vmem:[%s3 + $0x10] sm:$0xff]
        %v6822 = vld [vmem:[%s3 + $0x18] sm:$0xff]
        %v6827 = vunpack.c.l.b16 %v6819
        %v6828 = vunpack.c.h.b16 %v6819
        %v6829 = vunpack.c.l.b16 %v6820
        %v6830 = vunpack.c.h.b16 %v6820
        %v6831 = vunpack.c.l.b16 %v6821
        %v6832 = vunpack.c.h.b16 %v6821
        %v6833 = vunpack.c.l.b16 %v6822
        %v6834 = vunpack.c.h.b16 %v6822
        %v6835 = vpack.c.b16 %v6829, %v6827
        %v6836 = vpack.c.b16 %v6830, %v6828
        %v6837 = vpack.c.b16 %v6833, %v6831
        %v6838 = vpack.c.b16 %v6834, %v6832
        %v6844 = vsel %vm910, %v6818, 0
        %6846 = vmatprep.subr.bf16.mxu0 %v6836
        %6847 = vmatpush1.bf16.msra.mxu0 %v6835
        %6848 = vmatprep.subr.bf16.mxu0 %v6838
        %6849 = vmatpush1.bf16.msra.mxu0 %v6837
        %6850 = vmatprep.subr.bf16.mxu0 0
        %6851 = vmatpush1.bf16.msra.mxu0 0
        %6852 = vmatprep.subr.bf16.mxu0 0
        %6853 = vmatpush1.bf16.msra.mxu0 0
        %6854 = vmatprep.subr.bf16.mxu0 0
        %6855 = vmatpush1.bf16.msra.mxu0 0
        %6856 = vmatprep.subr.bf16.mxu0 0
        %6857 = vmatpush1.bf16.msra.mxu0 0
        %6858 = vmatprep.subr.bf16.mxu0 0
        %6859 = vmatpush1.bf16.msra.mxu0 0
        %6860 = vmatprep.subr.bf16.mxu0 0
        %6861 = vmatpush1.bf16.msra.mxu0 0
        %6862 = vmatprep.subr.bf16.mxu0 0
        %6863 = vmatpush1.bf16.msra.mxu0 0
        %6864 = vmatprep.subr.bf16.mxu0 0
        %6865 = vmatpush1.bf16.msra.mxu0 0
        %6866 = vmatprep.subr.bf16.mxu0 0
        %6867 = vmatpush1.bf16.msra.mxu0 0
        %6868 = vmatprep.subr.bf16.mxu0 0
        %6869 = vmatpush1.bf16.msra.mxu0 0
        %6870 = vmatprep.subr.bf16.mxu0 0
        %6871 = vmatpush1.bf16.msra.mxu0 0
        %6872 = vmatprep.subr.bf16.mxu0 0
        %6873 = vmatpush1.bf16.msra.mxu0 0
        %6874 = vmatprep.subr.bf16.mxu0 0
        %6875 = vmatpush1.bf16.msra.mxu0 0
        %6876 = vmatprep.subr.bf16.mxu0 0
        %6877 = vmatpush1.bf16.msra.mxu0 0
        %6878 = vmatprep.mubr.bf16.mxu0 0
        %6879 = vmatmul.mubr.bf16.gmra.mrb[0].mxu0 %v6844
        %v6880 = vpop.f32.mrb[0].mxu0
        %v6881 = vadd.f32 0.0, %v6880
        %v6882 = vpop.f32.mrb[0].mxu0
        %v6883 = vadd.f32 0.0, %v6882
        %v6884 = vpop.f32.mrb[0].mxu0
        %v6885 = vpop.f32.mrb[0].mxu0
        %6886 = vdwg.mxu0
        %6887 = vst [vmem:[%s688] sm:$0xff] %v6881
        %6888 = vst [vmem:[%s688 + $0x8] sm:$0xff] %v6883
        %s6889 = sand.u32 %s475, 1
        %s6890 = scalar_lea.sflag [#allocation3], %s6889
        %s6891 = sand.u32 %s475, 1
        %s6892 = smul.addr %s6891, 16
        %s6893 = scalar_lea.vmem [#allocation2], %s6892
        %p6894 = scmp.lt.s32.totalorder %s37, 1
        %s6895 = scalar_select %p6894, %s37, 1
        %s6896 = smul.addr %s6895, 2
        %s6897 = smul.addr %s6896, 4
        %s6898 = scalar_lea.vmem %s21, %s6897
        %p6899 = scmp.lt.s32.totalorder %s37, 1
        %s6900 = scalar_select %p6899, %s37, 1
        %s6901 = smul.addr %s6900, 2
        %s6902 = smul.addr %s6901, 4
        %s6903 = scalar_lea.vmem %s22, %s6902
        // Predicated region
        $region101: #{_decoder_apply.1} parent=99 // pred_check
          %p6904 = pneg %p485
        $region102: #{_decoder_apply.1} parent=99 // pred_check_branch
          %6906 = sbr.rel (%p6904) target = $region104
        $region103: #{_decoder_apply.1} parent=99 // pred_region
          %s6908 = ssub.s32 256, 256
          %6909 = vsyncadd %s6890, %s6908
          %s6910 = smul.addr %s37, 2
          %s6911 = smul.addr %s6910, 128
          %s6912 = scalar_lea.hbm %s20, %s6911
          %s6914 = sshll.u32 %s6893, 4
          %s6915 = int_to_ptr.vmem [resolvable:$true] %s6914
          %6917 = dma.vmem_to_hbm [thread:$0]  %s6915, 256, %s6912, %s6890
        $region104: #{_decoder_apply.1} parent=99 // pred_fallthru
          _
        // Predicated region
        $region105: #{_decoder_apply.1} parent=99 // pred_check
          %p6918 = pneg %p511
        $region106: #{_decoder_apply.1} parent=99 // pred_check_branch
          %6920 = sbr.rel (%p6918) target = $region108
        $region107: #{_decoder_apply.1} parent=99 // pred_region
          _
        $region108: #{_decoder_apply.1} parent=99 // pred_fallthru
          _
        // Predicated region
        $region109: #{_decoder_apply.1} parent=99 // pred_check
          %p6921 = pneg %p537
        $region110: #{_decoder_apply.1} parent=99 // pred_check_branch
          %6923 = sbr.rel (%p6921) target = $region112
        $region111: #{_decoder_apply.1} parent=99 // pred_region
          _
        $region112: #{_decoder_apply.1} parent=99 // pred_fallthru
          _
      $region100: #{_decoder_apply.1} parent=5 // pred_fallthru
        _
      %p6924 = scmp.le.s32.totalorder 2, %s32
      // Predicated region
      $region113: #{_decoder_apply.1} parent=5 // pred_check
        %p6925 = pneg %p6924
      $region114: #{_decoder_apply.1} parent=5 // pred_check_branch
        %6927 = sbr.rel (%p6925) target = $region116
      $region115: #{_decoder_apply.1} parent=5 // pred_region
        %s6928 = ssub.s32 %s32, 2
        // Predicated region
        $region117: #{_decoder_apply.1} parent=115 // pred_check
          %p6929 = pneg %p491
        $region118: #{_decoder_apply.1} parent=115 // pred_check_branch
          %6931 = sbr.rel (%p6929) target = $region120
        $region119: #{_decoder_apply.1} parent=115 // pred_region
          %s6932 = sand.u32 %s476, 1
          %s6933 = scalar_lea.sflag [#allocation3], %s6932
          %s6934 = sand.u32 %s476, 1
          %s6935 = smul.addr %s6934, 16
          %s6936 = scalar_lea.vmem [#allocation2], %s6935
          %6937 = dma.done %s6933, 256
        $region120: #{_decoder_apply.1} parent=115 // pred_fallthru
          _
        // Predicated region
        $region121: #{_decoder_apply.1} parent=115 // pred_check
          %p6938 = pneg %p517
        $region122: #{_decoder_apply.1} parent=115 // pred_check_branch
          %6940 = sbr.rel (%p6938) target = $region124
        $region123: #{_decoder_apply.1} parent=115 // pred_region
          %p6941 = scmp.lt.s32.totalorder %s38, 1
          %s6942 = scalar_select %p6941, %s38, 1
          %s6943 = smul.addr %s6942, 2
          %s6944 = smul.addr %s6943, 4
          %s6945 = scalar_lea.vmem %s21, %s6944
        $region124: #{_decoder_apply.1} parent=115 // pred_fallthru
          _
        // Predicated region
        $region125: #{_decoder_apply.1} parent=115 // pred_check
          %p6946 = pneg %p543
        $region126: #{_decoder_apply.1} parent=115 // pred_check_branch
          %6948 = sbr.rel (%p6946) target = $region128
        $region127: #{_decoder_apply.1} parent=115 // pred_region
          %p6949 = scmp.lt.s32.totalorder %s38, 1
          %s6950 = scalar_select %p6949, %s38, 1
          %s6951 = smul.addr %s6950, 2
          %s6952 = smul.addr %s6951, 4
          %s6953 = scalar_lea.vmem %s22, %s6952
        $region128: #{_decoder_apply.1} parent=115 // pred_fallthru
          _
      $region116: #{_decoder_apply.1} parent=5 // pred_fallthru
        _
    $region6: #{_decoder_apply.1} parent=1 // loop_footer
      %s36 = sadd.s32 1, %s32
    $region7: #{_decoder_apply.1} parent=1 // loop_footer_branch
      %31 = sbr.rel target = $region3
    $region8: #{_decoder_apply.1} parent=1 // loop_exit
      _
    %6954 = vsyncpa [#allocation3], 1
    %s6955 = scalar_lea.sflag [#allocation3], 1
    %6956 = vsyncpa %s6955, 1

</llo_original>
